<compile_context>
chip_gen: v6e
topology: v6e:2x2x1
jax: 0.10.0
libtpu: 0.0.40
codegen_flags: <defaults>
</compile_context>

<pallas_src>
import functools
import math

import jax
import jax.numpy as jnp
from jax.experimental import pallas as pl
from jax.experimental.pallas import tpu as pltpu


VMEM_LIMIT_BYTES = 32 * 1024 * 1024  # safe on v5e/v6e (128 MiB) and v7x (64 MiB)


# ----------------------------------------------------------------------------
# helpers
# ----------------------------------------------------------------------------
def _ln_rows(x, g, b, eps):
    """Row-wise LayerNorm of a 2-D f32 array x (M, D); g/b are (1, D)."""
    mu = jnp.mean(x, axis=-1, keepdims=True)
    xc = x - mu
    var = jnp.mean(xc * xc, axis=-1, keepdims=True)
    return xc * jax.lax.rsqrt(var + eps) * g + b


def _softmax_rows(s):
    """Row-wise softmax (f32) with approx-reciprocal normalization (EUP slot)."""
    s = s - jnp.max(s, axis=-1, keepdims=True)
    e = jnp.exp(s)
    return e * pl.reciprocal(jnp.sum(e, axis=-1, keepdims=True), approx=True)


def _row_tile(m):
    for t in (512, 256, 128, 64, 32, 16, 8):
        if m % t == 0 and m // t >= 2:
            return t
    return m


# ----------------------------------------------------------------------------
# Kernel 1: point head (LN4 + MLP) + self-attention (+ residual + LN1)
#           one grid point per batch element
# ----------------------------------------------------------------------------
def _self_attn_point_kernel(tgt_ref, qpos_ref,
                            wqk_ref, bqk_ref, wv_ref, bv_ref, wo_ref, bo_ref,
                            n1g_ref, n1b_ref, n4g_ref, n4b_ref,
                            pw0_ref, pb0_ref, pw1_ref, pb1_ref,
                            pw2_ref, pb2_ref, prw_ref, prb_ref,
                            out_ref, off_ref, ref_ref,
                            *, nhead, eps):
    tgt = tgt_ref[0].astype(jnp.float32)        # (Lq, D)
    qpos = qpos_ref[0].astype(jnp.float32)      # (Lq, D)
    d = tgt.shape[-1]
    dh = d // nhead
    x = tgt + qpos

    # --- point head: LN4 prologue + 2-layer ReLU MLP + offset / ref projections
    out4 = _ln_rows(x, n4g_ref[...], n4b_ref[...], eps)
    h = jnp.dot(out4, pw0_ref[...], preferred_element_type=jnp.float32) + pb0_ref[...]
    h = jnp.maximum(h, 0.0)
    h = jnp.dot(h, pw1_ref[...], preferred_element_type=jnp.float32) + pb1_ref[...]
    h = jnp.maximum(h, 0.0)
    off_ref[0] = (jnp.dot(h, pw2_ref[...], preferred_element_type=jnp.float32)
                  + pb2_ref[...]).astype(off_ref.dtype)
    ref_ref[0] = (jnp.dot(out4, prw_ref[...], preferred_element_type=jnp.float32)
                  + prb_ref[...]).astype(ref_ref.dtype)

    # --- self attention: fused q/k projection from x, v projection from tgt
    qk = jnp.dot(x, wqk_ref[...], preferred_element_type=jnp.float32) + bqk_ref[...]
    q = qk[:, :d]
    k = qk[:, d:]
    v = jnp.dot(tgt, wv_ref[...], preferred_element_type=jnp.float32) + bv_ref[...]

    scale = 1.0 / math.sqrt(dh)
    wo = wo_ref[...]
    acc = None
    for hh in range(nhead):                      # static unrolled head loop
        sl = slice(hh * dh, (hh + 1) * dh)
        qh = q[:, sl] * scale
        kh = k[:, sl]
        vh = v[:, sl]
        s = jax.lax.dot_general(qh, kh, (((1,), (1,)), ((), ())),
                                preferred_element_type=jnp.float32)  # (Lq, Lq)
        pr = _softmax_rows(s)
        oh = jnp.dot(pr, vh, preferred_element_type=jnp.float32)     # (Lq, Dh)
        contrib = jnp.dot(oh, wo[sl, :], preferred_element_type=jnp.float32)
        acc = contrib if acc is None else acc + contrib
    attn = acc + bo_ref[...]

    out_ref[0] = _ln_rows(tgt + attn, n1g_ref[...], n1b_ref[...], eps).astype(out_ref.dtype)


def self_attn_point(tgt_bm, qpos_bm, p, nhead, eps=1e-5):
    """tgt_bm/qpos_bm: (B, Lq, D).  Returns (tgt1, point_offset, ref_raw)."""
    B, Lq, D = tgt_bm.shape
    sa = p["self_attn"]
    ph = p["point"]
    n_off = 2 * nhead

    def xspec(L, C):
        return pl.BlockSpec((1, L, C), lambda b: (b, 0, 0))

    def wspec(a):
        r, c = a.shape
        return pl.BlockSpec((r, c), lambda b: (0, 0))

    weights = [sa["wqk"], sa["bqk"], sa["wv"], sa["bv"], sa["wo"], sa["bo"],
               p["norm1"]["g"], p["norm1"]["b"], p["norm4"]["g"], p["norm4"]["b"],
               ph["w0"], ph["b0"], ph["w1"], ph["b1"],
               ph["w2"], ph["b2"], ph["wr"], ph["br"]]

    out_shapes = (jax.ShapeDtypeStruct((B, Lq, D), tgt_bm.dtype),
                  jax.ShapeDtypeStruct((B, Lq, n_off), tgt_bm.dtype),
                  jax.ShapeDtypeStruct((B, Lq, 2), tgt_bm.dtype))
    out_specs = (pl.BlockSpec((1, Lq, D), lambda b: (b, 0, 0)),
                 pl.BlockSpec((1, Lq, n_off), lambda b: (b, 0, 0)),
                 pl.BlockSpec((1, Lq, 2), lambda b: (b, 0, 0)))

    return pl.pallas_call(
        functools.partial(_self_attn_point_kernel, nhead=nhead, eps=eps),
        out_shape=out_shapes,
        grid=(B,),
        in_specs=[xspec(Lq, D), xspec(Lq, D)] + [wspec(w) for w in weights],
        out_specs=out_specs,
        compiler_params=pltpu.CompilerParams(
            dimension_semantics=("parallel",),
            vmem_limit_bytes=VMEM_LIMIT_BYTES),
    )(tgt_bm, qpos_bm, *weights)


# ----------------------------------------------------------------------------
# Kernel 2: cross-attention with in-kernel Gaussian spatial bias
#           (+ residual + LN2) + FFN (+ residual + LN3)
#           one grid point per batch element
# ----------------------------------------------------------------------------
def _cross_attn_ffn_kernel(tgt_ref, qpos_ref, mem_ref, pos_ref, pt_ref,
                           gridt_ref, g2_ref,
                           wq_ref, bq_ref, wk_ref, bk_ref, wv_ref, bv_ref,
                           wo_ref, bo_ref,
                           n2g_ref, n2b_ref, n3g_ref, n3b_ref,
                           w1_ref, b1_ref, w2_ref, b2_ref,
                           out_ref, *, nhead, smooth, eps):
    tgt = tgt_ref[0].astype(jnp.float32)          # (Lq, D)
    qpos = qpos_ref[0].astype(jnp.float32)        # (Lq, D)
    mem = mem_ref[0].astype(jnp.float32)          # (Lk, D)
    pos = pos_ref[0].astype(jnp.float32)          # (Lk, D)
    pts = pt_ref[0].astype(jnp.float32)           # (Lq, 2H)
    gridt = gridt_ref[...].astype(jnp.float32)    # (2, Lk)
    g2 = g2_ref[...].astype(jnp.float32)          # (1, Lk)

    d = tgt.shape[-1]
    dh = d // nhead
    scale = 1.0 / math.sqrt(dh)
    inv_smooth = 1.0 / smooth

    q = jnp.dot(tgt + qpos, wq_ref[...], preferred_element_type=jnp.float32) + bq_ref[...]
    k = jnp.dot(mem + pos, wk_ref[...], preferred_element_type=jnp.float32) + bk_ref[...]
    v = jnp.dot(mem, wv_ref[...], preferred_element_type=jnp.float32) + bv_ref[...]

    wo = wo_ref[...]
    acc = None
    for hh in range(nhead):                        # static unrolled head loop
        sl = slice(hh * dh, (hh + 1) * dh)
        qh = q[:, sl] * scale
        kh = k[:, sl]
        vh = v[:, sl]
        # Gaussian spatial bias: -||p - g||^2 / smooth, computed in-kernel.
        ph = pts[:, 2 * hh:2 * hh + 2]             # (Lq, 2)
        p2 = jnp.sum(ph * ph, axis=-1, keepdims=True)                        # (Lq, 1)
        pg = jnp.dot(ph, gridt, preferred_element_type=jnp.float32)          # (Lq, Lk)
        bias = -(p2 - 2.0 * pg + g2) * inv_smooth
        s = jax.lax.dot_general(qh, kh, (((1,), (1,)), ((), ())),
                                preferred_element_type=jnp.float32) + bias   # (Lq, Lk)
        pr = _softmax_rows(s)
        oh = jnp.dot(pr, vh, preferred_element_type=jnp.float32)             # (Lq, Dh)
        contrib = jnp.dot(oh, wo[sl, :], preferred_element_type=jnp.float32)
        acc = contrib if acc is None else acc + contrib
    attn = acc + bo_ref[...]

    # residual + LN2, then FFN with VMEM-resident intermediate, residual + LN3
    t2 = _ln_rows(tgt + attn, n2g_ref[...], n2b_ref[...], eps)
    ff = jnp.dot(t2, w1_ref[...], preferred_element_type=jnp.float32) + b1_ref[...]
    ff = jnp.maximum(ff, 0.0)
    ff = jnp.dot(ff, w2_ref[...], preferred_element_type=jnp.float32) + b2_ref[...]
    out_ref[0] = _ln_rows(t2 + ff, n3g_ref[...], n3b_ref[...], eps).astype(out_ref.dtype)


def cross_attn_ffn(tgt_bm, qpos_bm, mem_bm, pos_bm, point_bm, grid_t, g2,
                   p, nhead, smooth, eps=1e-5):
    B, Lq, D = tgt_bm.shape
    Lk = mem_bm.shape[1]
    ca = p["cross_attn"]

    def xspec(L, C):
        return pl.BlockSpec((1, L, C), lambda b: (b, 0, 0))

    def wspec(a):
        r, c = a.shape
        return pl.BlockSpec((r, c), lambda b: (0, 0))

    weights = [ca["wq"], ca["bq"], ca["wk"], ca["bk"], ca["wv"], ca["bv"],
               ca["wo"], ca["bo"],
               p["norm2"]["g"], p["norm2"]["b"], p["norm3"]["g"], p["norm3"]["b"],
               p["lin1_w"], p["lin1_b"], p["lin2_w"], p["lin2_b"]]

    return pl.pallas_call(
        functools.partial(_cross_attn_ffn_kernel, nhead=nhead,
                          smooth=smooth, eps=eps),
        out_shape=jax.ShapeDtypeStruct((B, Lq, D), tgt_bm.dtype),
        grid=(B,),
        in_specs=[xspec(Lq, D), xspec(Lq, D), xspec(Lk, D), xspec(Lk, D),
                  xspec(Lq, 2 * nhead), wspec(grid_t), wspec(g2)]
                 + [wspec(w) for w in weights],
        out_specs=pl.BlockSpec((1, Lq, D), lambda b: (b, 0, 0)),
        compiler_params=pltpu.CompilerParams(
            dimension_semantics=("parallel",),
            vmem_limit_bytes=VMEM_LIMIT_BYTES),
    )(tgt_bm, qpos_bm, mem_bm, pos_bm, point_bm, grid_t, g2, *weights)


# ----------------------------------------------------------------------------
# Final LayerNorm (row-tiled, parallel grid)
# ----------------------------------------------------------------------------
def _layernorm_kernel(x_ref, g_ref, b_ref, o_ref, *, eps):
    x = x_ref[...].astype(jnp.float32)
    o_ref[...] = _ln_rows(x, g_ref[...], b_ref[...], eps).astype(o_ref.dtype)


def layernorm(x, g, b, eps=1e-5):
    """x: (M, D); g/b: (1, D)."""
    M, D = x.shape
    tile = _row_tile(M)
    return pl.pallas_call(
        functools.partial(_layernorm_kernel, eps=eps),
        out_shape=jax.ShapeDtypeStruct((M, D), x.dtype),
        grid=(M // tile,),
        in_specs=[pl.BlockSpec((tile, D), lambda i: (i, 0)),
                  pl.BlockSpec((1, D), lambda i: (0, 0)),
                  pl.BlockSpec((1, D), lambda i: (0, 0))],
        out_specs=pl.BlockSpec((tile, D), lambda i: (i, 0)),
        compiler_params=pltpu.CompilerParams(
            dimension_semantics=("parallel",),
            vmem_limit_bytes=VMEM_LIMIT_BYTES),
    )(x, g, b)


# ----------------------------------------------------------------------------
# Decoder layer (wrapper glue is tiny: point slicing / sigmoid / tile / add)
# ----------------------------------------------------------------------------
def decoder_layer(p, grid_t, g2, h_w, tgt_bm, mem_bm, pos_bm, qpos_bm,
                  point_ref_previous, nhead, smooth):
    tgt1, point_offset, ref_raw = self_attn_point(tgt_bm, qpos_bm, p, nhead)

    if point_ref_previous is None:
        # reference points only computed in the first layer
        psr = jax.nn.sigmoid(ref_raw) * (h_w[:, None, :] / 32.0)   # (B, Lq, 2)
        point_sigmoid_ref = jnp.tile(psr, (1, 1, nhead))           # (B, Lq, 2H)
    else:
        point_sigmoid_ref = point_ref_previous

    point = point_sigmoid_ref + point_offset                       # (B, Lq, 2H)

    out = cross_attn_ffn(tgt1, qpos_bm, mem_bm, pos_bm, point, grid_t, g2,
                         p, nhead, smooth)
    return out, point, point_sigmoid_ref


# ----------------------------------------------------------------------------
# TransformerDecoder forward (return_intermediate=False)
# ----------------------------------------------------------------------------
def transformer_decoder(params, grid_pts, h_w, tgt, memory, pos, query_pos,
                        nhead, smooth):
    # TODO(synk): tgt_mask / memory_mask / key-padding masks (None in this
    # configuration) are not implemented.
    # seq-first (L, B, D) -> batch-major (B, L, D) once; kernels run batch-major.
    tgt_bm = jnp.transpose(tgt, (1, 0, 2))
    mem_bm = jnp.transpose(memory, (1, 0, 2))
    pos_bm = jnp.transpose(pos, (1, 0, 2))
    qpos_bm = jnp.transpose(query_pos, (1, 0, 2))

    grid_t = jnp.transpose(grid_pts, (1, 0))                      # (2, HW)
    g2 = jnp.sum(grid_pts * grid_pts, axis=-1)[None, :]           # (1, HW)

    output = tgt_bm
    point_sigmoid_ref = None
    points = []
    for layer_p in params["layers"]:
        output, point, point_sigmoid_ref = decoder_layer(
            layer_p, grid_t, g2, h_w, output, mem_bm, pos_bm, qpos_bm,
            point_sigmoid_ref, nhead, smooth)
        points.append(point)

    if params["norm"] is not None:
        B, Lq, D = output.shape
        output = layernorm(output.reshape(B * Lq, D),
                           params["norm"]["g"], params["norm"]["b"]).reshape(B, Lq, D)

    output = jnp.transpose(output, (1, 0, 2))    # back to (Lq, B, D)
    # return_intermediate=False  =>  output.unsqueeze(0)
    return output[None]


# ----------------------------------------------------------------------------
# Deterministic parameter construction
# ----------------------------------------------------------------------------
def _init_linear(key, fin, fout, scale=0.05):
    kw, kb = jax.random.split(key)
    w = scale * jax.random.normal(kw, (fin, fout), jnp.float32)
    b = scale * jax.random.normal(kb, (1, fout), jnp.float32)
    return w, b


def _init_norm(d):
    return dict(g=jnp.ones((1, d), jnp.float32), b=jnp.zeros((1, d), jnp.float32))


def _init_self_attn(key, d):
    ks = jax.random.split(key, 4)
    wq, bq = _init_linear(ks[0], d, d)
    wk, bk = _init_linear(ks[1], d, d)
    wv, bv = _init_linear(ks[2], d, d)
    wo, bo = _init_linear(ks[3], d, d)
    # fused q/k projection (q and k share the same input x = tgt + query_pos)
    return dict(wqk=jnp.concatenate([wq, wk], axis=1),
                bqk=jnp.concatenate([bq, bk], axis=1),
                wv=wv, bv=bv, wo=wo, bo=bo)


def _init_cross_attn(key, d):
    ks = jax.random.split(key, 4)
    wq, bq = _init_linear(ks[0], d, d)
    wk, bk = _init_linear(ks[1], d, d)
    wv, bv = _init_linear(ks[2], d, d)
    wo, bo = _init_linear(ks[3], d, d)
    return dict(wq=wq, bq=bq, wk=wk, bk=bk, wv=wv, bv=bv, wo=wo, bo=bo)


def _init_layer(key, d, dff, nhead):
    ks = jax.random.split(key, 8)
    p = {}
    p["self_attn"] = _init_self_attn(ks[0], d)
    p["cross_attn"] = _init_cross_attn(ks[1], d)
    p["lin1_w"], p["lin1_b"] = _init_linear(ks[2], d, dff)
    p["lin2_w"], p["lin2_b"] = _init_linear(ks[3], dff, d)
    ph = {}
    ph["w0"], ph["b0"] = _init_linear(ks[4], d, d)
    ph["w1"], ph["b1"] = _init_linear(ks[5], d, d)
    ph["w2"], ph["b2"] = _init_linear(ks[6], d, 2 * nhead)   # point offsets
    ph["wr"], ph["br"] = _init_linear(ks[7], d, 2)           # reference points
    p["point"] = ph
    p["norm1"] = _init_norm(d)
    p["norm2"] = _init_norm(d)
    p["norm3"] = _init_norm(d)
    p["norm4"] = _init_norm(d)
    return p


# ----------------------------------------------------------------------------
if __name__ == "__main__":
    # Small shapes consistent with the decoder interface.
    d_model, nhead, dff = 32, 4, 64
    num_queries, batch = 8, 2
    H, W = 4, 4
    HW = H * W
    num_layers = 2
    smooth = 8.0

    key = jax.random.PRNGKey(0)
    k_par, k_tgt, k_mem, k_pos, k_qpos = jax.random.split(key, 5)

    layer_keys = jax.random.split(k_par, num_layers)
    params = {
        "layers": [_init_layer(layer_keys[i], d_model, dff, nhead)
                   for i in range(num_layers)],
        "norm": _init_norm(d_model),
    }

    # Inputs (sequence-first, PyTorch MHA convention).
    tgt = jax.random.normal(k_tgt, (num_queries, batch, d_model), jnp.float32)
    memory = jax.random.normal(k_mem, (HW, batch, d_model), jnp.float32)
    pos = jax.random.normal(k_pos, (HW, batch, d_model), jnp.float32)
    query_pos = jax.random.normal(k_qpos, (num_queries, batch, d_model), jnp.float32)

    # Spatial grid of feature-map coordinates and per-image (h, w).
    gy, gx = jnp.meshgrid(jnp.arange(H, dtype=jnp.float32),
                          jnp.arange(W, dtype=jnp.float32), indexing="ij")
    grid_pts = jnp.stack([gx, gy], axis=-1).reshape(HW, 2)       # (HW, 2)
    h_w = jnp.tile(jnp.array([[float(H), float(W)]], jnp.float32), (batch, 1))  # (B, 2)

    fwd = jax.jit(functools.partial(transformer_decoder, nhead=nhead, smooth=smooth))
    out = fwd(params, grid_pts, h_w, tgt, memory, pos, query_pos)
    out = jax.block_until_ready(out)

    assert out.shape == (1, num_queries, batch, d_model), out.shape
    assert jnp.all(jnp.isfinite(out))
    print("KERNEL_OK")
</pallas_src>

<mosaic_0001>
module attributes {stable_mosaic.version = 11 : i64} {
  func.func @_self_attn_point_kernel(%arg0: i32, %arg1: memref<1x8x32xf32, #tpu.memory_space<vmem>>, %arg2: memref<1x8x32xf32, #tpu.memory_space<vmem>>, %arg3: memref<32x64xf32, #tpu.memory_space<vmem>>, %arg4: memref<1x64xf32, #tpu.memory_space<vmem>>, %arg5: memref<32x32xf32, #tpu.memory_space<vmem>>, %arg6: memref<1x32xf32, #tpu.memory_space<vmem>>, %arg7: memref<32x32xf32, #tpu.memory_space<vmem>>, %arg8: memref<1x32xf32, #tpu.memory_space<vmem>>, %arg9: memref<1x32xf32, #tpu.memory_space<vmem>>, %arg10: memref<1x32xf32, #tpu.memory_space<vmem>>, %arg11: memref<1x32xf32, #tpu.memory_space<vmem>>, %arg12: memref<1x32xf32, #tpu.memory_space<vmem>>, %arg13: memref<32x32xf32, #tpu.memory_space<vmem>>, %arg14: memref<1x32xf32, #tpu.memory_space<vmem>>, %arg15: memref<32x32xf32, #tpu.memory_space<vmem>>, %arg16: memref<1x32xf32, #tpu.memory_space<vmem>>, %arg17: memref<32x8xf32, #tpu.memory_space<vmem>>, %arg18: memref<1x8xf32, #tpu.memory_space<vmem>>, %arg19: memref<32x2xf32, #tpu.memory_space<vmem>>, %arg20: memref<1x2xf32, #tpu.memory_space<vmem>>, %arg21: memref<1x8x32xf32, #tpu.memory_space<vmem>>, %arg22: memref<1x8x8xf32, #tpu.memory_space<vmem>>, %arg23: memref<1x8x2xf32, #tpu.memory_space<vmem>>) attributes {dimension_semantics = [#tpu.dimension_semantics<parallel>], iteration_bounds = array<i64: 2>, scalar_prefetch = 0 : i64, scratch_operands = 0 : i64, tpu.core_type = #tpu.core_type<tc>, window_params = [{transform_indices = @transform_0, window_bounds = array<i64: 1, 8, 32>}, {transform_indices = @transform_1, window_bounds = array<i64: 1, 8, 32>}, {pipeline_mode = #tpu.pipeline_mode<synchronous>, transform_indices = @transform_2, window_bounds = array<i64: 32, 64>}, {pipeline_mode = #tpu.pipeline_mode<synchronous>, transform_indices = @transform_3, window_bounds = array<i64: 1, 64>}, {pipeline_mode = #tpu.pipeline_mode<synchronous>, transform_indices = @transform_4, window_bounds = array<i64: 32, 32>}, {pipeline_mode = #tpu.pipeline_mode<synchronous>, transform_indices = @transform_5, window_bounds = array<i64: 1, 32>}, {pipeline_mode = #tpu.pipeline_mode<synchronous>, transform_indices = @transform_6, window_bounds = array<i64: 32, 32>}, {pipeline_mode = #tpu.pipeline_mode<synchronous>, transform_indices = @transform_7, window_bounds = array<i64: 1, 32>}, {pipeline_mode = #tpu.pipeline_mode<synchronous>, transform_indices = @transform_8, window_bounds = array<i64: 1, 32>}, {pipeline_mode = #tpu.pipeline_mode<synchronous>, transform_indices = @transform_9, window_bounds = array<i64: 1, 32>}, {pipeline_mode = #tpu.pipeline_mode<synchronous>, transform_indices = @transform_10, window_bounds = array<i64: 1, 32>}, {pipeline_mode = #tpu.pipeline_mode<synchronous>, transform_indices = @transform_11, window_bounds = array<i64: 1, 32>}, {pipeline_mode = #tpu.pipeline_mode<synchronous>, transform_indices = @transform_12, window_bounds = array<i64: 32, 32>}, {pipeline_mode = #tpu.pipeline_mode<synchronous>, transform_indices = @transform_13, window_bounds = array<i64: 1, 32>}, {pipeline_mode = #tpu.pipeline_mode<synchronous>, transform_indices = @transform_14, window_bounds = array<i64: 32, 32>}, {pipeline_mode = #tpu.pipeline_mode<synchronous>, transform_indices = @transform_15, window_bounds = array<i64: 1, 32>}, {pipeline_mode = #tpu.pipeline_mode<synchronous>, transform_indices = @transform_16, window_bounds = array<i64: 32, 8>}, {pipeline_mode = #tpu.pipeline_mode<synchronous>, transform_indices = @transform_17, window_bounds = array<i64: 1, 8>}, {pipeline_mode = #tpu.pipeline_mode<synchronous>, transform_indices = @transform_18, window_bounds = array<i64: 32, 2>}, {pipeline_mode = #tpu.pipeline_mode<synchronous>, transform_indices = @transform_19, window_bounds = array<i64: 1, 2>}, {transform_indices = @transform_20, window_bounds = array<i64: 1, 8, 32>}, {transform_indices = @transform_21, window_bounds = array<i64: 1, 8, 8>}, {transform_indices = @transform_22, window_bounds = array<i64: 1, 8, 2>}]} {
    %c0 = arith.constant 0 : index
    %c0_0 = arith.constant 0 : index
    %c0_1 = arith.constant 0 : index
    %0 = vector.load %arg1[%c0, %c0_0, %c0_1] : memref<1x8x32xf32, #tpu.memory_space<vmem>>, vector<1x8x32xf32>
    %1 = vector.shape_cast %0 : vector<1x8x32xf32> to vector<8x32xf32>
    %c0_2 = arith.constant 0 : index
    %c0_3 = arith.constant 0 : index
    %c0_4 = arith.constant 0 : index
    %2 = vector.load %arg2[%c0_2, %c0_3, %c0_4] : memref<1x8x32xf32, #tpu.memory_space<vmem>>, vector<1x8x32xf32>
    %3 = vector.shape_cast %2 : vector<1x8x32xf32> to vector<8x32xf32>
    %4 = arith.addf %1, %3 : vector<8x32xf32>
    %c0_5 = arith.constant 0 : index
    %c0_6 = arith.constant 0 : index
    %5 = vector.load %arg11[%c0_5, %c0_6] : memref<1x32xf32, #tpu.memory_space<vmem>>, vector<1x32xf32>
    %c0_7 = arith.constant 0 : index
    %c0_8 = arith.constant 0 : index
    %6 = vector.load %arg12[%c0_7, %c0_8] : memref<1x32xf32, #tpu.memory_space<vmem>>, vector<1x32xf32>
    %cst = arith.constant dense<0.000000e+00> : vector<8xf32>
    %7 = vector.multi_reduction <add>, %4, %cst [1] : vector<8x32xf32> to vector<8xf32>
    %8 = vector.shape_cast %7 : vector<8xf32> to vector<8x1xf32>
    %cst_9 = arith.constant 3.200000e+01 : f32
    %9 = vector.broadcast %cst_9 : f32 to vector<8x1xf32>
    %10 = arith.divf %8, %9 : vector<8x1xf32>
    %11 = vector.broadcast %10 : vector<8x1xf32> to vector<8x32xf32>
    %12 = arith.subf %4, %11 : vector<8x32xf32>
    %13 = arith.mulf %12, %12 : vector<8x32xf32>
    %cst_10 = arith.constant dense<0.000000e+00> : vector<8xf32>
    %14 = vector.multi_reduction <add>, %13, %cst_10 [1] : vector<8x32xf32> to vector<8xf32>
    %15 = vector.shape_cast %14 : vector<8xf32> to vector<8x1xf32>
    %cst_11 = arith.constant 3.200000e+01 : f32
    %16 = vector.broadcast %cst_11 : f32 to vector<8x1xf32>
    %17 = arith.divf %15, %16 : vector<8x1xf32>
    %cst_12 = arith.constant 9.99999974E-6 : f32
    %18 = vector.broadcast %cst_12 : f32 to vector<8x1xf32>
    %19 = arith.addf %17, %18 : vector<8x1xf32>
    %20 = math.rsqrt %19 : vector<8x1xf32>
    %21 = vector.broadcast %20 : vector<8x1xf32> to vector<8x32xf32>
    %22 = arith.mulf %12, %21 : vector<8x32xf32>
    %23 = vector.broadcast %5 : vector<1x32xf32> to vector<8x32xf32>
    %24 = arith.mulf %22, %23 : vector<8x32xf32>
    %25 = vector.broadcast %6 : vector<1x32xf32> to vector<8x32xf32>
    %26 = arith.addf %24, %25 : vector<8x32xf32>
    %c0_13 = arith.constant 0 : index
    %c0_14 = arith.constant 0 : index
    %27 = vector.load %arg13[%c0_13, %c0_14] : memref<32x32xf32, #tpu.memory_space<vmem>>, vector<32x32xf32>
    %cst_15 = arith.constant dense<0.000000e+00> : vector<8x32xf32>
    %28 = tpu.matmul %26, %27, %cst_15 {dimension_numbers = #tpu.dot_dimension_numbers<[1], [0], [0], [1], [0, 0, 1, 1], [], []>} : vector<8x32xf32>, vector<32x32xf32>, vector<8x32xf32> -> vector<8x32xf32>
    %c0_16 = arith.constant 0 : index
    %c0_17 = arith.constant 0 : index
    %29 = vector.load %arg14[%c0_16, %c0_17] : memref<1x32xf32, #tpu.memory_space<vmem>>, vector<1x32xf32>
    %30 = vector.broadcast %29 : vector<1x32xf32> to vector<8x32xf32>
    %31 = arith.addf %28, %30 : vector<8x32xf32>
    %cst_18 = arith.constant 0.000000e+00 : f32
    %32 = vector.broadcast %cst_18 : f32 to vector<8x32xf32>
    %33 = arith.maximumf %31, %32 : vector<8x32xf32>
    %c0_19 = arith.constant 0 : index
    %c0_20 = arith.constant 0 : index
    %34 = vector.load %arg15[%c0_19, %c0_20] : memref<32x32xf32, #tpu.memory_space<vmem>>, vector<32x32xf32>
    %cst_21 = arith.constant dense<0.000000e+00> : vector<8x32xf32>
    %35 = tpu.matmul %33, %34, %cst_21 {dimension_numbers = #tpu.dot_dimension_numbers<[1], [0], [0], [1], [0, 0, 1, 1], [], []>} : vector<8x32xf32>, vector<32x32xf32>, vector<8x32xf32> -> vector<8x32xf32>
    %c0_22 = arith.constant 0 : index
    %c0_23 = arith.constant 0 : index
    %36 = vector.load %arg16[%c0_22, %c0_23] : memref<1x32xf32, #tpu.memory_space<vmem>>, vector<1x32xf32>
    %37 = vector.broadcast %36 : vector<1x32xf32> to vector<8x32xf32>
    %38 = arith.addf %35, %37 : vector<8x32xf32>
    %cst_24 = arith.constant 0.000000e+00 : f32
    %39 = vector.broadcast %cst_24 : f32 to vector<8x32xf32>
    %40 = arith.maximumf %38, %39 : vector<8x32xf32>
    %c0_25 = arith.constant 0 : index
    %c0_26 = arith.constant 0 : index
    %41 = vector.load %arg17[%c0_25, %c0_26] : memref<32x8xf32, #tpu.memory_space<vmem>>, vector<32x8xf32>
    %cst_27 = arith.constant dense<0.000000e+00> : vector<8x8xf32>
    %42 = tpu.matmul %40, %41, %cst_27 {dimension_numbers = #tpu.dot_dimension_numbers<[1], [0], [0], [1], [0, 0, 1, 1], [], []>} : vector<8x32xf32>, vector<32x8xf32>, vector<8x8xf32> -> vector<8x8xf32>
    %c0_28 = arith.constant 0 : index
    %c0_29 = arith.constant 0 : index
    %43 = vector.load %arg18[%c0_28, %c0_29] : memref<1x8xf32, #tpu.memory_space<vmem>>, vector<1x8xf32>
    %44 = vector.broadcast %43 : vector<1x8xf32> to vector<8x8xf32>
    %45 = arith.addf %42, %44 : vector<8x8xf32>
    %c0_30 = arith.constant 0 : index
    %c0_31 = arith.constant 0 : index
    %c0_32 = arith.constant 0 : index
    %46 = vector.load %arg22[%c0_30, %c0_31, %c0_32] : memref<1x8x8xf32, #tpu.memory_space<vmem>>, vector<1x8x8xf32>
    %47 = vector.shape_cast %46 : vector<1x8x8xf32> to vector<8x8xf32>
    %48 = vector.shape_cast %45 : vector<8x8xf32> to vector<1x8x8xf32>
    tpu.vector_store %arg22[%c0_30, %c0_31, %c0_32], %48 {strides = array<i32>} : memref<1x8x8xf32, #tpu.memory_space<vmem>>, vector<1x8x8xf32>,
    %c0_33 = arith.constant 0 : index
    %c0_34 = arith.constant 0 : index
    %49 = vector.load %arg19[%c0_33, %c0_34] : memref<32x2xf32, #tpu.memory_space<vmem>>, vector<32x2xf32>
    %cst_35 = arith.constant dense<0.000000e+00> : vector<8x2xf32>
    %50 = tpu.matmul %26, %49, %cst_35 {dimension_numbers = #tpu.dot_dimension_numbers<[1], [0], [0], [1], [0, 0, 1, 1], [], []>} : vector<8x32xf32>, vector<32x2xf32>, vector<8x2xf32> -> vector<8x2xf32>
    %c0_36 = arith.constant 0 : index
    %c0_37 = arith.constant 0 : index
    %51 = vector.load %arg20[%c0_36, %c0_37] : memref<1x2xf32, #tpu.memory_space<vmem>>, vector<1x2xf32>
    %52 = vector.broadcast %51 : vector<1x2xf32> to vector<8x2xf32>
    %53 = arith.addf %50, %52 : vector<8x2xf32>
    %c0_38 = arith.constant 0 : index
    %c0_39 = arith.constant 0 : index
    %c0_40 = arith.constant 0 : index
    %54 = vector.load %arg23[%c0_38, %c0_39, %c0_40] : memref<1x8x2xf32, #tpu.memory_space<vmem>>, vector<1x8x2xf32>
    %55 = vector.shape_cast %54 : vector<1x8x2xf32> to vector<8x2xf32>
    %56 = vector.shape_cast %53 : vector<8x2xf32> to vector<1x8x2xf32>
    tpu.vector_store %arg23[%c0_38, %c0_39, %c0_40], %56 {strides = array<i32>} : memref<1x8x2xf32, #tpu.memory_space<vmem>>, vector<1x8x2xf32>,
    %c0_41 = arith.constant 0 : index
    %c0_42 = arith.constant 0 : index
    %57 = vector.load %arg3[%c0_41, %c0_42] : memref<32x64xf32, #tpu.memory_space<vmem>>, vector<32x64xf32>
    %cst_43 = arith.constant dense<0.000000e+00> : vector<8x64xf32>
    %58 = tpu.matmul %4, %57, %cst_43 {dimension_numbers = #tpu.dot_dimension_numbers<[1], [0], [0], [1], [0, 0, 1, 1], [], []>} : vector<8x32xf32>, vector<32x64xf32>, vector<8x64xf32> -> vector<8x64xf32>
    %c0_44 = arith.constant 0 : index
    %c0_45 = arith.constant 0 : index
    %59 = vector.load %arg4[%c0_44, %c0_45] : memref<1x64xf32, #tpu.memory_space<vmem>>, vector<1x64xf32>
    %60 = vector.broadcast %59 : vector<1x64xf32> to vector<8x64xf32>
    %61 = arith.addf %58, %60 : vector<8x64xf32>
    %62 = vector.extract_strided_slice %61 {offsets = [0, 0], sizes = [8, 32], strides = [1, 1]} : vector<8x64xf32> to vector<8x32xf32>
    %63 = vector.extract_strided_slice %61 {offsets = [0, 32], sizes = [8, 32], strides = [1, 1]} : vector<8x64xf32> to vector<8x32xf32>
    %c0_46 = arith.constant 0 : index
    %c0_47 = arith.constant 0 : index
    %64 = vector.load %arg5[%c0_46, %c0_47] : memref<32x32xf32, #tpu.memory_space<vmem>>, vector<32x32xf32>
    %cst_48 = arith.constant dense<0.000000e+00> : vector<8x32xf32>
    %65 = tpu.matmul %1, %64, %cst_48 {dimension_numbers = #tpu.dot_dimension_numbers<[1], [0], [0], [1], [0, 0, 1, 1], [], []>} : vector<8x32xf32>, vector<32x32xf32>, vector<8x32xf32> -> vector<8x32xf32>
    %c0_49 = arith.constant 0 : index
    %c0_50 = arith.constant 0 : index
    %66 = vector.load %arg6[%c0_49, %c0_50] : memref<1x32xf32, #tpu.memory_space<vmem>>, vector<1x32xf32>
    %67 = vector.broadcast %66 : vector<1x32xf32> to vector<8x32xf32>
    %68 = arith.addf %65, %67 : vector<8x32xf32>
    %c0_51 = arith.constant 0 : index
    %c0_52 = arith.constant 0 : index
    %69 = vector.load %arg7[%c0_51, %c0_52] : memref<32x32xf32, #tpu.memory_space<vmem>>, vector<32x32xf32>
    %70 = vector.extract_strided_slice %62 {offsets = [0, 0], sizes = [8, 8], strides = [1, 1]} : vector<8x32xf32> to vector<8x8xf32>
    %cst_53 = arith.constant 0.353553385 : f32
    %71 = vector.broadcast %cst_53 : f32 to vector<8x8xf32>
    %72 = arith.mulf %70, %71 : vector<8x8xf32>
    %73 = vector.extract_strided_slice %63 {offsets = [0, 0], sizes = [8, 8], strides = [1, 1]} : vector<8x32xf32> to vector<8x8xf32>
    %74 = vector.extract_strided_slice %68 {offsets = [0, 0], sizes = [8, 8], strides = [1, 1]} : vector<8x32xf32> to vector<8x8xf32>
    %cst_54 = arith.constant dense<0.000000e+00> : vector<8x8xf32>
    %75 = tpu.matmul %72, %73, %cst_54 {dimension_numbers = #tpu.dot_dimension_numbers<[1], [1], [0], [0], [0, 0, 1, 0], [], []>} : vector<8x8xf32>, vector<8x8xf32>, vector<8x8xf32> -> vector<8x8xf32>
    %cst_55 = arith.constant dense<0xFF800000> : vector<8xf32>
    %76 = vector.multi_reduction <maximumf>, %75, %cst_55 [1] : vector<8x8xf32> to vector<8xf32>
    %77 = vector.shape_cast %76 : vector<8xf32> to vector<8x1xf32>
    %78 = vector.broadcast %77 : vector<8x1xf32> to vector<8x8xf32>
    %79 = arith.subf %75, %78 : vector<8x8xf32>
    %80 = math.exp %79 : vector<8x8xf32>
    %cst_56 = arith.constant dense<0.000000e+00> : vector<8xf32>
    %81 = vector.multi_reduction <add>, %80, %cst_56 [1] : vector<8x8xf32> to vector<8xf32>
    %82 = vector.shape_cast %81 : vector<8xf32> to vector<8x1xf32>
    %83 = tpu.reciprocal %82 {approx = true} : vector<8x1xf32> -> vector<8x1xf32>
    %84 = vector.broadcast %83 : vector<8x1xf32> to vector<8x8xf32>
    %85 = arith.mulf %80, %84 : vector<8x8xf32>
    %cst_57 = arith.constant dense<0.000000e+00> : vector<8x8xf32>
    %86 = tpu.matmul %85, %74, %cst_57 {dimension_numbers = #tpu.dot_dimension_numbers<[1], [0], [0], [1], [0, 0, 1, 1], [], []>} : vector<8x8xf32>, vector<8x8xf32>, vector<8x8xf32> -> vector<8x8xf32>
    %87 = vector.extract_strided_slice %69 {offsets = [0, 0], sizes = [8, 32], strides = [1, 1]} : vector<32x32xf32> to vector<8x32xf32>
    %cst_58 = arith.constant dense<0.000000e+00> : vector<8x32xf32>
    %88 = tpu.matmul %86, %87, %cst_58 {dimension_numbers = #tpu.dot_dimension_numbers<[1], [0], [0], [1], [0, 0, 1, 1], [], []>} : vector<8x8xf32>, vector<8x32xf32>, vector<8x32xf32> -> vector<8x32xf32>
    %89 = vector.extract_strided_slice %62 {offsets = [0, 8], sizes = [8, 8], strides = [1, 1]} : vector<8x32xf32> to vector<8x8xf32>
    %cst_59 = arith.constant 0.353553385 : f32
    %90 = vector.broadcast %cst_59 : f32 to vector<8x8xf32>
    %91 = arith.mulf %89, %90 : vector<8x8xf32>
    %92 = vector.extract_strided_slice %63 {offsets = [0, 8], sizes = [8, 8], strides = [1, 1]} : vector<8x32xf32> to vector<8x8xf32>
    %93 = vector.extract_strided_slice %68 {offsets = [0, 8], sizes = [8, 8], strides = [1, 1]} : vector<8x32xf32> to vector<8x8xf32>
    %cst_60 = arith.constant dense<0.000000e+00> : vector<8x8xf32>
    %94 = tpu.matmul %91, %92, %cst_60 {dimension_numbers = #tpu.dot_dimension_numbers<[1], [1], [0], [0], [0, 0, 1, 0], [], []>} : vector<8x8xf32>, vector<8x8xf32>, vector<8x8xf32> -> vector<8x8xf32>
    %cst_61 = arith.constant dense<0xFF800000> : vector<8xf32>
    %95 = vector.multi_reduction <maximumf>, %94, %cst_61 [1] : vector<8x8xf32> to vector<8xf32>
    %96 = vector.shape_cast %95 : vector<8xf32> to vector<8x1xf32>
    %97 = vector.broadcast %96 : vector<8x1xf32> to vector<8x8xf32>
    %98 = arith.subf %94, %97 : vector<8x8xf32>
    %99 = math.exp %98 : vector<8x8xf32>
    %cst_62 = arith.constant dense<0.000000e+00> : vector<8xf32>
    %100 = vector.multi_reduction <add>, %99, %cst_62 [1] : vector<8x8xf32> to vector<8xf32>
    %101 = vector.shape_cast %100 : vector<8xf32> to vector<8x1xf32>
    %102 = tpu.reciprocal %101 {approx = true} : vector<8x1xf32> -> vector<8x1xf32>
    %103 = vector.broadcast %102 : vector<8x1xf32> to vector<8x8xf32>
    %104 = arith.mulf %99, %103 : vector<8x8xf32>
    %cst_63 = arith.constant dense<0.000000e+00> : vector<8x8xf32>
    %105 = tpu.matmul %104, %93, %cst_63 {dimension_numbers = #tpu.dot_dimension_numbers<[1], [0], [0], [1], [0, 0, 1, 1], [], []>} : vector<8x8xf32>, vector<8x8xf32>, vector<8x8xf32> -> vector<8x8xf32>
    %106 = vector.extract_strided_slice %69 {offsets = [8, 0], sizes = [8, 32], strides = [1, 1]} : vector<32x32xf32> to vector<8x32xf32>
    %cst_64 = arith.constant dense<0.000000e+00> : vector<8x32xf32>
    %107 = tpu.matmul %105, %106, %cst_64 {dimension_numbers = #tpu.dot_dimension_numbers<[1], [0], [0], [1], [0, 0, 1, 1], [], []>} : vector<8x8xf32>, vector<8x32xf32>, vector<8x32xf32> -> vector<8x32xf32>
    %108 = arith.addf %88, %107 : vector<8x32xf32>
    %109 = vector.extract_strided_slice %62 {offsets = [0, 16], sizes = [8, 8], strides = [1, 1]} : vector<8x32xf32> to vector<8x8xf32>
    %cst_65 = arith.constant 0.353553385 : f32
    %110 = vector.broadcast %cst_65 : f32 to vector<8x8xf32>
    %111 = arith.mulf %109, %110 : vector<8x8xf32>
    %112 = vector.extract_strided_slice %63 {offsets = [0, 16], sizes = [8, 8], strides = [1, 1]} : vector<8x32xf32> to vector<8x8xf32>
    %113 = vector.extract_strided_slice %68 {offsets = [0, 16], sizes = [8, 8], strides = [1, 1]} : vector<8x32xf32> to vector<8x8xf32>
    %cst_66 = arith.constant dense<0.000000e+00> : vector<8x8xf32>
    %114 = tpu.matmul %111, %112, %cst_66 {dimension_numbers = #tpu.dot_dimension_numbers<[1], [1], [0], [0], [0, 0, 1, 0], [], []>} : vector<8x8xf32>, vector<8x8xf32>, vector<8x8xf32> -> vector<8x8xf32>
    %cst_67 = arith.constant dense<0xFF800000> : vector<8xf32>
    %115 = vector.multi_reduction <maximumf>, %114, %cst_67 [1] : vector<8x8xf32> to vector<8xf32>
    %116 = vector.shape_cast %115 : vector<8xf32> to vector<8x1xf32>
    %117 = vector.broadcast %116 : vector<8x1xf32> to vector<8x8xf32>
    %118 = arith.subf %114, %117 : vector<8x8xf32>
    %119 = math.exp %118 : vector<8x8xf32>
    %cst_68 = arith.constant dense<0.000000e+00> : vector<8xf32>
    %120 = vector.multi_reduction <add>, %119, %cst_68 [1] : vector<8x8xf32> to vector<8xf32>
    %121 = vector.shape_cast %120 : vector<8xf32> to vector<8x1xf32>
    %122 = tpu.reciprocal %121 {approx = true} : vector<8x1xf32> -> vector<8x1xf32>
    %123 = vector.broadcast %122 : vector<8x1xf32> to vector<8x8xf32>
    %124 = arith.mulf %119, %123 : vector<8x8xf32>
    %cst_69 = arith.constant dense<0.000000e+00> : vector<8x8xf32>
    %125 = tpu.matmul %124, %113, %cst_69 {dimension_numbers = #tpu.dot_dimension_numbers<[1], [0], [0], [1], [0, 0, 1, 1], [], []>} : vector<8x8xf32>, vector<8x8xf32>, vector<8x8xf32> -> vector<8x8xf32>
    %126 = vector.extract_strided_slice %69 {offsets = [16, 0], sizes = [8, 32], strides = [1, 1]} : vector<32x32xf32> to vector<8x32xf32>
    %cst_70 = arith.constant dense<0.000000e+00> : vector<8x32xf32>
    %127 = tpu.matmul %125, %126, %cst_70 {dimension_numbers = #tpu.dot_dimension_numbers<[1], [0], [0], [1], [0, 0, 1, 1], [], []>} : vector<8x8xf32>, vector<8x32xf32>, vector<8x32xf32> -> vector<8x32xf32>
    %128 = arith.addf %108, %127 : vector<8x32xf32>
    %129 = vector.extract_strided_slice %62 {offsets = [0, 24], sizes = [8, 8], strides = [1, 1]} : vector<8x32xf32> to vector<8x8xf32>
    %cst_71 = arith.constant 0.353553385 : f32
    %130 = vector.broadcast %cst_71 : f32 to vector<8x8xf32>
    %131 = arith.mulf %129, %130 : vector<8x8xf32>
    %132 = vector.extract_strided_slice %63 {offsets = [0, 24], sizes = [8, 8], strides = [1, 1]} : vector<8x32xf32> to vector<8x8xf32>
    %133 = vector.extract_strided_slice %68 {offsets = [0, 24], sizes = [8, 8], strides = [1, 1]} : vector<8x32xf32> to vector<8x8xf32>
    %cst_72 = arith.constant dense<0.000000e+00> : vector<8x8xf32>
    %134 = tpu.matmul %131, %132, %cst_72 {dimension_numbers = #tpu.dot_dimension_numbers<[1], [1], [0], [0], [0, 0, 1, 0], [], []>} : vector<8x8xf32>, vector<8x8xf32>, vector<8x8xf32> -> vector<8x8xf32>
    %cst_73 = arith.constant dense<0xFF800000> : vector<8xf32>
    %135 = vector.multi_reduction <maximumf>, %134, %cst_73 [1] : vector<8x8xf32> to vector<8xf32>
    %136 = vector.shape_cast %135 : vector<8xf32> to vector<8x1xf32>
    %137 = vector.broadcast %136 : vector<8x1xf32> to vector<8x8xf32>
    %138 = arith.subf %134, %137 : vector<8x8xf32>
    %139 = math.exp %138 : vector<8x8xf32>
    %cst_74 = arith.constant dense<0.000000e+00> : vector<8xf32>
    %140 = vector.multi_reduction <add>, %139, %cst_74 [1] : vector<8x8xf32> to vector<8xf32>
    %141 = vector.shape_cast %140 : vector<8xf32> to vector<8x1xf32>
    %142 = tpu.reciprocal %141 {approx = true} : vector<8x1xf32> -> vector<8x1xf32>
    %143 = vector.broadcast %142 : vector<8x1xf32> to vector<8x8xf32>
    %144 = arith.mulf %139, %143 : vector<8x8xf32>
    %cst_75 = arith.constant dense<0.000000e+00> : vector<8x8xf32>
    %145 = tpu.matmul %144, %133, %cst_75 {dimension_numbers = #tpu.dot_dimension_numbers<[1], [0], [0], [1], [0, 0, 1, 1], [], []>} : vector<8x8xf32>, vector<8x8xf32>, vector<8x8xf32> -> vector<8x8xf32>
    %146 = vector.extract_strided_slice %69 {offsets = [24, 0], sizes = [8, 32], strides = [1, 1]} : vector<32x32xf32> to vector<8x32xf32>
    %cst_76 = arith.constant dense<0.000000e+00> : vector<8x32xf32>
    %147 = tpu.matmul %145, %146, %cst_76 {dimension_numbers = #tpu.dot_dimension_numbers<[1], [0], [0], [1], [0, 0, 1, 1], [], []>} : vector<8x8xf32>, vector<8x32xf32>, vector<8x32xf32> -> vector<8x32xf32>
    %148 = arith.addf %128, %147 : vector<8x32xf32>
    %c0_77 = arith.constant 0 : index
    %c0_78 = arith.constant 0 : index
    %149 = vector.load %arg8[%c0_77, %c0_78] : memref<1x32xf32, #tpu.memory_space<vmem>>, vector<1x32xf32>
    %150 = vector.broadcast %149 : vector<1x32xf32> to vector<8x32xf32>
    %151 = arith.addf %148, %150 : vector<8x32xf32>
    %152 = arith.addf %1, %151 : vector<8x32xf32>
    %c0_79 = arith.constant 0 : index
    %c0_80 = arith.constant 0 : index
    %153 = vector.load %arg9[%c0_79, %c0_80] : memref<1x32xf32, #tpu.memory_space<vmem>>, vector<1x32xf32>
    %c0_81 = arith.constant 0 : index
    %c0_82 = arith.constant 0 : index
    %154 = vector.load %arg10[%c0_81, %c0_82] : memref<1x32xf32, #tpu.memory_space<vmem>>, vector<1x32xf32>
    %cst_83 = arith.constant dense<0.000000e+00> : vector<8xf32>
    %155 = vector.multi_reduction <add>, %152, %cst_83 [1] : vector<8x32xf32> to vector<8xf32>
    %156 = vector.shape_cast %155 : vector<8xf32> to vector<8x1xf32>
    %cst_84 = arith.constant 3.200000e+01 : f32
    %157 = vector.broadcast %cst_84 : f32 to vector<8x1xf32>
    %158 = arith.divf %156, %157 : vector<8x1xf32>
    %159 = vector.broadcast %158 : vector<8x1xf32> to vector<8x32xf32>
    %160 = arith.subf %152, %159 : vector<8x32xf32>
    %161 = arith.mulf %160, %160 : vector<8x32xf32>
    %cst_85 = arith.constant dense<0.000000e+00> : vector<8xf32>
    %162 = vector.multi_reduction <add>, %161, %cst_85 [1] : vector<8x32xf32> to vector<8xf32>
    %163 = vector.shape_cast %162 : vector<8xf32> to vector<8x1xf32>
    %cst_86 = arith.constant 3.200000e+01 : f32
    %164 = vector.broadcast %cst_86 : f32 to vector<8x1xf32>
    %165 = arith.divf %163, %164 : vector<8x1xf32>
    %cst_87 = arith.constant 9.99999974E-6 : f32
    %166 = vector.broadcast %cst_87 : f32 to vector<8x1xf32>
    %167 = arith.addf %165, %166 : vector<8x1xf32>
    %168 = math.rsqrt %167 : vector<8x1xf32>
    %169 = vector.broadcast %168 : vector<8x1xf32> to vector<8x32xf32>
    %170 = arith.mulf %160, %169 : vector<8x32xf32>
    %171 = vector.broadcast %153 : vector<1x32xf32> to vector<8x32xf32>
    %172 = arith.mulf %170, %171 : vector<8x32xf32>
    %173 = vector.broadcast %154 : vector<1x32xf32> to vector<8x32xf32>
    %174 = arith.addf %172, %173 : vector<8x32xf32>
    %c0_88 = arith.constant 0 : index
    %c0_89 = arith.constant 0 : index
    %c0_90 = arith.constant 0 : index
    %175 = vector.load %arg21[%c0_88, %c0_89, %c0_90] : memref<1x8x32xf32, #tpu.memory_space<vmem>>, vector<1x8x32xf32>
    %176 = vector.shape_cast %175 : vector<1x8x32xf32> to vector<8x32xf32>
    %177 = vector.shape_cast %174 : vector<8x32xf32> to vector<1x8x32xf32>
    tpu.vector_store %arg21[%c0_88, %c0_89, %c0_90], %177 {strides = array<i32>} : memref<1x8x32xf32, #tpu.memory_space<vmem>>, vector<1x8x32xf32>,
    return
  }
  func.func @transform_0(%arg0: i32) -> (i32, i32, i32) {
    %c0_i32 = arith.constant 0 : i32
    %c0_i32_0 = arith.constant 0 : i32
    %c0_i32_1 = arith.constant 0 : i32
    return %arg0, %c0_i32, %c0_i32_0 : i32, i32, i32
  }
  func.func @transform_1(%arg0: i32) -> (i32, i32, i32) {
    %c0_i32 = arith.constant 0 : i32
    %c0_i32_0 = arith.constant 0 : i32
    %c0_i32_1 = arith.constant 0 : i32
    return %arg0, %c0_i32, %c0_i32_0 : i32, i32, i32
  }
  func.func @transform_2(%arg0: i32) -> (i32, i32) {
    %c0_i32 = arith.constant 0 : i32
    %c0_i32_0 = arith.constant 0 : i32
    %c0_i32_1 = arith.constant 0 : i32
    return %c0_i32, %c0_i32_0 : i32, i32
  }
  func.func @transform_3(%arg0: i32) -> (i32, i32) {
    %c0_i32 = arith.constant 0 : i32
    %c0_i32_0 = arith.constant 0 : i32
    %c0_i32_1 = arith.constant 0 : i32
    return %c0_i32, %c0_i32_0 : i32, i32
  }
  func.func @transform_4(%arg0: i32) -> (i32, i32) {
    %c0_i32 = arith.constant 0 : i32
    %c0_i32_0 = arith.constant 0 : i32
    %c0_i32_1 = arith.constant 0 : i32
    return %c0_i32, %c0_i32_0 : i32, i32
  }
  func.func @transform_5(%arg0: i32) -> (i32, i32) {
    %c0_i32 = arith.constant 0 : i32
    %c0_i32_0 = arith.constant 0 : i32
    %c0_i32_1 = arith.constant 0 : i32
    return %c0_i32, %c0_i32_0 : i32, i32
  }
  func.func @transform_6(%arg0: i32) -> (i32, i32) {
    %c0_i32 = arith.constant 0 : i32
    %c0_i32_0 = arith.constant 0 : i32
    %c0_i32_1 = arith.constant 0 : i32
    return %c0_i32, %c0_i32_0 : i32, i32
  }
  func.func @transform_7(%arg0: i32) -> (i32, i32) {
    %c0_i32 = arith.constant 0 : i32
    %c0_i32_0 = arith.constant 0 : i32
    %c0_i32_1 = arith.constant 0 : i32
    return %c0_i32, %c0_i32_0 : i32, i32
  }
  func.func @transform_8(%arg0: i32) -> (i32, i32) {
    %c0_i32 = arith.constant 0 : i32
    %c0_i32_0 = arith.constant 0 : i32
    %c0_i32_1 = arith.constant 0 : i32
    return %c0_i32, %c0_i32_0 : i32, i32
  }
  func.func @transform_9(%arg0: i32) -> (i32, i32) {
    %c0_i32 = arith.constant 0 : i32
    %c0_i32_0 = arith.constant 0 : i32
    %c0_i32_1 = arith.constant 0 : i32
    return %c0_i32, %c0_i32_0 : i32, i32
  }
  func.func @transform_10(%arg0: i32) -> (i32, i32) {
    %c0_i32 = arith.constant 0 : i32
    %c0_i32_0 = arith.constant 0 : i32
    %c0_i32_1 = arith.constant 0 : i32
    return %c0_i32, %c0_i32_0 : i32, i32
  }
  func.func @transform_11(%arg0: i32) -> (i32, i32) {
    %c0_i32 = arith.constant 0 : i32
    %c0_i32_0 = arith.constant 0 : i32
    %c0_i32_1 = arith.constant 0 : i32
    return %c0_i32, %c0_i32_0 : i32, i32
  }
  func.func @transform_12(%arg0: i32) -> (i32, i32) {
    %c0_i32 = arith.constant 0 : i32
    %c0_i32_0 = arith.constant 0 : i32
    %c0_i32_1 = arith.constant 0 : i32
    return %c0_i32, %c0_i32_0 : i32, i32
  }
  func.func @transform_13(%arg0: i32) -> (i32, i32) {
    %c0_i32 = arith.constant 0 : i32
    %c0_i32_0 = arith.constant 0 : i32
    %c0_i32_1 = arith.constant 0 : i32
    return %c0_i32, %c0_i32_0 : i32, i32
  }
  func.func @transform_14(%arg0: i32) -> (i32, i32) {
    %c0_i32 = arith.constant 0 : i32
    %c0_i32_0 = arith.constant 0 : i32
    %c0_i32_1 = arith.constant 0 : i32
    return %c0_i32, %c0_i32_0 : i32, i32
  }
  func.func @transform_15(%arg0: i32) -> (i32, i32) {
    %c0_i32 = arith.constant 0 : i32
    %c0_i32_0 = arith.constant 0 : i32
    %c0_i32_1 = arith.constant 0 : i32
    return %c0_i32, %c0_i32_0 : i32, i32
  }
  func.func @transform_16(%arg0: i32) -> (i32, i32) {
    %c0_i32 = arith.constant 0 : i32
    %c0_i32_0 = arith.constant 0 : i32
    %c0_i32_1 = arith.constant 0 : i32
    return %c0_i32, %c0_i32_0 : i32, i32
  }
  func.func @transform_17(%arg0: i32) -> (i32, i32) {
    %c0_i32 = arith.constant 0 : i32
    %c0_i32_0 = arith.constant 0 : i32
    %c0_i32_1 = arith.constant 0 : i32
    return %c0_i32, %c0_i32_0 : i32, i32
  }
  func.func @transform_18(%arg0: i32) -> (i32, i32) {
    %c0_i32 = arith.constant 0 : i32
    %c0_i32_0 = arith.constant 0 : i32
    %c0_i32_1 = arith.constant 0 : i32
    return %c0_i32, %c0_i32_0 : i32, i32
  }
  func.func @transform_19(%arg0: i32) -> (i32, i32) {
    %c0_i32 = arith.constant 0 : i32
    %c0_i32_0 = arith.constant 0 : i32
    %c0_i32_1 = arith.constant 0 : i32
    return %c0_i32, %c0_i32_0 : i32, i32
  }
  func.func @transform_20(%arg0: i32) -> (i32, i32, i32) {
    %c0_i32 = arith.constant 0 : i32
    %c0_i32_0 = arith.constant 0 : i32
    %c0_i32_1 = arith.constant 0 : i32
    return %arg0, %c0_i32, %c0_i32_0 : i32, i32, i32
  }
  func.func @transform_21(%arg0: i32) -> (i32, i32, i32) {
    %c0_i32 = arith.constant 0 : i32
    %c0_i32_0 = arith.constant 0 : i32
    %c0_i32_1 = arith.constant 0 : i32
    return %arg0, %c0_i32, %c0_i32_0 : i32, i32, i32
  }
  func.func @transform_22(%arg0: i32) -> (i32, i32, i32) {
    %c0_i32 = arith.constant 0 : i32
    %c0_i32_0 = arith.constant 0 : i32
    %c0_i32_1 = arith.constant 0 : i32
    return %arg0, %c0_i32, %c0_i32_0 : i32, i32, i32
  }
}

module attributes {stable_mosaic.version = 11 : i64} {
  func.func @_cross_attn_ffn_kernel(%arg0: i32, %arg1: memref<1x8x32xf32, #tpu.memory_space<vmem>>, %arg2: memref<1x8x32xf32, #tpu.memory_space<vmem>>, %arg3: memref<1x16x32xf32, #tpu.memory_space<vmem>>, %arg4: memref<1x16x32xf32, #tpu.memory_space<vmem>>, %arg5: memref<1x8x8xf32, #tpu.memory_space<vmem>>, %arg6: memref<2x16xf32, #tpu.memory_space<vmem>>, %arg7: memref<1x16xf32, #tpu.memory_space<vmem>>, %arg8: memref<32x32xf32, #tpu.memory_space<vmem>>, %arg9: memref<1x32xf32, #tpu.memory_space<vmem>>, %arg10: memref<32x32xf32, #tpu.memory_space<vmem>>, %arg11: memref<1x32xf32, #tpu.memory_space<vmem>>, %arg12: memref<32x32xf32, #tpu.memory_space<vmem>>, %arg13: memref<1x32xf32, #tpu.memory_space<vmem>>, %arg14: memref<32x32xf32, #tpu.memory_space<vmem>>, %arg15: memref<1x32xf32, #tpu.memory_space<vmem>>, %arg16: memref<1x32xf32, #tpu.memory_space<vmem>>, %arg17: memref<1x32xf32, #tpu.memory_space<vmem>>, %arg18: memref<1x32xf32, #tpu.memory_space<vmem>>, %arg19: memref<1x32xf32, #tpu.memory_space<vmem>>, %arg20: memref<32x64xf32, #tpu.memory_space<vmem>>, %arg21: memref<1x64xf32, #tpu.memory_space<vmem>>, %arg22: memref<64x32xf32, #tpu.memory_space<vmem>>, %arg23: memref<1x32xf32, #tpu.memory_space<vmem>>, %arg24: memref<1x8x32xf32, #tpu.memory_space<vmem>>) attributes {dimension_semantics = [#tpu.dimension_semantics<parallel>], iteration_bounds = array<i64: 2>, scalar_prefetch = 0 : i64, scratch_operands = 0 : i64, tpu.core_type = #tpu.core_type<tc>, window_params = [{transform_indices = @transform_0, window_bounds = array<i64: 1, 8, 32>}, {transform_indices = @transform_1, window_bounds = array<i64: 1, 8, 32>}, {transform_indices = @transform_2, window_bounds = array<i64: 1, 16, 32>}, {transform_indices = @transform_3, window_bounds = array<i64: 1, 16, 32>}, {transform_indices = @transform_4, window_bounds = array<i64: 1, 8, 8>}, {pipeline_mode = #tpu.pipeline_mode<synchronous>, transform_indices = @transform_5, window_bounds = array<i64: 2, 16>}, {pipeline_mode = #tpu.pipeline_mode<synchronous>, transform_indices = @transform_6, window_bounds = array<i64: 1, 16>}, {pipeline_mode = #tpu.pipeline_mode<synchronous>, transform_indices = @transform_7, window_bounds = array<i64: 32, 32>}, {pipeline_mode = #tpu.pipeline_mode<synchronous>, transform_indices = @transform_8, window_bounds = array<i64: 1, 32>}, {pipeline_mode = #tpu.pipeline_mode<synchronous>, transform_indices = @transform_9, window_bounds = array<i64: 32, 32>}, {pipeline_mode = #tpu.pipeline_mode<synchronous>, transform_indices = @transform_10, window_bounds = array<i64: 1, 32>}, {pipeline_mode = #tpu.pipeline_mode<synchronous>, transform_indices = @transform_11, window_bounds = array<i64: 32, 32>}, {pipeline_mode = #tpu.pipeline_mode<synchronous>, transform_indices = @transform_12, window_bounds = array<i64: 1, 32>}, {pipeline_mode = #tpu.pipeline_mode<synchronous>, transform_indices = @transform_13, window_bounds = array<i64: 32, 32>}, {pipeline_mode = #tpu.pipeline_mode<synchronous>, transform_indices = @transform_14, window_bounds = array<i64: 1, 32>}, {pipeline_mode = #tpu.pipeline_mode<synchronous>, transform_indices = @transform_15, window_bounds = array<i64: 1, 32>}, {pipeline_mode = #tpu.pipeline_mode<synchronous>, transform_indices = @transform_16, window_bounds = array<i64: 1, 32>}, {pipeline_mode = #tpu.pipeline_mode<synchronous>, transform_indices = @transform_17, window_bounds = array<i64: 1, 32>}, {pipeline_mode = #tpu.pipeline_mode<synchronous>, transform_indices = @transform_18, window_bounds = array<i64: 1, 32>}, {pipeline_mode = #tpu.pipeline_mode<synchronous>, transform_indices = @transform_19, window_bounds = array<i64: 32, 64>}, {pipeline_mode = #tpu.pipeline_mode<synchronous>, transform_indices = @transform_20, window_bounds = array<i64: 1, 64>}, {pipeline_mode = #tpu.pipeline_mode<synchronous>, transform_indices = @transform_21, window_bounds = array<i64: 64, 32>}, {pipeline_mode = #tpu.pipeline_mode<synchronous>, transform_indices = @transform_22, window_bounds = array<i64: 1, 32>}, {transform_indices = @transform_23, window_bounds = array<i64: 1, 8, 32>}]} {
    %c0 = arith.constant 0 : index
    %c0_0 = arith.constant 0 : index
    %c0_1 = arith.constant 0 : index
    %0 = vector.load %arg1[%c0, %c0_0, %c0_1] : memref<1x8x32xf32, #tpu.memory_space<vmem>>, vector<1x8x32xf32>
    %1 = vector.shape_cast %0 : vector<1x8x32xf32> to vector<8x32xf32>
    %c0_2 = arith.constant 0 : index
    %c0_3 = arith.constant 0 : index
    %c0_4 = arith.constant 0 : index
    %2 = vector.load %arg2[%c0_2, %c0_3, %c0_4] : memref<1x8x32xf32, #tpu.memory_space<vmem>>, vector<1x8x32xf32>
    %3 = vector.shape_cast %2 : vector<1x8x32xf32> to vector<8x32xf32>
    %c0_5 = arith.constant 0 : index
    %c0_6 = arith.constant 0 : index
    %c0_7 = arith.constant 0 : index
    %4 = vector.load %arg3[%c0_5, %c0_6, %c0_7] : memref<1x16x32xf32, #tpu.memory_space<vmem>>, vector<1x16x32xf32>
    %5 = vector.shape_cast %4 : vector<1x16x32xf32> to vector<16x32xf32>
    %c0_8 = arith.constant 0 : index
    %c0_9 = arith.constant 0 : index
    %c0_10 = arith.constant 0 : index
    %6 = vector.load %arg4[%c0_8, %c0_9, %c0_10] : memref<1x16x32xf32, #tpu.memory_space<vmem>>, vector<1x16x32xf32>
    %7 = vector.shape_cast %6 : vector<1x16x32xf32> to vector<16x32xf32>
    %c0_11 = arith.constant 0 : index
    %c0_12 = arith.constant 0 : index
    %c0_13 = arith.constant 0 : index
    %8 = vector.load %arg5[%c0_11, %c0_12, %c0_13] : memref<1x8x8xf32, #tpu.memory_space<vmem>>, vector<1x8x8xf32>
    %9 = vector.shape_cast %8 : vector<1x8x8xf32> to vector<8x8xf32>
    %c0_14 = arith.constant 0 : index
    %c0_15 = arith.constant 0 : index
    %10 = vector.load %arg6[%c0_14, %c0_15] : memref<2x16xf32, #tpu.memory_space<vmem>>, vector<2x16xf32>
    %c0_16 = arith.constant 0 : index
    %c0_17 = arith.constant 0 : index
    %11 = vector.load %arg7[%c0_16, %c0_17] : memref<1x16xf32, #tpu.memory_space<vmem>>, vector<1x16xf32>
    %12 = arith.addf %1, %3 : vector<8x32xf32>
    %c0_18 = arith.constant 0 : index
    %c0_19 = arith.constant 0 : index
    %13 = vector.load %arg8[%c0_18, %c0_19] : memref<32x32xf32, #tpu.memory_space<vmem>>, vector<32x32xf32>
    %cst = arith.constant dense<0.000000e+00> : vector<8x32xf32>
    %14 = tpu.matmul %12, %13, %cst {dimension_numbers = #tpu.dot_dimension_numbers<[1], [0], [0], [1], [0, 0, 1, 1], [], []>} : vector<8x32xf32>, vector<32x32xf32>, vector<8x32xf32> -> vector<8x32xf32>
    %c0_20 = arith.constant 0 : index
    %c0_21 = arith.constant 0 : index
    %15 = vector.load %arg9[%c0_20, %c0_21] : memref<1x32xf32, #tpu.memory_space<vmem>>, vector<1x32xf32>
    %16 = vector.broadcast %15 : vector<1x32xf32> to vector<8x32xf32>
    %17 = arith.addf %14, %16 : vector<8x32xf32>
    %18 = arith.addf %5, %7 : vector<16x32xf32>
    %c0_22 = arith.constant 0 : index
    %c0_23 = arith.constant 0 : index
    %19 = vector.load %arg10[%c0_22, %c0_23] : memref<32x32xf32, #tpu.memory_space<vmem>>, vector<32x32xf32>
    %cst_24 = arith.constant dense<0.000000e+00> : vector<16x32xf32>
    %20 = tpu.matmul %18, %19, %cst_24 {dimension_numbers = #tpu.dot_dimension_numbers<[1], [0], [0], [1], [0, 0, 1, 1], [], []>} : vector<16x32xf32>, vector<32x32xf32>, vector<16x32xf32> -> vector<16x32xf32>
    %c0_25 = arith.constant 0 : index
    %c0_26 = arith.constant 0 : index
    %21 = vector.load %arg11[%c0_25, %c0_26] : memref<1x32xf32, #tpu.memory_space<vmem>>, vector<1x32xf32>
    %22 = vector.broadcast %21 : vector<1x32xf32> to vector<16x32xf32>
    %23 = arith.addf %20, %22 : vector<16x32xf32>
    %c0_27 = arith.constant 0 : index
    %c0_28 = arith.constant 0 : index
    %24 = vector.load %arg12[%c0_27, %c0_28] : memref<32x32xf32, #tpu.memory_space<vmem>>, vector<32x32xf32>
    %cst_29 = arith.constant dense<0.000000e+00> : vector<16x32xf32>
    %25 = tpu.matmul %5, %24, %cst_29 {dimension_numbers = #tpu.dot_dimension_numbers<[1], [0], [0], [1], [0, 0, 1, 1], [], []>} : vector<16x32xf32>, vector<32x32xf32>, vector<16x32xf32> -> vector<16x32xf32>
    %c0_30 = arith.constant 0 : index
    %c0_31 = arith.constant 0 : index
    %26 = vector.load %arg13[%c0_30, %c0_31] : memref<1x32xf32, #tpu.memory_space<vmem>>, vector<1x32xf32>
    %27 = vector.broadcast %26 : vector<1x32xf32> to vector<16x32xf32>
    %28 = arith.addf %25, %27 : vector<16x32xf32>
    %c0_32 = arith.constant 0 : index
    %c0_33 = arith.constant 0 : index
    %29 = vector.load %arg14[%c0_32, %c0_33] : memref<32x32xf32, #tpu.memory_space<vmem>>, vector<32x32xf32>
    %30 = vector.extract_strided_slice %17 {offsets = [0, 0], sizes = [8, 8], strides = [1, 1]} : vector<8x32xf32> to vector<8x8xf32>
    %cst_34 = arith.constant 0.353553385 : f32
    %31 = vector.broadcast %cst_34 : f32 to vector<8x8xf32>
    %32 = arith.mulf %30, %31 : vector<8x8xf32>
    %33 = vector.extract_strided_slice %23 {offsets = [0, 0], sizes = [16, 8], strides = [1, 1]} : vector<16x32xf32> to vector<16x8xf32>
    %34 = vector.extract_strided_slice %28 {offsets = [0, 0], sizes = [16, 8], strides = [1, 1]} : vector<16x32xf32> to vector<16x8xf32>
    %35 = vector.extract_strided_slice %9 {offsets = [0, 0], sizes = [8, 2], strides = [1, 1]} : vector<8x8xf32> to vector<8x2xf32>
    %36 = arith.mulf %35, %35 : vector<8x2xf32>
    %cst_35 = arith.constant dense<0.000000e+00> : vector<8xf32>
    %37 = vector.multi_reduction <add>, %36, %cst_35 [1] : vector<8x2xf32> to vector<8xf32>
    %38 = vector.shape_cast %37 : vector<8xf32> to vector<8x1xf32>
    %cst_36 = arith.constant dense<0.000000e+00> : vector<8x16xf32>
    %39 = tpu.matmul %35, %10, %cst_36 {dimension_numbers = #tpu.dot_dimension_numbers<[1], [0], [0], [1], [0, 0, 1, 1], [], []>} : vector<8x2xf32>, vector<2x16xf32>, vector<8x16xf32> -> vector<8x16xf32>
    %cst_37 = arith.constant 2.000000e+00 : f32
    %40 = vector.broadcast %cst_37 : f32 to vector<8x16xf32>
    %41 = arith.mulf %40, %39 : vector<8x16xf32>
    %42 = vector.broadcast %38 : vector<8x1xf32> to vector<8x16xf32>
    %43 = arith.subf %42, %41 : vector<8x16xf32>
    %44 = vector.broadcast %11 : vector<1x16xf32> to vector<8x16xf32>
    %45 = arith.addf %43, %44 : vector<8x16xf32>
    %cst_38 = arith.constant 0.000000e+00 : f32
    %46 = vector.broadcast %cst_38 : f32 to vector<8x16xf32>
    %47 = arith.subf %46, %45 : vector<8x16xf32>
    %cst_39 = arith.constant 1.250000e-01 : f32
    %48 = vector.broadcast %cst_39 : f32 to vector<8x16xf32>
    %49 = arith.mulf %47, %48 : vector<8x16xf32>
    %cst_40 = arith.constant dense<0.000000e+00> : vector<8x16xf32>
    %50 = tpu.matmul %32, %33, %cst_40 {dimension_numbers = #tpu.dot_dimension_numbers<[1], [1], [0], [0], [0, 0, 1, 0], [], []>} : vector<8x8xf32>, vector<16x8xf32>, vector<8x16xf32> -> vector<8x16xf32>
    %51 = arith.addf %50, %49 : vector<8x16xf32>
    %cst_41 = arith.constant dense<0xFF800000> : vector<8xf32>
    %52 = vector.multi_reduction <maximumf>, %51, %cst_41 [1] : vector<8x16xf32> to vector<8xf32>
    %53 = vector.shape_cast %52 : vector<8xf32> to vector<8x1xf32>
    %54 = vector.broadcast %53 : vector<8x1xf32> to vector<8x16xf32>
    %55 = arith.subf %51, %54 : vector<8x16xf32>
    %56 = math.exp %55 : vector<8x16xf32>
    %cst_42 = arith.constant dense<0.000000e+00> : vector<8xf32>
    %57 = vector.multi_reduction <add>, %56, %cst_42 [1] : vector<8x16xf32> to vector<8xf32>
    %58 = vector.shape_cast %57 : vector<8xf32> to vector<8x1xf32>
    %59 = tpu.reciprocal %58 {approx = true} : vector<8x1xf32> -> vector<8x1xf32>
    %60 = vector.broadcast %59 : vector<8x1xf32> to vector<8x16xf32>
    %61 = arith.mulf %56, %60 : vector<8x16xf32>
    %cst_43 = arith.constant dense<0.000000e+00> : vector<8x8xf32>
    %62 = tpu.matmul %61, %34, %cst_43 {dimension_numbers = #tpu.dot_dimension_numbers<[1], [0], [0], [1], [0, 0, 1, 1], [], []>} : vector<8x16xf32>, vector<16x8xf32>, vector<8x8xf32> -> vector<8x8xf32>
    %63 = vector.extract_strided_slice %29 {offsets = [0, 0], sizes = [8, 32], strides = [1, 1]} : vector<32x32xf32> to vector<8x32xf32>
    %cst_44 = arith.constant dense<0.000000e+00> : vector<8x32xf32>
    %64 = tpu.matmul %62, %63, %cst_44 {dimension_numbers = #tpu.dot_dimension_numbers<[1], [0], [0], [1], [0, 0, 1, 1], [], []>} : vector<8x8xf32>, vector<8x32xf32>, vector<8x32xf32> -> vector<8x32xf32>
    %65 = vector.extract_strided_slice %17 {offsets = [0, 8], sizes = [8, 8], strides = [1, 1]} : vector<8x32xf32> to vector<8x8xf32>
    %cst_45 = arith.constant 0.353553385 : f32
    %66 = vector.broadcast %cst_45 : f32 to vector<8x8xf32>
    %67 = arith.mulf %65, %66 : vector<8x8xf32>
    %68 = vector.extract_strided_slice %23 {offsets = [0, 8], sizes = [16, 8], strides = [1, 1]} : vector<16x32xf32> to vector<16x8xf32>
    %69 = vector.extract_strided_slice %28 {offsets = [0, 8], sizes = [16, 8], strides = [1, 1]} : vector<16x32xf32> to vector<16x8xf32>
    %70 = vector.extract_strided_slice %9 {offsets = [0, 2], sizes = [8, 2], strides = [1, 1]} : vector<8x8xf32> to vector<8x2xf32>
    %71 = arith.mulf %70, %70 : vector<8x2xf32>
    %cst_46 = arith.constant dense<0.000000e+00> : vector<8xf32>
    %72 = vector.multi_reduction <add>, %71, %cst_46 [1] : vector<8x2xf32> to vector<8xf32>
    %73 = vector.shape_cast %72 : vector<8xf32> to vector<8x1xf32>
    %cst_47 = arith.constant dense<0.000000e+00> : vector<8x16xf32>
    %74 = tpu.matmul %70, %10, %cst_47 {dimension_numbers = #tpu.dot_dimension_numbers<[1], [0], [0], [1], [0, 0, 1, 1], [], []>} : vector<8x2xf32>, vector<2x16xf32>, vector<8x16xf32> -> vector<8x16xf32>
    %cst_48 = arith.constant 2.000000e+00 : f32
    %75 = vector.broadcast %cst_48 : f32 to vector<8x16xf32>
    %76 = arith.mulf %75, %74 : vector<8x16xf32>
    %77 = vector.broadcast %73 : vector<8x1xf32> to vector<8x16xf32>
    %78 = arith.subf %77, %76 : vector<8x16xf32>
    %79 = vector.broadcast %11 : vector<1x16xf32> to vector<8x16xf32>
    %80 = arith.addf %78, %79 : vector<8x16xf32>
    %cst_49 = arith.constant 0.000000e+00 : f32
    %81 = vector.broadcast %cst_49 : f32 to vector<8x16xf32>
    %82 = arith.subf %81, %80 : vector<8x16xf32>
    %cst_50 = arith.constant 1.250000e-01 : f32
    %83 = vector.broadcast %cst_50 : f32 to vector<8x16xf32>
    %84 = arith.mulf %82, %83 : vector<8x16xf32>
    %cst_51 = arith.constant dense<0.000000e+00> : vector<8x16xf32>
    %85 = tpu.matmul %67, %68, %cst_51 {dimension_numbers = #tpu.dot_dimension_numbers<[1], [1], [0], [0], [0, 0, 1, 0], [], []>} : vector<8x8xf32>, vector<16x8xf32>, vector<8x16xf32> -> vector<8x16xf32>
    %86 = arith.addf %85, %84 : vector<8x16xf32>
    %cst_52 = arith.constant dense<0xFF800000> : vector<8xf32>
    %87 = vector.multi_reduction <maximumf>, %86, %cst_52 [1] : vector<8x16xf32> to vector<8xf32>
    %88 = vector.shape_cast %87 : vector<8xf32> to vector<8x1xf32>
    %89 = vector.broadcast %88 : vector<8x1xf32> to vector<8x16xf32>
    %90 = arith.subf %86, %89 : vector<8x16xf32>
    %91 = math.exp %90 : vector<8x16xf32>
    %cst_53 = arith.constant dense<0.000000e+00> : vector<8xf32>
    %92 = vector.multi_reduction <add>, %91, %cst_53 [1] : vector<8x16xf32> to vector<8xf32>
    %93 = vector.shape_cast %92 : vector<8xf32> to vector<8x1xf32>
    %94 = tpu.reciprocal %93 {approx = true} : vector<8x1xf32> -> vector<8x1xf32>
    %95 = vector.broadcast %94 : vector<8x1xf32> to vector<8x16xf32>
    %96 = arith.mulf %91, %95 : vector<8x16xf32>
    %cst_54 = arith.constant dense<0.000000e+00> : vector<8x8xf32>
    %97 = tpu.matmul %96, %69, %cst_54 {dimension_numbers = #tpu.dot_dimension_numbers<[1], [0], [0], [1], [0, 0, 1, 1], [], []>} : vector<8x16xf32>, vector<16x8xf32>, vector<8x8xf32> -> vector<8x8xf32>
    %98 = vector.extract_strided_slice %29 {offsets = [8, 0], sizes = [8, 32], strides = [1, 1]} : vector<32x32xf32> to vector<8x32xf32>
    %cst_55 = arith.constant dense<0.000000e+00> : vector<8x32xf32>
    %99 = tpu.matmul %97, %98, %cst_55 {dimension_numbers = #tpu.dot_dimension_numbers<[1], [0], [0], [1], [0, 0, 1, 1], [], []>} : vector<8x8xf32>, vector<8x32xf32>, vector<8x32xf32> -> vector<8x32xf32>
    %100 = arith.addf %64, %99 : vector<8x32xf32>
    %101 = vector.extract_strided_slice %17 {offsets = [0, 16], sizes = [8, 8], strides = [1, 1]} : vector<8x32xf32> to vector<8x8xf32>
    %cst_56 = arith.constant 0.353553385 : f32
    %102 = vector.broadcast %cst_56 : f32 to vector<8x8xf32>
    %103 = arith.mulf %101, %102 : vector<8x8xf32>
    %104 = vector.extract_strided_slice %23 {offsets = [0, 16], sizes = [16, 8], strides = [1, 1]} : vector<16x32xf32> to vector<16x8xf32>
    %105 = vector.extract_strided_slice %28 {offsets = [0, 16], sizes = [16, 8], strides = [1, 1]} : vector<16x32xf32> to vector<16x8xf32>
    %106 = vector.extract_strided_slice %9 {offsets = [0, 4], sizes = [8, 2], strides = [1, 1]} : vector<8x8xf32> to vector<8x2xf32>
    %107 = arith.mulf %106, %106 : vector<8x2xf32>
    %cst_57 = arith.constant dense<0.000000e+00> : vector<8xf32>
    %108 = vector.multi_reduction <add>, %107, %cst_57 [1] : vector<8x2xf32> to vector<8xf32>
    %109 = vector.shape_cast %108 : vector<8xf32> to vector<8x1xf32>
    %cst_58 = arith.constant dense<0.000000e+00> : vector<8x16xf32>
    %110 = tpu.matmul %106, %10, %cst_58 {dimension_numbers = #tpu.dot_dimension_numbers<[1], [0], [0], [1], [0, 0, 1, 1], [], []>} : vector<8x2xf32>, vector<2x16xf32>, vector<8x16xf32> -> vector<8x16xf32>
    %cst_59 = arith.constant 2.000000e+00 : f32
    %111 = vector.broadcast %cst_59 : f32 to vector<8x16xf32>
    %112 = arith.mulf %111, %110 : vector<8x16xf32>
    %113 = vector.broadcast %109 : vector<8x1xf32> to vector<8x16xf32>
    %114 = arith.subf %113, %112 : vector<8x16xf32>
    %115 = vector.broadcast %11 : vector<1x16xf32> to vector<8x16xf32>
    %116 = arith.addf %114, %115 : vector<8x16xf32>
    %cst_60 = arith.constant 0.000000e+00 : f32
    %117 = vector.broadcast %cst_60 : f32 to vector<8x16xf32>
    %118 = arith.subf %117, %116 : vector<8x16xf32>
    %cst_61 = arith.constant 1.250000e-01 : f32
    %119 = vector.broadcast %cst_61 : f32 to vector<8x16xf32>
    %120 = arith.mulf %118, %119 : vector<8x16xf32>
    %cst_62 = arith.constant dense<0.000000e+00> : vector<8x16xf32>
    %121 = tpu.matmul %103, %104, %cst_62 {dimension_numbers = #tpu.dot_dimension_numbers<[1], [1], [0], [0], [0, 0, 1, 0], [], []>} : vector<8x8xf32>, vector<16x8xf32>, vector<8x16xf32> -> vector<8x16xf32>
    %122 = arith.addf %121, %120 : vector<8x16xf32>
    %cst_63 = arith.constant dense<0xFF800000> : vector<8xf32>
    %123 = vector.multi_reduction <maximumf>, %122, %cst_63 [1] : vector<8x16xf32> to vector<8xf32>
    %124 = vector.shape_cast %123 : vector<8xf32> to vector<8x1xf32>
    %125 = vector.broadcast %124 : vector<8x1xf32> to vector<8x16xf32>
    %126 = arith.subf %122, %125 : vector<8x16xf32>
    %127 = math.exp %126 : vector<8x16xf32>
    %cst_64 = arith.constant dense<0.000000e+00> : vector<8xf32>
    %128 = vector.multi_reduction <add>, %127, %cst_64 [1] : vector<8x16xf32> to vector<8xf32>
    %129 = vector.shape_cast %128 : vector<8xf32> to vector<8x1xf32>
    %130 = tpu.reciprocal %129 {approx = true} : vector<8x1xf32> -> vector<8x1xf32>
    %131 = vector.broadcast %130 : vector<8x1xf32> to vector<8x16xf32>
    %132 = arith.mulf %127, %131 : vector<8x16xf32>
    %cst_65 = arith.constant dense<0.000000e+00> : vector<8x8xf32>
    %133 = tpu.matmul %132, %105, %cst_65 {dimension_numbers = #tpu.dot_dimension_numbers<[1], [0], [0], [1], [0, 0, 1, 1], [], []>} : vector<8x16xf32>, vector<16x8xf32>, vector<8x8xf32> -> vector<8x8xf32>
    %134 = vector.extract_strided_slice %29 {offsets = [16, 0], sizes = [8, 32], strides = [1, 1]} : vector<32x32xf32> to vector<8x32xf32>
    %cst_66 = arith.constant dense<0.000000e+00> : vector<8x32xf32>
    %135 = tpu.matmul %133, %134, %cst_66 {dimension_numbers = #tpu.dot_dimension_numbers<[1], [0], [0], [1], [0, 0, 1, 1], [], []>} : vector<8x8xf32>, vector<8x32xf32>, vector<8x32xf32> -> vector<8x32xf32>
    %136 = arith.addf %100, %135 : vector<8x32xf32>
    %137 = vector.extract_strided_slice %17 {offsets = [0, 24], sizes = [8, 8], strides = [1, 1]} : vector<8x32xf32> to vector<8x8xf32>
    %cst_67 = arith.constant 0.353553385 : f32
    %138 = vector.broadcast %cst_67 : f32 to vector<8x8xf32>
    %139 = arith.mulf %137, %138 : vector<8x8xf32>
    %140 = vector.extract_strided_slice %23 {offsets = [0, 24], sizes = [16, 8], strides = [1, 1]} : vector<16x32xf32> to vector<16x8xf32>
    %141 = vector.extract_strided_slice %28 {offsets = [0, 24], sizes = [16, 8], strides = [1, 1]} : vector<16x32xf32> to vector<16x8xf32>
    %142 = vector.extract_strided_slice %9 {offsets = [0, 6], sizes = [8, 2], strides = [1, 1]} : vector<8x8xf32> to vector<8x2xf32>
    %143 = arith.mulf %142, %142 : vector<8x2xf32>
    %cst_68 = arith.constant dense<0.000000e+00> : vector<8xf32>
    %144 = vector.multi_reduction <add>, %143, %cst_68 [1] : vector<8x2xf32> to vector<8xf32>
    %145 = vector.shape_cast %144 : vector<8xf32> to vector<8x1xf32>
    %cst_69 = arith.constant dense<0.000000e+00> : vector<8x16xf32>
    %146 = tpu.matmul %142, %10, %cst_69 {dimension_numbers = #tpu.dot_dimension_numbers<[1], [0], [0], [1], [0, 0, 1, 1], [], []>} : vector<8x2xf32>, vector<2x16xf32>, vector<8x16xf32> -> vector<8x16xf32>
    %cst_70 = arith.constant 2.000000e+00 : f32
    %147 = vector.broadcast %cst_70 : f32 to vector<8x16xf32>
    %148 = arith.mulf %147, %146 : vector<8x16xf32>
    %149 = vector.broadcast %145 : vector<8x1xf32> to vector<8x16xf32>
    %150 = arith.subf %149, %148 : vector<8x16xf32>
    %151 = vector.broadcast %11 : vector<1x16xf32> to vector<8x16xf32>
    %152 = arith.addf %150, %151 : vector<8x16xf32>
    %cst_71 = arith.constant 0.000000e+00 : f32
    %153 = vector.broadcast %cst_71 : f32 to vector<8x16xf32>
    %154 = arith.subf %153, %152 : vector<8x16xf32>
    %cst_72 = arith.constant 1.250000e-01 : f32
    %155 = vector.broadcast %cst_72 : f32 to vector<8x16xf32>
    %156 = arith.mulf %154, %155 : vector<8x16xf32>
    %cst_73 = arith.constant dense<0.000000e+00> : vector<8x16xf32>
    %157 = tpu.matmul %139, %140, %cst_73 {dimension_numbers = #tpu.dot_dimension_numbers<[1], [1], [0], [0], [0, 0, 1, 0], [], []>} : vector<8x8xf32>, vector<16x8xf32>, vector<8x16xf32> -> vector<8x16xf32>
    %158 = arith.addf %157, %156 : vector<8x16xf32>
    %cst_74 = arith.constant dense<0xFF800000> : vector<8xf32>
    %159 = vector.multi_reduction <maximumf>, %158, %cst_74 [1] : vector<8x16xf32> to vector<8xf32>
    %160 = vector.shape_cast %159 : vector<8xf32> to vector<8x1xf32>
    %161 = vector.broadcast %160 : vector<8x1xf32> to vector<8x16xf32>
    %162 = arith.subf %158, %161 : vector<8x16xf32>
    %163 = math.exp %162 : vector<8x16xf32>
    %cst_75 = arith.constant dense<0.000000e+00> : vector<8xf32>
    %164 = vector.multi_reduction <add>, %163, %cst_75 [1] : vector<8x16xf32> to vector<8xf32>
    %165 = vector.shape_cast %164 : vector<8xf32> to vector<8x1xf32>
    %166 = tpu.reciprocal %165 {approx = true} : vector<8x1xf32> -> vector<8x1xf32>
    %167 = vector.broadcast %166 : vector<8x1xf32> to vector<8x16xf32>
    %168 = arith.mulf %163, %167 : vector<8x16xf32>
    %cst_76 = arith.constant dense<0.000000e+00> : vector<8x8xf32>
    %169 = tpu.matmul %168, %141, %cst_76 {dimension_numbers = #tpu.dot_dimension_numbers<[1], [0], [0], [1], [0, 0, 1, 1], [], []>} : vector<8x16xf32>, vector<16x8xf32>, vector<8x8xf32> -> vector<8x8xf32>
    %170 = vector.extract_strided_slice %29 {offsets = [24, 0], sizes = [8, 32], strides = [1, 1]} : vector<32x32xf32> to vector<8x32xf32>
    %cst_77 = arith.constant dense<0.000000e+00> : vector<8x32xf32>
    %171 = tpu.matmul %169, %170, %cst_77 {dimension_numbers = #tpu.dot_dimension_numbers<[1], [0], [0], [1], [0, 0, 1, 1], [], []>} : vector<8x8xf32>, vector<8x32xf32>, vector<8x32xf32> -> vector<8x32xf32>
    %172 = arith.addf %136, %171 : vector<8x32xf32>
    %c0_78 = arith.constant 0 : index
    %c0_79 = arith.constant 0 : index
    %173 = vector.load %arg15[%c0_78, %c0_79] : memref<1x32xf32, #tpu.memory_space<vmem>>, vector<1x32xf32>
    %174 = vector.broadcast %173 : vector<1x32xf32> to vector<8x32xf32>
    %175 = arith.addf %172, %174 : vector<8x32xf32>
    %176 = arith.addf %1, %175 : vector<8x32xf32>
    %c0_80 = arith.constant 0 : index
    %c0_81 = arith.constant 0 : index
    %177 = vector.load %arg16[%c0_80, %c0_81] : memref<1x32xf32, #tpu.memory_space<vmem>>, vector<1x32xf32>
    %c0_82 = arith.constant 0 : index
    %c0_83 = arith.constant 0 : index
    %178 = vector.load %arg17[%c0_82, %c0_83] : memref<1x32xf32, #tpu.memory_space<vmem>>, vector<1x32xf32>
    %cst_84 = arith.constant dense<0.000000e+00> : vector<8xf32>
    %179 = vector.multi_reduction <add>, %176, %cst_84 [1] : vector<8x32xf32> to vector<8xf32>
    %180 = vector.shape_cast %179 : vector<8xf32> to vector<8x1xf32>
    %cst_85 = arith.constant 3.200000e+01 : f32
    %181 = vector.broadcast %cst_85 : f32 to vector<8x1xf32>
    %182 = arith.divf %180, %181 : vector<8x1xf32>
    %183 = vector.broadcast %182 : vector<8x1xf32> to vector<8x32xf32>
    %184 = arith.subf %176, %183 : vector<8x32xf32>
    %185 = arith.mulf %184, %184 : vector<8x32xf32>
    %cst_86 = arith.constant dense<0.000000e+00> : vector<8xf32>
    %186 = vector.multi_reduction <add>, %185, %cst_86 [1] : vector<8x32xf32> to vector<8xf32>
    %187 = vector.shape_cast %186 : vector<8xf32> to vector<8x1xf32>
    %cst_87 = arith.constant 3.200000e+01 : f32
    %188 = vector.broadcast %cst_87 : f32 to vector<8x1xf32>
    %189 = arith.divf %187, %188 : vector<8x1xf32>
    %cst_88 = arith.constant 9.99999974E-6 : f32
    %190 = vector.broadcast %cst_88 : f32 to vector<8x1xf32>
    %191 = arith.addf %189, %190 : vector<8x1xf32>
    %192 = math.rsqrt %191 : vector<8x1xf32>
    %193 = vector.broadcast %192 : vector<8x1xf32> to vector<8x32xf32>
    %194 = arith.mulf %184, %193 : vector<8x32xf32>
    %195 = vector.broadcast %177 : vector<1x32xf32> to vector<8x32xf32>
    %196 = arith.mulf %194, %195 : vector<8x32xf32>
    %197 = vector.broadcast %178 : vector<1x32xf32> to vector<8x32xf32>
    %198 = arith.addf %196, %197 : vector<8x32xf32>
    %c0_89 = arith.constant 0 : index
    %c0_90 = arith.constant 0 : index
    %199 = vector.load %arg20[%c0_89, %c0_90] : memref<32x64xf32, #tpu.memory_space<vmem>>, vector<32x64xf32>
    %cst_91 = arith.constant dense<0.000000e+00> : vector<8x64xf32>
    %200 = tpu.matmul %198, %199, %cst_91 {dimension_numbers = #tpu.dot_dimension_numbers<[1], [0], [0], [1], [0, 0, 1, 1], [], []>} : vector<8x32xf32>, vector<32x64xf32>, vector<8x64xf32> -> vector<8x64xf32>
    %c0_92 = arith.constant 0 : index
    %c0_93 = arith.constant 0 : index
    %201 = vector.load %arg21[%c0_92, %c0_93] : memref<1x64xf32, #tpu.memory_space<vmem>>, vector<1x64xf32>
    %202 = vector.broadcast %201 : vector<1x64xf32> to vector<8x64xf32>
    %203 = arith.addf %200, %202 : vector<8x64xf32>
    %cst_94 = arith.constant 0.000000e+00 : f32
    %204 = vector.broadcast %cst_94 : f32 to vector<8x64xf32>
    %205 = arith.maximumf %203, %204 : vector<8x64xf32>
    %c0_95 = arith.constant 0 : index
    %c0_96 = arith.constant 0 : index
    %206 = vector.load %arg22[%c0_95, %c0_96] : memref<64x32xf32, #tpu.memory_space<vmem>>, vector<64x32xf32>
    %cst_97 = arith.constant dense<0.000000e+00> : vector<8x32xf32>
    %207 = tpu.matmul %205, %206, %cst_97 {dimension_numbers = #tpu.dot_dimension_numbers<[1], [0], [0], [1], [0, 0, 1, 1], [], []>} : vector<8x64xf32>, vector<64x32xf32>, vector<8x32xf32> -> vector<8x32xf32>
    %c0_98 = arith.constant 0 : index
    %c0_99 = arith.constant 0 : index
    %208 = vector.load %arg23[%c0_98, %c0_99] : memref<1x32xf32, #tpu.memory_space<vmem>>, vector<1x32xf32>
    %209 = vector.broadcast %208 : vector<1x32xf32> to vector<8x32xf32>
    %210 = arith.addf %207, %209 : vector<8x32xf32>
    %211 = arith.addf %198, %210 : vector<8x32xf32>
    %c0_100 = arith.constant 0 : index
    %c0_101 = arith.constant 0 : index
    %212 = vector.load %arg18[%c0_100, %c0_101] : memref<1x32xf32, #tpu.memory_space<vmem>>, vector<1x32xf32>
    %c0_102 = arith.constant 0 : index
    %c0_103 = arith.constant 0 : index
    %213 = vector.load %arg19[%c0_102, %c0_103] : memref<1x32xf32, #tpu.memory_space<vmem>>, vector<1x32xf32>
    %cst_104 = arith.constant dense<0.000000e+00> : vector<8xf32>
    %214 = vector.multi_reduction <add>, %211, %cst_104 [1] : vector<8x32xf32> to vector<8xf32>
    %215 = vector.shape_cast %214 : vector<8xf32> to vector<8x1xf32>
    %cst_105 = arith.constant 3.200000e+01 : f32
    %216 = vector.broadcast %cst_105 : f32 to vector<8x1xf32>
    %217 = arith.divf %215, %216 : vector<8x1xf32>
    %218 = vector.broadcast %217 : vector<8x1xf32> to vector<8x32xf32>
    %219 = arith.subf %211, %218 : vector<8x32xf32>
    %220 = arith.mulf %219, %219 : vector<8x32xf32>
    %cst_106 = arith.constant dense<0.000000e+00> : vector<8xf32>
    %221 = vector.multi_reduction <add>, %220, %cst_106 [1] : vector<8x32xf32> to vector<8xf32>
    %222 = vector.shape_cast %221 : vector<8xf32> to vector<8x1xf32>
    %cst_107 = arith.constant 3.200000e+01 : f32
    %223 = vector.broadcast %cst_107 : f32 to vector<8x1xf32>
    %224 = arith.divf %222, %223 : vector<8x1xf32>
    %cst_108 = arith.constant 9.99999974E-6 : f32
    %225 = vector.broadcast %cst_108 : f32 to vector<8x1xf32>
    %226 = arith.addf %224, %225 : vector<8x1xf32>
    %227 = math.rsqrt %226 : vector<8x1xf32>
    %228 = vector.broadcast %227 : vector<8x1xf32> to vector<8x32xf32>
    %229 = arith.mulf %219, %228 : vector<8x32xf32>
    %230 = vector.broadcast %212 : vector<1x32xf32> to vector<8x32xf32>
    %231 = arith.mulf %229, %230 : vector<8x32xf32>
    %232 = vector.broadcast %213 : vector<1x32xf32> to vector<8x32xf32>
    %233 = arith.addf %231, %232 : vector<8x32xf32>
    %c0_109 = arith.constant 0 : index
    %c0_110 = arith.constant 0 : index
    %c0_111 = arith.constant 0 : index
    %234 = vector.load %arg24[%c0_109, %c0_110, %c0_111] : memref<1x8x32xf32, #tpu.memory_space<vmem>>, vector<1x8x32xf32>
    %235 = vector.shape_cast %234 : vector<1x8x32xf32> to vector<8x32xf32>
    %236 = vector.shape_cast %233 : vector<8x32xf32> to vector<1x8x32xf32>
    tpu.vector_store %arg24[%c0_109, %c0_110, %c0_111], %236 {strides = array<i32>} : memref<1x8x32xf32, #tpu.memory_space<vmem>>, vector<1x8x32xf32>,
    return
  }
  func.func @transform_0(%arg0: i32) -> (i32, i32, i32) {
    %c0_i32 = arith.constant 0 : i32
    %c0_i32_0 = arith.constant 0 : i32
    %c0_i32_1 = arith.constant 0 : i32
    return %arg0, %c0_i32, %c0_i32_0 : i32, i32, i32
  }
  func.func @transform_1(%arg0: i32) -> (i32, i32, i32) {
    %c0_i32 = arith.constant 0 : i32
    %c0_i32_0 = arith.constant 0 : i32
    %c0_i32_1 = arith.constant 0 : i32
    return %arg0, %c0_i32, %c0_i32_0 : i32, i32, i32
  }
  func.func @transform_2(%arg0: i32) -> (i32, i32, i32) {
    %c0_i32 = arith.constant 0 : i32
    %c0_i32_0 = arith.constant 0 : i32
    %c0_i32_1 = arith.constant 0 : i32
    return %arg0, %c0_i32, %c0_i32_0 : i32, i32, i32
  }
  func.func @transform_3(%arg0: i32) -> (i32, i32, i32) {
    %c0_i32 = arith.constant 0 : i32
    %c0_i32_0 = arith.constant 0 : i32
    %c0_i32_1 = arith.constant 0 : i32
    return %arg0, %c0_i32, %c0_i32_0 : i32, i32, i32
  }
  func.func @transform_4(%arg0: i32) -> (i32, i32, i32) {
    %c0_i32 = arith.constant 0 : i32
    %c0_i32_0 = arith.constant 0 : i32
    %c0_i32_1 = arith.constant 0 : i32
    return %arg0, %c0_i32, %c0_i32_0 : i32, i32, i32
  }
  func.func @transform_5(%arg0: i32) -> (i32, i32) {
    %c0_i32 = arith.constant 0 : i32
    %c0_i32_0 = arith.constant 0 : i32
    %c0_i32_1 = arith.constant 0 : i32
    return %c0_i32, %c0_i32_0 : i32, i32
  }
  func.func @transform_6(%arg0: i32) -> (i32, i32) {
    %c0_i32 = arith.constant 0 : i32
    %c0_i32_0 = arith.constant 0 : i32
    %c0_i32_1 = arith.constant 0 : i32
    return %c0_i32, %c0_i32_0 : i32, i32
  }
  func.func @transform_7(%arg0: i32) -> (i32, i32) {
    %c0_i32 = arith.constant 0 : i32
    %c0_i32_0 = arith.constant 0 : i32
    %c0_i32_1 = arith.constant 0 : i32
    return %c0_i32, %c0_i32_0 : i32, i32
  }
  func.func @transform_8(%arg0: i32) -> (i32, i32) {
    %c0_i32 = arith.constant 0 : i32
    %c0_i32_0 = arith.constant 0 : i32
    %c0_i32_1 = arith.constant 0 : i32
    return %c0_i32, %c0_i32_0 : i32, i32
  }
  func.func @transform_9(%arg0: i32) -> (i32, i32) {
    %c0_i32 = arith.constant 0 : i32
    %c0_i32_0 = arith.constant 0 : i32
    %c0_i32_1 = arith.constant 0 : i32
    return %c0_i32, %c0_i32_0 : i32, i32
  }
  func.func @transform_10(%arg0: i32) -> (i32, i32) {
    %c0_i32 = arith.constant 0 : i32
    %c0_i32_0 = arith.constant 0 : i32
    %c0_i32_1 = arith.constant 0 : i32
    return %c0_i32, %c0_i32_0 : i32, i32
  }
  func.func @transform_11(%arg0: i32) -> (i32, i32) {
    %c0_i32 = arith.constant 0 : i32
    %c0_i32_0 = arith.constant 0 : i32
    %c0_i32_1 = arith.constant 0 : i32
    return %c0_i32, %c0_i32_0 : i32, i32
  }
  func.func @transform_12(%arg0: i32) -> (i32, i32) {
    %c0_i32 = arith.constant 0 : i32
    %c0_i32_0 = arith.constant 0 : i32
    %c0_i32_1 = arith.constant 0 : i32
    return %c0_i32, %c0_i32_0 : i32, i32
  }
  func.func @transform_13(%arg0: i32) -> (i32, i32) {
    %c0_i32 = arith.constant 0 : i32
    %c0_i32_0 = arith.constant 0 : i32
    %c0_i32_1 = arith.constant 0 : i32
    return %c0_i32, %c0_i32_0 : i32, i32
  }
  func.func @transform_14(%arg0: i32) -> (i32, i32) {
    %c0_i32 = arith.constant 0 : i32
    %c0_i32_0 = arith.constant 0 : i32
    %c0_i32_1 = arith.constant 0 : i32
    return %c0_i32, %c0_i32_0 : i32, i32
  }
  func.func @transform_15(%arg0: i32) -> (i32, i32) {
    %c0_i32 = arith.constant 0 : i32
    %c0_i32_0 = arith.constant 0 : i32
    %c0_i32_1 = arith.constant 0 : i32
    return %c0_i32, %c0_i32_0 : i32, i32
  }
  func.func @transform_16(%arg0: i32) -> (i32, i32) {
    %c0_i32 = arith.constant 0 : i32
    %c0_i32_0 = arith.constant 0 : i32
    %c0_i32_1 = arith.constant 0 : i32
    return %c0_i32, %c0_i32_0 : i32, i32
  }
  func.func @transform_17(%arg0: i32) -> (i32, i32) {
    %c0_i32 = arith.constant 0 : i32
    %c0_i32_0 = arith.constant 0 : i32
    %c0_i32_1 = arith.constant 0 : i32
    return %c0_i32, %c0_i32_0 : i32, i32
  }
  func.func @transform_18(%arg0: i32) -> (i32, i32) {
    %c0_i32 = arith.constant 0 : i32
    %c0_i32_0 = arith.constant 0 : i32
    %c0_i32_1 = arith.constant 0 : i32
    return %c0_i32, %c0_i32_0 : i32, i32
  }
  func.func @transform_19(%arg0: i32) -> (i32, i32) {
    %c0_i32 = arith.constant 0 : i32
    %c0_i32_0 = arith.constant 0 : i32
    %c0_i32_1 = arith.constant 0 : i32
    return %c0_i32, %c0_i32_0 : i32, i32
  }
  func.func @transform_20(%arg0: i32) -> (i32, i32) {
    %c0_i32 = arith.constant 0 : i32
    %c0_i32_0 = arith.constant 0 : i32
    %c0_i32_1 = arith.constant 0 : i32
    return %c0_i32, %c0_i32_0 : i32, i32
  }
  func.func @transform_21(%arg0: i32) -> (i32, i32) {
    %c0_i32 = arith.constant 0 : i32
    %c0_i32_0 = arith.constant 0 : i32
    %c0_i32_1 = arith.constant 0 : i32
    return %c0_i32, %c0_i32_0 : i32, i32
  }
  func.func @transform_22(%arg0: i32) -> (i32, i32) {
    %c0_i32 = arith.constant 0 : i32
    %c0_i32_0 = arith.constant 0 : i32
    %c0_i32_1 = arith.constant 0 : i32
    return %c0_i32, %c0_i32_0 : i32, i32
  }
  func.func @transform_23(%arg0: i32) -> (i32, i32, i32) {
    %c0_i32 = arith.constant 0 : i32
    %c0_i32_0 = arith.constant 0 : i32
    %c0_i32_1 = arith.constant 0 : i32
    return %arg0, %c0_i32, %c0_i32_0 : i32, i32, i32
  }
}

module attributes {stable_mosaic.version = 11 : i64} {
  func.func @_self_attn_point_kernel(%arg0: i32, %arg1: memref<1x8x32xf32, #tpu.memory_space<vmem>>, %arg2: memref<1x8x32xf32, #tpu.memory_space<vmem>>, %arg3: memref<32x64xf32, #tpu.memory_space<vmem>>, %arg4: memref<1x64xf32, #tpu.memory_space<vmem>>, %arg5: memref<32x32xf32, #tpu.memory_space<vmem>>, %arg6: memref<1x32xf32, #tpu.memory_space<vmem>>, %arg7: memref<32x32xf32, #tpu.memory_space<vmem>>, %arg8: memref<1x32xf32, #tpu.memory_space<vmem>>, %arg9: memref<1x32xf32, #tpu.memory_space<vmem>>, %arg10: memref<1x32xf32, #tpu.memory_space<vmem>>, %arg11: memref<1x32xf32, #tpu.memory_space<vmem>>, %arg12: memref<1x32xf32, #tpu.memory_space<vmem>>, %arg13: memref<32x32xf32, #tpu.memory_space<vmem>>, %arg14: memref<1x32xf32, #tpu.memory_space<vmem>>, %arg15: memref<32x32xf32, #tpu.memory_space<vmem>>, %arg16: memref<1x32xf32, #tpu.memory_space<vmem>>, %arg17: memref<32x8xf32, #tpu.memory_space<vmem>>, %arg18: memref<1x8xf32, #tpu.memory_space<vmem>>, %arg19: memref<32x2xf32, #tpu.memory_space<vmem>>, %arg20: memref<1x2xf32, #tpu.memory_space<vmem>>, %arg21: memref<1x8x32xf32, #tpu.memory_space<vmem>>, %arg22: memref<1x8x8xf32, #tpu.memory_space<vmem>>, %arg23: memref<1x8x2xf32, #tpu.memory_space<vmem>>) attributes {dimension_semantics = [#tpu.dimension_semantics<parallel>], iteration_bounds = array<i64: 2>, scalar_prefetch = 0 : i64, scratch_operands = 0 : i64, tpu.core_type = #tpu.core_type<tc>, window_params = [{transform_indices = @transform_0, window_bounds = array<i64: 1, 8, 32>}, {transform_indices = @transform_1, window_bounds = array<i64: 1, 8, 32>}, {pipeline_mode = #tpu.pipeline_mode<synchronous>, transform_indices = @transform_2, window_bounds = array<i64: 32, 64>}, {pipeline_mode = #tpu.pipeline_mode<synchronous>, transform_indices = @transform_3, window_bounds = array<i64: 1, 64>}, {pipeline_mode = #tpu.pipeline_mode<synchronous>, transform_indices = @transform_4, window_bounds = array<i64: 32, 32>}, {pipeline_mode = #tpu.pipeline_mode<synchronous>, transform_indices = @transform_5, window_bounds = array<i64: 1, 32>}, {pipeline_mode = #tpu.pipeline_mode<synchronous>, transform_indices = @transform_6, window_bounds = array<i64: 32, 32>}, {pipeline_mode = #tpu.pipeline_mode<synchronous>, transform_indices = @transform_7, window_bounds = array<i64: 1, 32>}, {pipeline_mode = #tpu.pipeline_mode<synchronous>, transform_indices = @transform_8, window_bounds = array<i64: 1, 32>}, {pipeline_mode = #tpu.pipeline_mode<synchronous>, transform_indices = @transform_9, window_bounds = array<i64: 1, 32>}, {pipeline_mode = #tpu.pipeline_mode<synchronous>, transform_indices = @transform_10, window_bounds = array<i64: 1, 32>}, {pipeline_mode = #tpu.pipeline_mode<synchronous>, transform_indices = @transform_11, window_bounds = array<i64: 1, 32>}, {pipeline_mode = #tpu.pipeline_mode<synchronous>, transform_indices = @transform_12, window_bounds = array<i64: 32, 32>}, {pipeline_mode = #tpu.pipeline_mode<synchronous>, transform_indices = @transform_13, window_bounds = array<i64: 1, 32>}, {pipeline_mode = #tpu.pipeline_mode<synchronous>, transform_indices = @transform_14, window_bounds = array<i64: 32, 32>}, {pipeline_mode = #tpu.pipeline_mode<synchronous>, transform_indices = @transform_15, window_bounds = array<i64: 1, 32>}, {pipeline_mode = #tpu.pipeline_mode<synchronous>, transform_indices = @transform_16, window_bounds = array<i64: 32, 8>}, {pipeline_mode = #tpu.pipeline_mode<synchronous>, transform_indices = @transform_17, window_bounds = array<i64: 1, 8>}, {pipeline_mode = #tpu.pipeline_mode<synchronous>, transform_indices = @transform_18, window_bounds = array<i64: 32, 2>}, {pipeline_mode = #tpu.pipeline_mode<synchronous>, transform_indices = @transform_19, window_bounds = array<i64: 1, 2>}, {transform_indices = @transform_20, window_bounds = array<i64: 1, 8, 32>}, {transform_indices = @transform_21, window_bounds = array<i64: 1, 8, 8>}, {transform_indices = @transform_22, window_bounds = array<i64: 1, 8, 2>}]} {
    %c0 = arith.constant 0 : index
    %c0_0 = arith.constant 0 : index
    %c0_1 = arith.constant 0 : index
    %0 = vector.load %arg1[%c0, %c0_0, %c0_1] : memref<1x8x32xf32, #tpu.memory_space<vmem>>, vector<1x8x32xf32>
    %1 = vector.shape_cast %0 : vector<1x8x32xf32> to vector<8x32xf32>
    %c0_2 = arith.constant 0 : index
    %c0_3 = arith.constant 0 : index
    %c0_4 = arith.constant 0 : index
    %2 = vector.load %arg2[%c0_2, %c0_3, %c0_4] : memref<1x8x32xf32, #tpu.memory_space<vmem>>, vector<1x8x32xf32>
    %3 = vector.shape_cast %2 : vector<1x8x32xf32> to vector<8x32xf32>
    %4 = arith.addf %1, %3 : vector<8x32xf32>
    %c0_5 = arith.constant 0 : index
    %c0_6 = arith.constant 0 : index
    %5 = vector.load %arg11[%c0_5, %c0_6] : memref<1x32xf32, #tpu.memory_space<vmem>>, vector<1x32xf32>
    %c0_7 = arith.constant 0 : index
    %c0_8 = arith.constant 0 : index
    %6 = vector.load %arg12[%c0_7, %c0_8] : memref<1x32xf32, #tpu.memory_space<vmem>>, vector<1x32xf32>
    %cst = arith.constant dense<0.000000e+00> : vector<8xf32>
    %7 = vector.multi_reduction <add>, %4, %cst [1] : vector<8x32xf32> to vector<8xf32>
    %8 = vector.shape_cast %7 : vector<8xf32> to vector<8x1xf32>
    %cst_9 = arith.constant 3.200000e+01 : f32
    %9 = vector.broadcast %cst_9 : f32 to vector<8x1xf32>
    %10 = arith.divf %8, %9 : vector<8x1xf32>
    %11 = vector.broadcast %10 : vector<8x1xf32> to vector<8x32xf32>
    %12 = arith.subf %4, %11 : vector<8x32xf32>
    %13 = arith.mulf %12, %12 : vector<8x32xf32>
    %cst_10 = arith.constant dense<0.000000e+00> : vector<8xf32>
    %14 = vector.multi_reduction <add>, %13, %cst_10 [1] : vector<8x32xf32> to vector<8xf32>
    %15 = vector.shape_cast %14 : vector<8xf32> to vector<8x1xf32>
    %cst_11 = arith.constant 3.200000e+01 : f32
    %16 = vector.broadcast %cst_11 : f32 to vector<8x1xf32>
    %17 = arith.divf %15, %16 : vector<8x1xf32>
    %cst_12 = arith.constant 9.99999974E-6 : f32
    %18 = vector.broadcast %cst_12 : f32 to vector<8x1xf32>
    %19 = arith.addf %17, %18 : vector<8x1xf32>
    %20 = math.rsqrt %19 : vector<8x1xf32>
    %21 = vector.broadcast %20 : vector<8x1xf32> to vector<8x32xf32>
    %22 = arith.mulf %12, %21 : vector<8x32xf32>
    %23 = vector.broadcast %5 : vector<1x32xf32> to vector<8x32xf32>
    %24 = arith.mulf %22, %23 : vector<8x32xf32>
    %25 = vector.broadcast %6 : vector<1x32xf32> to vector<8x32xf32>
    %26 = arith.addf %24, %25 : vector<8x32xf32>
    %c0_13 = arith.constant 0 : index
    %c0_14 = arith.constant 0 : index
    %27 = vector.load %arg13[%c0_13, %c0_14] : memref<32x32xf32, #tpu.memory_space<vmem>>, vector<32x32xf32>
    %cst_15 = arith.constant dense<0.000000e+00> : vector<8x32xf32>
    %28 = tpu.matmul %26, %27, %cst_15 {dimension_numbers = #tpu.dot_dimension_numbers<[1], [0], [0], [1], [0, 0, 1, 1], [], []>} : vector<8x32xf32>, vector<32x32xf32>, vector<8x32xf32> -> vector<8x32xf32>
    %c0_16 = arith.constant 0 : index
    %c0_17 = arith.constant 0 : index
    %29 = vector.load %arg14[%c0_16, %c0_17] : memref<1x32xf32, #tpu.memory_space<vmem>>, vector<1x32xf32>
    %30 = vector.broadcast %29 : vector<1x32xf32> to vector<8x32xf32>
    %31 = arith.addf %28, %30 : vector<8x32xf32>
    %cst_18 = arith.constant 0.000000e+00 : f32
    %32 = vector.broadcast %cst_18 : f32 to vector<8x32xf32>
    %33 = arith.maximumf %31, %32 : vector<8x32xf32>
    %c0_19 = arith.constant 0 : index
    %c0_20 = arith.constant 0 : index
    %34 = vector.load %arg15[%c0_19, %c0_20] : memref<32x32xf32, #tpu.memory_space<vmem>>, vector<32x32xf32>
    %cst_21 = arith.constant dense<0.000000e+00> : vector<8x32xf32>
    %35 = tpu.matmul %33, %34, %cst_21 {dimension_numbers = #tpu.dot_dimension_numbers<[1], [0], [0], [1], [0, 0, 1, 1], [], []>} : vector<8x32xf32>, vector<32x32xf32>, vector<8x32xf32> -> vector<8x32xf32>
    %c0_22 = arith.constant 0 : index
    %c0_23 = arith.constant 0 : index
    %36 = vector.load %arg16[%c0_22, %c0_23] : memref<1x32xf32, #tpu.memory_space<vmem>>, vector<1x32xf32>
    %37 = vector.broadcast %36 : vector<1x32xf32> to vector<8x32xf32>
    %38 = arith.addf %35, %37 : vector<8x32xf32>
    %cst_24 = arith.constant 0.000000e+00 : f32
    %39 = vector.broadcast %cst_24 : f32 to vector<8x32xf32>
    %40 = arith.maximumf %38, %39 : vector<8x32xf32>
    %c0_25 = arith.constant 0 : index
    %c0_26 = arith.constant 0 : index
    %41 = vector.load %arg17[%c0_25, %c0_26] : memref<32x8xf32, #tpu.memory_space<vmem>>, vector<32x8xf32>
    %cst_27 = arith.constant dense<0.000000e+00> : vector<8x8xf32>
    %42 = tpu.matmul %40, %41, %cst_27 {dimension_numbers = #tpu.dot_dimension_numbers<[1], [0], [0], [1], [0, 0, 1, 1], [], []>} : vector<8x32xf32>, vector<32x8xf32>, vector<8x8xf32> -> vector<8x8xf32>
    %c0_28 = arith.constant 0 : index
    %c0_29 = arith.constant 0 : index
    %43 = vector.load %arg18[%c0_28, %c0_29] : memref<1x8xf32, #tpu.memory_space<vmem>>, vector<1x8xf32>
    %44 = vector.broadcast %43 : vector<1x8xf32> to vector<8x8xf32>
    %45 = arith.addf %42, %44 : vector<8x8xf32>
    %c0_30 = arith.constant 0 : index
    %c0_31 = arith.constant 0 : index
    %c0_32 = arith.constant 0 : index
    %46 = vector.load %arg22[%c0_30, %c0_31, %c0_32] : memref<1x8x8xf32, #tpu.memory_space<vmem>>, vector<1x8x8xf32>
    %47 = vector.shape_cast %46 : vector<1x8x8xf32> to vector<8x8xf32>
    %48 = vector.shape_cast %45 : vector<8x8xf32> to vector<1x8x8xf32>
    tpu.vector_store %arg22[%c0_30, %c0_31, %c0_32], %48 {strides = array<i32>} : memref<1x8x8xf32, #tpu.memory_space<vmem>>, vector<1x8x8xf32>,
    %c0_33 = arith.constant 0 : index
    %c0_34 = arith.constant 0 : index
    %49 = vector.load %arg19[%c0_33, %c0_34] : memref<32x2xf32, #tpu.memory_space<vmem>>, vector<32x2xf32>
    %cst_35 = arith.constant dense<0.000000e+00> : vector<8x2xf32>
    %50 = tpu.matmul %26, %49, %cst_35 {dimension_numbers = #tpu.dot_dimension_numbers<[1], [0], [0], [1], [0, 0, 1, 1], [], []>} : vector<8x32xf32>, vector<32x2xf32>, vector<8x2xf32> -> vector<8x2xf32>
    %c0_36 = arith.constant 0 : index
    %c0_37 = arith.constant 0 : index
    %51 = vector.load %arg20[%c0_36, %c0_37] : memref<1x2xf32, #tpu.memory_space<vmem>>, vector<1x2xf32>
    %52 = vector.broadcast %51 : vector<1x2xf32> to vector<8x2xf32>
    %53 = arith.addf %50, %52 : vector<8x2xf32>
    %c0_38 = arith.constant 0 : index
    %c0_39 = arith.constant 0 : index
    %c0_40 = arith.constant 0 : index
    %54 = vector.load %arg23[%c0_38, %c0_39, %c0_40] : memref<1x8x2xf32, #tpu.memory_space<vmem>>, vector<1x8x2xf32>
    %55 = vector.shape_cast %54 : vector<1x8x2xf32> to vector<8x2xf32>
    %56 = vector.shape_cast %53 : vector<8x2xf32> to vector<1x8x2xf32>
    tpu.vector_store %arg23[%c0_38, %c0_39, %c0_40], %56 {strides = array<i32>} : memref<1x8x2xf32, #tpu.memory_space<vmem>>, vector<1x8x2xf32>,
    %c0_41 = arith.constant 0 : index
    %c0_42 = arith.constant 0 : index
    %57 = vector.load %arg3[%c0_41, %c0_42] : memref<32x64xf32, #tpu.memory_space<vmem>>, vector<32x64xf32>
    %cst_43 = arith.constant dense<0.000000e+00> : vector<8x64xf32>
    %58 = tpu.matmul %4, %57, %cst_43 {dimension_numbers = #tpu.dot_dimension_numbers<[1], [0], [0], [1], [0, 0, 1, 1], [], []>} : vector<8x32xf32>, vector<32x64xf32>, vector<8x64xf32> -> vector<8x64xf32>
    %c0_44 = arith.constant 0 : index
    %c0_45 = arith.constant 0 : index
    %59 = vector.load %arg4[%c0_44, %c0_45] : memref<1x64xf32, #tpu.memory_space<vmem>>, vector<1x64xf32>
    %60 = vector.broadcast %59 : vector<1x64xf32> to vector<8x64xf32>
    %61 = arith.addf %58, %60 : vector<8x64xf32>
    %62 = vector.extract_strided_slice %61 {offsets = [0, 0], sizes = [8, 32], strides = [1, 1]} : vector<8x64xf32> to vector<8x32xf32>
    %63 = vector.extract_strided_slice %61 {offsets = [0, 32], sizes = [8, 32], strides = [1, 1]} : vector<8x64xf32> to vector<8x32xf32>
    %c0_46 = arith.constant 0 : index
    %c0_47 = arith.constant 0 : index
    %64 = vector.load %arg5[%c0_46, %c0_47] : memref<32x32xf32, #tpu.memory_space<vmem>>, vector<32x32xf32>
    %cst_48 = arith.constant dense<0.000000e+00> : vector<8x32xf32>
    %65 = tpu.matmul %1, %64, %cst_48 {dimension_numbers = #tpu.dot_dimension_numbers<[1], [0], [0], [1], [0, 0, 1, 1], [], []>} : vector<8x32xf32>, vector<32x32xf32>, vector<8x32xf32> -> vector<8x32xf32>
    %c0_49 = arith.constant 0 : index
    %c0_50 = arith.constant 0 : index
    %66 = vector.load %arg6[%c0_49, %c0_50] : memref<1x32xf32, #tpu.memory_space<vmem>>, vector<1x32xf32>
    %67 = vector.broadcast %66 : vector<1x32xf32> to vector<8x32xf32>
    %68 = arith.addf %65, %67 : vector<8x32xf32>
    %c0_51 = arith.constant 0 : index
    %c0_52 = arith.constant 0 : index
    %69 = vector.load %arg7[%c0_51, %c0_52] : memref<32x32xf32, #tpu.memory_space<vmem>>, vector<32x32xf32>
    %70 = vector.extract_strided_slice %62 {offsets = [0, 0], sizes = [8, 8], strides = [1, 1]} : vector<8x32xf32> to vector<8x8xf32>
    %cst_53 = arith.constant 0.353553385 : f32
    %71 = vector.broadcast %cst_53 : f32 to vector<8x8xf32>
    %72 = arith.mulf %70, %71 : vector<8x8xf32>
    %73 = vector.extract_strided_slice %63 {offsets = [0, 0], sizes = [8, 8], strides = [1, 1]} : vector<8x32xf32> to vector<8x8xf32>
    %74 = vector.extract_strided_slice %68 {offsets = [0, 0], sizes = [8, 8], strides = [1, 1]} : vector<8x32xf32> to vector<8x8xf32>
    %cst_54 = arith.constant dense<0.000000e+00> : vector<8x8xf32>
    %75 = tpu.matmul %72, %73, %cst_54 {dimension_numbers = #tpu.dot_dimension_numbers<[1], [1], [0], [0], [0, 0, 1, 0], [], []>} : vector<8x8xf32>, vector<8x8xf32>, vector<8x8xf32> -> vector<8x8xf32>
    %cst_55 = arith.constant dense<0xFF800000> : vector<8xf32>
    %76 = vector.multi_reduction <maximumf>, %75, %cst_55 [1] : vector<8x8xf32> to vector<8xf32>
    %77 = vector.shape_cast %76 : vector<8xf32> to vector<8x1xf32>
    %78 = vector.broadcast %77 : vector<8x1xf32> to vector<8x8xf32>
    %79 = arith.subf %75, %78 : vector<8x8xf32>
    %80 = math.exp %79 : vector<8x8xf32>
    %cst_56 = arith.constant dense<0.000000e+00> : vector<8xf32>
    %81 = vector.multi_reduction <add>, %80, %cst_56 [1] : vector<8x8xf32> to vector<8xf32>
    %82 = vector.shape_cast %81 : vector<8xf32> to vector<8x1xf32>
    %83 = tpu.reciprocal %82 {approx = true} : vector<8x1xf32> -> vector<8x1xf32>
    %84 = vector.broadcast %83 : vector<8x1xf32> to vector<8x8xf32>
    %85 = arith.mulf %80, %84 : vector<8x8xf32>
    %cst_57 = arith.constant dense<0.000000e+00> : vector<8x8xf32>
    %86 = tpu.matmul %85, %74, %cst_57 {dimension_numbers = #tpu.dot_dimension_numbers<[1], [0], [0], [1], [0, 0, 1, 1], [], []>} : vector<8x8xf32>, vector<8x8xf32>, vector<8x8xf32> -> vector<8x8xf32>
    %87 = vector.extract_strided_slice %69 {offsets = [0, 0], sizes = [8, 32], strides = [1, 1]} : vector<32x32xf32> to vector<8x32xf32>
    %cst_58 = arith.constant dense<0.000000e+00> : vector<8x32xf32>
    %88 = tpu.matmul %86, %87, %cst_58 {dimension_numbers = #tpu.dot_dimension_numbers<[1], [0], [0], [1], [0, 0, 1, 1], [], []>} : vector<8x8xf32>, vector<8x32xf32>, vector<8x32xf32> -> vector<8x32xf32>
    %89 = vector.extract_strided_slice %62 {offsets = [0, 8], sizes = [8, 8], strides = [1, 1]} : vector<8x32xf32> to vector<8x8xf32>
    %cst_59 = arith.constant 0.353553385 : f32
    %90 = vector.broadcast %cst_59 : f32 to vector<8x8xf32>
    %91 = arith.mulf %89, %90 : vector<8x8xf32>
    %92 = vector.extract_strided_slice %63 {offsets = [0, 8], sizes = [8, 8], strides = [1, 1]} : vector<8x32xf32> to vector<8x8xf32>
    %93 = vector.extract_strided_slice %68 {offsets = [0, 8], sizes = [8, 8], strides = [1, 1]} : vector<8x32xf32> to vector<8x8xf32>
    %cst_60 = arith.constant dense<0.000000e+00> : vector<8x8xf32>
    %94 = tpu.matmul %91, %92, %cst_60 {dimension_numbers = #tpu.dot_dimension_numbers<[1], [1], [0], [0], [0, 0, 1, 0], [], []>} : vector<8x8xf32>, vector<8x8xf32>, vector<8x8xf32> -> vector<8x8xf32>
    %cst_61 = arith.constant dense<0xFF800000> : vector<8xf32>
    %95 = vector.multi_reduction <maximumf>, %94, %cst_61 [1] : vector<8x8xf32> to vector<8xf32>
    %96 = vector.shape_cast %95 : vector<8xf32> to vector<8x1xf32>
    %97 = vector.broadcast %96 : vector<8x1xf32> to vector<8x8xf32>
    %98 = arith.subf %94, %97 : vector<8x8xf32>
    %99 = math.exp %98 : vector<8x8xf32>
    %cst_62 = arith.constant dense<0.000000e+00> : vector<8xf32>
    %100 = vector.multi_reduction <add>, %99, %cst_62 [1] : vector<8x8xf32> to vector<8xf32>
    %101 = vector.shape_cast %100 : vector<8xf32> to vector<8x1xf32>
    %102 = tpu.reciprocal %101 {approx = true} : vector<8x1xf32> -> vector<8x1xf32>
    %103 = vector.broadcast %102 : vector<8x1xf32> to vector<8x8xf32>
    %104 = arith.mulf %99, %103 : vector<8x8xf32>
    %cst_63 = arith.constant dense<0.000000e+00> : vector<8x8xf32>
    %105 = tpu.matmul %104, %93, %cst_63 {dimension_numbers = #tpu.dot_dimension_numbers<[1], [0], [0], [1], [0, 0, 1, 1], [], []>} : vector<8x8xf32>, vector<8x8xf32>, vector<8x8xf32> -> vector<8x8xf32>
    %106 = vector.extract_strided_slice %69 {offsets = [8, 0], sizes = [8, 32], strides = [1, 1]} : vector<32x32xf32> to vector<8x32xf32>
    %cst_64 = arith.constant dense<0.000000e+00> : vector<8x32xf32>
    %107 = tpu.matmul %105, %106, %cst_64 {dimension_numbers = #tpu.dot_dimension_numbers<[1], [0], [0], [1], [0, 0, 1, 1], [], []>} : vector<8x8xf32>, vector<8x32xf32>, vector<8x32xf32> -> vector<8x32xf32>
    %108 = arith.addf %88, %107 : vector<8x32xf32>
    %109 = vector.extract_strided_slice %62 {offsets = [0, 16], sizes = [8, 8], strides = [1, 1]} : vector<8x32xf32> to vector<8x8xf32>
    %cst_65 = arith.constant 0.353553385 : f32
    %110 = vector.broadcast %cst_65 : f32 to vector<8x8xf32>
    %111 = arith.mulf %109, %110 : vector<8x8xf32>
    %112 = vector.extract_strided_slice %63 {offsets = [0, 16], sizes = [8, 8], strides = [1, 1]} : vector<8x32xf32> to vector<8x8xf32>
    %113 = vector.extract_strided_slice %68 {offsets = [0, 16], sizes = [8, 8], strides = [1, 1]} : vector<8x32xf32> to vector<8x8xf32>
    %cst_66 = arith.constant dense<0.000000e+00> : vector<8x8xf32>
    %114 = tpu.matmul %111, %112, %cst_66 {dimension_numbers = #tpu.dot_dimension_numbers<[1], [1], [0], [0], [0, 0, 1, 0], [], []>} : vector<8x8xf32>, vector<8x8xf32>, vector<8x8xf32> -> vector<8x8xf32>
    %cst_67 = arith.constant dense<0xFF800000> : vector<8xf32>
    %115 = vector.multi_reduction <maximumf>, %114, %cst_67 [1] : vector<8x8xf32> to vector<8xf32>
    %116 = vector.shape_cast %115 : vector<8xf32> to vector<8x1xf32>
    %117 = vector.broadcast %116 : vector<8x1xf32> to vector<8x8xf32>
    %118 = arith.subf %114, %117 : vector<8x8xf32>
    %119 = math.exp %118 : vector<8x8xf32>
    %cst_68 = arith.constant dense<0.000000e+00> : vector<8xf32>
    %120 = vector.multi_reduction <add>, %119, %cst_68 [1] : vector<8x8xf32> to vector<8xf32>
    %121 = vector.shape_cast %120 : vector<8xf32> to vector<8x1xf32>
    %122 = tpu.reciprocal %121 {approx = true} : vector<8x1xf32> -> vector<8x1xf32>
    %123 = vector.broadcast %122 : vector<8x1xf32> to vector<8x8xf32>
    %124 = arith.mulf %119, %123 : vector<8x8xf32>
    %cst_69 = arith.constant dense<0.000000e+00> : vector<8x8xf32>
    %125 = tpu.matmul %124, %113, %cst_69 {dimension_numbers = #tpu.dot_dimension_numbers<[1], [0], [0], [1], [0, 0, 1, 1], [], []>} : vector<8x8xf32>, vector<8x8xf32>, vector<8x8xf32> -> vector<8x8xf32>
    %126 = vector.extract_strided_slice %69 {offsets = [16, 0], sizes = [8, 32], strides = [1, 1]} : vector<32x32xf32> to vector<8x32xf32>
    %cst_70 = arith.constant dense<0.000000e+00> : vector<8x32xf32>
    %127 = tpu.matmul %125, %126, %cst_70 {dimension_numbers = #tpu.dot_dimension_numbers<[1], [0], [0], [1], [0, 0, 1, 1], [], []>} : vector<8x8xf32>, vector<8x32xf32>, vector<8x32xf32> -> vector<8x32xf32>
    %128 = arith.addf %108, %127 : vector<8x32xf32>
    %129 = vector.extract_strided_slice %62 {offsets = [0, 24], sizes = [8, 8], strides = [1, 1]} : vector<8x32xf32> to vector<8x8xf32>
    %cst_71 = arith.constant 0.353553385 : f32
    %130 = vector.broadcast %cst_71 : f32 to vector<8x8xf32>
    %131 = arith.mulf %129, %130 : vector<8x8xf32>
    %132 = vector.extract_strided_slice %63 {offsets = [0, 24], sizes = [8, 8], strides = [1, 1]} : vector<8x32xf32> to vector<8x8xf32>
    %133 = vector.extract_strided_slice %68 {offsets = [0, 24], sizes = [8, 8], strides = [1, 1]} : vector<8x32xf32> to vector<8x8xf32>
    %cst_72 = arith.constant dense<0.000000e+00> : vector<8x8xf32>
    %134 = tpu.matmul %131, %132, %cst_72 {dimension_numbers = #tpu.dot_dimension_numbers<[1], [1], [0], [0], [0, 0, 1, 0], [], []>} : vector<8x8xf32>, vector<8x8xf32>, vector<8x8xf32> -> vector<8x8xf32>
    %cst_73 = arith.constant dense<0xFF800000> : vector<8xf32>
    %135 = vector.multi_reduction <maximumf>, %134, %cst_73 [1] : vector<8x8xf32> to vector<8xf32>
    %136 = vector.shape_cast %135 : vector<8xf32> to vector<8x1xf32>
    %137 = vector.broadcast %136 : vector<8x1xf32> to vector<8x8xf32>
    %138 = arith.subf %134, %137 : vector<8x8xf32>
    %139 = math.exp %138 : vector<8x8xf32>
    %cst_74 = arith.constant dense<0.000000e+00> : vector<8xf32>
    %140 = vector.multi_reduction <add>, %139, %cst_74 [1] : vector<8x8xf32> to vector<8xf32>
    %141 = vector.shape_cast %140 : vector<8xf32> to vector<8x1xf32>
    %142 = tpu.reciprocal %141 {approx = true} : vector<8x1xf32> -> vector<8x1xf32>
    %143 = vector.broadcast %142 : vector<8x1xf32> to vector<8x8xf32>
    %144 = arith.mulf %139, %143 : vector<8x8xf32>
    %cst_75 = arith.constant dense<0.000000e+00> : vector<8x8xf32>
    %145 = tpu.matmul %144, %133, %cst_75 {dimension_numbers = #tpu.dot_dimension_numbers<[1], [0], [0], [1], [0, 0, 1, 1], [], []>} : vector<8x8xf32>, vector<8x8xf32>, vector<8x8xf32> -> vector<8x8xf32>
    %146 = vector.extract_strided_slice %69 {offsets = [24, 0], sizes = [8, 32], strides = [1, 1]} : vector<32x32xf32> to vector<8x32xf32>
    %cst_76 = arith.constant dense<0.000000e+00> : vector<8x32xf32>
    %147 = tpu.matmul %145, %146, %cst_76 {dimension_numbers = #tpu.dot_dimension_numbers<[1], [0], [0], [1], [0, 0, 1, 1], [], []>} : vector<8x8xf32>, vector<8x32xf32>, vector<8x32xf32> -> vector<8x32xf32>
    %148 = arith.addf %128, %147 : vector<8x32xf32>
    %c0_77 = arith.constant 0 : index
    %c0_78 = arith.constant 0 : index
    %149 = vector.load %arg8[%c0_77, %c0_78] : memref<1x32xf32, #tpu.memory_space<vmem>>, vector<1x32xf32>
    %150 = vector.broadcast %149 : vector<1x32xf32> to vector<8x32xf32>
    %151 = arith.addf %148, %150 : vector<8x32xf32>
    %152 = arith.addf %1, %151 : vector<8x32xf32>
    %c0_79 = arith.constant 0 : index
    %c0_80 = arith.constant 0 : index
    %153 = vector.load %arg9[%c0_79, %c0_80] : memref<1x32xf32, #tpu.memory_space<vmem>>, vector<1x32xf32>
    %c0_81 = arith.constant 0 : index
    %c0_82 = arith.constant 0 : index
    %154 = vector.load %arg10[%c0_81, %c0_82] : memref<1x32xf32, #tpu.memory_space<vmem>>, vector<1x32xf32>
    %cst_83 = arith.constant dense<0.000000e+00> : vector<8xf32>
    %155 = vector.multi_reduction <add>, %152, %cst_83 [1] : vector<8x32xf32> to vector<8xf32>
    %156 = vector.shape_cast %155 : vector<8xf32> to vector<8x1xf32>
    %cst_84 = arith.constant 3.200000e+01 : f32
    %157 = vector.broadcast %cst_84 : f32 to vector<8x1xf32>
    %158 = arith.divf %156, %157 : vector<8x1xf32>
    %159 = vector.broadcast %158 : vector<8x1xf32> to vector<8x32xf32>
    %160 = arith.subf %152, %159 : vector<8x32xf32>
    %161 = arith.mulf %160, %160 : vector<8x32xf32>
    %cst_85 = arith.constant dense<0.000000e+00> : vector<8xf32>
    %162 = vector.multi_reduction <add>, %161, %cst_85 [1] : vector<8x32xf32> to vector<8xf32>
    %163 = vector.shape_cast %162 : vector<8xf32> to vector<8x1xf32>
    %cst_86 = arith.constant 3.200000e+01 : f32
    %164 = vector.broadcast %cst_86 : f32 to vector<8x1xf32>
    %165 = arith.divf %163, %164 : vector<8x1xf32>
    %cst_87 = arith.constant 9.99999974E-6 : f32
    %166 = vector.broadcast %cst_87 : f32 to vector<8x1xf32>
    %167 = arith.addf %165, %166 : vector<8x1xf32>
    %168 = math.rsqrt %167 : vector<8x1xf32>
    %169 = vector.broadcast %168 : vector<8x1xf32> to vector<8x32xf32>
    %170 = arith.mulf %160, %169 : vector<8x32xf32>
    %171 = vector.broadcast %153 : vector<1x32xf32> to vector<8x32xf32>
    %172 = arith.mulf %170, %171 : vector<8x32xf32>
    %173 = vector.broadcast %154 : vector<1x32xf32> to vector<8x32xf32>
    %174 = arith.addf %172, %173 : vector<8x32xf32>
    %c0_88 = arith.constant 0 : index
    %c0_89 = arith.constant 0 : index
    %c0_90 = arith.constant 0 : index
    %175 = vector.load %arg21[%c0_88, %c0_89, %c0_90] : memref<1x8x32xf32, #tpu.memory_space<vmem>>, vector<1x8x32xf32>
    %176 = vector.shape_cast %175 : vector<1x8x32xf32> to vector<8x32xf32>
    %177 = vector.shape_cast %174 : vector<8x32xf32> to vector<1x8x32xf32>
    tpu.vector_store %arg21[%c0_88, %c0_89, %c0_90], %177 {strides = array<i32>} : memref<1x8x32xf32, #tpu.memory_space<vmem>>, vector<1x8x32xf32>,
    return
  }
  func.func @transform_0(%arg0: i32) -> (i32, i32, i32) {
    %c0_i32 = arith.constant 0 : i32
    %c0_i32_0 = arith.constant 0 : i32
    %c0_i32_1 = arith.constant 0 : i32
    return %arg0, %c0_i32, %c0_i32_0 : i32, i32, i32
  }
  func.func @transform_1(%arg0: i32) -> (i32, i32, i32) {
    %c0_i32 = arith.constant 0 : i32
    %c0_i32_0 = arith.constant 0 : i32
    %c0_i32_1 = arith.constant 0 : i32
    return %arg0, %c0_i32, %c0_i32_0 : i32, i32, i32
  }
  func.func @transform_2(%arg0: i32) -> (i32, i32) {
    %c0_i32 = arith.constant 0 : i32
    %c0_i32_0 = arith.constant 0 : i32
    %c0_i32_1 = arith.constant 0 : i32
    return %c0_i32, %c0_i32_0 : i32, i32
  }
  func.func @transform_3(%arg0: i32) -> (i32, i32) {
    %c0_i32 = arith.constant 0 : i32
    %c0_i32_0 = arith.constant 0 : i32
    %c0_i32_1 = arith.constant 0 : i32
    return %c0_i32, %c0_i32_0 : i32, i32
  }
  func.func @transform_4(%arg0: i32) -> (i32, i32) {
    %c0_i32 = arith.constant 0 : i32
    %c0_i32_0 = arith.constant 0 : i32
    %c0_i32_1 = arith.constant 0 : i32
    return %c0_i32, %c0_i32_0 : i32, i32
  }
  func.func @transform_5(%arg0: i32) -> (i32, i32) {
    %c0_i32 = arith.constant 0 : i32
    %c0_i32_0 = arith.constant 0 : i32
    %c0_i32_1 = arith.constant 0 : i32
    return %c0_i32, %c0_i32_0 : i32, i32
  }
  func.func @transform_6(%arg0: i32) -> (i32, i32) {
    %c0_i32 = arith.constant 0 : i32
    %c0_i32_0 = arith.constant 0 : i32
    %c0_i32_1 = arith.constant 0 : i32
    return %c0_i32, %c0_i32_0 : i32, i32
  }
  func.func @transform_7(%arg0: i32) -> (i32, i32) {
    %c0_i32 = arith.constant 0 : i32
    %c0_i32_0 = arith.constant 0 : i32
    %c0_i32_1 = arith.constant 0 : i32
    return %c0_i32, %c0_i32_0 : i32, i32
  }
  func.func @transform_8(%arg0: i32) -> (i32, i32) {
    %c0_i32 = arith.constant 0 : i32
    %c0_i32_0 = arith.constant 0 : i32
    %c0_i32_1 = arith.constant 0 : i32
    return %c0_i32, %c0_i32_0 : i32, i32
  }
  func.func @transform_9(%arg0: i32) -> (i32, i32) {
    %c0_i32 = arith.constant 0 : i32
    %c0_i32_0 = arith.constant 0 : i32
    %c0_i32_1 = arith.constant 0 : i32
    return %c0_i32, %c0_i32_0 : i32, i32
  }
  func.func @transform_10(%arg0: i32) -> (i32, i32) {
    %c0_i32 = arith.constant 0 : i32
    %c0_i32_0 = arith.constant 0 : i32
    %c0_i32_1 = arith.constant 0 : i32
    return %c0_i32, %c0_i32_0 : i32, i32
  }
  func.func @transform_11(%arg0: i32) -> (i32, i32) {
    %c0_i32 = arith.constant 0 : i32
    %c0_i32_0 = arith.constant 0 : i32
    %c0_i32_1 = arith.constant 0 : i32
    return %c0_i32, %c0_i32_0 : i32, i32
  }
  func.func @transform_12(%arg0: i32) -> (i32, i32) {
    %c0_i32 = arith.constant 0 : i32
    %c0_i32_0 = arith.constant 0 : i32
    %c0_i32_1 = arith.constant 0 : i32
    return %c0_i32, %c0_i32_0 : i32, i32
  }
  func.func @transform_13(%arg0: i32) -> (i32, i32) {
    %c0_i32 = arith.constant 0 : i32
    %c0_i32_0 = arith.constant 0 : i32
    %c0_i32_1 = arith.constant 0 : i32
    return %c0_i32, %c0_i32_0 : i32, i32
  }
  func.func @transform_14(%arg0: i32) -> (i32, i32) {
    %c0_i32 = arith.constant 0 : i32
    %c0_i32_0 = arith.constant 0 : i32
    %c0_i32_1 = arith.constant 0 : i32
    return %c0_i32, %c0_i32_0 : i32, i32
  }
  func.func @transform_15(%arg0: i32) -> (i32, i32) {
    %c0_i32 = arith.constant 0 : i32
    %c0_i32_0 = arith.constant 0 : i32
    %c0_i32_1 = arith.constant 0 : i32
    return %c0_i32, %c0_i32_0 : i32, i32
  }
  func.func @transform_16(%arg0: i32) -> (i32, i32) {
    %c0_i32 = arith.constant 0 : i32
    %c0_i32_0 = arith.constant 0 : i32
    %c0_i32_1 = arith.constant 0 : i32
    return %c0_i32, %c0_i32_0 : i32, i32
  }
  func.func @transform_17(%arg0: i32) -> (i32, i32) {
    %c0_i32 = arith.constant 0 : i32
    %c0_i32_0 = arith.constant 0 : i32
    %c0_i32_1 = arith.constant 0 : i32
    return %c0_i32, %c0_i32_0 : i32, i32
  }
  func.func @transform_18(%arg0: i32) -> (i32, i32) {
    %c0_i32 = arith.constant 0 : i32
    %c0_i32_0 = arith.constant 0 : i32
    %c0_i32_1 = arith.constant 0 : i32
    return %c0_i32, %c0_i32_0 : i32, i32
  }
  func.func @transform_19(%arg0: i32) -> (i32, i32) {
    %c0_i32 = arith.constant 0 : i32
    %c0_i32_0 = arith.constant 0 : i32
    %c0_i32_1 = arith.constant 0 : i32
    return %c0_i32, %c0_i32_0 : i32, i32
  }
  func.func @transform_20(%arg0: i32) -> (i32, i32, i32) {
    %c0_i32 = arith.constant 0 : i32
    %c0_i32_0 = arith.constant 0 : i32
    %c0_i32_1 = arith.constant 0 : i32
    return %arg0, %c0_i32, %c0_i32_0 : i32, i32, i32
  }
  func.func @transform_21(%arg0: i32) -> (i32, i32, i32) {
    %c0_i32 = arith.constant 0 : i32
    %c0_i32_0 = arith.constant 0 : i32
    %c0_i32_1 = arith.constant 0 : i32
    return %arg0, %c0_i32, %c0_i32_0 : i32, i32, i32
  }
  func.func @transform_22(%arg0: i32) -> (i32, i32, i32) {
    %c0_i32 = arith.constant 0 : i32
    %c0_i32_0 = arith.constant 0 : i32
    %c0_i32_1 = arith.constant 0 : i32
    return %arg0, %c0_i32, %c0_i32_0 : i32, i32, i32
  }
}

module attributes {stable_mosaic.version = 11 : i64} {
  func.func @_layernorm_kernel(%arg0: i32, %arg1: memref<8x32xf32, #tpu.memory_space<vmem>>, %arg2: memref<1x32xf32, #tpu.memory_space<vmem>>, %arg3: memref<1x32xf32, #tpu.memory_space<vmem>>, %arg4: memref<8x32xf32, #tpu.memory_space<vmem>>) attributes {dimension_semantics = [#tpu.dimension_semantics<parallel>], iteration_bounds = array<i64: 2>, scalar_prefetch = 0 : i64, scratch_operands = 0 : i64, tpu.core_type = #tpu.core_type<tc>, window_params = [{transform_indices = @transform_0, window_bounds = array<i64: 8, 32>}, {pipeline_mode = #tpu.pipeline_mode<synchronous>, transform_indices = @transform_1, window_bounds = array<i64: 1, 32>}, {pipeline_mode = #tpu.pipeline_mode<synchronous>, transform_indices = @transform_2, window_bounds = array<i64: 1, 32>}, {transform_indices = @transform_3, window_bounds = array<i64: 8, 32>}]} {
    %c0 = arith.constant 0 : index
    %c0_0 = arith.constant 0 : index
    %0 = vector.load %arg1[%c0, %c0_0] : memref<8x32xf32, #tpu.memory_space<vmem>>, vector<8x32xf32>
    %c0_1 = arith.constant 0 : index
    %c0_2 = arith.constant 0 : index
    %1 = vector.load %arg2[%c0_1, %c0_2] : memref<1x32xf32, #tpu.memory_space<vmem>>, vector<1x32xf32>
    %c0_3 = arith.constant 0 : index
    %c0_4 = arith.constant 0 : index
    %2 = vector.load %arg3[%c0_3, %c0_4] : memref<1x32xf32, #tpu.memory_space<vmem>>, vector<1x32xf32>
    %cst = arith.constant dense<0.000000e+00> : vector<8xf32>
    %3 = vector.multi_reduction <add>, %0, %cst [1] : vector<8x32xf32> to vector<8xf32>
    %4 = vector.shape_cast %3 : vector<8xf32> to vector<8x1xf32>
    %cst_5 = arith.constant 3.200000e+01 : f32
    %5 = vector.broadcast %cst_5 : f32 to vector<8x1xf32>
    %6 = arith.divf %4, %5 : vector<8x1xf32>
    %7 = vector.broadcast %6 : vector<8x1xf32> to vector<8x32xf32>
    %8 = arith.subf %0, %7 : vector<8x32xf32>
    %9 = arith.mulf %8, %8 : vector<8x32xf32>
    %cst_6 = arith.constant dense<0.000000e+00> : vector<8xf32>
    %10 = vector.multi_reduction <add>, %9, %cst_6 [1] : vector<8x32xf32> to vector<8xf32>
    %11 = vector.shape_cast %10 : vector<8xf32> to vector<8x1xf32>
    %cst_7 = arith.constant 3.200000e+01 : f32
    %12 = vector.broadcast %cst_7 : f32 to vector<8x1xf32>
    %13 = arith.divf %11, %12 : vector<8x1xf32>
    %cst_8 = arith.constant 9.99999974E-6 : f32
    %14 = vector.broadcast %cst_8 : f32 to vector<8x1xf32>
    %15 = arith.addf %13, %14 : vector<8x1xf32>
    %16 = math.rsqrt %15 : vector<8x1xf32>
    %17 = vector.broadcast %16 : vector<8x1xf32> to vector<8x32xf32>
    %18 = arith.mulf %8, %17 : vector<8x32xf32>
    %19 = vector.broadcast %1 : vector<1x32xf32> to vector<8x32xf32>
    %20 = arith.mulf %18, %19 : vector<8x32xf32>
    %21 = vector.broadcast %2 : vector<1x32xf32> to vector<8x32xf32>
    %22 = arith.addf %20, %21 : vector<8x32xf32>
    %c0_9 = arith.constant 0 : index
    %c0_10 = arith.constant 0 : index
    %23 = vector.load %arg4[%c0_9, %c0_10] : memref<8x32xf32, #tpu.memory_space<vmem>>, vector<8x32xf32>
    tpu.vector_store %arg4[%c0_9, %c0_10], %22 {strides = array<i32>} : memref<8x32xf32, #tpu.memory_space<vmem>>, vector<8x32xf32>,
    return
  }
  func.func @transform_0(%arg0: i32) -> (i32, i32) {
    %c0_i32 = arith.constant 0 : i32
    %c0_i32_0 = arith.constant 0 : i32
    return %arg0, %c0_i32 : i32, i32
  }
  func.func @transform_1(%arg0: i32) -> (i32, i32) {
    %c0_i32 = arith.constant 0 : i32
    %c0_i32_0 = arith.constant 0 : i32
    %c0_i32_1 = arith.constant 0 : i32
    return %c0_i32, %c0_i32_0 : i32, i32
  }
  func.func @transform_2(%arg0: i32) -> (i32, i32) {
    %c0_i32 = arith.constant 0 : i32
    %c0_i32_0 = arith.constant 0 : i32
    %c0_i32_1 = arith.constant 0 : i32
    return %c0_i32, %c0_i32_0 : i32, i32
  }
  func.func @transform_3(%arg0: i32) -> (i32, i32) {
    %c0_i32 = arith.constant 0 : i32
    %c0_i32_0 = arith.constant 0 : i32
    return %arg0, %c0_i32 : i32, i32
  }
}

</mosaic_0001>

<llo_original>
// kernel: transformer_decoder.9
$region0: #{transformer_decoder.9}
  #allocation0 [shape = 'u32[]', space=smem, size = 0x4, offset = 0x4, fixed_abs, tag = 'smem constant byte address 0x4 - core index']
  #allocation1 [shape = 'u32[144,128]{1,0:T(1,128)}', space=vmem, size = 0x12000, scoped, tag = 'internal scratch']
  %s0 = inlined_call_operand.vmem [shape: f32[16,32], index: 0, kind: input, shape index: {}]
  %s1 = inlined_call_operand.vmem [shape: f32[1,32], index: 1, kind: input, shape index: {}]
  %s2 = inlined_call_operand.vmem [shape: f32[1,32], index: 2, kind: input, shape index: {}]
  %s3 = inlined_call_operand.vmem [shape: f32[16,32], index: 3, kind: output, shape index: {}]
  %s4 = sld [smem:[#allocation0]]
  $region45: #{transformer_decoder.9} parent=0
    _
  %s6 = ssub.s32 1, %s4
  %s7 = scalar_select 0, %s6, %s4
  loop: start=0, step=1, limit=4
  $region2: #{transformer_decoder.9} parent=0 // loop_pre_header
    _
  $region3: #{transformer_decoder.9} parent=0 // loop_header
    %s9 = sphi 0, %s13
    %p10 = scmp.ge.s32.totalorder %s9, 4
    %s19 = sphi 0, %s21
    %s22 = sphi 0, %s19
    %s23 = sphi 0, %s22
    %s39 = sphi 0, %s23
    %s43 = sphi 0, %s43
    %s45 = sphi 0, %s43
    %s46 = sphi 0, %s45
    %s60 = sphi 0, %s46
    %s64 = sphi 0, %s64
    %s66 = sphi 0, %s64
    %s67 = sphi 0, %s66
    %s81 = sphi 0, %s67
    %s87 = sphi 0, %s89
    %s90 = sphi 0, %s87
    %s91 = sphi 0, %s90
    %s107 = sphi 0, %s91
  $region4: #{transformer_decoder.9} parent=0 // loop_header_branch
    %12 = sbr.rel (%p10) target = $region8
  $region5: #{transformer_decoder.9} parent=0 // loop_body
    %s14 = ssub.s32 %s9, 1
    %s15 = ssub.s32 %s9, 2
    %s16 = sadd.s32 %s9, 1
    %s17 = ssub.s32 %s9, %s16
    %p18 = scmp.eq.s32.totalorder %s17, 0
    %s20 = sadd.s32 %s19, 1
    %s21 = scalar_select %p18, %s19, %s20
    %p24 = pneg %p18
    %p25 = scmp.eq.s32.totalorder %s9, 1
    %p26 = por %p24, %p25
    %p27 = scmp.ne.s32.totalorder %s19, %s22
    %p28 = scmp.eq.s32.totalorder %s9, 0
    %p29 = por %p27, %p28
    %p30 = scmp.ne.s32.totalorder %s19, %s22
    %p31 = scmp.eq.s32.totalorder %s14, 1
    %p32 = por %p30, %p31
    %p33 = scmp.ne.s32.totalorder %s22, %s23
    %p34 = scmp.eq.s32.totalorder %s14, 0
    %p35 = por %p33, %p34
    %p36 = scmp.ne.s32.totalorder %s22, %s23
    %p37 = scmp.eq.s32.totalorder %s15, 1
    %p38 = por %p36, %p37
    %p40 = scmp.ne.s32.totalorder %s23, %s39
    %p41 = scmp.eq.s32.totalorder %s15, 0
    %p42 = por %p40, %p41
    %s44 = sadd.s32 %s43, 1
    %p47 = scmp.eq.s32.totalorder %s9, 1
    %p48 = scmp.ne.s32.totalorder %s43, %s45
    %p49 = scmp.eq.s32.totalorder %s9, 0
    %p50 = por %p48, %p49
    %p51 = scmp.ne.s32.totalorder %s43, %s45
    %p52 = scmp.eq.s32.totalorder %s14, 1
    %p53 = por %p51, %p52
    %p54 = scmp.ne.s32.totalorder %s45, %s46
    %p55 = scmp.eq.s32.totalorder %s14, 0
    %p56 = por %p54, %p55
    %p57 = scmp.ne.s32.totalorder %s45, %s46
    %p58 = scmp.eq.s32.totalorder %s15, 1
    %p59 = por %p57, %p58
    %p61 = scmp.ne.s32.totalorder %s46, %s60
    %p62 = scmp.eq.s32.totalorder %s15, 0
    %p63 = por %p61, %p62
    %s65 = sadd.s32 %s64, 1
    %p68 = scmp.eq.s32.totalorder %s9, 1
    %p69 = scmp.ne.s32.totalorder %s64, %s66
    %p70 = scmp.eq.s32.totalorder %s9, 0
    %p71 = por %p69, %p70
    %p72 = scmp.ne.s32.totalorder %s64, %s66
    %p73 = scmp.eq.s32.totalorder %s14, 1
    %p74 = por %p72, %p73
    %p75 = scmp.ne.s32.totalorder %s66, %s67
    %p76 = scmp.eq.s32.totalorder %s14, 0
    %p77 = por %p75, %p76
    %p78 = scmp.ne.s32.totalorder %s66, %s67
    %p79 = scmp.eq.s32.totalorder %s15, 1
    %p80 = por %p78, %p79
    %p82 = scmp.ne.s32.totalorder %s67, %s81
    %p83 = scmp.eq.s32.totalorder %s15, 0
    %p84 = por %p82, %p83
    %s85 = ssub.s32 %s9, %s16
    %p86 = scmp.eq.s32.totalorder %s85, 0
    %s88 = sadd.s32 %s87, 1
    %s89 = scalar_select %p86, %s87, %s88
    %p92 = pneg %p86
    %p93 = scmp.eq.s32.totalorder %s9, 1
    %p94 = por %p92, %p93
    %p95 = scmp.ne.s32.totalorder %s87, %s90
    %p96 = scmp.eq.s32.totalorder %s9, 0
    %p97 = por %p95, %p96
    %p98 = scmp.ne.s32.totalorder %s87, %s90
    %p99 = scmp.eq.s32.totalorder %s14, 1
    %p100 = por %p98, %p99
    %p101 = scmp.ne.s32.totalorder %s90, %s91
    %p102 = scmp.eq.s32.totalorder %s14, 0
    %p103 = por %p101, %p102
    %p104 = scmp.ne.s32.totalorder %s90, %s91
    %p105 = scmp.eq.s32.totalorder %s15, 1
    %p106 = por %p104, %p105
    %p108 = scmp.ne.s32.totalorder %s91, %s107
    %p109 = scmp.eq.s32.totalorder %s15, 0
    %p110 = por %p108, %p109
    %p111 = scmp.le.s32.totalorder 1, %s9
    %p112 = scmp.lt.s32.totalorder %s9, 3
    %p113 = pnand %p111, %p112
    %p114 = pneg %p113
    // Predicated region
    $region9: #{transformer_decoder.9} parent=5 // pred_check
      _
    $region10: #{transformer_decoder.9} parent=5 // pred_check_branch
      %116 = sbr.rel (%p113) target = $region12
    $region11: #{transformer_decoder.9} parent=5 // pred_region
      %s117 = ssub.s32 %s9, 1
      // Predicated region
      $region13: #{transformer_decoder.9} parent=11 // pred_check
        %p118 = pneg %p56
      $region14: #{transformer_decoder.9} parent=11 // pred_check_branch
        %120 = sbr.rel (%p118) target = $region16
      $region15: #{transformer_decoder.9} parent=11 // pred_region
        _
      $region16: #{transformer_decoder.9} parent=11 // pred_fallthru
        _
      // Predicated region
      $region17: #{transformer_decoder.9} parent=11 // pred_check
        %p121 = pneg %p77
      $region18: #{transformer_decoder.9} parent=11 // pred_check_branch
        %123 = sbr.rel (%p121) target = $region20
      $region19: #{transformer_decoder.9} parent=11 // pred_region
        _
      $region20: #{transformer_decoder.9} parent=11 // pred_fallthru
        _
    $region12: #{transformer_decoder.9} parent=5 // pred_fallthru
      _
    %p124 = scmp.lt.s32.totalorder %s9, 2
    // Predicated region
    $region21: #{transformer_decoder.9} parent=5 // pred_check
      %p125 = pneg %p124
    $region22: #{transformer_decoder.9} parent=5 // pred_check_branch
      %127 = sbr.rel (%p125) target = $region24
    $region23: #{transformer_decoder.9} parent=5 // pred_region
      // Predicated region
      $region25: #{transformer_decoder.9} parent=23 // pred_check
        %p128 = pneg %p29
      $region26: #{transformer_decoder.9} parent=23 // pred_check_branch
        %130 = sbr.rel (%p128) target = $region28
      $region27: #{transformer_decoder.9} parent=23 // pred_region
        %p131 = scmp.lt.s32.totalorder %s9, 1
        %s132 = scalar_select %p131, %s9, 1
        %s133 = smul.addr %s132, 8
        %s134 = scalar_lea.vmem %s0, %s133
      $region28: #{transformer_decoder.9} parent=23 // pred_fallthru
        _
    $region24: #{transformer_decoder.9} parent=5 // pred_fallthru
      _
    %p135 = scmp.le.s32.totalorder 1, %s9
    %p136 = scmp.lt.s32.totalorder %s9, 3
    %p137 = pnand %p135, %p136
    %p138 = pneg %p137
    // Predicated region
    $region29: #{transformer_decoder.9} parent=5 // pred_check
      _
    $region30: #{transformer_decoder.9} parent=5 // pred_check_branch
      %140 = sbr.rel (%p137) target = $region32
    $region31: #{transformer_decoder.9} parent=5 // pred_region
      %s141 = ssub.s32 %s9, 1
      %p142 = scmp.lt.s32.totalorder %s14, 1
      %s143 = scalar_select %p142, %s14, 1
      %s144 = smul.addr %s143, 8
      %s145 = scalar_lea.vmem %s0, %s144
      %p146 = pneg %p35
      %p147 = pneg %p32
      %p148 = pneg %p56
      %p149 = pneg %p53
      %p150 = pneg %p77
      %p151 = pneg %p74
      %p152 = pneg %p103
      %p153 = pneg %p100
      %p154 = scmp.lt.s32.totalorder %s14, 1
      %s155 = scalar_select %p154, %s14, 1
      %s156 = smul.addr %s155, 8
      %s157 = scalar_lea.vmem %s3, %s156
      %p158 = scmp.lt.s32.totalorder %s14, 1
      %s159 = scalar_select %p158, %s14, 1
      %s160 = smul.addr %s159, 8
      %s161 = scalar_lea.vmem %s0, %s160
      %p162 = scmp.lt.s32.totalorder %s14, 1
      %s163 = scalar_select %p162, %s14, 1
      %s164 = smul.addr %s163, 8
      %s165 = scalar_lea.vmem %s3, %s164
      %v166 = vld [vmem:[%s161] sm:$0xff]
      %v167 = vld [vmem:[%s1] sm:$0x1]
      %v168 = vld [vmem:[%s2] sm:$0x1]
      %vm169 = vcmask 261120
      %v170 = vsel %vm169, %v166, 0.0
      %171 = vadd.xlane.f32.xlu0 %v170
      %v172 = vpop.xlane.xlu0 %171
      %v173 = vrcp.pop 32.0
      %v174 = vmul.f32 %v172, %v173
      %v175 = vsub.f32 %v166, %v174
      %v176 = vmul.f32 %v175, %v175
      %v177 = vsel %vm169, %v176, 0.0
      %178 = vadd.xlane.f32.xlu0 %v177
      %v179 = vpop.xlane.xlu0 %178
      %v180 = vmul.f32 %v179, %v173
      %v181 = vadd.f32 %v180, 1e-05
      %v182 = vrsqrt.pop %v181
      %v183 = vmul.f32 %v175, %v182
      %v185 = vlaneseq
      %v186 = vshrl.u32 %v185, 7
      %v187 = vsub.s32 0, %v186
      %v188 = vrot.slane %v167, %v187
      %v190 = vmul.f32 %v183, %v188
      %v192 = vlaneseq
      %v193 = vshrl.u32 %v192, 7
      %v194 = vsub.s32 0, %v193
      %v195 = vrot.slane %v168, %v194
      %v197 = vadd.f32 %v190, %v195
      %198 = vst.msk [vmem:[%s165] sm:$0xff] %vm169, %v197
      %p199 = scmp.lt.s32.totalorder %s14, 1
      %s200 = scalar_select %p199, %s14, 1
      %s201 = smul.addr %s200, 8
      %s202 = scalar_lea.vmem %s3, %s201
      // Predicated region
      $region33: #{transformer_decoder.9} parent=31 // pred_check
        %p203 = pneg %p100
      $region34: #{transformer_decoder.9} parent=31 // pred_check_branch
        %205 = sbr.rel (%p203) target = $region36
      $region35: #{transformer_decoder.9} parent=31 // pred_region
        _
      $region36: #{transformer_decoder.9} parent=31 // pred_fallthru
        _
    $region32: #{transformer_decoder.9} parent=5 // pred_fallthru
      _
    %p206 = scmp.le.s32.totalorder 2, %s9
    // Predicated region
    $region37: #{transformer_decoder.9} parent=5 // pred_check
      %p207 = pneg %p206
    $region38: #{transformer_decoder.9} parent=5 // pred_check_branch
      %209 = sbr.rel (%p207) target = $region40
    $region39: #{transformer_decoder.9} parent=5 // pred_region
      %s210 = ssub.s32 %s9, 2
      // Predicated region
      $region41: #{transformer_decoder.9} parent=39 // pred_check
        %p211 = pneg %p106
      $region42: #{transformer_decoder.9} parent=39 // pred_check_branch
        %213 = sbr.rel (%p211) target = $region44
      $region43: #{transformer_decoder.9} parent=39 // pred_region
        %p214 = scmp.lt.s32.totalorder %s15, 1
        %s215 = scalar_select %p214, %s15, 1
        %s216 = smul.addr %s215, 8
        %s217 = scalar_lea.vmem %s3, %s216
      $region44: #{transformer_decoder.9} parent=39 // pred_fallthru
        _
    $region40: #{transformer_decoder.9} parent=5 // pred_fallthru
      _
  $region6: #{transformer_decoder.9} parent=0 // loop_footer
    %s13 = sadd.s32 1, %s9
  $region7: #{transformer_decoder.9} parent=0 // loop_footer_branch
    %8 = sbr.rel target = $region3
  $region8: #{transformer_decoder.9} parent=0 // loop_exit
    _

// kernel: transformer_decoder.7
$region0: #{transformer_decoder.7}
  #allocation0 [shape = 'u32[]', space=smem, size = 0x4, offset = 0x4, fixed_abs, tag = 'smem constant byte address 0x4 - core index']
  #allocation1 [shape = 'u32[144,128]{1,0:T(1,128)}', space=vmem, size = 0x12000, scoped, tag = 'internal scratch']
  %s0 = inlined_call_operand.vmem [shape: f32[2,8,32], index: 0, kind: input, shape index: {}]
  %s1 = inlined_call_operand.vmem [shape: f32[2,8,32], index: 1, kind: input, shape index: {}]
  %s2 = inlined_call_operand.vmem [shape: f32[32,64], index: 2, kind: input, shape index: {}]
  %s3 = inlined_call_operand.vmem [shape: f32[1,64], index: 3, kind: input, shape index: {}]
  %s4 = inlined_call_operand.vmem [shape: f32[32,32], index: 4, kind: input, shape index: {}]
  %s5 = inlined_call_operand.vmem [shape: f32[1,32], index: 5, kind: input, shape index: {}]
  %s6 = inlined_call_operand.vmem [shape: f32[32,32], index: 6, kind: input, shape index: {}]
  %s7 = inlined_call_operand.vmem [shape: f32[1,32], index: 7, kind: input, shape index: {}]
  %s8 = inlined_call_operand.vmem [shape: f32[1,32], index: 8, kind: input, shape index: {}]
  %s9 = inlined_call_operand.vmem [shape: f32[1,32], index: 9, kind: input, shape index: {}]
  %s10 = inlined_call_operand.vmem [shape: f32[1,32], index: 10, kind: input, shape index: {}]
  %s11 = inlined_call_operand.vmem [shape: f32[1,32], index: 11, kind: input, shape index: {}]
  %s12 = inlined_call_operand.vmem [shape: f32[32,32], index: 12, kind: input, shape index: {}]
  %s13 = inlined_call_operand.vmem [shape: f32[1,32], index: 13, kind: input, shape index: {}]
  %s14 = inlined_call_operand.vmem [shape: f32[32,32], index: 14, kind: input, shape index: {}]
  %s15 = inlined_call_operand.vmem [shape: f32[1,32], index: 15, kind: input, shape index: {}]
  %s16 = inlined_call_operand.vmem [shape: f32[32,8], index: 16, kind: input, shape index: {}]
  %s17 = inlined_call_operand.vmem [shape: f32[1,8], index: 17, kind: input, shape index: {}]
  %s18 = inlined_call_operand.vmem [shape: f32[32,2], index: 18, kind: input, shape index: {}]
  %s19 = inlined_call_operand.vmem [shape: f32[1,2], index: 19, kind: input, shape index: {}]
  %s20 = inlined_call_operand.vmem [shape: f32[2,8,32], index: 20, kind: output, shape index: {0}]
  %s21 = inlined_call_operand.vmem [shape: f32[2,8,8], index: 21, kind: output, shape index: {1}]
  %s22 = inlined_call_operand.hbm [shape: f32[2,8,2], index: 22, kind: output, shape index: {2}]
  %23 = xla_tuple %s20, %s21, %s22
  %s24 = sld [smem:[#allocation0]]
  $region129: #{transformer_decoder.7} parent=0
    _
  %s26 = ssub.s32 1, %s24
  %s27 = scalar_select 0, %s26, %s24
  $region1: #{transformer_decoder.7} parent=0
    #allocation2 [shape = 'u8[8192]{0}', space=vmem, size = 0x2000, scoped, tag = 'output window, operand 2']
    #allocation3 [shape = 's32[2]{0}', space=sflag, size = 0x8, scoped, tag = 'scoped memory for transformer_decoder.7']
    %28 = vsyncpa [#allocation3], 0
    %s29 = scalar_lea.sflag [#allocation3], 1
    %30 = vsyncpa %s29, 0
    loop: start=0, step=1, limit=4
    $region2: #{transformer_decoder.7} parent=1 // loop_pre_header
      _
    $region3: #{transformer_decoder.7} parent=1 // loop_header
      %s32 = sphi 0, %s36
      %p33 = scmp.ge.s32.totalorder %s32, 4
      %s42 = sphi 0, %s44
      %s45 = sphi 0, %s42
      %s46 = sphi 0, %s45
      %s62 = sphi 0, %s46
      %s68 = sphi 0, %s70
      %s71 = sphi 0, %s68
      %s72 = sphi 0, %s71
      %s88 = sphi 0, %s72
      %s92 = sphi 0, %s92
      %s94 = sphi 0, %s92
      %s95 = sphi 0, %s94
      %s109 = sphi 0, %s95
      %s113 = sphi 0, %s113
      %s115 = sphi 0, %s113
      %s116 = sphi 0, %s115
      %s130 = sphi 0, %s116
      %s134 = sphi 0, %s134
      %s136 = sphi 0, %s134
      %s137 = sphi 0, %s136
      %s151 = sphi 0, %s137
      %s155 = sphi 0, %s155
      %s157 = sphi 0, %s155
      %s158 = sphi 0, %s157
      %s172 = sphi 0, %s158
      %s176 = sphi 0, %s176
      %s178 = sphi 0, %s176
      %s179 = sphi 0, %s178
      %s193 = sphi 0, %s179
      %s197 = sphi 0, %s197
      %s199 = sphi 0, %s197
      %s200 = sphi 0, %s199
      %s214 = sphi 0, %s200
      %s218 = sphi 0, %s218
      %s220 = sphi 0, %s218
      %s221 = sphi 0, %s220
      %s235 = sphi 0, %s221
      %s239 = sphi 0, %s239
      %s241 = sphi 0, %s239
      %s242 = sphi 0, %s241
      %s256 = sphi 0, %s242
      %s260 = sphi 0, %s260
      %s262 = sphi 0, %s260
      %s263 = sphi 0, %s262
      %s277 = sphi 0, %s263
      %s281 = sphi 0, %s281
      %s283 = sphi 0, %s281
      %s284 = sphi 0, %s283
      %s298 = sphi 0, %s284
      %s302 = sphi 0, %s302
      %s304 = sphi 0, %s302
      %s305 = sphi 0, %s304
      %s319 = sphi 0, %s305
      %s323 = sphi 0, %s323
      %s325 = sphi 0, %s323
      %s326 = sphi 0, %s325
      %s340 = sphi 0, %s326
      %s344 = sphi 0, %s344
      %s346 = sphi 0, %s344
      %s347 = sphi 0, %s346
      %s361 = sphi 0, %s347
      %s365 = sphi 0, %s365
      %s367 = sphi 0, %s365
      %s368 = sphi 0, %s367
      %s382 = sphi 0, %s368
      %s386 = sphi 0, %s386
      %s388 = sphi 0, %s386
      %s389 = sphi 0, %s388
      %s403 = sphi 0, %s389
      %s407 = sphi 0, %s407
      %s409 = sphi 0, %s407
      %s410 = sphi 0, %s409
      %s424 = sphi 0, %s410
      %s428 = sphi 0, %s428
      %s430 = sphi 0, %s428
      %s431 = sphi 0, %s430
      %s445 = sphi 0, %s431
      %s449 = sphi 0, %s449
      %s451 = sphi 0, %s449
      %s452 = sphi 0, %s451
      %s466 = sphi 0, %s452
      %s472 = sphi 0, %s474
      %s475 = sphi 0, %s472
      %s476 = sphi 0, %s475
      %s492 = sphi 0, %s476
      %s498 = sphi 0, %s500
      %s501 = sphi 0, %s498
      %s502 = sphi 0, %s501
      %s518 = sphi 0, %s502
      %s524 = sphi 0, %s526
      %s527 = sphi 0, %s524
      %s528 = sphi 0, %s527
      %s544 = sphi 0, %s528
    $region4: #{transformer_decoder.7} parent=1 // loop_header_branch
      %35 = sbr.rel (%p33) target = $region8
    $region5: #{transformer_decoder.7} parent=1 // loop_body
      %s37 = ssub.s32 %s32, 1
      %s38 = ssub.s32 %s32, 2
      %s39 = sadd.s32 %s32, 1
      %s40 = ssub.s32 %s32, %s39
      %p41 = scmp.eq.s32.totalorder %s40, 0
      %s43 = sadd.s32 %s42, 1
      %s44 = scalar_select %p41, %s42, %s43
      %p47 = pneg %p41
      %p48 = scmp.eq.s32.totalorder %s32, 1
      %p49 = por %p47, %p48
      %p50 = scmp.ne.s32.totalorder %s42, %s45
      %p51 = scmp.eq.s32.totalorder %s32, 0
      %p52 = por %p50, %p51
      %p53 = scmp.ne.s32.totalorder %s42, %s45
      %p54 = scmp.eq.s32.totalorder %s37, 1
      %p55 = por %p53, %p54
      %p56 = scmp.ne.s32.totalorder %s45, %s46
      %p57 = scmp.eq.s32.totalorder %s37, 0
      %p58 = por %p56, %p57
      %p59 = scmp.ne.s32.totalorder %s45, %s46
      %p60 = scmp.eq.s32.totalorder %s38, 1
      %p61 = por %p59, %p60
      %p63 = scmp.ne.s32.totalorder %s46, %s62
      %p64 = scmp.eq.s32.totalorder %s38, 0
      %p65 = por %p63, %p64
      %s66 = ssub.s32 %s32, %s39
      %p67 = scmp.eq.s32.totalorder %s66, 0
      %s69 = sadd.s32 %s68, 1
      %s70 = scalar_select %p67, %s68, %s69
      %p73 = pneg %p67
      %p74 = scmp.eq.s32.totalorder %s32, 1
      %p75 = por %p73, %p74
      %p76 = scmp.ne.s32.totalorder %s68, %s71
      %p77 = scmp.eq.s32.totalorder %s32, 0
      %p78 = por %p76, %p77
      %p79 = scmp.ne.s32.totalorder %s68, %s71
      %p80 = scmp.eq.s32.totalorder %s37, 1
      %p81 = por %p79, %p80
      %p82 = scmp.ne.s32.totalorder %s71, %s72
      %p83 = scmp.eq.s32.totalorder %s37, 0
      %p84 = por %p82, %p83
      %p85 = scmp.ne.s32.totalorder %s71, %s72
      %p86 = scmp.eq.s32.totalorder %s38, 1
      %p87 = por %p85, %p86
      %p89 = scmp.ne.s32.totalorder %s72, %s88
      %p90 = scmp.eq.s32.totalorder %s38, 0
      %p91 = por %p89, %p90
      %s93 = sadd.s32 %s92, 1
      %p96 = scmp.eq.s32.totalorder %s32, 1
      %p97 = scmp.ne.s32.totalorder %s92, %s94
      %p98 = scmp.eq.s32.totalorder %s32, 0
      %p99 = por %p97, %p98
      %p100 = scmp.ne.s32.totalorder %s92, %s94
      %p101 = scmp.eq.s32.totalorder %s37, 1
      %p102 = por %p100, %p101
      %p103 = scmp.ne.s32.totalorder %s94, %s95
      %p104 = scmp.eq.s32.totalorder %s37, 0
      %p105 = por %p103, %p104
      %p106 = scmp.ne.s32.totalorder %s94, %s95
      %p107 = scmp.eq.s32.totalorder %s38, 1
      %p108 = por %p106, %p107
      %p110 = scmp.ne.s32.totalorder %s95, %s109
      %p111 = scmp.eq.s32.totalorder %s38, 0
      %p112 = por %p110, %p111
      %s114 = sadd.s32 %s113, 1
      %p117 = scmp.eq.s32.totalorder %s32, 1
      %p118 = scmp.ne.s32.totalorder %s113, %s115
      %p119 = scmp.eq.s32.totalorder %s32, 0
      %p120 = por %p118, %p119
      %p121 = scmp.ne.s32.totalorder %s113, %s115
      %p122 = scmp.eq.s32.totalorder %s37, 1
      %p123 = por %p121, %p122
      %p124 = scmp.ne.s32.totalorder %s115, %s116
      %p125 = scmp.eq.s32.totalorder %s37, 0
      %p126 = por %p124, %p125
      %p127 = scmp.ne.s32.totalorder %s115, %s116
      %p128 = scmp.eq.s32.totalorder %s38, 1
      %p129 = por %p127, %p128
      %p131 = scmp.ne.s32.totalorder %s116, %s130
      %p132 = scmp.eq.s32.totalorder %s38, 0
      %p133 = por %p131, %p132
      %s135 = sadd.s32 %s134, 1
      %p138 = scmp.eq.s32.totalorder %s32, 1
      %p139 = scmp.ne.s32.totalorder %s134, %s136
      %p140 = scmp.eq.s32.totalorder %s32, 0
      %p141 = por %p139, %p140
      %p142 = scmp.ne.s32.totalorder %s134, %s136
      %p143 = scmp.eq.s32.totalorder %s37, 1
      %p144 = por %p142, %p143
      %p145 = scmp.ne.s32.totalorder %s136, %s137
      %p146 = scmp.eq.s32.totalorder %s37, 0
      %p147 = por %p145, %p146
      %p148 = scmp.ne.s32.totalorder %s136, %s137
      %p149 = scmp.eq.s32.totalorder %s38, 1
      %p150 = por %p148, %p149
      %p152 = scmp.ne.s32.totalorder %s137, %s151
      %p153 = scmp.eq.s32.totalorder %s38, 0
      %p154 = por %p152, %p153
      %s156 = sadd.s32 %s155, 1
      %p159 = scmp.eq.s32.totalorder %s32, 1
      %p160 = scmp.ne.s32.totalorder %s155, %s157
      %p161 = scmp.eq.s32.totalorder %s32, 0
      %p162 = por %p160, %p161
      %p163 = scmp.ne.s32.totalorder %s155, %s157
      %p164 = scmp.eq.s32.totalorder %s37, 1
      %p165 = por %p163, %p164
      %p166 = scmp.ne.s32.totalorder %s157, %s158
      %p167 = scmp.eq.s32.totalorder %s37, 0
      %p168 = por %p166, %p167
      %p169 = scmp.ne.s32.totalorder %s157, %s158
      %p170 = scmp.eq.s32.totalorder %s38, 1
      %p171 = por %p169, %p170
      %p173 = scmp.ne.s32.totalorder %s158, %s172
      %p174 = scmp.eq.s32.totalorder %s38, 0
      %p175 = por %p173, %p174
      %s177 = sadd.s32 %s176, 1
      %p180 = scmp.eq.s32.totalorder %s32, 1
      %p181 = scmp.ne.s32.totalorder %s176, %s178
      %p182 = scmp.eq.s32.totalorder %s32, 0
      %p183 = por %p181, %p182
      %p184 = scmp.ne.s32.totalorder %s176, %s178
      %p185 = scmp.eq.s32.totalorder %s37, 1
      %p186 = por %p184, %p185
      %p187 = scmp.ne.s32.totalorder %s178, %s179
      %p188 = scmp.eq.s32.totalorder %s37, 0
      %p189 = por %p187, %p188
      %p190 = scmp.ne.s32.totalorder %s178, %s179
      %p191 = scmp.eq.s32.totalorder %s38, 1
      %p192 = por %p190, %p191
      %p194 = scmp.ne.s32.totalorder %s179, %s193
      %p195 = scmp.eq.s32.totalorder %s38, 0
      %p196 = por %p194, %p195
      %s198 = sadd.s32 %s197, 1
      %p201 = scmp.eq.s32.totalorder %s32, 1
      %p202 = scmp.ne.s32.totalorder %s197, %s199
      %p203 = scmp.eq.s32.totalorder %s32, 0
      %p204 = por %p202, %p203
      %p205 = scmp.ne.s32.totalorder %s197, %s199
      %p206 = scmp.eq.s32.totalorder %s37, 1
      %p207 = por %p205, %p206
      %p208 = scmp.ne.s32.totalorder %s199, %s200
      %p209 = scmp.eq.s32.totalorder %s37, 0
      %p210 = por %p208, %p209
      %p211 = scmp.ne.s32.totalorder %s199, %s200
      %p212 = scmp.eq.s32.totalorder %s38, 1
      %p213 = por %p211, %p212
      %p215 = scmp.ne.s32.totalorder %s200, %s214
      %p216 = scmp.eq.s32.totalorder %s38, 0
      %p217 = por %p215, %p216
      %s219 = sadd.s32 %s218, 1
      %p222 = scmp.eq.s32.totalorder %s32, 1
      %p223 = scmp.ne.s32.totalorder %s218, %s220
      %p224 = scmp.eq.s32.totalorder %s32, 0
      %p225 = por %p223, %p224
      %p226 = scmp.ne.s32.totalorder %s218, %s220
      %p227 = scmp.eq.s32.totalorder %s37, 1
      %p228 = por %p226, %p227
      %p229 = scmp.ne.s32.totalorder %s220, %s221
      %p230 = scmp.eq.s32.totalorder %s37, 0
      %p231 = por %p229, %p230
      %p232 = scmp.ne.s32.totalorder %s220, %s221
      %p233 = scmp.eq.s32.totalorder %s38, 1
      %p234 = por %p232, %p233
      %p236 = scmp.ne.s32.totalorder %s221, %s235
      %p237 = scmp.eq.s32.totalorder %s38, 0
      %p238 = por %p236, %p237
      %s240 = sadd.s32 %s239, 1
      %p243 = scmp.eq.s32.totalorder %s32, 1
      %p244 = scmp.ne.s32.totalorder %s239, %s241
      %p245 = scmp.eq.s32.totalorder %s32, 0
      %p246 = por %p244, %p245
      %p247 = scmp.ne.s32.totalorder %s239, %s241
      %p248 = scmp.eq.s32.totalorder %s37, 1
      %p249 = por %p247, %p248
      %p250 = scmp.ne.s32.totalorder %s241, %s242
      %p251 = scmp.eq.s32.totalorder %s37, 0
      %p252 = por %p250, %p251
      %p253 = scmp.ne.s32.totalorder %s241, %s242
      %p254 = scmp.eq.s32.totalorder %s38, 1
      %p255 = por %p253, %p254
      %p257 = scmp.ne.s32.totalorder %s242, %s256
      %p258 = scmp.eq.s32.totalorder %s38, 0
      %p259 = por %p257, %p258
      %s261 = sadd.s32 %s260, 1
      %p264 = scmp.eq.s32.totalorder %s32, 1
      %p265 = scmp.ne.s32.totalorder %s260, %s262
      %p266 = scmp.eq.s32.totalorder %s32, 0
      %p267 = por %p265, %p266
      %p268 = scmp.ne.s32.totalorder %s260, %s262
      %p269 = scmp.eq.s32.totalorder %s37, 1
      %p270 = por %p268, %p269
      %p271 = scmp.ne.s32.totalorder %s262, %s263
      %p272 = scmp.eq.s32.totalorder %s37, 0
      %p273 = por %p271, %p272
      %p274 = scmp.ne.s32.totalorder %s262, %s263
      %p275 = scmp.eq.s32.totalorder %s38, 1
      %p276 = por %p274, %p275
      %p278 = scmp.ne.s32.totalorder %s263, %s277
      %p279 = scmp.eq.s32.totalorder %s38, 0
      %p280 = por %p278, %p279
      %s282 = sadd.s32 %s281, 1
      %p285 = scmp.eq.s32.totalorder %s32, 1
      %p286 = scmp.ne.s32.totalorder %s281, %s283
      %p287 = scmp.eq.s32.totalorder %s32, 0
      %p288 = por %p286, %p287
      %p289 = scmp.ne.s32.totalorder %s281, %s283
      %p290 = scmp.eq.s32.totalorder %s37, 1
      %p291 = por %p289, %p290
      %p292 = scmp.ne.s32.totalorder %s283, %s284
      %p293 = scmp.eq.s32.totalorder %s37, 0
      %p294 = por %p292, %p293
      %p295 = scmp.ne.s32.totalorder %s283, %s284
      %p296 = scmp.eq.s32.totalorder %s38, 1
      %p297 = por %p295, %p296
      %p299 = scmp.ne.s32.totalorder %s284, %s298
      %p300 = scmp.eq.s32.totalorder %s38, 0
      %p301 = por %p299, %p300
      %s303 = sadd.s32 %s302, 1
      %p306 = scmp.eq.s32.totalorder %s32, 1
      %p307 = scmp.ne.s32.totalorder %s302, %s304
      %p308 = scmp.eq.s32.totalorder %s32, 0
      %p309 = por %p307, %p308
      %p310 = scmp.ne.s32.totalorder %s302, %s304
      %p311 = scmp.eq.s32.totalorder %s37, 1
      %p312 = por %p310, %p311
      %p313 = scmp.ne.s32.totalorder %s304, %s305
      %p314 = scmp.eq.s32.totalorder %s37, 0
      %p315 = por %p313, %p314
      %p316 = scmp.ne.s32.totalorder %s304, %s305
      %p317 = scmp.eq.s32.totalorder %s38, 1
      %p318 = por %p316, %p317
      %p320 = scmp.ne.s32.totalorder %s305, %s319
      %p321 = scmp.eq.s32.totalorder %s38, 0
      %p322 = por %p320, %p321
      %s324 = sadd.s32 %s323, 1
      %p327 = scmp.eq.s32.totalorder %s32, 1
      %p328 = scmp.ne.s32.totalorder %s323, %s325
      %p329 = scmp.eq.s32.totalorder %s32, 0
      %p330 = por %p328, %p329
      %p331 = scmp.ne.s32.totalorder %s323, %s325
      %p332 = scmp.eq.s32.totalorder %s37, 1
      %p333 = por %p331, %p332
      %p334 = scmp.ne.s32.totalorder %s325, %s326
      %p335 = scmp.eq.s32.totalorder %s37, 0
      %p336 = por %p334, %p335
      %p337 = scmp.ne.s32.totalorder %s325, %s326
      %p338 = scmp.eq.s32.totalorder %s38, 1
      %p339 = por %p337, %p338
      %p341 = scmp.ne.s32.totalorder %s326, %s340
      %p342 = scmp.eq.s32.totalorder %s38, 0
      %p343 = por %p341, %p342
      %s345 = sadd.s32 %s344, 1
      %p348 = scmp.eq.s32.totalorder %s32, 1
      %p349 = scmp.ne.s32.totalorder %s344, %s346
      %p350 = scmp.eq.s32.totalorder %s32, 0
      %p351 = por %p349, %p350
      %p352 = scmp.ne.s32.totalorder %s344, %s346
      %p353 = scmp.eq.s32.totalorder %s37, 1
      %p354 = por %p352, %p353
      %p355 = scmp.ne.s32.totalorder %s346, %s347
      %p356 = scmp.eq.s32.totalorder %s37, 0
      %p357 = por %p355, %p356
      %p358 = scmp.ne.s32.totalorder %s346, %s347
      %p359 = scmp.eq.s32.totalorder %s38, 1
      %p360 = por %p358, %p359
      %p362 = scmp.ne.s32.totalorder %s347, %s361
      %p363 = scmp.eq.s32.totalorder %s38, 0
      %p364 = por %p362, %p363
      %s366 = sadd.s32 %s365, 1
      %p369 = scmp.eq.s32.totalorder %s32, 1
      %p370 = scmp.ne.s32.totalorder %s365, %s367
      %p371 = scmp.eq.s32.totalorder %s32, 0
      %p372 = por %p370, %p371
      %p373 = scmp.ne.s32.totalorder %s365, %s367
      %p374 = scmp.eq.s32.totalorder %s37, 1
      %p375 = por %p373, %p374
      %p376 = scmp.ne.s32.totalorder %s367, %s368
      %p377 = scmp.eq.s32.totalorder %s37, 0
      %p378 = por %p376, %p377
      %p379 = scmp.ne.s32.totalorder %s367, %s368
      %p380 = scmp.eq.s32.totalorder %s38, 1
      %p381 = por %p379, %p380
      %p383 = scmp.ne.s32.totalorder %s368, %s382
      %p384 = scmp.eq.s32.totalorder %s38, 0
      %p385 = por %p383, %p384
      %s387 = sadd.s32 %s386, 1
      %p390 = scmp.eq.s32.totalorder %s32, 1
      %p391 = scmp.ne.s32.totalorder %s386, %s388
      %p392 = scmp.eq.s32.totalorder %s32, 0
      %p393 = por %p391, %p392
      %p394 = scmp.ne.s32.totalorder %s386, %s388
      %p395 = scmp.eq.s32.totalorder %s37, 1
      %p396 = por %p394, %p395
      %p397 = scmp.ne.s32.totalorder %s388, %s389
      %p398 = scmp.eq.s32.totalorder %s37, 0
      %p399 = por %p397, %p398
      %p400 = scmp.ne.s32.totalorder %s388, %s389
      %p401 = scmp.eq.s32.totalorder %s38, 1
      %p402 = por %p400, %p401
      %p404 = scmp.ne.s32.totalorder %s389, %s403
      %p405 = scmp.eq.s32.totalorder %s38, 0
      %p406 = por %p404, %p405
      %s408 = sadd.s32 %s407, 1
      %p411 = scmp.eq.s32.totalorder %s32, 1
      %p412 = scmp.ne.s32.totalorder %s407, %s409
      %p413 = scmp.eq.s32.totalorder %s32, 0
      %p414 = por %p412, %p413
      %p415 = scmp.ne.s32.totalorder %s407, %s409
      %p416 = scmp.eq.s32.totalorder %s37, 1
      %p417 = por %p415, %p416
      %p418 = scmp.ne.s32.totalorder %s409, %s410
      %p419 = scmp.eq.s32.totalorder %s37, 0
      %p420 = por %p418, %p419
      %p421 = scmp.ne.s32.totalorder %s409, %s410
      %p422 = scmp.eq.s32.totalorder %s38, 1
      %p423 = por %p421, %p422
      %p425 = scmp.ne.s32.totalorder %s410, %s424
      %p426 = scmp.eq.s32.totalorder %s38, 0
      %p427 = por %p425, %p426
      %s429 = sadd.s32 %s428, 1
      %p432 = scmp.eq.s32.totalorder %s32, 1
      %p433 = scmp.ne.s32.totalorder %s428, %s430
      %p434 = scmp.eq.s32.totalorder %s32, 0
      %p435 = por %p433, %p434
      %p436 = scmp.ne.s32.totalorder %s428, %s430
      %p437 = scmp.eq.s32.totalorder %s37, 1
      %p438 = por %p436, %p437
      %p439 = scmp.ne.s32.totalorder %s430, %s431
      %p440 = scmp.eq.s32.totalorder %s37, 0
      %p441 = por %p439, %p440
      %p442 = scmp.ne.s32.totalorder %s430, %s431
      %p443 = scmp.eq.s32.totalorder %s38, 1
      %p444 = por %p442, %p443
      %p446 = scmp.ne.s32.totalorder %s431, %s445
      %p447 = scmp.eq.s32.totalorder %s38, 0
      %p448 = por %p446, %p447
      %s450 = sadd.s32 %s449, 1
      %p453 = scmp.eq.s32.totalorder %s32, 1
      %p454 = scmp.ne.s32.totalorder %s449, %s451
      %p455 = scmp.eq.s32.totalorder %s32, 0
      %p456 = por %p454, %p455
      %p457 = scmp.ne.s32.totalorder %s449, %s451
      %p458 = scmp.eq.s32.totalorder %s37, 1
      %p459 = por %p457, %p458
      %p460 = scmp.ne.s32.totalorder %s451, %s452
      %p461 = scmp.eq.s32.totalorder %s37, 0
      %p462 = por %p460, %p461
      %p463 = scmp.ne.s32.totalorder %s451, %s452
      %p464 = scmp.eq.s32.totalorder %s38, 1
      %p465 = por %p463, %p464
      %p467 = scmp.ne.s32.totalorder %s452, %s466
      %p468 = scmp.eq.s32.totalorder %s38, 0
      %p469 = por %p467, %p468
      %s470 = ssub.s32 %s32, %s39
      %p471 = scmp.eq.s32.totalorder %s470, 0
      %s473 = sadd.s32 %s472, 1
      %s474 = scalar_select %p471, %s472, %s473
      %p477 = pneg %p471
      %p478 = scmp.eq.s32.totalorder %s32, 1
      %p479 = por %p477, %p478
      %p480 = scmp.ne.s32.totalorder %s472, %s475
      %p481 = scmp.eq.s32.totalorder %s32, 0
      %p482 = por %p480, %p481
      %p483 = scmp.ne.s32.totalorder %s472, %s475
      %p484 = scmp.eq.s32.totalorder %s37, 1
      %p485 = por %p483, %p484
      %p486 = scmp.ne.s32.totalorder %s475, %s476
      %p487 = scmp.eq.s32.totalorder %s37, 0
      %p488 = por %p486, %p487
      %p489 = scmp.ne.s32.totalorder %s475, %s476
      %p490 = scmp.eq.s32.totalorder %s38, 1
      %p491 = por %p489, %p490
      %p493 = scmp.ne.s32.totalorder %s476, %s492
      %p494 = scmp.eq.s32.totalorder %s38, 0
      %p495 = por %p493, %p494
      %s496 = ssub.s32 %s32, %s39
      %p497 = scmp.eq.s32.totalorder %s496, 0
      %s499 = sadd.s32 %s498, 1
      %s500 = scalar_select %p497, %s498, %s499
      %p503 = pneg %p497
      %p504 = scmp.eq.s32.totalorder %s32, 1
      %p505 = por %p503, %p504
      %p506 = scmp.ne.s32.totalorder %s498, %s501
      %p507 = scmp.eq.s32.totalorder %s32, 0
      %p508 = por %p506, %p507
      %p509 = scmp.ne.s32.totalorder %s498, %s501
      %p510 = scmp.eq.s32.totalorder %s37, 1
      %p511 = por %p509, %p510
      %p512 = scmp.ne.s32.totalorder %s501, %s502
      %p513 = scmp.eq.s32.totalorder %s37, 0
      %p514 = por %p512, %p513
      %p515 = scmp.ne.s32.totalorder %s501, %s502
      %p516 = scmp.eq.s32.totalorder %s38, 1
      %p517 = por %p515, %p516
      %p519 = scmp.ne.s32.totalorder %s502, %s518
      %p520 = scmp.eq.s32.totalorder %s38, 0
      %p521 = por %p519, %p520
      %s522 = ssub.s32 %s32, %s39
      %p523 = scmp.eq.s32.totalorder %s522, 0
      %s525 = sadd.s32 %s524, 1
      %s526 = scalar_select %p523, %s524, %s525
      %p529 = pneg %p523
      %p530 = scmp.eq.s32.totalorder %s32, 1
      %p531 = por %p529, %p530
      %p532 = scmp.ne.s32.totalorder %s524, %s527
      %p533 = scmp.eq.s32.totalorder %s32, 0
      %p534 = por %p532, %p533
      %p535 = scmp.ne.s32.totalorder %s524, %s527
      %p536 = scmp.eq.s32.totalorder %s37, 1
      %p537 = por %p535, %p536
      %p538 = scmp.ne.s32.totalorder %s527, %s528
      %p539 = scmp.eq.s32.totalorder %s37, 0
      %p540 = por %p538, %p539
      %p541 = scmp.ne.s32.totalorder %s527, %s528
      %p542 = scmp.eq.s32.totalorder %s38, 1
      %p543 = por %p541, %p542
      %p545 = scmp.ne.s32.totalorder %s528, %s544
      %p546 = scmp.eq.s32.totalorder %s38, 0
      %p547 = por %p545, %p546
      %p548 = scmp.le.s32.totalorder 1, %s32
      %p549 = scmp.lt.s32.totalorder %s32, 3
      %p550 = pnand %p548, %p549
      %p551 = pneg %p550
      // Predicated region
      $region9: #{transformer_decoder.7} parent=5 // pred_check
        _
      $region10: #{transformer_decoder.7} parent=5 // pred_check_branch
        %553 = sbr.rel (%p550) target = $region12
      $region11: #{transformer_decoder.7} parent=5 // pred_region
        %s554 = ssub.s32 %s32, 1
        // Predicated region
        $region13: #{transformer_decoder.7} parent=11 // pred_check
          %p555 = pneg %p105
        $region14: #{transformer_decoder.7} parent=11 // pred_check_branch
          %557 = sbr.rel (%p555) target = $region16
        $region15: #{transformer_decoder.7} parent=11 // pred_region
          _
        $region16: #{transformer_decoder.7} parent=11 // pred_fallthru
          _
        // Predicated region
        $region17: #{transformer_decoder.7} parent=11 // pred_check
          %p558 = pneg %p126
        $region18: #{transformer_decoder.7} parent=11 // pred_check_branch
          %560 = sbr.rel (%p558) target = $region20
        $region19: #{transformer_decoder.7} parent=11 // pred_region
          _
        $region20: #{transformer_decoder.7} parent=11 // pred_fallthru
          _
        // Predicated region
        $region21: #{transformer_decoder.7} parent=11 // pred_check
          %p561 = pneg %p147
        $region22: #{transformer_decoder.7} parent=11 // pred_check_branch
          %563 = sbr.rel (%p561) target = $region24
        $region23: #{transformer_decoder.7} parent=11 // pred_region
          _
        $region24: #{transformer_decoder.7} parent=11 // pred_fallthru
          _
        // Predicated region
        $region25: #{transformer_decoder.7} parent=11 // pred_check
          %p564 = pneg %p168
        $region26: #{transformer_decoder.7} parent=11 // pred_check_branch
          %566 = sbr.rel (%p564) target = $region28
        $region27: #{transformer_decoder.7} parent=11 // pred_region
          _
        $region28: #{transformer_decoder.7} parent=11 // pred_fallthru
          _
        // Predicated region
        $region29: #{transformer_decoder.7} parent=11 // pred_check
          %p567 = pneg %p189
        $region30: #{transformer_decoder.7} parent=11 // pred_check_branch
          %569 = sbr.rel (%p567) target = $region32
        $region31: #{transformer_decoder.7} parent=11 // pred_region
          _
        $region32: #{transformer_decoder.7} parent=11 // pred_fallthru
          _
        // Predicated region
        $region33: #{transformer_decoder.7} parent=11 // pred_check
          %p570 = pneg %p210
        $region34: #{transformer_decoder.7} parent=11 // pred_check_branch
          %572 = sbr.rel (%p570) target = $region36
        $region35: #{transformer_decoder.7} parent=11 // pred_region
          _
        $region36: #{transformer_decoder.7} parent=11 // pred_fallthru
          _
        // Predicated region
        $region37: #{transformer_decoder.7} parent=11 // pred_check
          %p573 = pneg %p231
        $region38: #{transformer_decoder.7} parent=11 // pred_check_branch
          %575 = sbr.rel (%p573) target = $region40
        $region39: #{transformer_decoder.7} parent=11 // pred_region
          _
        $region40: #{transformer_decoder.7} parent=11 // pred_fallthru
          _
        // Predicated region
        $region41: #{transformer_decoder.7} parent=11 // pred_check
          %p576 = pneg %p252
        $region42: #{transformer_decoder.7} parent=11 // pred_check_branch
          %578 = sbr.rel (%p576) target = $region44
        $region43: #{transformer_decoder.7} parent=11 // pred_region
          _
        $region44: #{transformer_decoder.7} parent=11 // pred_fallthru
          _
        // Predicated region
        $region45: #{transformer_decoder.7} parent=11 // pred_check
          %p579 = pneg %p273
        $region46: #{transformer_decoder.7} parent=11 // pred_check_branch
          %581 = sbr.rel (%p579) target = $region48
        $region47: #{transformer_decoder.7} parent=11 // pred_region
          _
        $region48: #{transformer_decoder.7} parent=11 // pred_fallthru
          _
        // Predicated region
        $region49: #{transformer_decoder.7} parent=11 // pred_check
          %p582 = pneg %p294
        $region50: #{transformer_decoder.7} parent=11 // pred_check_branch
          %584 = sbr.rel (%p582) target = $region52
        $region51: #{transformer_decoder.7} parent=11 // pred_region
          _
        $region52: #{transformer_decoder.7} parent=11 // pred_fallthru
          _
        // Predicated region
        $region53: #{transformer_decoder.7} parent=11 // pred_check
          %p585 = pneg %p315
        $region54: #{transformer_decoder.7} parent=11 // pred_check_branch
          %587 = sbr.rel (%p585) target = $region56
        $region55: #{transformer_decoder.7} parent=11 // pred_region
          _
        $region56: #{transformer_decoder.7} parent=11 // pred_fallthru
          _
        // Predicated region
        $region57: #{transformer_decoder.7} parent=11 // pred_check
          %p588 = pneg %p336
        $region58: #{transformer_decoder.7} parent=11 // pred_check_branch
          %590 = sbr.rel (%p588) target = $region60
        $region59: #{transformer_decoder.7} parent=11 // pred_region
          _
        $region60: #{transformer_decoder.7} parent=11 // pred_fallthru
          _
        // Predicated region
        $region61: #{transformer_decoder.7} parent=11 // pred_check
          %p591 = pneg %p357
        $region62: #{transformer_decoder.7} parent=11 // pred_check_branch
          %593 = sbr.rel (%p591) target = $region64
        $region63: #{transformer_decoder.7} parent=11 // pred_region
          _
        $region64: #{transformer_decoder.7} parent=11 // pred_fallthru
          _
        // Predicated region
        $region65: #{transformer_decoder.7} parent=11 // pred_check
          %p594 = pneg %p378
        $region66: #{transformer_decoder.7} parent=11 // pred_check_branch
          %596 = sbr.rel (%p594) target = $region68
        $region67: #{transformer_decoder.7} parent=11 // pred_region
          _
        $region68: #{transformer_decoder.7} parent=11 // pred_fallthru
          _
        // Predicated region
        $region69: #{transformer_decoder.7} parent=11 // pred_check
          %p597 = pneg %p399
        $region70: #{transformer_decoder.7} parent=11 // pred_check_branch
          %599 = sbr.rel (%p597) target = $region72
        $region71: #{transformer_decoder.7} parent=11 // pred_region
          _
        $region72: #{transformer_decoder.7} parent=11 // pred_fallthru
          _
        // Predicated region
        $region73: #{transformer_decoder.7} parent=11 // pred_check
          %p600 = pneg %p420
        $region74: #{transformer_decoder.7} parent=11 // pred_check_branch
          %602 = sbr.rel (%p600) target = $region76
        $region75: #{transformer_decoder.7} parent=11 // pred_region
          _
        $region76: #{transformer_decoder.7} parent=11 // pred_fallthru
          _
        // Predicated region
        $region77: #{transformer_decoder.7} parent=11 // pred_check
          %p603 = pneg %p441
        $region78: #{transformer_decoder.7} parent=11 // pred_check_branch
          %605 = sbr.rel (%p603) target = $region80
        $region79: #{transformer_decoder.7} parent=11 // pred_region
          _
        $region80: #{transformer_decoder.7} parent=11 // pred_fallthru
          _
        // Predicated region
        $region81: #{transformer_decoder.7} parent=11 // pred_check
          %p606 = pneg %p462
        $region82: #{transformer_decoder.7} parent=11 // pred_check_branch
          %608 = sbr.rel (%p606) target = $region84
        $region83: #{transformer_decoder.7} parent=11 // pred_region
          _
        $region84: #{transformer_decoder.7} parent=11 // pred_fallthru
          _
      $region12: #{transformer_decoder.7} parent=5 // pred_fallthru
        _
      %p609 = scmp.lt.s32.totalorder %s32, 2
      // Predicated region
      $region85: #{transformer_decoder.7} parent=5 // pred_check
        %p610 = pneg %p609
      $region86: #{transformer_decoder.7} parent=5 // pred_check_branch
        %612 = sbr.rel (%p610) target = $region88
      $region87: #{transformer_decoder.7} parent=5 // pred_region
        // Predicated region
        $region89: #{transformer_decoder.7} parent=87 // pred_check
          %p613 = pneg %p52
        $region90: #{transformer_decoder.7} parent=87 // pred_check_branch
          %615 = sbr.rel (%p613) target = $region92
        $region91: #{transformer_decoder.7} parent=87 // pred_region
          %p616 = scmp.lt.s32.totalorder %s32, 1
          %s617 = scalar_select %p616, %s32, 1
          %s618 = smul.addr %s617, 8
          %s619 = scalar_lea.vmem %s0, %s618
        $region92: #{transformer_decoder.7} parent=87 // pred_fallthru
          _
        // Predicated region
        $region93: #{transformer_decoder.7} parent=87 // pred_check
          %p620 = pneg %p78
        $region94: #{transformer_decoder.7} parent=87 // pred_check_branch
          %622 = sbr.rel (%p620) target = $region96
        $region95: #{transformer_decoder.7} parent=87 // pred_region
          %p623 = scmp.lt.s32.totalorder %s32, 1
          %s624 = scalar_select %p623, %s32, 1
          %s625 = smul.addr %s624, 8
          %s626 = scalar_lea.vmem %s1, %s625
        $region96: #{transformer_decoder.7} parent=87 // pred_fallthru
          _
      $region88: #{transformer_decoder.7} parent=5 // pred_fallthru
        _
      %p627 = scmp.le.s32.totalorder 1, %s32
      %p628 = scmp.lt.s32.totalorder %s32, 3
      %p629 = pnand %p627, %p628
      %p630 = pneg %p629
      // Predicated region
      $region97: #{transformer_decoder.7} parent=5 // pred_check
        _
      $region98: #{transformer_decoder.7} parent=5 // pred_check_branch
        %632 = sbr.rel (%p629) target = $region100
      $region99: #{transformer_decoder.7} parent=5 // pred_region
        %s633 = ssub.s32 %s32, 1
        %p634 = scmp.lt.s32.totalorder %s37, 1
        %s635 = scalar_select %p634, %s37, 1
        %s636 = smul.addr %s635, 8
        %s637 = scalar_lea.vmem %s0, %s636
        %p638 = pneg %p58
        %p639 = pneg %p55
        %p640 = scmp.lt.s32.totalorder %s37, 1
        %s641 = scalar_select %p640, %s37, 1
        %s642 = smul.addr %s641, 8
        %s643 = scalar_lea.vmem %s1, %s642
        %p644 = pneg %p84
        %p645 = pneg %p81
        %p646 = pneg %p105
        %p647 = pneg %p102
        %p648 = pneg %p126
        %p649 = pneg %p123
        %p650 = pneg %p147
        %p651 = pneg %p144
        %p652 = pneg %p168
        %p653 = pneg %p165
        %p654 = pneg %p189
        %p655 = pneg %p186
        %p656 = pneg %p210
        %p657 = pneg %p207
        %p658 = pneg %p231
        %p659 = pneg %p228
        %p660 = pneg %p252
        %p661 = pneg %p249
        %p662 = pneg %p273
        %p663 = pneg %p270
        %p664 = pneg %p294
        %p665 = pneg %p291
        %p666 = pneg %p315
        %p667 = pneg %p312
        %p668 = pneg %p336
        %p669 = pneg %p333
        %p670 = pneg %p357
        %p671 = pneg %p354
        %p672 = pneg %p378
        %p673 = pneg %p375
        %p674 = pneg %p399
        %p675 = pneg %p396
        %p676 = pneg %p420
        %p677 = pneg %p417
        %p678 = pneg %p441
        %p679 = pneg %p438
        %p680 = pneg %p462
        %p681 = pneg %p459
        %p682 = pneg %p488
        %p683 = pneg %p485
        %p684 = scmp.lt.s32.totalorder %s37, 1
        %s685 = scalar_select %p684, %s37, 1
        %s686 = smul.addr %s685, 8
        %s687 = scalar_lea.vmem %s20, %s686
        %p688 = pneg %p514
        %p689 = pneg %p511
        %p690 = scmp.lt.s32.totalorder %s37, 1
        %s691 = scalar_select %p690, %s37, 1
        %s692 = smul.addr %s691, 8
        %s693 = scalar_lea.vmem %s21, %s692
        %p694 = pneg %p540
        %p695 = pneg %p537
        %s696 = sand.u32 %s527, 1
        %s697 = scalar_lea.sflag [#allocation3], %s696
        %s698 = sand.u32 %s527, 1
        %s699 = smul.addr %s698, 8
        %s700 = scalar_lea.vmem [#allocation2], %s699
        %p701 = scmp.lt.s32.totalorder %s37, 1
        %s702 = scalar_select %p701, %s37, 1
        %s703 = smul.addr %s702, 8
        %s704 = scalar_lea.vmem %s0, %s703
        %p705 = scmp.lt.s32.totalorder %s37, 1
        %s706 = scalar_select %p705, %s37, 1
        %s707 = smul.addr %s706, 8
        %s708 = scalar_lea.vmem %s1, %s707
        %p709 = scmp.lt.s32.totalorder %s37, 1
        %s710 = scalar_select %p709, %s37, 1
        %s711 = smul.addr %s710, 8
        %s712 = scalar_lea.vmem %s20, %s711
        %p713 = scmp.lt.s32.totalorder %s37, 1
        %s714 = scalar_select %p713, %s37, 1
        %s715 = smul.addr %s714, 8
        %s716 = scalar_lea.vmem %s21, %s715
        %v717 = vld [vmem:[%s704] sm:$0xff]
        %v718 = vld [vmem:[%s708] sm:$0xff]
        %v719 = vadd.f32 %v717, %v718
        %v720 = vld [vmem:[%s10] sm:$0x1]
        %v721 = vld [vmem:[%s11] sm:$0x1]
        %vm722 = vcmask 261120
        %v723 = vsel %vm722, %v719, 0.0
        %724 = vadd.xlane.f32.xlu0 %v723
        %v725 = vpop.xlane.xlu0 %724
        %v726 = vrcp.pop 32.0
        %v727 = vmul.f32 %v725, %v726
        %v728 = vsub.f32 %v719, %v727
        %v729 = vmul.f32 %v728, %v728
        %v730 = vsel %vm722, %v729, 0.0
        %731 = vadd.xlane.f32.xlu0 %v730
        %v732 = vpop.xlane.xlu0 %731
        %v733 = vmul.f32 %v732, %v726
        %v734 = vadd.f32 %v733, 1e-05
        %v735 = vrsqrt.pop %v734
        %v736 = vmul.f32 %v728, %v735
        %v738 = vlaneseq
        %v739 = vshrl.u32 %v738, 7
        %v740 = vsub.s32 0, %v739
        %v741 = vrot.slane %v720, %v740
        %v743 = vmul.f32 %v736, %v741
        %v745 = vlaneseq
        %v746 = vshrl.u32 %v745, 7
        %v747 = vsub.s32 0, %v746
        %v748 = vrot.slane %v721, %v747
        %v750 = vadd.f32 %v743, %v748
        %v751 = vld [vmem:[%s12] sm:$0xff]
        %v752 = vld [vmem:[%s12 + $0x8] sm:$0xff]
        %v753 = vld [vmem:[%s12 + $0x10] sm:$0xff]
        %v754 = vld [vmem:[%s12 + $0x18] sm:$0xff]
        %v755 = vld [vmem:[%s13] sm:$0x1]
        %v757 = vlaneseq
        %v758 = vshrl.u32 %v757, 7
        %v759 = vsub.s32 0, %v758
        %v760 = vrot.slane %v755, %v759
        %v763 = vsel %vm722, %v750, 0
        %765 = vmatprep.subr.mxu0 0.0
        %766 = vmatpush1.msra.mxu0 0.0
        %767 = vmatprep.subr.mxu0 0.0
        %768 = vmatpush1.msra.mxu0 0.0
        %769 = vmatprep.subr.mxu0 0.0
        %770 = vmatpush1.msra.mxu0 0.0
        %771 = vmatprep.subr.mxu0 0.0
        %772 = vmatpush1.msra.mxu0 0.0
        %773 = vmatprep.subr.mxu0 0.0
        %774 = vmatpush1.msra.mxu0 0.0
        %775 = vmatprep.subr.mxu0 0.0
        %776 = vmatpush1.msra.mxu0 0.0
        %777 = vmatprep.subr.mxu0 0.0
        %778 = vmatpush1.msra.mxu0 0.0
        %779 = vmatprep.subr.mxu0 0.0
        %780 = vmatpush1.msra.mxu0 0.0
        %781 = vmatprep.subr.mxu0 0.0
        %782 = vmatpush1.msra.mxu0 0.0
        %783 = vmatprep.subr.mxu0 0.0
        %784 = vmatpush1.msra.mxu0 0.0
        %785 = vmatprep.subr.mxu0 0.0
        %786 = vmatpush1.msra.mxu0 0.0
        %787 = vmatprep.subr.mxu0 0.0
        %788 = vmatpush1.msra.mxu0 0.0
        %789 = vmatprep.subr.mxu0 0.0
        %790 = vmatpush1.msra.mxu0 %v754
        %791 = vmatprep.subr.mxu0 0.0
        %792 = vmatpush1.msra.mxu0 %v753
        %793 = vmatprep.subr.mxu0 0.0
        %794 = vmatpush1.msra.mxu0 %v752
        %795 = vmatprep.subr.mxu0 0.0
        %796 = vmatpush1.msra.mxu0 %v751
        %797 = vmatprep.subr.mxu0 0.0
        %798 = vmatpush2.msra.mxu0 0.0
        %799 = vmatprep.subr.mxu0 0.0
        %800 = vmatpush2.msra.mxu0 0.0
        %801 = vmatprep.subr.mxu0 0.0
        %802 = vmatpush2.msra.mxu0 0.0
        %803 = vmatprep.subr.mxu0 0.0
        %804 = vmatpush2.msra.mxu0 0.0
        %805 = vmatprep.subr.mxu0 0.0
        %806 = vmatpush2.msra.mxu0 0.0
        %807 = vmatprep.subr.mxu0 0.0
        %808 = vmatpush2.msra.mxu0 0.0
        %809 = vmatprep.subr.mxu0 0.0
        %810 = vmatpush2.msra.mxu0 0.0
        %811 = vmatprep.subr.mxu0 0.0
        %812 = vmatpush2.msra.mxu0 0.0
        %813 = vmatprep.subr.mxu0 0.0
        %814 = vmatpush2.msra.mxu0 0.0
        %815 = vmatprep.subr.mxu0 0.0
        %816 = vmatpush2.msra.mxu0 0.0
        %817 = vmatprep.subr.mxu0 0.0
        %818 = vmatpush2.msra.mxu0 0.0
        %819 = vmatprep.subr.mxu0 0.0
        %820 = vmatpush2.msra.mxu0 0.0
        %821 = vmatprep.subr.mxu0 0.0
        %822 = vmatpush2.msra.mxu0 0.0
        %823 = vmatprep.subr.mxu0 0.0
        %824 = vmatpush2.msra.mxu0 0.0
        %825 = vmatprep.subr.mxu0 0.0
        %826 = vmatpush2.msra.mxu0 0.0
        %827 = vmatprep.subr.mxu0 0.0
        %828 = vmatpush2.msra.mxu0 0.0
        %829 = vmatprep.mubr.f32.mxu0 0.0
        %830 = vmatmul.mubr.f32.gmra.mxu0 %v763
        %v831 = vpop.f32.mrf.mxu0
        %v832 = vadd.f32 %v760, %v831
        %v833 = vpop.f32.mrf.mxu0
        %834 = vdwg.mxu0
        %v835 = vmax.f32 %v832, 0.0
        %v836 = vld [vmem:[%s14] sm:$0xff]
        %v837 = vld [vmem:[%s14 + $0x8] sm:$0xff]
        %v838 = vld [vmem:[%s14 + $0x10] sm:$0xff]
        %v839 = vld [vmem:[%s14 + $0x18] sm:$0xff]
        %v840 = vld [vmem:[%s15] sm:$0x1]
        %v842 = vlaneseq
        %v843 = vshrl.u32 %v842, 7
        %v844 = vsub.s32 0, %v843
        %v845 = vrot.slane %v840, %v844
        %v848 = vsel %vm722, %v835, 0
        %850 = vmatprep.subr.mxu0 0.0
        %851 = vmatpush1.msra.mxu0 0.0
        %852 = vmatprep.subr.mxu0 0.0
        %853 = vmatpush1.msra.mxu0 0.0
        %854 = vmatprep.subr.mxu0 0.0
        %855 = vmatpush1.msra.mxu0 0.0
        %856 = vmatprep.subr.mxu0 0.0
        %857 = vmatpush1.msra.mxu0 0.0
        %858 = vmatprep.subr.mxu0 0.0
        %859 = vmatpush1.msra.mxu0 0.0
        %860 = vmatprep.subr.mxu0 0.0
        %861 = vmatpush1.msra.mxu0 0.0
        %862 = vmatprep.subr.mxu0 0.0
        %863 = vmatpush1.msra.mxu0 0.0
        %864 = vmatprep.subr.mxu0 0.0
        %865 = vmatpush1.msra.mxu0 0.0
        %866 = vmatprep.subr.mxu0 0.0
        %867 = vmatpush1.msra.mxu0 0.0
        %868 = vmatprep.subr.mxu0 0.0
        %869 = vmatpush1.msra.mxu0 0.0
        %870 = vmatprep.subr.mxu0 0.0
        %871 = vmatpush1.msra.mxu0 0.0
        %872 = vmatprep.subr.mxu0 0.0
        %873 = vmatpush1.msra.mxu0 0.0
        %874 = vmatprep.subr.mxu0 0.0
        %875 = vmatpush1.msra.mxu0 %v839
        %876 = vmatprep.subr.mxu0 0.0
        %877 = vmatpush1.msra.mxu0 %v838
        %878 = vmatprep.subr.mxu0 0.0
        %879 = vmatpush1.msra.mxu0 %v837
        %880 = vmatprep.subr.mxu0 0.0
        %881 = vmatpush1.msra.mxu0 %v836
        %882 = vmatprep.subr.mxu0 0.0
        %883 = vmatpush2.msra.mxu0 0.0
        %884 = vmatprep.subr.mxu0 0.0
        %885 = vmatpush2.msra.mxu0 0.0
        %886 = vmatprep.subr.mxu0 0.0
        %887 = vmatpush2.msra.mxu0 0.0
        %888 = vmatprep.subr.mxu0 0.0
        %889 = vmatpush2.msra.mxu0 0.0
        %890 = vmatprep.subr.mxu0 0.0
        %891 = vmatpush2.msra.mxu0 0.0
        %892 = vmatprep.subr.mxu0 0.0
        %893 = vmatpush2.msra.mxu0 0.0
        %894 = vmatprep.subr.mxu0 0.0
        %895 = vmatpush2.msra.mxu0 0.0
        %896 = vmatprep.subr.mxu0 0.0
        %897 = vmatpush2.msra.mxu0 0.0
        %898 = vmatprep.subr.mxu0 0.0
        %899 = vmatpush2.msra.mxu0 0.0
        %900 = vmatprep.subr.mxu0 0.0
        %901 = vmatpush2.msra.mxu0 0.0
        %902 = vmatprep.subr.mxu0 0.0
        %903 = vmatpush2.msra.mxu0 0.0
        %904 = vmatprep.subr.mxu0 0.0
        %905 = vmatpush2.msra.mxu0 0.0
        %906 = vmatprep.subr.mxu0 0.0
        %907 = vmatpush2.msra.mxu0 0.0
        %908 = vmatprep.subr.mxu0 0.0
        %909 = vmatpush2.msra.mxu0 0.0
        %910 = vmatprep.subr.mxu0 0.0
        %911 = vmatpush2.msra.mxu0 0.0
        %912 = vmatprep.subr.mxu0 0.0
        %913 = vmatpush2.msra.mxu0 0.0
        %914 = vmatprep.mubr.f32.mxu0 0.0
        %915 = vmatmul.mubr.f32.gmra.mxu0 %v848
        %v916 = vpop.f32.mrf.mxu0
        %v917 = vadd.f32 %v845, %v916
        %v918 = vpop.f32.mrf.mxu0
        %919 = vdwg.mxu0
        %v920 = vmax.f32 %v917, 0.0
        %v921 = vld [vmem:[%s16] sm:$0xff]
        %v922 = vld [vmem:[%s16 + $0x8] sm:$0xff]
        %v923 = vld [vmem:[%s16 + $0x10] sm:$0xff]
        %v924 = vld [vmem:[%s16 + $0x18] sm:$0xff]
        %v925 = vld [vmem:[%s17] sm:$0x1]
        %v927 = vlaneseq
        %v928 = vshrl.u32 %v927, 7
        %v929 = vsub.s32 0, %v928
        %v930 = vrot.slane %v925, %v929
        %v933 = vsel %vm722, %v920, 0
        %935 = vmatprep.subr.mxu0 0.0
        %936 = vmatpush1.msra.mxu0 0.0
        %937 = vmatprep.subr.mxu0 0.0
        %938 = vmatpush1.msra.mxu0 0.0
        %939 = vmatprep.subr.mxu0 0.0
        %940 = vmatpush1.msra.mxu0 0.0
        %941 = vmatprep.subr.mxu0 0.0
        %942 = vmatpush1.msra.mxu0 0.0
        %943 = vmatprep.subr.mxu0 0.0
        %944 = vmatpush1.msra.mxu0 0.0
        %945 = vmatprep.subr.mxu0 0.0
        %946 = vmatpush1.msra.mxu0 0.0
        %947 = vmatprep.subr.mxu0 0.0
        %948 = vmatpush1.msra.mxu0 0.0
        %949 = vmatprep.subr.mxu0 0.0
        %950 = vmatpush1.msra.mxu0 0.0
        %951 = vmatprep.subr.mxu0 0.0
        %952 = vmatpush1.msra.mxu0 0.0
        %953 = vmatprep.subr.mxu0 0.0
        %954 = vmatpush1.msra.mxu0 0.0
        %955 = vmatprep.subr.mxu0 0.0
        %956 = vmatpush1.msra.mxu0 0.0
        %957 = vmatprep.subr.mxu0 0.0
        %958 = vmatpush1.msra.mxu0 0.0
        %959 = vmatprep.subr.mxu0 0.0
        %960 = vmatpush1.msra.mxu0 %v924
        %961 = vmatprep.subr.mxu0 0.0
        %962 = vmatpush1.msra.mxu0 %v923
        %963 = vmatprep.subr.mxu0 0.0
        %964 = vmatpush1.msra.mxu0 %v922
        %965 = vmatprep.subr.mxu0 0.0
        %966 = vmatpush1.msra.mxu0 %v921
        %967 = vmatprep.subr.mxu0 0.0
        %968 = vmatpush2.msra.mxu0 0.0
        %969 = vmatprep.subr.mxu0 0.0
        %970 = vmatpush2.msra.mxu0 0.0
        %971 = vmatprep.subr.mxu0 0.0
        %972 = vmatpush2.msra.mxu0 0.0
        %973 = vmatprep.subr.mxu0 0.0
        %974 = vmatpush2.msra.mxu0 0.0
        %975 = vmatprep.subr.mxu0 0.0
        %976 = vmatpush2.msra.mxu0 0.0
        %977 = vmatprep.subr.mxu0 0.0
        %978 = vmatpush2.msra.mxu0 0.0
        %979 = vmatprep.subr.mxu0 0.0
        %980 = vmatpush2.msra.mxu0 0.0
        %981 = vmatprep.subr.mxu0 0.0
        %982 = vmatpush2.msra.mxu0 0.0
        %983 = vmatprep.subr.mxu0 0.0
        %984 = vmatpush2.msra.mxu0 0.0
        %985 = vmatprep.subr.mxu0 0.0
        %986 = vmatpush2.msra.mxu0 0.0
        %987 = vmatprep.subr.mxu0 0.0
        %988 = vmatpush2.msra.mxu0 0.0
        %989 = vmatprep.subr.mxu0 0.0
        %990 = vmatpush2.msra.mxu0 0.0
        %991 = vmatprep.subr.mxu0 0.0
        %992 = vmatpush2.msra.mxu0 0.0
        %993 = vmatprep.subr.mxu0 0.0
        %994 = vmatpush2.msra.mxu0 0.0
        %995 = vmatprep.subr.mxu0 0.0
        %996 = vmatpush2.msra.mxu0 0.0
        %997 = vmatprep.subr.mxu0 0.0
        %998 = vmatpush2.msra.mxu0 0.0
        %999 = vmatprep.mubr.f32.mxu0 0.0
        %1000 = vmatmul.mubr.f32.gmra.mxu0 %v933
        %v1001 = vpop.f32.mrf.mxu0
        %v1002 = vadd.f32 %v930, %v1001
        %v1003 = vpop.f32.mrf.mxu0
        %1004 = vdwg.mxu0
        %vm1005 = vcmask 64512
        %1006 = vst.msk [vmem:[%s716] sm:$0xff] %vm1005, %v1002
        %v1007 = vld [vmem:[%s18] sm:$0xff]
        %v1008 = vld [vmem:[%s18 + $0x8] sm:$0xff]
        %v1009 = vld [vmem:[%s18 + $0x10] sm:$0xff]
        %v1010 = vld [vmem:[%s18 + $0x18] sm:$0xff]
        %v1011 = vld [vmem:[%s19] sm:$0x1]
        %v1013 = vlaneseq
        %v1014 = vshrl.u32 %v1013, 7
        %v1015 = vsub.s32 0, %v1014
        %v1016 = vrot.slane %v1011, %v1015
        %1018 = vmatprep.subr.mxu0 0.0
        %1019 = vmatpush1.msra.mxu0 0.0
        %1020 = vmatprep.subr.mxu0 0.0
        %1021 = vmatpush1.msra.mxu0 0.0
        %1022 = vmatprep.subr.mxu0 0.0
        %1023 = vmatpush1.msra.mxu0 0.0
        %1024 = vmatprep.subr.mxu0 0.0
        %1025 = vmatpush1.msra.mxu0 0.0
        %1026 = vmatprep.subr.mxu0 0.0
        %1027 = vmatpush1.msra.mxu0 0.0
        %1028 = vmatprep.subr.mxu0 0.0
        %1029 = vmatpush1.msra.mxu0 0.0
        %1030 = vmatprep.subr.mxu0 0.0
        %1031 = vmatpush1.msra.mxu0 0.0
        %1032 = vmatprep.subr.mxu0 0.0
        %1033 = vmatpush1.msra.mxu0 0.0
        %1034 = vmatprep.subr.mxu0 0.0
        %1035 = vmatpush1.msra.mxu0 0.0
        %1036 = vmatprep.subr.mxu0 0.0
        %1037 = vmatpush1.msra.mxu0 0.0
        %1038 = vmatprep.subr.mxu0 0.0
        %1039 = vmatpush1.msra.mxu0 0.0
        %1040 = vmatprep.subr.mxu0 0.0
        %1041 = vmatpush1.msra.mxu0 0.0
        %1042 = vmatprep.subr.mxu0 0.0
        %1043 = vmatpush1.msra.mxu0 %v1010
        %1044 = vmatprep.subr.mxu0 0.0
        %1045 = vmatpush1.msra.mxu0 %v1009
        %1046 = vmatprep.subr.mxu0 0.0
        %1047 = vmatpush1.msra.mxu0 %v1008
        %1048 = vmatprep.subr.mxu0 0.0
        %1049 = vmatpush1.msra.mxu0 %v1007
        %1050 = vmatprep.subr.mxu0 0.0
        %1051 = vmatpush2.msra.mxu0 0.0
        %1052 = vmatprep.subr.mxu0 0.0
        %1053 = vmatpush2.msra.mxu0 0.0
        %1054 = vmatprep.subr.mxu0 0.0
        %1055 = vmatpush2.msra.mxu0 0.0
        %1056 = vmatprep.subr.mxu0 0.0
        %1057 = vmatpush2.msra.mxu0 0.0
        %1058 = vmatprep.subr.mxu0 0.0
        %1059 = vmatpush2.msra.mxu0 0.0
        %1060 = vmatprep.subr.mxu0 0.0
        %1061 = vmatpush2.msra.mxu0 0.0
        %1062 = vmatprep.subr.mxu0 0.0
        %1063 = vmatpush2.msra.mxu0 0.0
        %1064 = vmatprep.subr.mxu0 0.0
        %1065 = vmatpush2.msra.mxu0 0.0
        %1066 = vmatprep.subr.mxu0 0.0
        %1067 = vmatpush2.msra.mxu0 0.0
        %1068 = vmatprep.subr.mxu0 0.0
        %1069 = vmatpush2.msra.mxu0 0.0
        %1070 = vmatprep.subr.mxu0 0.0
        %1071 = vmatpush2.msra.mxu0 0.0
        %1072 = vmatprep.subr.mxu0 0.0
        %1073 = vmatpush2.msra.mxu0 0.0
        %1074 = vmatprep.subr.mxu0 0.0
        %1075 = vmatpush2.msra.mxu0 0.0
        %1076 = vmatprep.subr.mxu0 0.0
        %1077 = vmatpush2.msra.mxu0 0.0
        %1078 = vmatprep.subr.mxu0 0.0
        %1079 = vmatpush2.msra.mxu0 0.0
        %1080 = vmatprep.subr.mxu0 0.0
        %1081 = vmatpush2.msra.mxu0 0.0
        %1082 = vmatprep.mubr.f32.mxu0 0.0
        %1083 = vmatmul.mubr.f32.gmra.mxu0 %v763
        %v1084 = vpop.f32.mrf.mxu0
        %v1085 = vadd.f32 %v1016, %v1084
        %v1086 = vpop.f32.mrf.mxu0
        %1087 = vdwg.mxu0
        %vm1088 = vcmask 15360
        %1089 = vst.msk [vmem:[%s700] sm:$0xff] %vm1088, %v1085
        %v1090 = vld [vmem:[%s2] sm:$0xff]
        %v1091 = vld [vmem:[%s2 + $0x8] sm:$0xff]
        %v1092 = vld [vmem:[%s2 + $0x10] sm:$0xff]
        %v1093 = vld [vmem:[%s2 + $0x18] sm:$0xff]
        %v1094 = vld [vmem:[%s3] sm:$0x1]
        %v1096 = vlaneseq
        %v1097 = vshrl.u32 %v1096, 7
        %v1098 = vsub.s32 0, %v1097
        %v1099 = vrot.slane %v1094, %v1098
        %v1102 = vsel %vm722, %v719, 0
        %1104 = vmatprep.subr.mxu0 0.0
        %1105 = vmatpush1.msra.mxu0 0.0
        %1106 = vmatprep.subr.mxu0 0.0
        %1107 = vmatpush1.msra.mxu0 0.0
        %1108 = vmatprep.subr.mxu0 0.0
        %1109 = vmatpush1.msra.mxu0 0.0
        %1110 = vmatprep.subr.mxu0 0.0
        %1111 = vmatpush1.msra.mxu0 0.0
        %1112 = vmatprep.subr.mxu0 0.0
        %1113 = vmatpush1.msra.mxu0 0.0
        %1114 = vmatprep.subr.mxu0 0.0
        %1115 = vmatpush1.msra.mxu0 0.0
        %1116 = vmatprep.subr.mxu0 0.0
        %1117 = vmatpush1.msra.mxu0 0.0
        %1118 = vmatprep.subr.mxu0 0.0
        %1119 = vmatpush1.msra.mxu0 0.0
        %1120 = vmatprep.subr.mxu0 0.0
        %1121 = vmatpush1.msra.mxu0 0.0
        %1122 = vmatprep.subr.mxu0 0.0
        %1123 = vmatpush1.msra.mxu0 0.0
        %1124 = vmatprep.subr.mxu0 0.0
        %1125 = vmatpush1.msra.mxu0 0.0
        %1126 = vmatprep.subr.mxu0 0.0
        %1127 = vmatpush1.msra.mxu0 0.0
        %1128 = vmatprep.subr.mxu0 0.0
        %1129 = vmatpush1.msra.mxu0 %v1093
        %1130 = vmatprep.subr.mxu0 0.0
        %1131 = vmatpush1.msra.mxu0 %v1092
        %1132 = vmatprep.subr.mxu0 0.0
        %1133 = vmatpush1.msra.mxu0 %v1091
        %1134 = vmatprep.subr.mxu0 0.0
        %1135 = vmatpush1.msra.mxu0 %v1090
        %1136 = vmatprep.subr.mxu0 0.0
        %1137 = vmatpush2.msra.mxu0 0.0
        %1138 = vmatprep.subr.mxu0 0.0
        %1139 = vmatpush2.msra.mxu0 0.0
        %1140 = vmatprep.subr.mxu0 0.0
        %1141 = vmatpush2.msra.mxu0 0.0
        %1142 = vmatprep.subr.mxu0 0.0
        %1143 = vmatpush2.msra.mxu0 0.0
        %1144 = vmatprep.subr.mxu0 0.0
        %1145 = vmatpush2.msra.mxu0 0.0
        %1146 = vmatprep.subr.mxu0 0.0
        %1147 = vmatpush2.msra.mxu0 0.0
        %1148 = vmatprep.subr.mxu0 0.0
        %1149 = vmatpush2.msra.mxu0 0.0
        %1150 = vmatprep.subr.mxu0 0.0
        %1151 = vmatpush2.msra.mxu0 0.0
        %1152 = vmatprep.subr.mxu0 0.0
        %1153 = vmatpush2.msra.mxu0 0.0
        %1154 = vmatprep.subr.mxu0 0.0
        %1155 = vmatpush2.msra.mxu0 0.0
        %1156 = vmatprep.subr.mxu0 0.0
        %1157 = vmatpush2.msra.mxu0 0.0
        %1158 = vmatprep.subr.mxu0 0.0
        %1159 = vmatpush2.msra.mxu0 0.0
        %1160 = vmatprep.subr.mxu0 0.0
        %1161 = vmatpush2.msra.mxu0 0.0
        %1162 = vmatprep.subr.mxu0 0.0
        %1163 = vmatpush2.msra.mxu0 0.0
        %1164 = vmatprep.subr.mxu0 0.0
        %1165 = vmatpush2.msra.mxu0 0.0
        %1166 = vmatprep.subr.mxu0 0.0
        %1167 = vmatpush2.msra.mxu0 0.0
        %1168 = vmatprep.mubr.f32.mxu0 0.0
        %1169 = vmatmul.mubr.f32.gmra.mxu0 %v1102
        %v1170 = vpop.f32.mrf.mxu0
        %v1171 = vadd.f32 %v1099, %v1170
        %v1172 = vpop.f32.mrf.mxu0
        %1173 = vdwg.mxu0
        %v1174 = vld [vmem:[%s4] sm:$0xff]
        %v1175 = vld [vmem:[%s4 + $0x8] sm:$0xff]
        %v1176 = vld [vmem:[%s4 + $0x10] sm:$0xff]
        %v1177 = vld [vmem:[%s4 + $0x18] sm:$0xff]
        %v1178 = vld [vmem:[%s5] sm:$0x1]
        %v1180 = vlaneseq
        %v1181 = vshrl.u32 %v1180, 7
        %v1182 = vsub.s32 0, %v1181
        %v1183 = vrot.slane %v1178, %v1182
        %v1186 = vsel %vm722, %v717, 0
        %1188 = vmatprep.subr.mxu0 0.0
        %1189 = vmatpush1.msra.mxu0 0.0
        %1190 = vmatprep.subr.mxu0 0.0
        %1191 = vmatpush1.msra.mxu0 0.0
        %1192 = vmatprep.subr.mxu0 0.0
        %1193 = vmatpush1.msra.mxu0 0.0
        %1194 = vmatprep.subr.mxu0 0.0
        %1195 = vmatpush1.msra.mxu0 0.0
        %1196 = vmatprep.subr.mxu0 0.0
        %1197 = vmatpush1.msra.mxu0 0.0
        %1198 = vmatprep.subr.mxu0 0.0
        %1199 = vmatpush1.msra.mxu0 0.0
        %1200 = vmatprep.subr.mxu0 0.0
        %1201 = vmatpush1.msra.mxu0 0.0
        %1202 = vmatprep.subr.mxu0 0.0
        %1203 = vmatpush1.msra.mxu0 0.0
        %1204 = vmatprep.subr.mxu0 0.0
        %1205 = vmatpush1.msra.mxu0 0.0
        %1206 = vmatprep.subr.mxu0 0.0
        %1207 = vmatpush1.msra.mxu0 0.0
        %1208 = vmatprep.subr.mxu0 0.0
        %1209 = vmatpush1.msra.mxu0 0.0
        %1210 = vmatprep.subr.mxu0 0.0
        %1211 = vmatpush1.msra.mxu0 0.0
        %1212 = vmatprep.subr.mxu0 0.0
        %1213 = vmatpush1.msra.mxu0 %v1177
        %1214 = vmatprep.subr.mxu0 0.0
        %1215 = vmatpush1.msra.mxu0 %v1176
        %1216 = vmatprep.subr.mxu0 0.0
        %1217 = vmatpush1.msra.mxu0 %v1175
        %1218 = vmatprep.subr.mxu0 0.0
        %1219 = vmatpush1.msra.mxu0 %v1174
        %1220 = vmatprep.subr.mxu0 0.0
        %1221 = vmatpush2.msra.mxu0 0.0
        %1222 = vmatprep.subr.mxu0 0.0
        %1223 = vmatpush2.msra.mxu0 0.0
        %1224 = vmatprep.subr.mxu0 0.0
        %1225 = vmatpush2.msra.mxu0 0.0
        %1226 = vmatprep.subr.mxu0 0.0
        %1227 = vmatpush2.msra.mxu0 0.0
        %1228 = vmatprep.subr.mxu0 0.0
        %1229 = vmatpush2.msra.mxu0 0.0
        %1230 = vmatprep.subr.mxu0 0.0
        %1231 = vmatpush2.msra.mxu0 0.0
        %1232 = vmatprep.subr.mxu0 0.0
        %1233 = vmatpush2.msra.mxu0 0.0
        %1234 = vmatprep.subr.mxu0 0.0
        %1235 = vmatpush2.msra.mxu0 0.0
        %1236 = vmatprep.subr.mxu0 0.0
        %1237 = vmatpush2.msra.mxu0 0.0
        %1238 = vmatprep.subr.mxu0 0.0
        %1239 = vmatpush2.msra.mxu0 0.0
        %1240 = vmatprep.subr.mxu0 0.0
        %1241 = vmatpush2.msra.mxu0 0.0
        %1242 = vmatprep.subr.mxu0 0.0
        %1243 = vmatpush2.msra.mxu0 0.0
        %1244 = vmatprep.subr.mxu0 0.0
        %1245 = vmatpush2.msra.mxu0 0.0
        %1246 = vmatprep.subr.mxu0 0.0
        %1247 = vmatpush2.msra.mxu0 0.0
        %1248 = vmatprep.subr.mxu0 0.0
        %1249 = vmatpush2.msra.mxu0 0.0
        %1250 = vmatprep.subr.mxu0 0.0
        %1251 = vmatpush2.msra.mxu0 0.0
        %1252 = vmatprep.mubr.f32.mxu0 0.0
        %1253 = vmatmul.mubr.f32.gmra.mxu0 %v1186
        %v1254 = vpop.f32.mrf.mxu0
        %v1255 = vadd.f32 %v1183, %v1254
        %v1256 = vpop.f32.mrf.mxu0
        %1257 = vdwg.mxu0
        %v1258 = vld [vmem:[%s6] sm:$0xff]
        %v1259 = vld [vmem:[%s6 + $0x8] sm:$0xff]
        %v1260 = vld [vmem:[%s6 + $0x10] sm:$0xff]
        %v1261 = vld [vmem:[%s6 + $0x18] sm:$0xff]
        %v1262 = vmul.f32 %v1171, 0.35355338
        %1264 = vrot.lane.b32.xlu0 %v1171, 96
        %v1265 = vpop.permute.xlu0 %1264
        %v1267 = vsel %vm1005, %v1262, 0
        %v1269 = vsel %vm1005, %v1265, 0
        %1271 = vmatprep.subr.mxu0 0.0
        %1272 = vmatpush1.xpose.msra.mxu0 0.0
        %1273 = vmatprep.subr.mxu0 0.0
        %1274 = vmatpush1.xpose.msra.mxu0 0.0
        %1275 = vmatprep.subr.mxu0 0.0
        %1276 = vmatpush1.xpose.msra.mxu0 0.0
        %1277 = vmatprep.subr.mxu0 0.0
        %1278 = vmatpush1.xpose.msra.mxu0 0.0
        %1279 = vmatprep.subr.mxu0 0.0
        %1280 = vmatpush1.xpose.msra.mxu0 0.0
        %1281 = vmatprep.subr.mxu0 0.0
        %1282 = vmatpush1.xpose.msra.mxu0 0.0
        %1283 = vmatprep.subr.mxu0 0.0
        %1284 = vmatpush1.xpose.msra.mxu0 0.0
        %1285 = vmatprep.subr.mxu0 0.0
        %1286 = vmatpush1.xpose.msra.mxu0 0.0
        %1287 = vmatprep.subr.mxu0 0.0
        %1288 = vmatpush1.xpose.msra.mxu0 0.0
        %1289 = vmatprep.subr.mxu0 0.0
        %1290 = vmatpush1.xpose.msra.mxu0 0.0
        %1291 = vmatprep.subr.mxu0 0.0
        %1292 = vmatpush1.xpose.msra.mxu0 0.0
        %1293 = vmatprep.subr.mxu0 0.0
        %1294 = vmatpush1.xpose.msra.mxu0 0.0
        %1295 = vmatprep.subr.mxu0 0.0
        %1296 = vmatpush1.xpose.msra.mxu0 0.0
        %1297 = vmatprep.subr.mxu0 0.0
        %1298 = vmatpush1.xpose.msra.mxu0 0.0
        %1299 = vmatprep.subr.mxu0 0.0
        %1300 = vmatpush1.xpose.msra.mxu0 0.0
        %1301 = vmatprep.subr.mxu0 0.0
        %1302 = vmatpush1.xpose.msra.mxu0 %v1269
        %1303 = vmatprep.subr.mxu0 0.0
        %1304 = vmatpush2.xpose.msra.mxu0 0.0
        %1305 = vmatprep.subr.mxu0 0.0
        %1306 = vmatpush2.xpose.msra.mxu0 0.0
        %1307 = vmatprep.subr.mxu0 0.0
        %1308 = vmatpush2.xpose.msra.mxu0 0.0
        %1309 = vmatprep.subr.mxu0 0.0
        %1310 = vmatpush2.xpose.msra.mxu0 0.0
        %1311 = vmatprep.subr.mxu0 0.0
        %1312 = vmatpush2.xpose.msra.mxu0 0.0
        %1313 = vmatprep.subr.mxu0 0.0
        %1314 = vmatpush2.xpose.msra.mxu0 0.0
        %1315 = vmatprep.subr.mxu0 0.0
        %1316 = vmatpush2.xpose.msra.mxu0 0.0
        %1317 = vmatprep.subr.mxu0 0.0
        %1318 = vmatpush2.xpose.msra.mxu0 0.0
        %1319 = vmatprep.subr.mxu0 0.0
        %1320 = vmatpush2.xpose.msra.mxu0 0.0
        %1321 = vmatprep.subr.mxu0 0.0
        %1322 = vmatpush2.xpose.msra.mxu0 0.0
        %1323 = vmatprep.subr.mxu0 0.0
        %1324 = vmatpush2.xpose.msra.mxu0 0.0
        %1325 = vmatprep.subr.mxu0 0.0
        %1326 = vmatpush2.xpose.msra.mxu0 0.0
        %1327 = vmatprep.subr.mxu0 0.0
        %1328 = vmatpush2.xpose.msra.mxu0 0.0
        %1329 = vmatprep.subr.mxu0 0.0
        %1330 = vmatpush2.xpose.msra.mxu0 0.0
        %1331 = vmatprep.subr.mxu0 0.0
        %1332 = vmatpush2.xpose.msra.mxu0 0.0
        %1333 = vmatprep.subr.mxu0 0.0
        %1334 = vmatpush2.xpose.msra.mxu0 0.0
        %1335 = vmatprep.mubr.f32.mxu0 0.0
        %1336 = vmatmul.mubr.f32.gmra.mxu0 %v1267
        %v1337 = vpop.f32.mrf.mxu0
        %v1338 = vadd.f32 0.0, %v1337
        %v1339 = vpop.f32.mrf.mxu0
        %1340 = vdwg.mxu0
        %v1341 = vsel %vm1005, %v1338, -inf
        %1342 = vmax.xlane.f32.xlu0 %v1341
        %v1343 = vpop.xlane.xlu0 %1342
        %v1344 = vsub.f32 %v1338, %v1343
        %v1345 = vmul.f32 %v1344, 1.442695
        %v1346 = vpow.pop %v1345
        %v1347 = vsel %vm1005, %v1346, 0.0
        %1348 = vadd.xlane.f32.xlu0 %v1347
        %v1349 = vpop.xlane.xlu0 %1348
        %v1350 = vrcp.pop %v1349
        %v1351 = vmul.f32 %v1346, %v1350
        %v1353 = vsel %vm1005, %v1351, 0
        %1355 = vmatprep.subr.mxu0 0.0
        %1356 = vmatpush1.msra.mxu0 0.0
        %1357 = vmatprep.subr.mxu0 0.0
        %1358 = vmatpush1.msra.mxu0 0.0
        %1359 = vmatprep.subr.mxu0 0.0
        %1360 = vmatpush1.msra.mxu0 0.0
        %1361 = vmatprep.subr.mxu0 0.0
        %1362 = vmatpush1.msra.mxu0 0.0
        %1363 = vmatprep.subr.mxu0 0.0
        %1364 = vmatpush1.msra.mxu0 0.0
        %1365 = vmatprep.subr.mxu0 0.0
        %1366 = vmatpush1.msra.mxu0 0.0
        %1367 = vmatprep.subr.mxu0 0.0
        %1368 = vmatpush1.msra.mxu0 0.0
        %1369 = vmatprep.subr.mxu0 0.0
        %1370 = vmatpush1.msra.mxu0 0.0
        %1371 = vmatprep.subr.mxu0 0.0
        %1372 = vmatpush1.msra.mxu0 0.0
        %1373 = vmatprep.subr.mxu0 0.0
        %1374 = vmatpush1.msra.mxu0 0.0
        %1375 = vmatprep.subr.mxu0 0.0
        %1376 = vmatpush1.msra.mxu0 0.0
        %1377 = vmatprep.subr.mxu0 0.0
        %1378 = vmatpush1.msra.mxu0 0.0
        %1379 = vmatprep.subr.mxu0 0.0
        %1380 = vmatpush1.msra.mxu0 0.0
        %1381 = vmatprep.subr.mxu0 0.0
        %1382 = vmatpush1.msra.mxu0 0.0
        %1383 = vmatprep.subr.mxu0 0.0
        %1384 = vmatpush1.msra.mxu0 0.0
        %1385 = vmatprep.subr.mxu0 0.0
        %1386 = vmatpush1.msra.mxu0 %v1255
        %1387 = vmatprep.subr.mxu0 0.0
        %1388 = vmatpush2.msra.mxu0 0.0
        %1389 = vmatprep.subr.mxu0 0.0
        %1390 = vmatpush2.msra.mxu0 0.0
        %1391 = vmatprep.subr.mxu0 0.0
        %1392 = vmatpush2.msra.mxu0 0.0
        %1393 = vmatprep.subr.mxu0 0.0
        %1394 = vmatpush2.msra.mxu0 0.0
        %1395 = vmatprep.subr.mxu0 0.0
        %1396 = vmatpush2.msra.mxu0 0.0
        %1397 = vmatprep.subr.mxu0 0.0
        %1398 = vmatpush2.msra.mxu0 0.0
        %1399 = vmatprep.subr.mxu0 0.0
        %1400 = vmatpush2.msra.mxu0 0.0
        %1401 = vmatprep.subr.mxu0 0.0
        %1402 = vmatpush2.msra.mxu0 0.0
        %1403 = vmatprep.subr.mxu0 0.0
        %1404 = vmatpush2.msra.mxu0 0.0
        %1405 = vmatprep.subr.mxu0 0.0
        %1406 = vmatpush2.msra.mxu0 0.0
        %1407 = vmatprep.subr.mxu0 0.0
        %1408 = vmatpush2.msra.mxu0 0.0
        %1409 = vmatprep.subr.mxu0 0.0
        %1410 = vmatpush2.msra.mxu0 0.0
        %1411 = vmatprep.subr.mxu0 0.0
        %1412 = vmatpush2.msra.mxu0 0.0
        %1413 = vmatprep.subr.mxu0 0.0
        %1414 = vmatpush2.msra.mxu0 0.0
        %1415 = vmatprep.subr.mxu0 0.0
        %1416 = vmatpush2.msra.mxu0 0.0
        %1417 = vmatprep.subr.mxu0 0.0
        %1418 = vmatpush2.msra.mxu0 0.0
        %1419 = vmatprep.mubr.f32.mxu0 0.0
        %1420 = vmatmul.mubr.f32.gmra.mxu0 %v1353
        %v1421 = vpop.f32.mrf.mxu0
        %v1422 = vadd.f32 0.0, %v1421
        %v1423 = vpop.f32.mrf.mxu0
        %1424 = vdwg.mxu0
        %1425 = vrot.lane.b32.xlu0 %v1262, 120
        %v1426 = vpop.permute.xlu0 %1425
        %1427 = vrot.lane.b32.xlu0 %v1171, 88
        %v1428 = vpop.permute.xlu0 %1427
        %v1429 = vsel %vm1005, %v1426, 0
        %v1431 = vsel %vm1005, %v1428, 0
        %1433 = vmatprep.subr.mxu0 0.0
        %1434 = vmatpush1.xpose.msra.mxu0 0.0
        %1435 = vmatprep.subr.mxu0 0.0
        %1436 = vmatpush1.xpose.msra.mxu0 0.0
        %1437 = vmatprep.subr.mxu0 0.0
        %1438 = vmatpush1.xpose.msra.mxu0 0.0
        %1439 = vmatprep.subr.mxu0 0.0
        %1440 = vmatpush1.xpose.msra.mxu0 0.0
        %1441 = vmatprep.subr.mxu0 0.0
        %1442 = vmatpush1.xpose.msra.mxu0 0.0
        %1443 = vmatprep.subr.mxu0 0.0
        %1444 = vmatpush1.xpose.msra.mxu0 0.0
        %1445 = vmatprep.subr.mxu0 0.0
        %1446 = vmatpush1.xpose.msra.mxu0 0.0
        %1447 = vmatprep.subr.mxu0 0.0
        %1448 = vmatpush1.xpose.msra.mxu0 0.0
        %1449 = vmatprep.subr.mxu0 0.0
        %1450 = vmatpush1.xpose.msra.mxu0 0.0
        %1451 = vmatprep.subr.mxu0 0.0
        %1452 = vmatpush1.xpose.msra.mxu0 0.0
        %1453 = vmatprep.subr.mxu0 0.0
        %1454 = vmatpush1.xpose.msra.mxu0 0.0
        %1455 = vmatprep.subr.mxu0 0.0
        %1456 = vmatpush1.xpose.msra.mxu0 0.0
        %1457 = vmatprep.subr.mxu0 0.0
        %1458 = vmatpush1.xpose.msra.mxu0 0.0
        %1459 = vmatprep.subr.mxu0 0.0
        %1460 = vmatpush1.xpose.msra.mxu0 0.0
        %1461 = vmatprep.subr.mxu0 0.0
        %1462 = vmatpush1.xpose.msra.mxu0 0.0
        %1463 = vmatprep.subr.mxu0 0.0
        %1464 = vmatpush1.xpose.msra.mxu0 %v1431
        %1465 = vmatprep.subr.mxu0 0.0
        %1466 = vmatpush2.xpose.msra.mxu0 0.0
        %1467 = vmatprep.subr.mxu0 0.0
        %1468 = vmatpush2.xpose.msra.mxu0 0.0
        %1469 = vmatprep.subr.mxu0 0.0
        %1470 = vmatpush2.xpose.msra.mxu0 0.0
        %1471 = vmatprep.subr.mxu0 0.0
        %1472 = vmatpush2.xpose.msra.mxu0 0.0
        %1473 = vmatprep.subr.mxu0 0.0
        %1474 = vmatpush2.xpose.msra.mxu0 0.0
        %1475 = vmatprep.subr.mxu0 0.0
        %1476 = vmatpush2.xpose.msra.mxu0 0.0
        %1477 = vmatprep.subr.mxu0 0.0
        %1478 = vmatpush2.xpose.msra.mxu0 0.0
        %1479 = vmatprep.subr.mxu0 0.0
        %1480 = vmatpush2.xpose.msra.mxu0 0.0
        %1481 = vmatprep.subr.mxu0 0.0
        %1482 = vmatpush2.xpose.msra.mxu0 0.0
        %1483 = vmatprep.subr.mxu0 0.0
        %1484 = vmatpush2.xpose.msra.mxu0 0.0
        %1485 = vmatprep.subr.mxu0 0.0
        %1486 = vmatpush2.xpose.msra.mxu0 0.0
        %1487 = vmatprep.subr.mxu0 0.0
        %1488 = vmatpush2.xpose.msra.mxu0 0.0
        %1489 = vmatprep.subr.mxu0 0.0
        %1490 = vmatpush2.xpose.msra.mxu0 0.0
        %1491 = vmatprep.subr.mxu0 0.0
        %1492 = vmatpush2.xpose.msra.mxu0 0.0
        %1493 = vmatprep.subr.mxu0 0.0
        %1494 = vmatpush2.xpose.msra.mxu0 0.0
        %1495 = vmatprep.subr.mxu0 0.0
        %1496 = vmatpush2.xpose.msra.mxu0 0.0
        %1497 = vmatprep.mubr.f32.mxu0 0.0
        %1498 = vmatmul.mubr.f32.gmra.mxu0 %v1429
        %v1499 = vpop.f32.mrf.mxu0
        %v1500 = vadd.f32 0.0, %v1499
        %v1501 = vpop.f32.mrf.mxu0
        %1502 = vdwg.mxu0
        %v1503 = vsel %vm1005, %v1500, -inf
        %1504 = vmax.xlane.f32.xlu0 %v1503
        %v1505 = vpop.xlane.xlu0 %1504
        %v1506 = vsub.f32 %v1500, %v1505
        %v1507 = vmul.f32 %v1506, 1.442695
        %v1508 = vpow.pop %v1507
        %v1509 = vsel %vm1005, %v1508, 0.0
        %1510 = vadd.xlane.f32.xlu0 %v1509
        %v1511 = vpop.xlane.xlu0 %1510
        %v1512 = vrcp.pop %v1511
        %v1513 = vmul.f32 %v1508, %v1512
        %1515 = vrot.lane.b32.xlu0 %v1255, 120
        %v1516 = vpop.permute.xlu0 %1515
        %v1519 = vsel %vm1005, %v1513, 0
        %1521 = vmatprep.subr.mxu0 0.0
        %1522 = vmatpush1.msra.mxu0 0.0
        %1523 = vmatprep.subr.mxu0 0.0
        %1524 = vmatpush1.msra.mxu0 0.0
        %1525 = vmatprep.subr.mxu0 0.0
        %1526 = vmatpush1.msra.mxu0 0.0
        %1527 = vmatprep.subr.mxu0 0.0
        %1528 = vmatpush1.msra.mxu0 0.0
        %1529 = vmatprep.subr.mxu0 0.0
        %1530 = vmatpush1.msra.mxu0 0.0
        %1531 = vmatprep.subr.mxu0 0.0
        %1532 = vmatpush1.msra.mxu0 0.0
        %1533 = vmatprep.subr.mxu0 0.0
        %1534 = vmatpush1.msra.mxu0 0.0
        %1535 = vmatprep.subr.mxu0 0.0
        %1536 = vmatpush1.msra.mxu0 0.0
        %1537 = vmatprep.subr.mxu0 0.0
        %1538 = vmatpush1.msra.mxu0 0.0
        %1539 = vmatprep.subr.mxu0 0.0
        %1540 = vmatpush1.msra.mxu0 0.0
        %1541 = vmatprep.subr.mxu0 0.0
        %1542 = vmatpush1.msra.mxu0 0.0
        %1543 = vmatprep.subr.mxu0 0.0
        %1544 = vmatpush1.msra.mxu0 0.0
        %1545 = vmatprep.subr.mxu0 0.0
        %1546 = vmatpush1.msra.mxu0 0.0
        %1547 = vmatprep.subr.mxu0 0.0
        %1548 = vmatpush1.msra.mxu0 0.0
        %1549 = vmatprep.subr.mxu0 0.0
        %1550 = vmatpush1.msra.mxu0 0.0
        %1551 = vmatprep.subr.mxu0 0.0
        %1552 = vmatpush1.msra.mxu0 %v1516
        %1553 = vmatprep.subr.mxu0 0.0
        %1554 = vmatpush2.msra.mxu0 0.0
        %1555 = vmatprep.subr.mxu0 0.0
        %1556 = vmatpush2.msra.mxu0 0.0
        %1557 = vmatprep.subr.mxu0 0.0
        %1558 = vmatpush2.msra.mxu0 0.0
        %1559 = vmatprep.subr.mxu0 0.0
        %1560 = vmatpush2.msra.mxu0 0.0
        %1561 = vmatprep.subr.mxu0 0.0
        %1562 = vmatpush2.msra.mxu0 0.0
        %1563 = vmatprep.subr.mxu0 0.0
        %1564 = vmatpush2.msra.mxu0 0.0
        %1565 = vmatprep.subr.mxu0 0.0
        %1566 = vmatpush2.msra.mxu0 0.0
        %1567 = vmatprep.subr.mxu0 0.0
        %1568 = vmatpush2.msra.mxu0 0.0
        %1569 = vmatprep.subr.mxu0 0.0
        %1570 = vmatpush2.msra.mxu0 0.0
        %1571 = vmatprep.subr.mxu0 0.0
        %1572 = vmatpush2.msra.mxu0 0.0
        %1573 = vmatprep.subr.mxu0 0.0
        %1574 = vmatpush2.msra.mxu0 0.0
        %1575 = vmatprep.subr.mxu0 0.0
        %1576 = vmatpush2.msra.mxu0 0.0
        %1577 = vmatprep.subr.mxu0 0.0
        %1578 = vmatpush2.msra.mxu0 0.0
        %1579 = vmatprep.subr.mxu0 0.0
        %1580 = vmatpush2.msra.mxu0 0.0
        %1581 = vmatprep.subr.mxu0 0.0
        %1582 = vmatpush2.msra.mxu0 0.0
        %1583 = vmatprep.subr.mxu0 0.0
        %1584 = vmatpush2.msra.mxu0 0.0
        %1585 = vmatprep.mubr.f32.mxu0 0.0
        %1586 = vmatmul.mubr.f32.gmra.mxu0 %v1519
        %v1587 = vpop.f32.mrf.mxu0
        %v1588 = vadd.f32 0.0, %v1587
        %v1589 = vpop.f32.mrf.mxu0
        %1590 = vdwg.mxu0
        %v1592 = vsel %vm1005, %v1588, 0
        %1594 = vmatprep.subr.mxu0 0.0
        %1595 = vmatpush1.msra.mxu0 0.0
        %1596 = vmatprep.subr.mxu0 0.0
        %1597 = vmatpush1.msra.mxu0 0.0
        %1598 = vmatprep.subr.mxu0 0.0
        %1599 = vmatpush1.msra.mxu0 0.0
        %1600 = vmatprep.subr.mxu0 0.0
        %1601 = vmatpush1.msra.mxu0 0.0
        %1602 = vmatprep.subr.mxu0 0.0
        %1603 = vmatpush1.msra.mxu0 0.0
        %1604 = vmatprep.subr.mxu0 0.0
        %1605 = vmatpush1.msra.mxu0 0.0
        %1606 = vmatprep.subr.mxu0 0.0
        %1607 = vmatpush1.msra.mxu0 0.0
        %1608 = vmatprep.subr.mxu0 0.0
        %1609 = vmatpush1.msra.mxu0 0.0
        %1610 = vmatprep.subr.mxu0 0.0
        %1611 = vmatpush1.msra.mxu0 0.0
        %1612 = vmatprep.subr.mxu0 0.0
        %1613 = vmatpush1.msra.mxu0 0.0
        %1614 = vmatprep.subr.mxu0 0.0
        %1615 = vmatpush1.msra.mxu0 0.0
        %1616 = vmatprep.subr.mxu0 0.0
        %1617 = vmatpush1.msra.mxu0 0.0
        %1618 = vmatprep.subr.mxu0 0.0
        %1619 = vmatpush1.msra.mxu0 0.0
        %1620 = vmatprep.subr.mxu0 0.0
        %1621 = vmatpush1.msra.mxu0 0.0
        %1622 = vmatprep.subr.mxu0 0.0
        %1623 = vmatpush1.msra.mxu0 0.0
        %1624 = vmatprep.subr.mxu0 0.0
        %1625 = vmatpush1.msra.mxu0 %v1259
        %1626 = vmatprep.subr.mxu0 0.0
        %1627 = vmatpush2.msra.mxu0 0.0
        %1628 = vmatprep.subr.mxu0 0.0
        %1629 = vmatpush2.msra.mxu0 0.0
        %1630 = vmatprep.subr.mxu0 0.0
        %1631 = vmatpush2.msra.mxu0 0.0
        %1632 = vmatprep.subr.mxu0 0.0
        %1633 = vmatpush2.msra.mxu0 0.0
        %1634 = vmatprep.subr.mxu0 0.0
        %1635 = vmatpush2.msra.mxu0 0.0
        %1636 = vmatprep.subr.mxu0 0.0
        %1637 = vmatpush2.msra.mxu0 0.0
        %1638 = vmatprep.subr.mxu0 0.0
        %1639 = vmatpush2.msra.mxu0 0.0
        %1640 = vmatprep.subr.mxu0 0.0
        %1641 = vmatpush2.msra.mxu0 0.0
        %1642 = vmatprep.subr.mxu0 0.0
        %1643 = vmatpush2.msra.mxu0 0.0
        %1644 = vmatprep.subr.mxu0 0.0
        %1645 = vmatpush2.msra.mxu0 0.0
        %1646 = vmatprep.subr.mxu0 0.0
        %1647 = vmatpush2.msra.mxu0 0.0
        %1648 = vmatprep.subr.mxu0 0.0
        %1649 = vmatpush2.msra.mxu0 0.0
        %1650 = vmatprep.subr.mxu0 0.0
        %1651 = vmatpush2.msra.mxu0 0.0
        %1652 = vmatprep.subr.mxu0 0.0
        %1653 = vmatpush2.msra.mxu0 0.0
        %1654 = vmatprep.subr.mxu0 0.0
        %1655 = vmatpush2.msra.mxu0 0.0
        %1656 = vmatprep.subr.mxu0 0.0
        %1657 = vmatpush2.msra.mxu0 0.0
        %1658 = vmatprep.mubr.f32.mxu0 0.0
        %1659 = vmatmul.mubr.f32.gmra.mxu0 %v1592
        %v1660 = vpop.f32.mrf.mxu0
        %v1661 = vadd.f32 0.0, %v1660
        %v1662 = vpop.f32.mrf.mxu0
        %1663 = vdwg.mxu0
        %v1665 = vsel %vm1005, %v1422, 0
        %1667 = vmatprep.subr.mxu0 0.0
        %1668 = vmatpush1.msra.mxu0 0.0
        %1669 = vmatprep.subr.mxu0 0.0
        %1670 = vmatpush1.msra.mxu0 0.0
        %1671 = vmatprep.subr.mxu0 0.0
        %1672 = vmatpush1.msra.mxu0 0.0
        %1673 = vmatprep.subr.mxu0 0.0
        %1674 = vmatpush1.msra.mxu0 0.0
        %1675 = vmatprep.subr.mxu0 0.0
        %1676 = vmatpush1.msra.mxu0 0.0
        %1677 = vmatprep.subr.mxu0 0.0
        %1678 = vmatpush1.msra.mxu0 0.0
        %1679 = vmatprep.subr.mxu0 0.0
        %1680 = vmatpush1.msra.mxu0 0.0
        %1681 = vmatprep.subr.mxu0 0.0
        %1682 = vmatpush1.msra.mxu0 0.0
        %1683 = vmatprep.subr.mxu0 0.0
        %1684 = vmatpush1.msra.mxu0 0.0
        %1685 = vmatprep.subr.mxu0 0.0
        %1686 = vmatpush1.msra.mxu0 0.0
        %1687 = vmatprep.subr.mxu0 0.0
        %1688 = vmatpush1.msra.mxu0 0.0
        %1689 = vmatprep.subr.mxu0 0.0
        %1690 = vmatpush1.msra.mxu0 0.0
        %1691 = vmatprep.subr.mxu0 0.0
        %1692 = vmatpush1.msra.mxu0 0.0
        %1693 = vmatprep.subr.mxu0 0.0
        %1694 = vmatpush1.msra.mxu0 0.0
        %1695 = vmatprep.subr.mxu0 0.0
        %1696 = vmatpush1.msra.mxu0 0.0
        %1697 = vmatprep.subr.mxu0 0.0
        %1698 = vmatpush1.msra.mxu0 %v1258
        %1699 = vmatprep.subr.mxu0 0.0
        %1700 = vmatpush2.msra.mxu0 0.0
        %1701 = vmatprep.subr.mxu0 0.0
        %1702 = vmatpush2.msra.mxu0 0.0
        %1703 = vmatprep.subr.mxu0 0.0
        %1704 = vmatpush2.msra.mxu0 0.0
        %1705 = vmatprep.subr.mxu0 0.0
        %1706 = vmatpush2.msra.mxu0 0.0
        %1707 = vmatprep.subr.mxu0 0.0
        %1708 = vmatpush2.msra.mxu0 0.0
        %1709 = vmatprep.subr.mxu0 0.0
        %1710 = vmatpush2.msra.mxu0 0.0
        %1711 = vmatprep.subr.mxu0 0.0
        %1712 = vmatpush2.msra.mxu0 0.0
        %1713 = vmatprep.subr.mxu0 0.0
        %1714 = vmatpush2.msra.mxu0 0.0
        %1715 = vmatprep.subr.mxu0 0.0
        %1716 = vmatpush2.msra.mxu0 0.0
        %1717 = vmatprep.subr.mxu0 0.0
        %1718 = vmatpush2.msra.mxu0 0.0
        %1719 = vmatprep.subr.mxu0 0.0
        %1720 = vmatpush2.msra.mxu0 0.0
        %1721 = vmatprep.subr.mxu0 0.0
        %1722 = vmatpush2.msra.mxu0 0.0
        %1723 = vmatprep.subr.mxu0 0.0
        %1724 = vmatpush2.msra.mxu0 0.0
        %1725 = vmatprep.subr.mxu0 0.0
        %1726 = vmatpush2.msra.mxu0 0.0
        %1727 = vmatprep.subr.mxu0 0.0
        %1728 = vmatpush2.msra.mxu0 0.0
        %1729 = vmatprep.subr.mxu0 0.0
        %1730 = vmatpush2.msra.mxu0 0.0
        %1731 = vmatprep.mubr.f32.mxu0 0.0
        %1732 = vmatmul.mubr.f32.gmra.mxu0 %v1665
        %v1733 = vpop.f32.mrf.mxu0
        %v1734 = vadd.f32 %v1661, %v1733
        %v1735 = vpop.f32.mrf.mxu0
        %1736 = vdwg.mxu0
        %1737 = vrot.lane.b32.xlu0 %v1262, 112
        %v1738 = vpop.permute.xlu0 %1737
        %1739 = vrot.lane.b32.xlu0 %v1171, 80
        %v1740 = vpop.permute.xlu0 %1739
        %v1741 = vsel %vm1005, %v1738, 0
        %v1743 = vsel %vm1005, %v1740, 0
        %1745 = vmatprep.subr.mxu0 0.0
        %1746 = vmatpush1.xpose.msra.mxu0 0.0
        %1747 = vmatprep.subr.mxu0 0.0
        %1748 = vmatpush1.xpose.msra.mxu0 0.0
        %1749 = vmatprep.subr.mxu0 0.0
        %1750 = vmatpush1.xpose.msra.mxu0 0.0
        %1751 = vmatprep.subr.mxu0 0.0
        %1752 = vmatpush1.xpose.msra.mxu0 0.0
        %1753 = vmatprep.subr.mxu0 0.0
        %1754 = vmatpush1.xpose.msra.mxu0 0.0
        %1755 = vmatprep.subr.mxu0 0.0
        %1756 = vmatpush1.xpose.msra.mxu0 0.0
        %1757 = vmatprep.subr.mxu0 0.0
        %1758 = vmatpush1.xpose.msra.mxu0 0.0
        %1759 = vmatprep.subr.mxu0 0.0
        %1760 = vmatpush1.xpose.msra.mxu0 0.0
        %1761 = vmatprep.subr.mxu0 0.0
        %1762 = vmatpush1.xpose.msra.mxu0 0.0
        %1763 = vmatprep.subr.mxu0 0.0
        %1764 = vmatpush1.xpose.msra.mxu0 0.0
        %1765 = vmatprep.subr.mxu0 0.0
        %1766 = vmatpush1.xpose.msra.mxu0 0.0
        %1767 = vmatprep.subr.mxu0 0.0
        %1768 = vmatpush1.xpose.msra.mxu0 0.0
        %1769 = vmatprep.subr.mxu0 0.0
        %1770 = vmatpush1.xpose.msra.mxu0 0.0
        %1771 = vmatprep.subr.mxu0 0.0
        %1772 = vmatpush1.xpose.msra.mxu0 0.0
        %1773 = vmatprep.subr.mxu0 0.0
        %1774 = vmatpush1.xpose.msra.mxu0 0.0
        %1775 = vmatprep.subr.mxu0 0.0
        %1776 = vmatpush1.xpose.msra.mxu0 %v1743
        %1777 = vmatprep.subr.mxu0 0.0
        %1778 = vmatpush2.xpose.msra.mxu0 0.0
        %1779 = vmatprep.subr.mxu0 0.0
        %1780 = vmatpush2.xpose.msra.mxu0 0.0
        %1781 = vmatprep.subr.mxu0 0.0
        %1782 = vmatpush2.xpose.msra.mxu0 0.0
        %1783 = vmatprep.subr.mxu0 0.0
        %1784 = vmatpush2.xpose.msra.mxu0 0.0
        %1785 = vmatprep.subr.mxu0 0.0
        %1786 = vmatpush2.xpose.msra.mxu0 0.0
        %1787 = vmatprep.subr.mxu0 0.0
        %1788 = vmatpush2.xpose.msra.mxu0 0.0
        %1789 = vmatprep.subr.mxu0 0.0
        %1790 = vmatpush2.xpose.msra.mxu0 0.0
        %1791 = vmatprep.subr.mxu0 0.0
        %1792 = vmatpush2.xpose.msra.mxu0 0.0
        %1793 = vmatprep.subr.mxu0 0.0
        %1794 = vmatpush2.xpose.msra.mxu0 0.0
        %1795 = vmatprep.subr.mxu0 0.0
        %1796 = vmatpush2.xpose.msra.mxu0 0.0
        %1797 = vmatprep.subr.mxu0 0.0
        %1798 = vmatpush2.xpose.msra.mxu0 0.0
        %1799 = vmatprep.subr.mxu0 0.0
        %1800 = vmatpush2.xpose.msra.mxu0 0.0
        %1801 = vmatprep.subr.mxu0 0.0
        %1802 = vmatpush2.xpose.msra.mxu0 0.0
        %1803 = vmatprep.subr.mxu0 0.0
        %1804 = vmatpush2.xpose.msra.mxu0 0.0
        %1805 = vmatprep.subr.mxu0 0.0
        %1806 = vmatpush2.xpose.msra.mxu0 0.0
        %1807 = vmatprep.subr.mxu0 0.0
        %1808 = vmatpush2.xpose.msra.mxu0 0.0
        %1809 = vmatprep.mubr.f32.mxu0 0.0
        %1810 = vmatmul.mubr.f32.gmra.mxu0 %v1741
        %v1811 = vpop.f32.mrf.mxu0
        %v1812 = vadd.f32 0.0, %v1811
        %v1813 = vpop.f32.mrf.mxu0
        %1814 = vdwg.mxu0
        %v1815 = vsel %vm1005, %v1812, -inf
        %1816 = vmax.xlane.f32.xlu0 %v1815
        %v1817 = vpop.xlane.xlu0 %1816
        %v1818 = vsub.f32 %v1812, %v1817
        %v1819 = vmul.f32 %v1818, 1.442695
        %v1820 = vpow.pop %v1819
        %v1821 = vsel %vm1005, %v1820, 0.0
        %1822 = vadd.xlane.f32.xlu0 %v1821
        %v1823 = vpop.xlane.xlu0 %1822
        %v1824 = vrcp.pop %v1823
        %v1825 = vmul.f32 %v1820, %v1824
        %1826 = vrot.lane.b32.xlu0 %v1255, 112
        %v1827 = vpop.permute.xlu0 %1826
        %v1830 = vsel %vm1005, %v1825, 0
        %1832 = vmatprep.subr.mxu0 0.0
        %1833 = vmatpush1.msra.mxu0 0.0
        %1834 = vmatprep.subr.mxu0 0.0
        %1835 = vmatpush1.msra.mxu0 0.0
        %1836 = vmatprep.subr.mxu0 0.0
        %1837 = vmatpush1.msra.mxu0 0.0
        %1838 = vmatprep.subr.mxu0 0.0
        %1839 = vmatpush1.msra.mxu0 0.0
        %1840 = vmatprep.subr.mxu0 0.0
        %1841 = vmatpush1.msra.mxu0 0.0
        %1842 = vmatprep.subr.mxu0 0.0
        %1843 = vmatpush1.msra.mxu0 0.0
        %1844 = vmatprep.subr.mxu0 0.0
        %1845 = vmatpush1.msra.mxu0 0.0
        %1846 = vmatprep.subr.mxu0 0.0
        %1847 = vmatpush1.msra.mxu0 0.0
        %1848 = vmatprep.subr.mxu0 0.0
        %1849 = vmatpush1.msra.mxu0 0.0
        %1850 = vmatprep.subr.mxu0 0.0
        %1851 = vmatpush1.msra.mxu0 0.0
        %1852 = vmatprep.subr.mxu0 0.0
        %1853 = vmatpush1.msra.mxu0 0.0
        %1854 = vmatprep.subr.mxu0 0.0
        %1855 = vmatpush1.msra.mxu0 0.0
        %1856 = vmatprep.subr.mxu0 0.0
        %1857 = vmatpush1.msra.mxu0 0.0
        %1858 = vmatprep.subr.mxu0 0.0
        %1859 = vmatpush1.msra.mxu0 0.0
        %1860 = vmatprep.subr.mxu0 0.0
        %1861 = vmatpush1.msra.mxu0 0.0
        %1862 = vmatprep.subr.mxu0 0.0
        %1863 = vmatpush1.msra.mxu0 %v1827
        %1864 = vmatprep.subr.mxu0 0.0
        %1865 = vmatpush2.msra.mxu0 0.0
        %1866 = vmatprep.subr.mxu0 0.0
        %1867 = vmatpush2.msra.mxu0 0.0
        %1868 = vmatprep.subr.mxu0 0.0
        %1869 = vmatpush2.msra.mxu0 0.0
        %1870 = vmatprep.subr.mxu0 0.0
        %1871 = vmatpush2.msra.mxu0 0.0
        %1872 = vmatprep.subr.mxu0 0.0
        %1873 = vmatpush2.msra.mxu0 0.0
        %1874 = vmatprep.subr.mxu0 0.0
        %1875 = vmatpush2.msra.mxu0 0.0
        %1876 = vmatprep.subr.mxu0 0.0
        %1877 = vmatpush2.msra.mxu0 0.0
        %1878 = vmatprep.subr.mxu0 0.0
        %1879 = vmatpush2.msra.mxu0 0.0
        %1880 = vmatprep.subr.mxu0 0.0
        %1881 = vmatpush2.msra.mxu0 0.0
        %1882 = vmatprep.subr.mxu0 0.0
        %1883 = vmatpush2.msra.mxu0 0.0
        %1884 = vmatprep.subr.mxu0 0.0
        %1885 = vmatpush2.msra.mxu0 0.0
        %1886 = vmatprep.subr.mxu0 0.0
        %1887 = vmatpush2.msra.mxu0 0.0
        %1888 = vmatprep.subr.mxu0 0.0
        %1889 = vmatpush2.msra.mxu0 0.0
        %1890 = vmatprep.subr.mxu0 0.0
        %1891 = vmatpush2.msra.mxu0 0.0
        %1892 = vmatprep.subr.mxu0 0.0
        %1893 = vmatpush2.msra.mxu0 0.0
        %1894 = vmatprep.subr.mxu0 0.0
        %1895 = vmatpush2.msra.mxu0 0.0
        %1896 = vmatprep.mubr.f32.mxu0 0.0
        %1897 = vmatmul.mubr.f32.gmra.mxu0 %v1830
        %v1898 = vpop.f32.mrf.mxu0
        %v1899 = vadd.f32 0.0, %v1898
        %v1900 = vpop.f32.mrf.mxu0
        %1901 = vdwg.mxu0
        %v1903 = vsel %vm1005, %v1899, 0
        %1905 = vmatprep.subr.mxu0 0.0
        %1906 = vmatpush1.msra.mxu0 0.0
        %1907 = vmatprep.subr.mxu0 0.0
        %1908 = vmatpush1.msra.mxu0 0.0
        %1909 = vmatprep.subr.mxu0 0.0
        %1910 = vmatpush1.msra.mxu0 0.0
        %1911 = vmatprep.subr.mxu0 0.0
        %1912 = vmatpush1.msra.mxu0 0.0
        %1913 = vmatprep.subr.mxu0 0.0
        %1914 = vmatpush1.msra.mxu0 0.0
        %1915 = vmatprep.subr.mxu0 0.0
        %1916 = vmatpush1.msra.mxu0 0.0
        %1917 = vmatprep.subr.mxu0 0.0
        %1918 = vmatpush1.msra.mxu0 0.0
        %1919 = vmatprep.subr.mxu0 0.0
        %1920 = vmatpush1.msra.mxu0 0.0
        %1921 = vmatprep.subr.mxu0 0.0
        %1922 = vmatpush1.msra.mxu0 0.0
        %1923 = vmatprep.subr.mxu0 0.0
        %1924 = vmatpush1.msra.mxu0 0.0
        %1925 = vmatprep.subr.mxu0 0.0
        %1926 = vmatpush1.msra.mxu0 0.0
        %1927 = vmatprep.subr.mxu0 0.0
        %1928 = vmatpush1.msra.mxu0 0.0
        %1929 = vmatprep.subr.mxu0 0.0
        %1930 = vmatpush1.msra.mxu0 0.0
        %1931 = vmatprep.subr.mxu0 0.0
        %1932 = vmatpush1.msra.mxu0 0.0
        %1933 = vmatprep.subr.mxu0 0.0
        %1934 = vmatpush1.msra.mxu0 0.0
        %1935 = vmatprep.subr.mxu0 0.0
        %1936 = vmatpush1.msra.mxu0 %v1260
        %1937 = vmatprep.subr.mxu0 0.0
        %1938 = vmatpush2.msra.mxu0 0.0
        %1939 = vmatprep.subr.mxu0 0.0
        %1940 = vmatpush2.msra.mxu0 0.0
        %1941 = vmatprep.subr.mxu0 0.0
        %1942 = vmatpush2.msra.mxu0 0.0
        %1943 = vmatprep.subr.mxu0 0.0
        %1944 = vmatpush2.msra.mxu0 0.0
        %1945 = vmatprep.subr.mxu0 0.0
        %1946 = vmatpush2.msra.mxu0 0.0
        %1947 = vmatprep.subr.mxu0 0.0
        %1948 = vmatpush2.msra.mxu0 0.0
        %1949 = vmatprep.subr.mxu0 0.0
        %1950 = vmatpush2.msra.mxu0 0.0
        %1951 = vmatprep.subr.mxu0 0.0
        %1952 = vmatpush2.msra.mxu0 0.0
        %1953 = vmatprep.subr.mxu0 0.0
        %1954 = vmatpush2.msra.mxu0 0.0
        %1955 = vmatprep.subr.mxu0 0.0
        %1956 = vmatpush2.msra.mxu0 0.0
        %1957 = vmatprep.subr.mxu0 0.0
        %1958 = vmatpush2.msra.mxu0 0.0
        %1959 = vmatprep.subr.mxu0 0.0
        %1960 = vmatpush2.msra.mxu0 0.0
        %1961 = vmatprep.subr.mxu0 0.0
        %1962 = vmatpush2.msra.mxu0 0.0
        %1963 = vmatprep.subr.mxu0 0.0
        %1964 = vmatpush2.msra.mxu0 0.0
        %1965 = vmatprep.subr.mxu0 0.0
        %1966 = vmatpush2.msra.mxu0 0.0
        %1967 = vmatprep.subr.mxu0 0.0
        %1968 = vmatpush2.msra.mxu0 0.0
        %1969 = vmatprep.mubr.f32.mxu0 0.0
        %1970 = vmatmul.mubr.f32.gmra.mxu0 %v1903
        %v1971 = vpop.f32.mrf.mxu0
        %v1972 = vadd.f32 0.0, %v1971
        %v1973 = vpop.f32.mrf.mxu0
        %1974 = vdwg.mxu0
        %v1975 = vadd.f32 %v1734, %v1972
        %1976 = vrot.lane.b32.xlu0 %v1262, 104
        %v1977 = vpop.permute.xlu0 %1976
        %1978 = vrot.lane.b32.xlu0 %v1171, 72
        %v1979 = vpop.permute.xlu0 %1978
        %v1980 = vsel %vm1005, %v1977, 0
        %v1982 = vsel %vm1005, %v1979, 0
        %1984 = vmatprep.subr.mxu0 0.0
        %1985 = vmatpush1.xpose.msra.mxu0 0.0
        %1986 = vmatprep.subr.mxu0 0.0
        %1987 = vmatpush1.xpose.msra.mxu0 0.0
        %1988 = vmatprep.subr.mxu0 0.0
        %1989 = vmatpush1.xpose.msra.mxu0 0.0
        %1990 = vmatprep.subr.mxu0 0.0
        %1991 = vmatpush1.xpose.msra.mxu0 0.0
        %1992 = vmatprep.subr.mxu0 0.0
        %1993 = vmatpush1.xpose.msra.mxu0 0.0
        %1994 = vmatprep.subr.mxu0 0.0
        %1995 = vmatpush1.xpose.msra.mxu0 0.0
        %1996 = vmatprep.subr.mxu0 0.0
        %1997 = vmatpush1.xpose.msra.mxu0 0.0
        %1998 = vmatprep.subr.mxu0 0.0
        %1999 = vmatpush1.xpose.msra.mxu0 0.0
        %2000 = vmatprep.subr.mxu0 0.0
        %2001 = vmatpush1.xpose.msra.mxu0 0.0
        %2002 = vmatprep.subr.mxu0 0.0
        %2003 = vmatpush1.xpose.msra.mxu0 0.0
        %2004 = vmatprep.subr.mxu0 0.0
        %2005 = vmatpush1.xpose.msra.mxu0 0.0
        %2006 = vmatprep.subr.mxu0 0.0
        %2007 = vmatpush1.xpose.msra.mxu0 0.0
        %2008 = vmatprep.subr.mxu0 0.0
        %2009 = vmatpush1.xpose.msra.mxu0 0.0
        %2010 = vmatprep.subr.mxu0 0.0
        %2011 = vmatpush1.xpose.msra.mxu0 0.0
        %2012 = vmatprep.subr.mxu0 0.0
        %2013 = vmatpush1.xpose.msra.mxu0 0.0
        %2014 = vmatprep.subr.mxu0 0.0
        %2015 = vmatpush1.xpose.msra.mxu0 %v1982
        %2016 = vmatprep.subr.mxu0 0.0
        %2017 = vmatpush2.xpose.msra.mxu0 0.0
        %2018 = vmatprep.subr.mxu0 0.0
        %2019 = vmatpush2.xpose.msra.mxu0 0.0
        %2020 = vmatprep.subr.mxu0 0.0
        %2021 = vmatpush2.xpose.msra.mxu0 0.0
        %2022 = vmatprep.subr.mxu0 0.0
        %2023 = vmatpush2.xpose.msra.mxu0 0.0
        %2024 = vmatprep.subr.mxu0 0.0
        %2025 = vmatpush2.xpose.msra.mxu0 0.0
        %2026 = vmatprep.subr.mxu0 0.0
        %2027 = vmatpush2.xpose.msra.mxu0 0.0
        %2028 = vmatprep.subr.mxu0 0.0
        %2029 = vmatpush2.xpose.msra.mxu0 0.0
        %2030 = vmatprep.subr.mxu0 0.0
        %2031 = vmatpush2.xpose.msra.mxu0 0.0
        %2032 = vmatprep.subr.mxu0 0.0
        %2033 = vmatpush2.xpose.msra.mxu0 0.0
        %2034 = vmatprep.subr.mxu0 0.0
        %2035 = vmatpush2.xpose.msra.mxu0 0.0
        %2036 = vmatprep.subr.mxu0 0.0
        %2037 = vmatpush2.xpose.msra.mxu0 0.0
        %2038 = vmatprep.subr.mxu0 0.0
        %2039 = vmatpush2.xpose.msra.mxu0 0.0
        %2040 = vmatprep.subr.mxu0 0.0
        %2041 = vmatpush2.xpose.msra.mxu0 0.0
        %2042 = vmatprep.subr.mxu0 0.0
        %2043 = vmatpush2.xpose.msra.mxu0 0.0
        %2044 = vmatprep.subr.mxu0 0.0
        %2045 = vmatpush2.xpose.msra.mxu0 0.0
        %2046 = vmatprep.subr.mxu0 0.0
        %2047 = vmatpush2.xpose.msra.mxu0 0.0
        %2048 = vmatprep.mubr.f32.mxu0 0.0
        %2049 = vmatmul.mubr.f32.gmra.mxu0 %v1980
        %v2050 = vpop.f32.mrf.mxu0
        %v2051 = vadd.f32 0.0, %v2050
        %v2052 = vpop.f32.mrf.mxu0
        %2053 = vdwg.mxu0
        %v2054 = vsel %vm1005, %v2051, -inf
        %2055 = vmax.xlane.f32.xlu0 %v2054
        %v2056 = vpop.xlane.xlu0 %2055
        %v2057 = vsub.f32 %v2051, %v2056
        %v2058 = vmul.f32 %v2057, 1.442695
        %v2059 = vpow.pop %v2058
        %v2060 = vsel %vm1005, %v2059, 0.0
        %2061 = vadd.xlane.f32.xlu0 %v2060
        %v2062 = vpop.xlane.xlu0 %2061
        %v2063 = vrcp.pop %v2062
        %v2064 = vmul.f32 %v2059, %v2063
        %2065 = vrot.lane.b32.xlu0 %v1255, 104
        %v2066 = vpop.permute.xlu0 %2065
        %v2069 = vsel %vm1005, %v2064, 0
        %2071 = vmatprep.subr.mxu0 0.0
        %2072 = vmatpush1.msra.mxu0 0.0
        %2073 = vmatprep.subr.mxu0 0.0
        %2074 = vmatpush1.msra.mxu0 0.0
        %2075 = vmatprep.subr.mxu0 0.0
        %2076 = vmatpush1.msra.mxu0 0.0
        %2077 = vmatprep.subr.mxu0 0.0
        %2078 = vmatpush1.msra.mxu0 0.0
        %2079 = vmatprep.subr.mxu0 0.0
        %2080 = vmatpush1.msra.mxu0 0.0
        %2081 = vmatprep.subr.mxu0 0.0
        %2082 = vmatpush1.msra.mxu0 0.0
        %2083 = vmatprep.subr.mxu0 0.0
        %2084 = vmatpush1.msra.mxu0 0.0
        %2085 = vmatprep.subr.mxu0 0.0
        %2086 = vmatpush1.msra.mxu0 0.0
        %2087 = vmatprep.subr.mxu0 0.0
        %2088 = vmatpush1.msra.mxu0 0.0
        %2089 = vmatprep.subr.mxu0 0.0
        %2090 = vmatpush1.msra.mxu0 0.0
        %2091 = vmatprep.subr.mxu0 0.0
        %2092 = vmatpush1.msra.mxu0 0.0
        %2093 = vmatprep.subr.mxu0 0.0
        %2094 = vmatpush1.msra.mxu0 0.0
        %2095 = vmatprep.subr.mxu0 0.0
        %2096 = vmatpush1.msra.mxu0 0.0
        %2097 = vmatprep.subr.mxu0 0.0
        %2098 = vmatpush1.msra.mxu0 0.0
        %2099 = vmatprep.subr.mxu0 0.0
        %2100 = vmatpush1.msra.mxu0 0.0
        %2101 = vmatprep.subr.mxu0 0.0
        %2102 = vmatpush1.msra.mxu0 %v2066
        %2103 = vmatprep.subr.mxu0 0.0
        %2104 = vmatpush2.msra.mxu0 0.0
        %2105 = vmatprep.subr.mxu0 0.0
        %2106 = vmatpush2.msra.mxu0 0.0
        %2107 = vmatprep.subr.mxu0 0.0
        %2108 = vmatpush2.msra.mxu0 0.0
        %2109 = vmatprep.subr.mxu0 0.0
        %2110 = vmatpush2.msra.mxu0 0.0
        %2111 = vmatprep.subr.mxu0 0.0
        %2112 = vmatpush2.msra.mxu0 0.0
        %2113 = vmatprep.subr.mxu0 0.0
        %2114 = vmatpush2.msra.mxu0 0.0
        %2115 = vmatprep.subr.mxu0 0.0
        %2116 = vmatpush2.msra.mxu0 0.0
        %2117 = vmatprep.subr.mxu0 0.0
        %2118 = vmatpush2.msra.mxu0 0.0
        %2119 = vmatprep.subr.mxu0 0.0
        %2120 = vmatpush2.msra.mxu0 0.0
        %2121 = vmatprep.subr.mxu0 0.0
        %2122 = vmatpush2.msra.mxu0 0.0
        %2123 = vmatprep.subr.mxu0 0.0
        %2124 = vmatpush2.msra.mxu0 0.0
        %2125 = vmatprep.subr.mxu0 0.0
        %2126 = vmatpush2.msra.mxu0 0.0
        %2127 = vmatprep.subr.mxu0 0.0
        %2128 = vmatpush2.msra.mxu0 0.0
        %2129 = vmatprep.subr.mxu0 0.0
        %2130 = vmatpush2.msra.mxu0 0.0
        %2131 = vmatprep.subr.mxu0 0.0
        %2132 = vmatpush2.msra.mxu0 0.0
        %2133 = vmatprep.subr.mxu0 0.0
        %2134 = vmatpush2.msra.mxu0 0.0
        %2135 = vmatprep.mubr.f32.mxu0 0.0
        %2136 = vmatmul.mubr.f32.gmra.mxu0 %v2069
        %v2137 = vpop.f32.mrf.mxu0
        %v2138 = vadd.f32 0.0, %v2137
        %v2139 = vpop.f32.mrf.mxu0
        %2140 = vdwg.mxu0
        %v2142 = vsel %vm1005, %v2138, 0
        %2144 = vmatprep.subr.mxu0 0.0
        %2145 = vmatpush1.msra.mxu0 0.0
        %2146 = vmatprep.subr.mxu0 0.0
        %2147 = vmatpush1.msra.mxu0 0.0
        %2148 = vmatprep.subr.mxu0 0.0
        %2149 = vmatpush1.msra.mxu0 0.0
        %2150 = vmatprep.subr.mxu0 0.0
        %2151 = vmatpush1.msra.mxu0 0.0
        %2152 = vmatprep.subr.mxu0 0.0
        %2153 = vmatpush1.msra.mxu0 0.0
        %2154 = vmatprep.subr.mxu0 0.0
        %2155 = vmatpush1.msra.mxu0 0.0
        %2156 = vmatprep.subr.mxu0 0.0
        %2157 = vmatpush1.msra.mxu0 0.0
        %2158 = vmatprep.subr.mxu0 0.0
        %2159 = vmatpush1.msra.mxu0 0.0
        %2160 = vmatprep.subr.mxu0 0.0
        %2161 = vmatpush1.msra.mxu0 0.0
        %2162 = vmatprep.subr.mxu0 0.0
        %2163 = vmatpush1.msra.mxu0 0.0
        %2164 = vmatprep.subr.mxu0 0.0
        %2165 = vmatpush1.msra.mxu0 0.0
        %2166 = vmatprep.subr.mxu0 0.0
        %2167 = vmatpush1.msra.mxu0 0.0
        %2168 = vmatprep.subr.mxu0 0.0
        %2169 = vmatpush1.msra.mxu0 0.0
        %2170 = vmatprep.subr.mxu0 0.0
        %2171 = vmatpush1.msra.mxu0 0.0
        %2172 = vmatprep.subr.mxu0 0.0
        %2173 = vmatpush1.msra.mxu0 0.0
        %2174 = vmatprep.subr.mxu0 0.0
        %2175 = vmatpush1.msra.mxu0 %v1261
        %2176 = vmatprep.subr.mxu0 0.0
        %2177 = vmatpush2.msra.mxu0 0.0
        %2178 = vmatprep.subr.mxu0 0.0
        %2179 = vmatpush2.msra.mxu0 0.0
        %2180 = vmatprep.subr.mxu0 0.0
        %2181 = vmatpush2.msra.mxu0 0.0
        %2182 = vmatprep.subr.mxu0 0.0
        %2183 = vmatpush2.msra.mxu0 0.0
        %2184 = vmatprep.subr.mxu0 0.0
        %2185 = vmatpush2.msra.mxu0 0.0
        %2186 = vmatprep.subr.mxu0 0.0
        %2187 = vmatpush2.msra.mxu0 0.0
        %2188 = vmatprep.subr.mxu0 0.0
        %2189 = vmatpush2.msra.mxu0 0.0
        %2190 = vmatprep.subr.mxu0 0.0
        %2191 = vmatpush2.msra.mxu0 0.0
        %2192 = vmatprep.subr.mxu0 0.0
        %2193 = vmatpush2.msra.mxu0 0.0
        %2194 = vmatprep.subr.mxu0 0.0
        %2195 = vmatpush2.msra.mxu0 0.0
        %2196 = vmatprep.subr.mxu0 0.0
        %2197 = vmatpush2.msra.mxu0 0.0
        %2198 = vmatprep.subr.mxu0 0.0
        %2199 = vmatpush2.msra.mxu0 0.0
        %2200 = vmatprep.subr.mxu0 0.0
        %2201 = vmatpush2.msra.mxu0 0.0
        %2202 = vmatprep.subr.mxu0 0.0
        %2203 = vmatpush2.msra.mxu0 0.0
        %2204 = vmatprep.subr.mxu0 0.0
        %2205 = vmatpush2.msra.mxu0 0.0
        %2206 = vmatprep.subr.mxu0 0.0
        %2207 = vmatpush2.msra.mxu0 0.0
        %2208 = vmatprep.mubr.f32.mxu0 0.0
        %2209 = vmatmul.mubr.f32.gmra.mxu0 %v2142
        %v2210 = vpop.f32.mrf.mxu0
        %v2211 = vadd.f32 0.0, %v2210
        %v2212 = vpop.f32.mrf.mxu0
        %2213 = vdwg.mxu0
        %v2214 = vadd.f32 %v1975, %v2211
        %v2215 = vld [vmem:[%s7] sm:$0x1]
        %v2217 = vlaneseq
        %v2218 = vshrl.u32 %v2217, 7
        %v2219 = vsub.s32 0, %v2218
        %v2220 = vrot.slane %v2215, %v2219
        %v2222 = vadd.f32 %v2214, %v2220
        %v2223 = vadd.f32 %v717, %v2222
        %v2224 = vld [vmem:[%s8] sm:$0x1]
        %v2225 = vld [vmem:[%s9] sm:$0x1]
        %v2226 = vsel %vm722, %v2223, 0.0
        %2227 = vadd.xlane.f32.xlu0 %v2226
        %v2228 = vpop.xlane.xlu0 %2227
        %v2229 = vmul.f32 %v2228, %v726
        %v2230 = vsub.f32 %v2223, %v2229
        %v2231 = vmul.f32 %v2230, %v2230
        %v2232 = vsel %vm722, %v2231, 0.0
        %2233 = vadd.xlane.f32.xlu0 %v2232
        %v2234 = vpop.xlane.xlu0 %2233
        %v2235 = vmul.f32 %v2234, %v726
        %v2236 = vadd.f32 %v2235, 1e-05
        %v2237 = vrsqrt.pop %v2236
        %v2238 = vmul.f32 %v2230, %v2237
        %v2240 = vlaneseq
        %v2241 = vshrl.u32 %v2240, 7
        %v2242 = vsub.s32 0, %v2241
        %v2243 = vrot.slane %v2224, %v2242
        %v2245 = vmul.f32 %v2238, %v2243
        %v2247 = vlaneseq
        %v2248 = vshrl.u32 %v2247, 7
        %v2249 = vsub.s32 0, %v2248
        %v2250 = vrot.slane %v2225, %v2249
        %v2252 = vadd.f32 %v2245, %v2250
        %2253 = vst.msk [vmem:[%s712] sm:$0xff] %vm722, %v2252
        %p2254 = scmp.lt.s32.totalorder %s37, 1
        %s2255 = scalar_select %p2254, %s37, 1
        %s2256 = smul.addr %s2255, 8
        %s2257 = scalar_lea.vmem %s20, %s2256
        %p2258 = scmp.lt.s32.totalorder %s37, 1
        %s2259 = scalar_select %p2258, %s37, 1
        %s2260 = smul.addr %s2259, 8
        %s2261 = scalar_lea.vmem %s21, %s2260
        %s2262 = sand.u32 %s527, 1
        %s2263 = scalar_lea.sflag [#allocation3], %s2262
        %s2264 = sand.u32 %s527, 1
        %s2265 = smul.addr %s2264, 8
        %s2266 = scalar_lea.vmem [#allocation2], %s2265
        // Predicated region
        $region101: #{transformer_decoder.7} parent=99 // pred_check
          %p2267 = pneg %p485
        $region102: #{transformer_decoder.7} parent=99 // pred_check_branch
          %2269 = sbr.rel (%p2267) target = $region104
        $region103: #{transformer_decoder.7} parent=99 // pred_region
          _
        $region104: #{transformer_decoder.7} parent=99 // pred_fallthru
          _
        // Predicated region
        $region105: #{transformer_decoder.7} parent=99 // pred_check
          %p2270 = pneg %p511
        $region106: #{transformer_decoder.7} parent=99 // pred_check_branch
          %2272 = sbr.rel (%p2270) target = $region108
        $region107: #{transformer_decoder.7} parent=99 // pred_region
          _
        $region108: #{transformer_decoder.7} parent=99 // pred_fallthru
          _
        // Predicated region
        $region109: #{transformer_decoder.7} parent=99 // pred_check
          %p2273 = pneg %p537
        $region110: #{transformer_decoder.7} parent=99 // pred_check_branch
          %2275 = sbr.rel (%p2273) target = $region112
        $region111: #{transformer_decoder.7} parent=99 // pred_region
          %s2277 = ssub.s32 128, 128
          %2278 = vsyncadd %s2263, %s2277
          %s2279 = smul.addr %s37, 128
          %s2280 = scalar_lea.hbm %s22, %s2279
          %s2282 = sshll.u32 %s2266, 4
          %s2283 = int_to_ptr.vmem [resolvable:$true] %s2282
          %2285 = dma.vmem_to_hbm [thread:$0]  %s2283, 128, %s2280, %s2263
        $region112: #{transformer_decoder.7} parent=99 // pred_fallthru
          _
      $region100: #{transformer_decoder.7} parent=5 // pred_fallthru
        _
      %p2286 = scmp.le.s32.totalorder 2, %s32
      // Predicated region
      $region113: #{transformer_decoder.7} parent=5 // pred_check
        %p2287 = pneg %p2286
      $region114: #{transformer_decoder.7} parent=5 // pred_check_branch
        %2289 = sbr.rel (%p2287) target = $region116
      $region115: #{transformer_decoder.7} parent=5 // pred_region
        %s2290 = ssub.s32 %s32, 2
        // Predicated region
        $region117: #{transformer_decoder.7} parent=115 // pred_check
          %p2291 = pneg %p491
        $region118: #{transformer_decoder.7} parent=115 // pred_check_branch
          %2293 = sbr.rel (%p2291) target = $region120
        $region119: #{transformer_decoder.7} parent=115 // pred_region
          %p2294 = scmp.lt.s32.totalorder %s38, 1
          %s2295 = scalar_select %p2294, %s38, 1
          %s2296 = smul.addr %s2295, 8
          %s2297 = scalar_lea.vmem %s20, %s2296
        $region120: #{transformer_decoder.7} parent=115 // pred_fallthru
          _
        // Predicated region
        $region121: #{transformer_decoder.7} parent=115 // pred_check
          %p2298 = pneg %p517
        $region122: #{transformer_decoder.7} parent=115 // pred_check_branch
          %2300 = sbr.rel (%p2298) target = $region124
        $region123: #{transformer_decoder.7} parent=115 // pred_region
          %p2301 = scmp.lt.s32.totalorder %s38, 1
          %s2302 = scalar_select %p2301, %s38, 1
          %s2303 = smul.addr %s2302, 8
          %s2304 = scalar_lea.vmem %s21, %s2303
        $region124: #{transformer_decoder.7} parent=115 // pred_fallthru
          _
        // Predicated region
        $region125: #{transformer_decoder.7} parent=115 // pred_check
          %p2305 = pneg %p543
        $region126: #{transformer_decoder.7} parent=115 // pred_check_branch
          %2307 = sbr.rel (%p2305) target = $region128
        $region127: #{transformer_decoder.7} parent=115 // pred_region
          %s2308 = sand.u32 %s528, 1
          %s2309 = scalar_lea.sflag [#allocation3], %s2308
          %s2310 = sand.u32 %s528, 1
          %s2311 = smul.addr %s2310, 8
          %s2312 = scalar_lea.vmem [#allocation2], %s2311
          %2313 = dma.done %s2309, 128
        $region128: #{transformer_decoder.7} parent=115 // pred_fallthru
          _
      $region116: #{transformer_decoder.7} parent=5 // pred_fallthru
        _
    $region6: #{transformer_decoder.7} parent=1 // loop_footer
      %s36 = sadd.s32 1, %s32
    $region7: #{transformer_decoder.7} parent=1 // loop_footer_branch
      %31 = sbr.rel target = $region3
    $region8: #{transformer_decoder.7} parent=1 // loop_exit
      _
    %2314 = vsyncpa [#allocation3], 1
    %s2315 = scalar_lea.sflag [#allocation3], 1
    %2316 = vsyncpa %s2315, 1

// kernel: transformer_decoder.5
$region0: #{transformer_decoder.5}
  #allocation0 [shape = 'u32[]', space=smem, size = 0x4, offset = 0x4, fixed_abs, tag = 'smem constant byte address 0x4 - core index']
  #allocation1 [shape = 'u32[144,128]{1,0:T(1,128)}', space=vmem, size = 0x12000, scoped, tag = 'internal scratch']
  %s0 = inlined_call_operand.vmem [shape: f32[2,8,32], index: 0, kind: input, shape index: {}]
  %s1 = inlined_call_operand.vmem [shape: f32[2,8,32], index: 1, kind: input, shape index: {}]
  %s2 = inlined_call_operand.vmem [shape: f32[32,64], index: 2, kind: input, shape index: {}]
  %s3 = inlined_call_operand.vmem [shape: f32[1,64], index: 3, kind: input, shape index: {}]
  %s4 = inlined_call_operand.vmem [shape: f32[32,32], index: 4, kind: input, shape index: {}]
  %s5 = inlined_call_operand.vmem [shape: f32[1,32], index: 5, kind: input, shape index: {}]
  %s6 = inlined_call_operand.vmem [shape: f32[32,32], index: 6, kind: input, shape index: {}]
  %s7 = inlined_call_operand.vmem [shape: f32[1,32], index: 7, kind: input, shape index: {}]
  %s8 = inlined_call_operand.vmem [shape: f32[1,32], index: 8, kind: input, shape index: {}]
  %s9 = inlined_call_operand.vmem [shape: f32[1,32], index: 9, kind: input, shape index: {}]
  %s10 = inlined_call_operand.vmem [shape: f32[1,32], index: 10, kind: input, shape index: {}]
  %s11 = inlined_call_operand.vmem [shape: f32[1,32], index: 11, kind: input, shape index: {}]
  %s12 = inlined_call_operand.vmem [shape: f32[32,32], index: 12, kind: input, shape index: {}]
  %s13 = inlined_call_operand.vmem [shape: f32[1,32], index: 13, kind: input, shape index: {}]
  %s14 = inlined_call_operand.vmem [shape: f32[32,32], index: 14, kind: input, shape index: {}]
  %s15 = inlined_call_operand.vmem [shape: f32[1,32], index: 15, kind: input, shape index: {}]
  %s16 = inlined_call_operand.vmem [shape: f32[32,8], index: 16, kind: input, shape index: {}]
  %s17 = inlined_call_operand.vmem [shape: f32[1,8], index: 17, kind: input, shape index: {}]
  %s18 = inlined_call_operand.vmem [shape: f32[32,2], index: 18, kind: input, shape index: {}]
  %s19 = inlined_call_operand.vmem [shape: f32[1,2], index: 19, kind: input, shape index: {}]
  %s20 = inlined_call_operand.vmem [shape: f32[2,8,32], index: 20, kind: output, shape index: {0}]
  %s21 = inlined_call_operand.vmem [shape: f32[2,8,8], index: 21, kind: output, shape index: {1}]
  %s22 = inlined_call_operand.vmem [shape: f32[2,8,2], index: 22, kind: output, shape index: {2}]
  %23 = xla_tuple %s20, %s21, %s22
  %s24 = sld [smem:[#allocation0]]
  $region129: #{transformer_decoder.5} parent=0
    _
  %s26 = ssub.s32 1, %s24
  %s27 = scalar_select 0, %s26, %s24
  loop: start=0, step=1, limit=4
  $region2: #{transformer_decoder.5} parent=0 // loop_pre_header
    _
  $region3: #{transformer_decoder.5} parent=0 // loop_header
    %s29 = sphi 0, %s33
    %p30 = scmp.ge.s32.totalorder %s29, 4
    %s39 = sphi 0, %s41
    %s42 = sphi 0, %s39
    %s43 = sphi 0, %s42
    %s59 = sphi 0, %s43
    %s65 = sphi 0, %s67
    %s68 = sphi 0, %s65
    %s69 = sphi 0, %s68
    %s85 = sphi 0, %s69
    %s89 = sphi 0, %s89
    %s91 = sphi 0, %s89
    %s92 = sphi 0, %s91
    %s106 = sphi 0, %s92
    %s110 = sphi 0, %s110
    %s112 = sphi 0, %s110
    %s113 = sphi 0, %s112
    %s127 = sphi 0, %s113
    %s131 = sphi 0, %s131
    %s133 = sphi 0, %s131
    %s134 = sphi 0, %s133
    %s148 = sphi 0, %s134
    %s152 = sphi 0, %s152
    %s154 = sphi 0, %s152
    %s155 = sphi 0, %s154
    %s169 = sphi 0, %s155
    %s173 = sphi 0, %s173
    %s175 = sphi 0, %s173
    %s176 = sphi 0, %s175
    %s190 = sphi 0, %s176
    %s194 = sphi 0, %s194
    %s196 = sphi 0, %s194
    %s197 = sphi 0, %s196
    %s211 = sphi 0, %s197
    %s215 = sphi 0, %s215
    %s217 = sphi 0, %s215
    %s218 = sphi 0, %s217
    %s232 = sphi 0, %s218
    %s236 = sphi 0, %s236
    %s238 = sphi 0, %s236
    %s239 = sphi 0, %s238
    %s253 = sphi 0, %s239
    %s257 = sphi 0, %s257
    %s259 = sphi 0, %s257
    %s260 = sphi 0, %s259
    %s274 = sphi 0, %s260
    %s278 = sphi 0, %s278
    %s280 = sphi 0, %s278
    %s281 = sphi 0, %s280
    %s295 = sphi 0, %s281
    %s299 = sphi 0, %s299
    %s301 = sphi 0, %s299
    %s302 = sphi 0, %s301
    %s316 = sphi 0, %s302
    %s320 = sphi 0, %s320
    %s322 = sphi 0, %s320
    %s323 = sphi 0, %s322
    %s337 = sphi 0, %s323
    %s341 = sphi 0, %s341
    %s343 = sphi 0, %s341
    %s344 = sphi 0, %s343
    %s358 = sphi 0, %s344
    %s362 = sphi 0, %s362
    %s364 = sphi 0, %s362
    %s365 = sphi 0, %s364
    %s379 = sphi 0, %s365
    %s383 = sphi 0, %s383
    %s385 = sphi 0, %s383
    %s386 = sphi 0, %s385
    %s400 = sphi 0, %s386
    %s404 = sphi 0, %s404
    %s406 = sphi 0, %s404
    %s407 = sphi 0, %s406
    %s421 = sphi 0, %s407
    %s425 = sphi 0, %s425
    %s427 = sphi 0, %s425
    %s428 = sphi 0, %s427
    %s442 = sphi 0, %s428
    %s446 = sphi 0, %s446
    %s448 = sphi 0, %s446
    %s449 = sphi 0, %s448
    %s463 = sphi 0, %s449
    %s469 = sphi 0, %s471
    %s472 = sphi 0, %s469
    %s473 = sphi 0, %s472
    %s489 = sphi 0, %s473
    %s495 = sphi 0, %s497
    %s498 = sphi 0, %s495
    %s499 = sphi 0, %s498
    %s515 = sphi 0, %s499
    %s521 = sphi 0, %s523
    %s524 = sphi 0, %s521
    %s525 = sphi 0, %s524
    %s541 = sphi 0, %s525
  $region4: #{transformer_decoder.5} parent=0 // loop_header_branch
    %32 = sbr.rel (%p30) target = $region8
  $region5: #{transformer_decoder.5} parent=0 // loop_body
    %s34 = ssub.s32 %s29, 1
    %s35 = ssub.s32 %s29, 2
    %s36 = sadd.s32 %s29, 1
    %s37 = ssub.s32 %s29, %s36
    %p38 = scmp.eq.s32.totalorder %s37, 0
    %s40 = sadd.s32 %s39, 1
    %s41 = scalar_select %p38, %s39, %s40
    %p44 = pneg %p38
    %p45 = scmp.eq.s32.totalorder %s29, 1
    %p46 = por %p44, %p45
    %p47 = scmp.ne.s32.totalorder %s39, %s42
    %p48 = scmp.eq.s32.totalorder %s29, 0
    %p49 = por %p47, %p48
    %p50 = scmp.ne.s32.totalorder %s39, %s42
    %p51 = scmp.eq.s32.totalorder %s34, 1
    %p52 = por %p50, %p51
    %p53 = scmp.ne.s32.totalorder %s42, %s43
    %p54 = scmp.eq.s32.totalorder %s34, 0
    %p55 = por %p53, %p54
    %p56 = scmp.ne.s32.totalorder %s42, %s43
    %p57 = scmp.eq.s32.totalorder %s35, 1
    %p58 = por %p56, %p57
    %p60 = scmp.ne.s32.totalorder %s43, %s59
    %p61 = scmp.eq.s32.totalorder %s35, 0
    %p62 = por %p60, %p61
    %s63 = ssub.s32 %s29, %s36
    %p64 = scmp.eq.s32.totalorder %s63, 0
    %s66 = sadd.s32 %s65, 1
    %s67 = scalar_select %p64, %s65, %s66
    %p70 = pneg %p64
    %p71 = scmp.eq.s32.totalorder %s29, 1
    %p72 = por %p70, %p71
    %p73 = scmp.ne.s32.totalorder %s65, %s68
    %p74 = scmp.eq.s32.totalorder %s29, 0
    %p75 = por %p73, %p74
    %p76 = scmp.ne.s32.totalorder %s65, %s68
    %p77 = scmp.eq.s32.totalorder %s34, 1
    %p78 = por %p76, %p77
    %p79 = scmp.ne.s32.totalorder %s68, %s69
    %p80 = scmp.eq.s32.totalorder %s34, 0
    %p81 = por %p79, %p80
    %p82 = scmp.ne.s32.totalorder %s68, %s69
    %p83 = scmp.eq.s32.totalorder %s35, 1
    %p84 = por %p82, %p83
    %p86 = scmp.ne.s32.totalorder %s69, %s85
    %p87 = scmp.eq.s32.totalorder %s35, 0
    %p88 = por %p86, %p87
    %s90 = sadd.s32 %s89, 1
    %p93 = scmp.eq.s32.totalorder %s29, 1
    %p94 = scmp.ne.s32.totalorder %s89, %s91
    %p95 = scmp.eq.s32.totalorder %s29, 0
    %p96 = por %p94, %p95
    %p97 = scmp.ne.s32.totalorder %s89, %s91
    %p98 = scmp.eq.s32.totalorder %s34, 1
    %p99 = por %p97, %p98
    %p100 = scmp.ne.s32.totalorder %s91, %s92
    %p101 = scmp.eq.s32.totalorder %s34, 0
    %p102 = por %p100, %p101
    %p103 = scmp.ne.s32.totalorder %s91, %s92
    %p104 = scmp.eq.s32.totalorder %s35, 1
    %p105 = por %p103, %p104
    %p107 = scmp.ne.s32.totalorder %s92, %s106
    %p108 = scmp.eq.s32.totalorder %s35, 0
    %p109 = por %p107, %p108
    %s111 = sadd.s32 %s110, 1
    %p114 = scmp.eq.s32.totalorder %s29, 1
    %p115 = scmp.ne.s32.totalorder %s110, %s112
    %p116 = scmp.eq.s32.totalorder %s29, 0
    %p117 = por %p115, %p116
    %p118 = scmp.ne.s32.totalorder %s110, %s112
    %p119 = scmp.eq.s32.totalorder %s34, 1
    %p120 = por %p118, %p119
    %p121 = scmp.ne.s32.totalorder %s112, %s113
    %p122 = scmp.eq.s32.totalorder %s34, 0
    %p123 = por %p121, %p122
    %p124 = scmp.ne.s32.totalorder %s112, %s113
    %p125 = scmp.eq.s32.totalorder %s35, 1
    %p126 = por %p124, %p125
    %p128 = scmp.ne.s32.totalorder %s113, %s127
    %p129 = scmp.eq.s32.totalorder %s35, 0
    %p130 = por %p128, %p129
    %s132 = sadd.s32 %s131, 1
    %p135 = scmp.eq.s32.totalorder %s29, 1
    %p136 = scmp.ne.s32.totalorder %s131, %s133
    %p137 = scmp.eq.s32.totalorder %s29, 0
    %p138 = por %p136, %p137
    %p139 = scmp.ne.s32.totalorder %s131, %s133
    %p140 = scmp.eq.s32.totalorder %s34, 1
    %p141 = por %p139, %p140
    %p142 = scmp.ne.s32.totalorder %s133, %s134
    %p143 = scmp.eq.s32.totalorder %s34, 0
    %p144 = por %p142, %p143
    %p145 = scmp.ne.s32.totalorder %s133, %s134
    %p146 = scmp.eq.s32.totalorder %s35, 1
    %p147 = por %p145, %p146
    %p149 = scmp.ne.s32.totalorder %s134, %s148
    %p150 = scmp.eq.s32.totalorder %s35, 0
    %p151 = por %p149, %p150
    %s153 = sadd.s32 %s152, 1
    %p156 = scmp.eq.s32.totalorder %s29, 1
    %p157 = scmp.ne.s32.totalorder %s152, %s154
    %p158 = scmp.eq.s32.totalorder %s29, 0
    %p159 = por %p157, %p158
    %p160 = scmp.ne.s32.totalorder %s152, %s154
    %p161 = scmp.eq.s32.totalorder %s34, 1
    %p162 = por %p160, %p161
    %p163 = scmp.ne.s32.totalorder %s154, %s155
    %p164 = scmp.eq.s32.totalorder %s34, 0
    %p165 = por %p163, %p164
    %p166 = scmp.ne.s32.totalorder %s154, %s155
    %p167 = scmp.eq.s32.totalorder %s35, 1
    %p168 = por %p166, %p167
    %p170 = scmp.ne.s32.totalorder %s155, %s169
    %p171 = scmp.eq.s32.totalorder %s35, 0
    %p172 = por %p170, %p171
    %s174 = sadd.s32 %s173, 1
    %p177 = scmp.eq.s32.totalorder %s29, 1
    %p178 = scmp.ne.s32.totalorder %s173, %s175
    %p179 = scmp.eq.s32.totalorder %s29, 0
    %p180 = por %p178, %p179
    %p181 = scmp.ne.s32.totalorder %s173, %s175
    %p182 = scmp.eq.s32.totalorder %s34, 1
    %p183 = por %p181, %p182
    %p184 = scmp.ne.s32.totalorder %s175, %s176
    %p185 = scmp.eq.s32.totalorder %s34, 0
    %p186 = por %p184, %p185
    %p187 = scmp.ne.s32.totalorder %s175, %s176
    %p188 = scmp.eq.s32.totalorder %s35, 1
    %p189 = por %p187, %p188
    %p191 = scmp.ne.s32.totalorder %s176, %s190
    %p192 = scmp.eq.s32.totalorder %s35, 0
    %p193 = por %p191, %p192
    %s195 = sadd.s32 %s194, 1
    %p198 = scmp.eq.s32.totalorder %s29, 1
    %p199 = scmp.ne.s32.totalorder %s194, %s196
    %p200 = scmp.eq.s32.totalorder %s29, 0
    %p201 = por %p199, %p200
    %p202 = scmp.ne.s32.totalorder %s194, %s196
    %p203 = scmp.eq.s32.totalorder %s34, 1
    %p204 = por %p202, %p203
    %p205 = scmp.ne.s32.totalorder %s196, %s197
    %p206 = scmp.eq.s32.totalorder %s34, 0
    %p207 = por %p205, %p206
    %p208 = scmp.ne.s32.totalorder %s196, %s197
    %p209 = scmp.eq.s32.totalorder %s35, 1
    %p210 = por %p208, %p209
    %p212 = scmp.ne.s32.totalorder %s197, %s211
    %p213 = scmp.eq.s32.totalorder %s35, 0
    %p214 = por %p212, %p213
    %s216 = sadd.s32 %s215, 1
    %p219 = scmp.eq.s32.totalorder %s29, 1
    %p220 = scmp.ne.s32.totalorder %s215, %s217
    %p221 = scmp.eq.s32.totalorder %s29, 0
    %p222 = por %p220, %p221
    %p223 = scmp.ne.s32.totalorder %s215, %s217
    %p224 = scmp.eq.s32.totalorder %s34, 1
    %p225 = por %p223, %p224
    %p226 = scmp.ne.s32.totalorder %s217, %s218
    %p227 = scmp.eq.s32.totalorder %s34, 0
    %p228 = por %p226, %p227
    %p229 = scmp.ne.s32.totalorder %s217, %s218
    %p230 = scmp.eq.s32.totalorder %s35, 1
    %p231 = por %p229, %p230
    %p233 = scmp.ne.s32.totalorder %s218, %s232
    %p234 = scmp.eq.s32.totalorder %s35, 0
    %p235 = por %p233, %p234
    %s237 = sadd.s32 %s236, 1
    %p240 = scmp.eq.s32.totalorder %s29, 1
    %p241 = scmp.ne.s32.totalorder %s236, %s238
    %p242 = scmp.eq.s32.totalorder %s29, 0
    %p243 = por %p241, %p242
    %p244 = scmp.ne.s32.totalorder %s236, %s238
    %p245 = scmp.eq.s32.totalorder %s34, 1
    %p246 = por %p244, %p245
    %p247 = scmp.ne.s32.totalorder %s238, %s239
    %p248 = scmp.eq.s32.totalorder %s34, 0
    %p249 = por %p247, %p248
    %p250 = scmp.ne.s32.totalorder %s238, %s239
    %p251 = scmp.eq.s32.totalorder %s35, 1
    %p252 = por %p250, %p251
    %p254 = scmp.ne.s32.totalorder %s239, %s253
    %p255 = scmp.eq.s32.totalorder %s35, 0
    %p256 = por %p254, %p255
    %s258 = sadd.s32 %s257, 1
    %p261 = scmp.eq.s32.totalorder %s29, 1
    %p262 = scmp.ne.s32.totalorder %s257, %s259
    %p263 = scmp.eq.s32.totalorder %s29, 0
    %p264 = por %p262, %p263
    %p265 = scmp.ne.s32.totalorder %s257, %s259
    %p266 = scmp.eq.s32.totalorder %s34, 1
    %p267 = por %p265, %p266
    %p268 = scmp.ne.s32.totalorder %s259, %s260
    %p269 = scmp.eq.s32.totalorder %s34, 0
    %p270 = por %p268, %p269
    %p271 = scmp.ne.s32.totalorder %s259, %s260
    %p272 = scmp.eq.s32.totalorder %s35, 1
    %p273 = por %p271, %p272
    %p275 = scmp.ne.s32.totalorder %s260, %s274
    %p276 = scmp.eq.s32.totalorder %s35, 0
    %p277 = por %p275, %p276
    %s279 = sadd.s32 %s278, 1
    %p282 = scmp.eq.s32.totalorder %s29, 1
    %p283 = scmp.ne.s32.totalorder %s278, %s280
    %p284 = scmp.eq.s32.totalorder %s29, 0
    %p285 = por %p283, %p284
    %p286 = scmp.ne.s32.totalorder %s278, %s280
    %p287 = scmp.eq.s32.totalorder %s34, 1
    %p288 = por %p286, %p287
    %p289 = scmp.ne.s32.totalorder %s280, %s281
    %p290 = scmp.eq.s32.totalorder %s34, 0
    %p291 = por %p289, %p290
    %p292 = scmp.ne.s32.totalorder %s280, %s281
    %p293 = scmp.eq.s32.totalorder %s35, 1
    %p294 = por %p292, %p293
    %p296 = scmp.ne.s32.totalorder %s281, %s295
    %p297 = scmp.eq.s32.totalorder %s35, 0
    %p298 = por %p296, %p297
    %s300 = sadd.s32 %s299, 1
    %p303 = scmp.eq.s32.totalorder %s29, 1
    %p304 = scmp.ne.s32.totalorder %s299, %s301
    %p305 = scmp.eq.s32.totalorder %s29, 0
    %p306 = por %p304, %p305
    %p307 = scmp.ne.s32.totalorder %s299, %s301
    %p308 = scmp.eq.s32.totalorder %s34, 1
    %p309 = por %p307, %p308
    %p310 = scmp.ne.s32.totalorder %s301, %s302
    %p311 = scmp.eq.s32.totalorder %s34, 0
    %p312 = por %p310, %p311
    %p313 = scmp.ne.s32.totalorder %s301, %s302
    %p314 = scmp.eq.s32.totalorder %s35, 1
    %p315 = por %p313, %p314
    %p317 = scmp.ne.s32.totalorder %s302, %s316
    %p318 = scmp.eq.s32.totalorder %s35, 0
    %p319 = por %p317, %p318
    %s321 = sadd.s32 %s320, 1
    %p324 = scmp.eq.s32.totalorder %s29, 1
    %p325 = scmp.ne.s32.totalorder %s320, %s322
    %p326 = scmp.eq.s32.totalorder %s29, 0
    %p327 = por %p325, %p326
    %p328 = scmp.ne.s32.totalorder %s320, %s322
    %p329 = scmp.eq.s32.totalorder %s34, 1
    %p330 = por %p328, %p329
    %p331 = scmp.ne.s32.totalorder %s322, %s323
    %p332 = scmp.eq.s32.totalorder %s34, 0
    %p333 = por %p331, %p332
    %p334 = scmp.ne.s32.totalorder %s322, %s323
    %p335 = scmp.eq.s32.totalorder %s35, 1
    %p336 = por %p334, %p335
    %p338 = scmp.ne.s32.totalorder %s323, %s337
    %p339 = scmp.eq.s32.totalorder %s35, 0
    %p340 = por %p338, %p339
    %s342 = sadd.s32 %s341, 1
    %p345 = scmp.eq.s32.totalorder %s29, 1
    %p346 = scmp.ne.s32.totalorder %s341, %s343
    %p347 = scmp.eq.s32.totalorder %s29, 0
    %p348 = por %p346, %p347
    %p349 = scmp.ne.s32.totalorder %s341, %s343
    %p350 = scmp.eq.s32.totalorder %s34, 1
    %p351 = por %p349, %p350
    %p352 = scmp.ne.s32.totalorder %s343, %s344
    %p353 = scmp.eq.s32.totalorder %s34, 0
    %p354 = por %p352, %p353
    %p355 = scmp.ne.s32.totalorder %s343, %s344
    %p356 = scmp.eq.s32.totalorder %s35, 1
    %p357 = por %p355, %p356
    %p359 = scmp.ne.s32.totalorder %s344, %s358
    %p360 = scmp.eq.s32.totalorder %s35, 0
    %p361 = por %p359, %p360
    %s363 = sadd.s32 %s362, 1
    %p366 = scmp.eq.s32.totalorder %s29, 1
    %p367 = scmp.ne.s32.totalorder %s362, %s364
    %p368 = scmp.eq.s32.totalorder %s29, 0
    %p369 = por %p367, %p368
    %p370 = scmp.ne.s32.totalorder %s362, %s364
    %p371 = scmp.eq.s32.totalorder %s34, 1
    %p372 = por %p370, %p371
    %p373 = scmp.ne.s32.totalorder %s364, %s365
    %p374 = scmp.eq.s32.totalorder %s34, 0
    %p375 = por %p373, %p374
    %p376 = scmp.ne.s32.totalorder %s364, %s365
    %p377 = scmp.eq.s32.totalorder %s35, 1
    %p378 = por %p376, %p377
    %p380 = scmp.ne.s32.totalorder %s365, %s379
    %p381 = scmp.eq.s32.totalorder %s35, 0
    %p382 = por %p380, %p381
    %s384 = sadd.s32 %s383, 1
    %p387 = scmp.eq.s32.totalorder %s29, 1
    %p388 = scmp.ne.s32.totalorder %s383, %s385
    %p389 = scmp.eq.s32.totalorder %s29, 0
    %p390 = por %p388, %p389
    %p391 = scmp.ne.s32.totalorder %s383, %s385
    %p392 = scmp.eq.s32.totalorder %s34, 1
    %p393 = por %p391, %p392
    %p394 = scmp.ne.s32.totalorder %s385, %s386
    %p395 = scmp.eq.s32.totalorder %s34, 0
    %p396 = por %p394, %p395
    %p397 = scmp.ne.s32.totalorder %s385, %s386
    %p398 = scmp.eq.s32.totalorder %s35, 1
    %p399 = por %p397, %p398
    %p401 = scmp.ne.s32.totalorder %s386, %s400
    %p402 = scmp.eq.s32.totalorder %s35, 0
    %p403 = por %p401, %p402
    %s405 = sadd.s32 %s404, 1
    %p408 = scmp.eq.s32.totalorder %s29, 1
    %p409 = scmp.ne.s32.totalorder %s404, %s406
    %p410 = scmp.eq.s32.totalorder %s29, 0
    %p411 = por %p409, %p410
    %p412 = scmp.ne.s32.totalorder %s404, %s406
    %p413 = scmp.eq.s32.totalorder %s34, 1
    %p414 = por %p412, %p413
    %p415 = scmp.ne.s32.totalorder %s406, %s407
    %p416 = scmp.eq.s32.totalorder %s34, 0
    %p417 = por %p415, %p416
    %p418 = scmp.ne.s32.totalorder %s406, %s407
    %p419 = scmp.eq.s32.totalorder %s35, 1
    %p420 = por %p418, %p419
    %p422 = scmp.ne.s32.totalorder %s407, %s421
    %p423 = scmp.eq.s32.totalorder %s35, 0
    %p424 = por %p422, %p423
    %s426 = sadd.s32 %s425, 1
    %p429 = scmp.eq.s32.totalorder %s29, 1
    %p430 = scmp.ne.s32.totalorder %s425, %s427
    %p431 = scmp.eq.s32.totalorder %s29, 0
    %p432 = por %p430, %p431
    %p433 = scmp.ne.s32.totalorder %s425, %s427
    %p434 = scmp.eq.s32.totalorder %s34, 1
    %p435 = por %p433, %p434
    %p436 = scmp.ne.s32.totalorder %s427, %s428
    %p437 = scmp.eq.s32.totalorder %s34, 0
    %p438 = por %p436, %p437
    %p439 = scmp.ne.s32.totalorder %s427, %s428
    %p440 = scmp.eq.s32.totalorder %s35, 1
    %p441 = por %p439, %p440
    %p443 = scmp.ne.s32.totalorder %s428, %s442
    %p444 = scmp.eq.s32.totalorder %s35, 0
    %p445 = por %p443, %p444
    %s447 = sadd.s32 %s446, 1
    %p450 = scmp.eq.s32.totalorder %s29, 1
    %p451 = scmp.ne.s32.totalorder %s446, %s448
    %p452 = scmp.eq.s32.totalorder %s29, 0
    %p453 = por %p451, %p452
    %p454 = scmp.ne.s32.totalorder %s446, %s448
    %p455 = scmp.eq.s32.totalorder %s34, 1
    %p456 = por %p454, %p455
    %p457 = scmp.ne.s32.totalorder %s448, %s449
    %p458 = scmp.eq.s32.totalorder %s34, 0
    %p459 = por %p457, %p458
    %p460 = scmp.ne.s32.totalorder %s448, %s449
    %p461 = scmp.eq.s32.totalorder %s35, 1
    %p462 = por %p460, %p461
    %p464 = scmp.ne.s32.totalorder %s449, %s463
    %p465 = scmp.eq.s32.totalorder %s35, 0
    %p466 = por %p464, %p465
    %s467 = ssub.s32 %s29, %s36
    %p468 = scmp.eq.s32.totalorder %s467, 0
    %s470 = sadd.s32 %s469, 1
    %s471 = scalar_select %p468, %s469, %s470
    %p474 = pneg %p468
    %p475 = scmp.eq.s32.totalorder %s29, 1
    %p476 = por %p474, %p475
    %p477 = scmp.ne.s32.totalorder %s469, %s472
    %p478 = scmp.eq.s32.totalorder %s29, 0
    %p479 = por %p477, %p478
    %p480 = scmp.ne.s32.totalorder %s469, %s472
    %p481 = scmp.eq.s32.totalorder %s34, 1
    %p482 = por %p480, %p481
    %p483 = scmp.ne.s32.totalorder %s472, %s473
    %p484 = scmp.eq.s32.totalorder %s34, 0
    %p485 = por %p483, %p484
    %p486 = scmp.ne.s32.totalorder %s472, %s473
    %p487 = scmp.eq.s32.totalorder %s35, 1
    %p488 = por %p486, %p487
    %p490 = scmp.ne.s32.totalorder %s473, %s489
    %p491 = scmp.eq.s32.totalorder %s35, 0
    %p492 = por %p490, %p491
    %s493 = ssub.s32 %s29, %s36
    %p494 = scmp.eq.s32.totalorder %s493, 0
    %s496 = sadd.s32 %s495, 1
    %s497 = scalar_select %p494, %s495, %s496
    %p500 = pneg %p494
    %p501 = scmp.eq.s32.totalorder %s29, 1
    %p502 = por %p500, %p501
    %p503 = scmp.ne.s32.totalorder %s495, %s498
    %p504 = scmp.eq.s32.totalorder %s29, 0
    %p505 = por %p503, %p504
    %p506 = scmp.ne.s32.totalorder %s495, %s498
    %p507 = scmp.eq.s32.totalorder %s34, 1
    %p508 = por %p506, %p507
    %p509 = scmp.ne.s32.totalorder %s498, %s499
    %p510 = scmp.eq.s32.totalorder %s34, 0
    %p511 = por %p509, %p510
    %p512 = scmp.ne.s32.totalorder %s498, %s499
    %p513 = scmp.eq.s32.totalorder %s35, 1
    %p514 = por %p512, %p513
    %p516 = scmp.ne.s32.totalorder %s499, %s515
    %p517 = scmp.eq.s32.totalorder %s35, 0
    %p518 = por %p516, %p517
    %s519 = ssub.s32 %s29, %s36
    %p520 = scmp.eq.s32.totalorder %s519, 0
    %s522 = sadd.s32 %s521, 1
    %s523 = scalar_select %p520, %s521, %s522
    %p526 = pneg %p520
    %p527 = scmp.eq.s32.totalorder %s29, 1
    %p528 = por %p526, %p527
    %p529 = scmp.ne.s32.totalorder %s521, %s524
    %p530 = scmp.eq.s32.totalorder %s29, 0
    %p531 = por %p529, %p530
    %p532 = scmp.ne.s32.totalorder %s521, %s524
    %p533 = scmp.eq.s32.totalorder %s34, 1
    %p534 = por %p532, %p533
    %p535 = scmp.ne.s32.totalorder %s524, %s525
    %p536 = scmp.eq.s32.totalorder %s34, 0
    %p537 = por %p535, %p536
    %p538 = scmp.ne.s32.totalorder %s524, %s525
    %p539 = scmp.eq.s32.totalorder %s35, 1
    %p540 = por %p538, %p539
    %p542 = scmp.ne.s32.totalorder %s525, %s541
    %p543 = scmp.eq.s32.totalorder %s35, 0
    %p544 = por %p542, %p543
    %p545 = scmp.le.s32.totalorder 1, %s29
    %p546 = scmp.lt.s32.totalorder %s29, 3
    %p547 = pnand %p545, %p546
    %p548 = pneg %p547
    // Predicated region
    $region9: #{transformer_decoder.5} parent=5 // pred_check
      _
    $region10: #{transformer_decoder.5} parent=5 // pred_check_branch
      %550 = sbr.rel (%p547) target = $region12
    $region11: #{transformer_decoder.5} parent=5 // pred_region
      %s551 = ssub.s32 %s29, 1
      // Predicated region
      $region13: #{transformer_decoder.5} parent=11 // pred_check
        %p552 = pneg %p102
      $region14: #{transformer_decoder.5} parent=11 // pred_check_branch
        %554 = sbr.rel (%p552) target = $region16
      $region15: #{transformer_decoder.5} parent=11 // pred_region
        _
      $region16: #{transformer_decoder.5} parent=11 // pred_fallthru
        _
      // Predicated region
      $region17: #{transformer_decoder.5} parent=11 // pred_check
        %p555 = pneg %p123
      $region18: #{transformer_decoder.5} parent=11 // pred_check_branch
        %557 = sbr.rel (%p555) target = $region20
      $region19: #{transformer_decoder.5} parent=11 // pred_region
        _
      $region20: #{transformer_decoder.5} parent=11 // pred_fallthru
        _
      // Predicated region
      $region21: #{transformer_decoder.5} parent=11 // pred_check
        %p558 = pneg %p144
      $region22: #{transformer_decoder.5} parent=11 // pred_check_branch
        %560 = sbr.rel (%p558) target = $region24
      $region23: #{transformer_decoder.5} parent=11 // pred_region
        _
      $region24: #{transformer_decoder.5} parent=11 // pred_fallthru
        _
      // Predicated region
      $region25: #{transformer_decoder.5} parent=11 // pred_check
        %p561 = pneg %p165
      $region26: #{transformer_decoder.5} parent=11 // pred_check_branch
        %563 = sbr.rel (%p561) target = $region28
      $region27: #{transformer_decoder.5} parent=11 // pred_region
        _
      $region28: #{transformer_decoder.5} parent=11 // pred_fallthru
        _
      // Predicated region
      $region29: #{transformer_decoder.5} parent=11 // pred_check
        %p564 = pneg %p186
      $region30: #{transformer_decoder.5} parent=11 // pred_check_branch
        %566 = sbr.rel (%p564) target = $region32
      $region31: #{transformer_decoder.5} parent=11 // pred_region
        _
      $region32: #{transformer_decoder.5} parent=11 // pred_fallthru
        _
      // Predicated region
      $region33: #{transformer_decoder.5} parent=11 // pred_check
        %p567 = pneg %p207
      $region34: #{transformer_decoder.5} parent=11 // pred_check_branch
        %569 = sbr.rel (%p567) target = $region36
      $region35: #{transformer_decoder.5} parent=11 // pred_region
        _
      $region36: #{transformer_decoder.5} parent=11 // pred_fallthru
        _
      // Predicated region
      $region37: #{transformer_decoder.5} parent=11 // pred_check
        %p570 = pneg %p228
      $region38: #{transformer_decoder.5} parent=11 // pred_check_branch
        %572 = sbr.rel (%p570) target = $region40
      $region39: #{transformer_decoder.5} parent=11 // pred_region
        _
      $region40: #{transformer_decoder.5} parent=11 // pred_fallthru
        _
      // Predicated region
      $region41: #{transformer_decoder.5} parent=11 // pred_check
        %p573 = pneg %p249
      $region42: #{transformer_decoder.5} parent=11 // pred_check_branch
        %575 = sbr.rel (%p573) target = $region44
      $region43: #{transformer_decoder.5} parent=11 // pred_region
        _
      $region44: #{transformer_decoder.5} parent=11 // pred_fallthru
        _
      // Predicated region
      $region45: #{transformer_decoder.5} parent=11 // pred_check
        %p576 = pneg %p270
      $region46: #{transformer_decoder.5} parent=11 // pred_check_branch
        %578 = sbr.rel (%p576) target = $region48
      $region47: #{transformer_decoder.5} parent=11 // pred_region
        _
      $region48: #{transformer_decoder.5} parent=11 // pred_fallthru
        _
      // Predicated region
      $region49: #{transformer_decoder.5} parent=11 // pred_check
        %p579 = pneg %p291
      $region50: #{transformer_decoder.5} parent=11 // pred_check_branch
        %581 = sbr.rel (%p579) target = $region52
      $region51: #{transformer_decoder.5} parent=11 // pred_region
        _
      $region52: #{transformer_decoder.5} parent=11 // pred_fallthru
        _
      // Predicated region
      $region53: #{transformer_decoder.5} parent=11 // pred_check
        %p582 = pneg %p312
      $region54: #{transformer_decoder.5} parent=11 // pred_check_branch
        %584 = sbr.rel (%p582) target = $region56
      $region55: #{transformer_decoder.5} parent=11 // pred_region
        _
      $region56: #{transformer_decoder.5} parent=11 // pred_fallthru
        _
      // Predicated region
      $region57: #{transformer_decoder.5} parent=11 // pred_check
        %p585 = pneg %p333
      $region58: #{transformer_decoder.5} parent=11 // pred_check_branch
        %587 = sbr.rel (%p585) target = $region60
      $region59: #{transformer_decoder.5} parent=11 // pred_region
        _
      $region60: #{transformer_decoder.5} parent=11 // pred_fallthru
        _
      // Predicated region
      $region61: #{transformer_decoder.5} parent=11 // pred_check
        %p588 = pneg %p354
      $region62: #{transformer_decoder.5} parent=11 // pred_check_branch
        %590 = sbr.rel (%p588) target = $region64
      $region63: #{transformer_decoder.5} parent=11 // pred_region
        _
      $region64: #{transformer_decoder.5} parent=11 // pred_fallthru
        _
      // Predicated region
      $region65: #{transformer_decoder.5} parent=11 // pred_check
        %p591 = pneg %p375
      $region66: #{transformer_decoder.5} parent=11 // pred_check_branch
        %593 = sbr.rel (%p591) target = $region68
      $region67: #{transformer_decoder.5} parent=11 // pred_region
        _
      $region68: #{transformer_decoder.5} parent=11 // pred_fallthru
        _
      // Predicated region
      $region69: #{transformer_decoder.5} parent=11 // pred_check
        %p594 = pneg %p396
      $region70: #{transformer_decoder.5} parent=11 // pred_check_branch
        %596 = sbr.rel (%p594) target = $region72
      $region71: #{transformer_decoder.5} parent=11 // pred_region
        _
      $region72: #{transformer_decoder.5} parent=11 // pred_fallthru
        _
      // Predicated region
      $region73: #{transformer_decoder.5} parent=11 // pred_check
        %p597 = pneg %p417
      $region74: #{transformer_decoder.5} parent=11 // pred_check_branch
        %599 = sbr.rel (%p597) target = $region76
      $region75: #{transformer_decoder.5} parent=11 // pred_region
        _
      $region76: #{transformer_decoder.5} parent=11 // pred_fallthru
        _
      // Predicated region
      $region77: #{transformer_decoder.5} parent=11 // pred_check
        %p600 = pneg %p438
      $region78: #{transformer_decoder.5} parent=11 // pred_check_branch
        %602 = sbr.rel (%p600) target = $region80
      $region79: #{transformer_decoder.5} parent=11 // pred_region
        _
      $region80: #{transformer_decoder.5} parent=11 // pred_fallthru
        _
      // Predicated region
      $region81: #{transformer_decoder.5} parent=11 // pred_check
        %p603 = pneg %p459
      $region82: #{transformer_decoder.5} parent=11 // pred_check_branch
        %605 = sbr.rel (%p603) target = $region84
      $region83: #{transformer_decoder.5} parent=11 // pred_region
        _
      $region84: #{transformer_decoder.5} parent=11 // pred_fallthru
        _
    $region12: #{transformer_decoder.5} parent=5 // pred_fallthru
      _
    %p606 = scmp.lt.s32.totalorder %s29, 2
    // Predicated region
    $region85: #{transformer_decoder.5} parent=5 // pred_check
      %p607 = pneg %p606
    $region86: #{transformer_decoder.5} parent=5 // pred_check_branch
      %609 = sbr.rel (%p607) target = $region88
    $region87: #{transformer_decoder.5} parent=5 // pred_region
      // Predicated region
      $region89: #{transformer_decoder.5} parent=87 // pred_check
        %p610 = pneg %p49
      $region90: #{transformer_decoder.5} parent=87 // pred_check_branch
        %612 = sbr.rel (%p610) target = $region92
      $region91: #{transformer_decoder.5} parent=87 // pred_region
        %p613 = scmp.lt.s32.totalorder %s29, 1
        %s614 = scalar_select %p613, %s29, 1
        %s615 = smul.addr %s614, 8
        %s616 = scalar_lea.vmem %s0, %s615
      $region92: #{transformer_decoder.5} parent=87 // pred_fallthru
        _
      // Predicated region
      $region93: #{transformer_decoder.5} parent=87 // pred_check
        %p617 = pneg %p75
      $region94: #{transformer_decoder.5} parent=87 // pred_check_branch
        %619 = sbr.rel (%p617) target = $region96
      $region95: #{transformer_decoder.5} parent=87 // pred_region
        %p620 = scmp.lt.s32.totalorder %s29, 1
        %s621 = scalar_select %p620, %s29, 1
        %s622 = smul.addr %s621, 8
        %s623 = scalar_lea.vmem %s1, %s622
      $region96: #{transformer_decoder.5} parent=87 // pred_fallthru
        _
    $region88: #{transformer_decoder.5} parent=5 // pred_fallthru
      _
    %p624 = scmp.le.s32.totalorder 1, %s29
    %p625 = scmp.lt.s32.totalorder %s29, 3
    %p626 = pnand %p624, %p625
    %p627 = pneg %p626
    // Predicated region
    $region97: #{transformer_decoder.5} parent=5 // pred_check
      _
    $region98: #{transformer_decoder.5} parent=5 // pred_check_branch
      %629 = sbr.rel (%p626) target = $region100
    $region99: #{transformer_decoder.5} parent=5 // pred_region
      %s630 = ssub.s32 %s29, 1
      %p631 = scmp.lt.s32.totalorder %s34, 1
      %s632 = scalar_select %p631, %s34, 1
      %s633 = smul.addr %s632, 8
      %s634 = scalar_lea.vmem %s0, %s633
      %p635 = pneg %p55
      %p636 = pneg %p52
      %p637 = scmp.lt.s32.totalorder %s34, 1
      %s638 = scalar_select %p637, %s34, 1
      %s639 = smul.addr %s638, 8
      %s640 = scalar_lea.vmem %s1, %s639
      %p641 = pneg %p81
      %p642 = pneg %p78
      %p643 = pneg %p102
      %p644 = pneg %p99
      %p645 = pneg %p123
      %p646 = pneg %p120
      %p647 = pneg %p144
      %p648 = pneg %p141
      %p649 = pneg %p165
      %p650 = pneg %p162
      %p651 = pneg %p186
      %p652 = pneg %p183
      %p653 = pneg %p207
      %p654 = pneg %p204
      %p655 = pneg %p228
      %p656 = pneg %p225
      %p657 = pneg %p249
      %p658 = pneg %p246
      %p659 = pneg %p270
      %p660 = pneg %p267
      %p661 = pneg %p291
      %p662 = pneg %p288
      %p663 = pneg %p312
      %p664 = pneg %p309
      %p665 = pneg %p333
      %p666 = pneg %p330
      %p667 = pneg %p354
      %p668 = pneg %p351
      %p669 = pneg %p375
      %p670 = pneg %p372
      %p671 = pneg %p396
      %p672 = pneg %p393
      %p673 = pneg %p417
      %p674 = pneg %p414
      %p675 = pneg %p438
      %p676 = pneg %p435
      %p677 = pneg %p459
      %p678 = pneg %p456
      %p679 = pneg %p485
      %p680 = pneg %p482
      %p681 = scmp.lt.s32.totalorder %s34, 1
      %s682 = scalar_select %p681, %s34, 1
      %s683 = smul.addr %s682, 8
      %s684 = scalar_lea.vmem %s20, %s683
      %p685 = pneg %p511
      %p686 = pneg %p508
      %p687 = scmp.lt.s32.totalorder %s34, 1
      %s688 = scalar_select %p687, %s34, 1
      %s689 = smul.addr %s688, 8
      %s690 = scalar_lea.vmem %s21, %s689
      %p691 = pneg %p537
      %p692 = pneg %p534
      %p693 = scmp.lt.s32.totalorder %s34, 1
      %s694 = scalar_select %p693, %s34, 1
      %s695 = smul.addr %s694, 8
      %s696 = scalar_lea.vmem %s22, %s695
      %p697 = scmp.lt.s32.totalorder %s34, 1
      %s698 = scalar_select %p697, %s34, 1
      %s699 = smul.addr %s698, 8
      %s700 = scalar_lea.vmem %s0, %s699
      %p701 = scmp.lt.s32.totalorder %s34, 1
      %s702 = scalar_select %p701, %s34, 1
      %s703 = smul.addr %s702, 8
      %s704 = scalar_lea.vmem %s1, %s703
      %p705 = scmp.lt.s32.totalorder %s34, 1
      %s706 = scalar_select %p705, %s34, 1
      %s707 = smul.addr %s706, 8
      %s708 = scalar_lea.vmem %s20, %s707
      %p709 = scmp.lt.s32.totalorder %s34, 1
      %s710 = scalar_select %p709, %s34, 1
      %s711 = smul.addr %s710, 8
      %s712 = scalar_lea.vmem %s21, %s711
      %p713 = scmp.lt.s32.totalorder %s34, 1
      %s714 = scalar_select %p713, %s34, 1
      %s715 = smul.addr %s714, 8
      %s716 = scalar_lea.vmem %s22, %s715
      %v717 = vld [vmem:[%s700] sm:$0xff]
      %v718 = vld [vmem:[%s704] sm:$0xff]
      %v719 = vadd.f32 %v717, %v718
      %v720 = vld [vmem:[%s10] sm:$0x1]
      %v721 = vld [vmem:[%s11] sm:$0x1]
      %vm722 = vcmask 261120
      %v723 = vsel %vm722, %v719, 0.0
      %724 = vadd.xlane.f32.xlu0 %v723
      %v725 = vpop.xlane.xlu0 %724
      %v726 = vrcp.pop 32.0
      %v727 = vmul.f32 %v725, %v726
      %v728 = vsub.f32 %v719, %v727
      %v729 = vmul.f32 %v728, %v728
      %v730 = vsel %vm722, %v729, 0.0
      %731 = vadd.xlane.f32.xlu0 %v730
      %v732 = vpop.xlane.xlu0 %731
      %v733 = vmul.f32 %v732, %v726
      %v734 = vadd.f32 %v733, 1e-05
      %v735 = vrsqrt.pop %v734
      %v736 = vmul.f32 %v728, %v735
      %v738 = vlaneseq
      %v739 = vshrl.u32 %v738, 7
      %v740 = vsub.s32 0, %v739
      %v741 = vrot.slane %v720, %v740
      %v743 = vmul.f32 %v736, %v741
      %v745 = vlaneseq
      %v746 = vshrl.u32 %v745, 7
      %v747 = vsub.s32 0, %v746
      %v748 = vrot.slane %v721, %v747
      %v750 = vadd.f32 %v743, %v748
      %v751 = vld [vmem:[%s12] sm:$0xff]
      %v752 = vld [vmem:[%s12 + $0x8] sm:$0xff]
      %v753 = vld [vmem:[%s12 + $0x10] sm:$0xff]
      %v754 = vld [vmem:[%s12 + $0x18] sm:$0xff]
      %v755 = vld [vmem:[%s13] sm:$0x1]
      %v757 = vlaneseq
      %v758 = vshrl.u32 %v757, 7
      %v759 = vsub.s32 0, %v758
      %v760 = vrot.slane %v755, %v759
      %v763 = vsel %vm722, %v750, 0
      %765 = vmatprep.subr.mxu0 0.0
      %766 = vmatpush1.msra.mxu0 0.0
      %767 = vmatprep.subr.mxu0 0.0
      %768 = vmatpush1.msra.mxu0 0.0
      %769 = vmatprep.subr.mxu0 0.0
      %770 = vmatpush1.msra.mxu0 0.0
      %771 = vmatprep.subr.mxu0 0.0
      %772 = vmatpush1.msra.mxu0 0.0
      %773 = vmatprep.subr.mxu0 0.0
      %774 = vmatpush1.msra.mxu0 0.0
      %775 = vmatprep.subr.mxu0 0.0
      %776 = vmatpush1.msra.mxu0 0.0
      %777 = vmatprep.subr.mxu0 0.0
      %778 = vmatpush1.msra.mxu0 0.0
      %779 = vmatprep.subr.mxu0 0.0
      %780 = vmatpush1.msra.mxu0 0.0
      %781 = vmatprep.subr.mxu0 0.0
      %782 = vmatpush1.msra.mxu0 0.0
      %783 = vmatprep.subr.mxu0 0.0
      %784 = vmatpush1.msra.mxu0 0.0
      %785 = vmatprep.subr.mxu0 0.0
      %786 = vmatpush1.msra.mxu0 0.0
      %787 = vmatprep.subr.mxu0 0.0
      %788 = vmatpush1.msra.mxu0 0.0
      %789 = vmatprep.subr.mxu0 0.0
      %790 = vmatpush1.msra.mxu0 %v754
      %791 = vmatprep.subr.mxu0 0.0
      %792 = vmatpush1.msra.mxu0 %v753
      %793 = vmatprep.subr.mxu0 0.0
      %794 = vmatpush1.msra.mxu0 %v752
      %795 = vmatprep.subr.mxu0 0.0
      %796 = vmatpush1.msra.mxu0 %v751
      %797 = vmatprep.subr.mxu0 0.0
      %798 = vmatpush2.msra.mxu0 0.0
      %799 = vmatprep.subr.mxu0 0.0
      %800 = vmatpush2.msra.mxu0 0.0
      %801 = vmatprep.subr.mxu0 0.0
      %802 = vmatpush2.msra.mxu0 0.0
      %803 = vmatprep.subr.mxu0 0.0
      %804 = vmatpush2.msra.mxu0 0.0
      %805 = vmatprep.subr.mxu0 0.0
      %806 = vmatpush2.msra.mxu0 0.0
      %807 = vmatprep.subr.mxu0 0.0
      %808 = vmatpush2.msra.mxu0 0.0
      %809 = vmatprep.subr.mxu0 0.0
      %810 = vmatpush2.msra.mxu0 0.0
      %811 = vmatprep.subr.mxu0 0.0
      %812 = vmatpush2.msra.mxu0 0.0
      %813 = vmatprep.subr.mxu0 0.0
      %814 = vmatpush2.msra.mxu0 0.0
      %815 = vmatprep.subr.mxu0 0.0
      %816 = vmatpush2.msra.mxu0 0.0
      %817 = vmatprep.subr.mxu0 0.0
      %818 = vmatpush2.msra.mxu0 0.0
      %819 = vmatprep.subr.mxu0 0.0
      %820 = vmatpush2.msra.mxu0 0.0
      %821 = vmatprep.subr.mxu0 0.0
      %822 = vmatpush2.msra.mxu0 0.0
      %823 = vmatprep.subr.mxu0 0.0
      %824 = vmatpush2.msra.mxu0 0.0
      %825 = vmatprep.subr.mxu0 0.0
      %826 = vmatpush2.msra.mxu0 0.0
      %827 = vmatprep.subr.mxu0 0.0
      %828 = vmatpush2.msra.mxu0 0.0
      %829 = vmatprep.mubr.f32.mxu0 0.0
      %830 = vmatmul.mubr.f32.gmra.mxu0 %v763
      %v831 = vpop.f32.mrf.mxu0
      %v832 = vadd.f32 %v760, %v831
      %v833 = vpop.f32.mrf.mxu0
      %834 = vdwg.mxu0
      %v835 = vmax.f32 %v832, 0.0
      %v836 = vld [vmem:[%s14] sm:$0xff]
      %v837 = vld [vmem:[%s14 + $0x8] sm:$0xff]
      %v838 = vld [vmem:[%s14 + $0x10] sm:$0xff]
      %v839 = vld [vmem:[%s14 + $0x18] sm:$0xff]
      %v840 = vld [vmem:[%s15] sm:$0x1]
      %v842 = vlaneseq
      %v843 = vshrl.u32 %v842, 7
      %v844 = vsub.s32 0, %v843
      %v845 = vrot.slane %v840, %v844
      %v848 = vsel %vm722, %v835, 0
      %850 = vmatprep.subr.mxu0 0.0
      %851 = vmatpush1.msra.mxu0 0.0
      %852 = vmatprep.subr.mxu0 0.0
      %853 = vmatpush1.msra.mxu0 0.0
      %854 = vmatprep.subr.mxu0 0.0
      %855 = vmatpush1.msra.mxu0 0.0
      %856 = vmatprep.subr.mxu0 0.0
      %857 = vmatpush1.msra.mxu0 0.0
      %858 = vmatprep.subr.mxu0 0.0
      %859 = vmatpush1.msra.mxu0 0.0
      %860 = vmatprep.subr.mxu0 0.0
      %861 = vmatpush1.msra.mxu0 0.0
      %862 = vmatprep.subr.mxu0 0.0
      %863 = vmatpush1.msra.mxu0 0.0
      %864 = vmatprep.subr.mxu0 0.0
      %865 = vmatpush1.msra.mxu0 0.0
      %866 = vmatprep.subr.mxu0 0.0
      %867 = vmatpush1.msra.mxu0 0.0
      %868 = vmatprep.subr.mxu0 0.0
      %869 = vmatpush1.msra.mxu0 0.0
      %870 = vmatprep.subr.mxu0 0.0
      %871 = vmatpush1.msra.mxu0 0.0
      %872 = vmatprep.subr.mxu0 0.0
      %873 = vmatpush1.msra.mxu0 0.0
      %874 = vmatprep.subr.mxu0 0.0
      %875 = vmatpush1.msra.mxu0 %v839
      %876 = vmatprep.subr.mxu0 0.0
      %877 = vmatpush1.msra.mxu0 %v838
      %878 = vmatprep.subr.mxu0 0.0
      %879 = vmatpush1.msra.mxu0 %v837
      %880 = vmatprep.subr.mxu0 0.0
      %881 = vmatpush1.msra.mxu0 %v836
      %882 = vmatprep.subr.mxu0 0.0
      %883 = vmatpush2.msra.mxu0 0.0
      %884 = vmatprep.subr.mxu0 0.0
      %885 = vmatpush2.msra.mxu0 0.0
      %886 = vmatprep.subr.mxu0 0.0
      %887 = vmatpush2.msra.mxu0 0.0
      %888 = vmatprep.subr.mxu0 0.0
      %889 = vmatpush2.msra.mxu0 0.0
      %890 = vmatprep.subr.mxu0 0.0
      %891 = vmatpush2.msra.mxu0 0.0
      %892 = vmatprep.subr.mxu0 0.0
      %893 = vmatpush2.msra.mxu0 0.0
      %894 = vmatprep.subr.mxu0 0.0
      %895 = vmatpush2.msra.mxu0 0.0
      %896 = vmatprep.subr.mxu0 0.0
      %897 = vmatpush2.msra.mxu0 0.0
      %898 = vmatprep.subr.mxu0 0.0
      %899 = vmatpush2.msra.mxu0 0.0
      %900 = vmatprep.subr.mxu0 0.0
      %901 = vmatpush2.msra.mxu0 0.0
      %902 = vmatprep.subr.mxu0 0.0
      %903 = vmatpush2.msra.mxu0 0.0
      %904 = vmatprep.subr.mxu0 0.0
      %905 = vmatpush2.msra.mxu0 0.0
      %906 = vmatprep.subr.mxu0 0.0
      %907 = vmatpush2.msra.mxu0 0.0
      %908 = vmatprep.subr.mxu0 0.0
      %909 = vmatpush2.msra.mxu0 0.0
      %910 = vmatprep.subr.mxu0 0.0
      %911 = vmatpush2.msra.mxu0 0.0
      %912 = vmatprep.subr.mxu0 0.0
      %913 = vmatpush2.msra.mxu0 0.0
      %914 = vmatprep.mubr.f32.mxu0 0.0
      %915 = vmatmul.mubr.f32.gmra.mxu0 %v848
      %v916 = vpop.f32.mrf.mxu0
      %v917 = vadd.f32 %v845, %v916
      %v918 = vpop.f32.mrf.mxu0
      %919 = vdwg.mxu0
      %v920 = vmax.f32 %v917, 0.0
      %v921 = vld [vmem:[%s16] sm:$0xff]
      %v922 = vld [vmem:[%s16 + $0x8] sm:$0xff]
      %v923 = vld [vmem:[%s16 + $0x10] sm:$0xff]
      %v924 = vld [vmem:[%s16 + $0x18] sm:$0xff]
      %v925 = vld [vmem:[%s17] sm:$0x1]
      %v927 = vlaneseq
      %v928 = vshrl.u32 %v927, 7
      %v929 = vsub.s32 0, %v928
      %v930 = vrot.slane %v925, %v929
      %v933 = vsel %vm722, %v920, 0
      %935 = vmatprep.subr.mxu0 0.0
      %936 = vmatpush1.msra.mxu0 0.0
      %937 = vmatprep.subr.mxu0 0.0
      %938 = vmatpush1.msra.mxu0 0.0
      %939 = vmatprep.subr.mxu0 0.0
      %940 = vmatpush1.msra.mxu0 0.0
      %941 = vmatprep.subr.mxu0 0.0
      %942 = vmatpush1.msra.mxu0 0.0
      %943 = vmatprep.subr.mxu0 0.0
      %944 = vmatpush1.msra.mxu0 0.0
      %945 = vmatprep.subr.mxu0 0.0
      %946 = vmatpush1.msra.mxu0 0.0
      %947 = vmatprep.subr.mxu0 0.0
      %948 = vmatpush1.msra.mxu0 0.0
      %949 = vmatprep.subr.mxu0 0.0
      %950 = vmatpush1.msra.mxu0 0.0
      %951 = vmatprep.subr.mxu0 0.0
      %952 = vmatpush1.msra.mxu0 0.0
      %953 = vmatprep.subr.mxu0 0.0
      %954 = vmatpush1.msra.mxu0 0.0
      %955 = vmatprep.subr.mxu0 0.0
      %956 = vmatpush1.msra.mxu0 0.0
      %957 = vmatprep.subr.mxu0 0.0
      %958 = vmatpush1.msra.mxu0 0.0
      %959 = vmatprep.subr.mxu0 0.0
      %960 = vmatpush1.msra.mxu0 %v924
      %961 = vmatprep.subr.mxu0 0.0
      %962 = vmatpush1.msra.mxu0 %v923
      %963 = vmatprep.subr.mxu0 0.0
      %964 = vmatpush1.msra.mxu0 %v922
      %965 = vmatprep.subr.mxu0 0.0
      %966 = vmatpush1.msra.mxu0 %v921
      %967 = vmatprep.subr.mxu0 0.0
      %968 = vmatpush2.msra.mxu0 0.0
      %969 = vmatprep.subr.mxu0 0.0
      %970 = vmatpush2.msra.mxu0 0.0
      %971 = vmatprep.subr.mxu0 0.0
      %972 = vmatpush2.msra.mxu0 0.0
      %973 = vmatprep.subr.mxu0 0.0
      %974 = vmatpush2.msra.mxu0 0.0
      %975 = vmatprep.subr.mxu0 0.0
      %976 = vmatpush2.msra.mxu0 0.0
      %977 = vmatprep.subr.mxu0 0.0
      %978 = vmatpush2.msra.mxu0 0.0
      %979 = vmatprep.subr.mxu0 0.0
      %980 = vmatpush2.msra.mxu0 0.0
      %981 = vmatprep.subr.mxu0 0.0
      %982 = vmatpush2.msra.mxu0 0.0
      %983 = vmatprep.subr.mxu0 0.0
      %984 = vmatpush2.msra.mxu0 0.0
      %985 = vmatprep.subr.mxu0 0.0
      %986 = vmatpush2.msra.mxu0 0.0
      %987 = vmatprep.subr.mxu0 0.0
      %988 = vmatpush2.msra.mxu0 0.0
      %989 = vmatprep.subr.mxu0 0.0
      %990 = vmatpush2.msra.mxu0 0.0
      %991 = vmatprep.subr.mxu0 0.0
      %992 = vmatpush2.msra.mxu0 0.0
      %993 = vmatprep.subr.mxu0 0.0
      %994 = vmatpush2.msra.mxu0 0.0
      %995 = vmatprep.subr.mxu0 0.0
      %996 = vmatpush2.msra.mxu0 0.0
      %997 = vmatprep.subr.mxu0 0.0
      %998 = vmatpush2.msra.mxu0 0.0
      %999 = vmatprep.mubr.f32.mxu0 0.0
      %1000 = vmatmul.mubr.f32.gmra.mxu0 %v933
      %v1001 = vpop.f32.mrf.mxu0
      %v1002 = vadd.f32 %v930, %v1001
      %v1003 = vpop.f32.mrf.mxu0
      %1004 = vdwg.mxu0
      %vm1005 = vcmask 64512
      %1006 = vst.msk [vmem:[%s712] sm:$0xff] %vm1005, %v1002
      %v1007 = vld [vmem:[%s18] sm:$0xff]
      %v1008 = vld [vmem:[%s18 + $0x8] sm:$0xff]
      %v1009 = vld [vmem:[%s18 + $0x10] sm:$0xff]
      %v1010 = vld [vmem:[%s18 + $0x18] sm:$0xff]
      %v1011 = vld [vmem:[%s19] sm:$0x1]
      %v1013 = vlaneseq
      %v1014 = vshrl.u32 %v1013, 7
      %v1015 = vsub.s32 0, %v1014
      %v1016 = vrot.slane %v1011, %v1015
      %1018 = vmatprep.subr.mxu0 0.0
      %1019 = vmatpush1.msra.mxu0 0.0
      %1020 = vmatprep.subr.mxu0 0.0
      %1021 = vmatpush1.msra.mxu0 0.0
      %1022 = vmatprep.subr.mxu0 0.0
      %1023 = vmatpush1.msra.mxu0 0.0
      %1024 = vmatprep.subr.mxu0 0.0
      %1025 = vmatpush1.msra.mxu0 0.0
      %1026 = vmatprep.subr.mxu0 0.0
      %1027 = vmatpush1.msra.mxu0 0.0
      %1028 = vmatprep.subr.mxu0 0.0
      %1029 = vmatpush1.msra.mxu0 0.0
      %1030 = vmatprep.subr.mxu0 0.0
      %1031 = vmatpush1.msra.mxu0 0.0
      %1032 = vmatprep.subr.mxu0 0.0
      %1033 = vmatpush1.msra.mxu0 0.0
      %1034 = vmatprep.subr.mxu0 0.0
      %1035 = vmatpush1.msra.mxu0 0.0
      %1036 = vmatprep.subr.mxu0 0.0
      %1037 = vmatpush1.msra.mxu0 0.0
      %1038 = vmatprep.subr.mxu0 0.0
      %1039 = vmatpush1.msra.mxu0 0.0
      %1040 = vmatprep.subr.mxu0 0.0
      %1041 = vmatpush1.msra.mxu0 0.0
      %1042 = vmatprep.subr.mxu0 0.0
      %1043 = vmatpush1.msra.mxu0 %v1010
      %1044 = vmatprep.subr.mxu0 0.0
      %1045 = vmatpush1.msra.mxu0 %v1009
      %1046 = vmatprep.subr.mxu0 0.0
      %1047 = vmatpush1.msra.mxu0 %v1008
      %1048 = vmatprep.subr.mxu0 0.0
      %1049 = vmatpush1.msra.mxu0 %v1007
      %1050 = vmatprep.subr.mxu0 0.0
      %1051 = vmatpush2.msra.mxu0 0.0
      %1052 = vmatprep.subr.mxu0 0.0
      %1053 = vmatpush2.msra.mxu0 0.0
      %1054 = vmatprep.subr.mxu0 0.0
      %1055 = vmatpush2.msra.mxu0 0.0
      %1056 = vmatprep.subr.mxu0 0.0
      %1057 = vmatpush2.msra.mxu0 0.0
      %1058 = vmatprep.subr.mxu0 0.0
      %1059 = vmatpush2.msra.mxu0 0.0
      %1060 = vmatprep.subr.mxu0 0.0
      %1061 = vmatpush2.msra.mxu0 0.0
      %1062 = vmatprep.subr.mxu0 0.0
      %1063 = vmatpush2.msra.mxu0 0.0
      %1064 = vmatprep.subr.mxu0 0.0
      %1065 = vmatpush2.msra.mxu0 0.0
      %1066 = vmatprep.subr.mxu0 0.0
      %1067 = vmatpush2.msra.mxu0 0.0
      %1068 = vmatprep.subr.mxu0 0.0
      %1069 = vmatpush2.msra.mxu0 0.0
      %1070 = vmatprep.subr.mxu0 0.0
      %1071 = vmatpush2.msra.mxu0 0.0
      %1072 = vmatprep.subr.mxu0 0.0
      %1073 = vmatpush2.msra.mxu0 0.0
      %1074 = vmatprep.subr.mxu0 0.0
      %1075 = vmatpush2.msra.mxu0 0.0
      %1076 = vmatprep.subr.mxu0 0.0
      %1077 = vmatpush2.msra.mxu0 0.0
      %1078 = vmatprep.subr.mxu0 0.0
      %1079 = vmatpush2.msra.mxu0 0.0
      %1080 = vmatprep.subr.mxu0 0.0
      %1081 = vmatpush2.msra.mxu0 0.0
      %1082 = vmatprep.mubr.f32.mxu0 0.0
      %1083 = vmatmul.mubr.f32.gmra.mxu0 %v763
      %v1084 = vpop.f32.mrf.mxu0
      %v1085 = vadd.f32 %v1016, %v1084
      %v1086 = vpop.f32.mrf.mxu0
      %1087 = vdwg.mxu0
      %vm1088 = vcmask 15360
      %1089 = vst.msk [vmem:[%s716] sm:$0xff] %vm1088, %v1085
      %v1090 = vld [vmem:[%s2] sm:$0xff]
      %v1091 = vld [vmem:[%s2 + $0x8] sm:$0xff]
      %v1092 = vld [vmem:[%s2 + $0x10] sm:$0xff]
      %v1093 = vld [vmem:[%s2 + $0x18] sm:$0xff]
      %v1094 = vld [vmem:[%s3] sm:$0x1]
      %v1096 = vlaneseq
      %v1097 = vshrl.u32 %v1096, 7
      %v1098 = vsub.s32 0, %v1097
      %v1099 = vrot.slane %v1094, %v1098
      %v1102 = vsel %vm722, %v719, 0
      %1104 = vmatprep.subr.mxu0 0.0
      %1105 = vmatpush1.msra.mxu0 0.0
      %1106 = vmatprep.subr.mxu0 0.0
      %1107 = vmatpush1.msra.mxu0 0.0
      %1108 = vmatprep.subr.mxu0 0.0
      %1109 = vmatpush1.msra.mxu0 0.0
      %1110 = vmatprep.subr.mxu0 0.0
      %1111 = vmatpush1.msra.mxu0 0.0
      %1112 = vmatprep.subr.mxu0 0.0
      %1113 = vmatpush1.msra.mxu0 0.0
      %1114 = vmatprep.subr.mxu0 0.0
      %1115 = vmatpush1.msra.mxu0 0.0
      %1116 = vmatprep.subr.mxu0 0.0
      %1117 = vmatpush1.msra.mxu0 0.0
      %1118 = vmatprep.subr.mxu0 0.0
      %1119 = vmatpush1.msra.mxu0 0.0
      %1120 = vmatprep.subr.mxu0 0.0
      %1121 = vmatpush1.msra.mxu0 0.0
      %1122 = vmatprep.subr.mxu0 0.0
      %1123 = vmatpush1.msra.mxu0 0.0
      %1124 = vmatprep.subr.mxu0 0.0
      %1125 = vmatpush1.msra.mxu0 0.0
      %1126 = vmatprep.subr.mxu0 0.0
      %1127 = vmatpush1.msra.mxu0 0.0
      %1128 = vmatprep.subr.mxu0 0.0
      %1129 = vmatpush1.msra.mxu0 %v1093
      %1130 = vmatprep.subr.mxu0 0.0
      %1131 = vmatpush1.msra.mxu0 %v1092
      %1132 = vmatprep.subr.mxu0 0.0
      %1133 = vmatpush1.msra.mxu0 %v1091
      %1134 = vmatprep.subr.mxu0 0.0
      %1135 = vmatpush1.msra.mxu0 %v1090
      %1136 = vmatprep.subr.mxu0 0.0
      %1137 = vmatpush2.msra.mxu0 0.0
      %1138 = vmatprep.subr.mxu0 0.0
      %1139 = vmatpush2.msra.mxu0 0.0
      %1140 = vmatprep.subr.mxu0 0.0
      %1141 = vmatpush2.msra.mxu0 0.0
      %1142 = vmatprep.subr.mxu0 0.0
      %1143 = vmatpush2.msra.mxu0 0.0
      %1144 = vmatprep.subr.mxu0 0.0
      %1145 = vmatpush2.msra.mxu0 0.0
      %1146 = vmatprep.subr.mxu0 0.0
      %1147 = vmatpush2.msra.mxu0 0.0
      %1148 = vmatprep.subr.mxu0 0.0
      %1149 = vmatpush2.msra.mxu0 0.0
      %1150 = vmatprep.subr.mxu0 0.0
      %1151 = vmatpush2.msra.mxu0 0.0
      %1152 = vmatprep.subr.mxu0 0.0
      %1153 = vmatpush2.msra.mxu0 0.0
      %1154 = vmatprep.subr.mxu0 0.0
      %1155 = vmatpush2.msra.mxu0 0.0
      %1156 = vmatprep.subr.mxu0 0.0
      %1157 = vmatpush2.msra.mxu0 0.0
      %1158 = vmatprep.subr.mxu0 0.0
      %1159 = vmatpush2.msra.mxu0 0.0
      %1160 = vmatprep.subr.mxu0 0.0
      %1161 = vmatpush2.msra.mxu0 0.0
      %1162 = vmatprep.subr.mxu0 0.0
      %1163 = vmatpush2.msra.mxu0 0.0
      %1164 = vmatprep.subr.mxu0 0.0
      %1165 = vmatpush2.msra.mxu0 0.0
      %1166 = vmatprep.subr.mxu0 0.0
      %1167 = vmatpush2.msra.mxu0 0.0
      %1168 = vmatprep.mubr.f32.mxu0 0.0
      %1169 = vmatmul.mubr.f32.gmra.mxu0 %v1102
      %v1170 = vpop.f32.mrf.mxu0
      %v1171 = vadd.f32 %v1099, %v1170
      %v1172 = vpop.f32.mrf.mxu0
      %1173 = vdwg.mxu0
      %v1174 = vld [vmem:[%s4] sm:$0xff]
      %v1175 = vld [vmem:[%s4 + $0x8] sm:$0xff]
      %v1176 = vld [vmem:[%s4 + $0x10] sm:$0xff]
      %v1177 = vld [vmem:[%s4 + $0x18] sm:$0xff]
      %v1178 = vld [vmem:[%s5] sm:$0x1]
      %v1180 = vlaneseq
      %v1181 = vshrl.u32 %v1180, 7
      %v1182 = vsub.s32 0, %v1181
      %v1183 = vrot.slane %v1178, %v1182
      %v1186 = vsel %vm722, %v717, 0
      %1188 = vmatprep.subr.mxu0 0.0
      %1189 = vmatpush1.msra.mxu0 0.0
      %1190 = vmatprep.subr.mxu0 0.0
      %1191 = vmatpush1.msra.mxu0 0.0
      %1192 = vmatprep.subr.mxu0 0.0
      %1193 = vmatpush1.msra.mxu0 0.0
      %1194 = vmatprep.subr.mxu0 0.0
      %1195 = vmatpush1.msra.mxu0 0.0
      %1196 = vmatprep.subr.mxu0 0.0
      %1197 = vmatpush1.msra.mxu0 0.0
      %1198 = vmatprep.subr.mxu0 0.0
      %1199 = vmatpush1.msra.mxu0 0.0
      %1200 = vmatprep.subr.mxu0 0.0
      %1201 = vmatpush1.msra.mxu0 0.0
      %1202 = vmatprep.subr.mxu0 0.0
      %1203 = vmatpush1.msra.mxu0 0.0
      %1204 = vmatprep.subr.mxu0 0.0
      %1205 = vmatpush1.msra.mxu0 0.0
      %1206 = vmatprep.subr.mxu0 0.0
      %1207 = vmatpush1.msra.mxu0 0.0
      %1208 = vmatprep.subr.mxu0 0.0
      %1209 = vmatpush1.msra.mxu0 0.0
      %1210 = vmatprep.subr.mxu0 0.0
      %1211 = vmatpush1.msra.mxu0 0.0
      %1212 = vmatprep.subr.mxu0 0.0
      %1213 = vmatpush1.msra.mxu0 %v1177
      %1214 = vmatprep.subr.mxu0 0.0
      %1215 = vmatpush1.msra.mxu0 %v1176
      %1216 = vmatprep.subr.mxu0 0.0
      %1217 = vmatpush1.msra.mxu0 %v1175
      %1218 = vmatprep.subr.mxu0 0.0
      %1219 = vmatpush1.msra.mxu0 %v1174
      %1220 = vmatprep.subr.mxu0 0.0
      %1221 = vmatpush2.msra.mxu0 0.0
      %1222 = vmatprep.subr.mxu0 0.0
      %1223 = vmatpush2.msra.mxu0 0.0
      %1224 = vmatprep.subr.mxu0 0.0
      %1225 = vmatpush2.msra.mxu0 0.0
      %1226 = vmatprep.subr.mxu0 0.0
      %1227 = vmatpush2.msra.mxu0 0.0
      %1228 = vmatprep.subr.mxu0 0.0
      %1229 = vmatpush2.msra.mxu0 0.0
      %1230 = vmatprep.subr.mxu0 0.0
      %1231 = vmatpush2.msra.mxu0 0.0
      %1232 = vmatprep.subr.mxu0 0.0
      %1233 = vmatpush2.msra.mxu0 0.0
      %1234 = vmatprep.subr.mxu0 0.0
      %1235 = vmatpush2.msra.mxu0 0.0
      %1236 = vmatprep.subr.mxu0 0.0
      %1237 = vmatpush2.msra.mxu0 0.0
      %1238 = vmatprep.subr.mxu0 0.0
      %1239 = vmatpush2.msra.mxu0 0.0
      %1240 = vmatprep.subr.mxu0 0.0
      %1241 = vmatpush2.msra.mxu0 0.0
      %1242 = vmatprep.subr.mxu0 0.0
      %1243 = vmatpush2.msra.mxu0 0.0
      %1244 = vmatprep.subr.mxu0 0.0
      %1245 = vmatpush2.msra.mxu0 0.0
      %1246 = vmatprep.subr.mxu0 0.0
      %1247 = vmatpush2.msra.mxu0 0.0
      %1248 = vmatprep.subr.mxu0 0.0
      %1249 = vmatpush2.msra.mxu0 0.0
      %1250 = vmatprep.subr.mxu0 0.0
      %1251 = vmatpush2.msra.mxu0 0.0
      %1252 = vmatprep.mubr.f32.mxu0 0.0
      %1253 = vmatmul.mubr.f32.gmra.mxu0 %v1186
      %v1254 = vpop.f32.mrf.mxu0
      %v1255 = vadd.f32 %v1183, %v1254
      %v1256 = vpop.f32.mrf.mxu0
      %1257 = vdwg.mxu0
      %v1258 = vld [vmem:[%s6] sm:$0xff]
      %v1259 = vld [vmem:[%s6 + $0x8] sm:$0xff]
      %v1260 = vld [vmem:[%s6 + $0x10] sm:$0xff]
      %v1261 = vld [vmem:[%s6 + $0x18] sm:$0xff]
      %v1262 = vmul.f32 %v1171, 0.35355338
      %1264 = vrot.lane.b32.xlu0 %v1171, 96
      %v1265 = vpop.permute.xlu0 %1264
      %v1267 = vsel %vm1005, %v1262, 0
      %v1269 = vsel %vm1005, %v1265, 0
      %1271 = vmatprep.subr.mxu0 0.0
      %1272 = vmatpush1.xpose.msra.mxu0 0.0
      %1273 = vmatprep.subr.mxu0 0.0
      %1274 = vmatpush1.xpose.msra.mxu0 0.0
      %1275 = vmatprep.subr.mxu0 0.0
      %1276 = vmatpush1.xpose.msra.mxu0 0.0
      %1277 = vmatprep.subr.mxu0 0.0
      %1278 = vmatpush1.xpose.msra.mxu0 0.0
      %1279 = vmatprep.subr.mxu0 0.0
      %1280 = vmatpush1.xpose.msra.mxu0 0.0
      %1281 = vmatprep.subr.mxu0 0.0
      %1282 = vmatpush1.xpose.msra.mxu0 0.0
      %1283 = vmatprep.subr.mxu0 0.0
      %1284 = vmatpush1.xpose.msra.mxu0 0.0
      %1285 = vmatprep.subr.mxu0 0.0
      %1286 = vmatpush1.xpose.msra.mxu0 0.0
      %1287 = vmatprep.subr.mxu0 0.0
      %1288 = vmatpush1.xpose.msra.mxu0 0.0
      %1289 = vmatprep.subr.mxu0 0.0
      %1290 = vmatpush1.xpose.msra.mxu0 0.0
      %1291 = vmatprep.subr.mxu0 0.0
      %1292 = vmatpush1.xpose.msra.mxu0 0.0
      %1293 = vmatprep.subr.mxu0 0.0
      %1294 = vmatpush1.xpose.msra.mxu0 0.0
      %1295 = vmatprep.subr.mxu0 0.0
      %1296 = vmatpush1.xpose.msra.mxu0 0.0
      %1297 = vmatprep.subr.mxu0 0.0
      %1298 = vmatpush1.xpose.msra.mxu0 0.0
      %1299 = vmatprep.subr.mxu0 0.0
      %1300 = vmatpush1.xpose.msra.mxu0 0.0
      %1301 = vmatprep.subr.mxu0 0.0
      %1302 = vmatpush1.xpose.msra.mxu0 %v1269
      %1303 = vmatprep.subr.mxu0 0.0
      %1304 = vmatpush2.xpose.msra.mxu0 0.0
      %1305 = vmatprep.subr.mxu0 0.0
      %1306 = vmatpush2.xpose.msra.mxu0 0.0
      %1307 = vmatprep.subr.mxu0 0.0
      %1308 = vmatpush2.xpose.msra.mxu0 0.0
      %1309 = vmatprep.subr.mxu0 0.0
      %1310 = vmatpush2.xpose.msra.mxu0 0.0
      %1311 = vmatprep.subr.mxu0 0.0
      %1312 = vmatpush2.xpose.msra.mxu0 0.0
      %1313 = vmatprep.subr.mxu0 0.0
      %1314 = vmatpush2.xpose.msra.mxu0 0.0
      %1315 = vmatprep.subr.mxu0 0.0
      %1316 = vmatpush2.xpose.msra.mxu0 0.0
      %1317 = vmatprep.subr.mxu0 0.0
      %1318 = vmatpush2.xpose.msra.mxu0 0.0
      %1319 = vmatprep.subr.mxu0 0.0
      %1320 = vmatpush2.xpose.msra.mxu0 0.0
      %1321 = vmatprep.subr.mxu0 0.0
      %1322 = vmatpush2.xpose.msra.mxu0 0.0
      %1323 = vmatprep.subr.mxu0 0.0
      %1324 = vmatpush2.xpose.msra.mxu0 0.0
      %1325 = vmatprep.subr.mxu0 0.0
      %1326 = vmatpush2.xpose.msra.mxu0 0.0
      %1327 = vmatprep.subr.mxu0 0.0
      %1328 = vmatpush2.xpose.msra.mxu0 0.0
      %1329 = vmatprep.subr.mxu0 0.0
      %1330 = vmatpush2.xpose.msra.mxu0 0.0
      %1331 = vmatprep.subr.mxu0 0.0
      %1332 = vmatpush2.xpose.msra.mxu0 0.0
      %1333 = vmatprep.subr.mxu0 0.0
      %1334 = vmatpush2.xpose.msra.mxu0 0.0
      %1335 = vmatprep.mubr.f32.mxu0 0.0
      %1336 = vmatmul.mubr.f32.gmra.mxu0 %v1267
      %v1337 = vpop.f32.mrf.mxu0
      %v1338 = vadd.f32 0.0, %v1337
      %v1339 = vpop.f32.mrf.mxu0
      %1340 = vdwg.mxu0
      %v1341 = vsel %vm1005, %v1338, -inf
      %1342 = vmax.xlane.f32.xlu0 %v1341
      %v1343 = vpop.xlane.xlu0 %1342
      %v1344 = vsub.f32 %v1338, %v1343
      %v1345 = vmul.f32 %v1344, 1.442695
      %v1346 = vpow.pop %v1345
      %v1347 = vsel %vm1005, %v1346, 0.0
      %1348 = vadd.xlane.f32.xlu0 %v1347
      %v1349 = vpop.xlane.xlu0 %1348
      %v1350 = vrcp.pop %v1349
      %v1351 = vmul.f32 %v1346, %v1350
      %v1353 = vsel %vm1005, %v1351, 0
      %1355 = vmatprep.subr.mxu0 0.0
      %1356 = vmatpush1.msra.mxu0 0.0
      %1357 = vmatprep.subr.mxu0 0.0
      %1358 = vmatpush1.msra.mxu0 0.0
      %1359 = vmatprep.subr.mxu0 0.0
      %1360 = vmatpush1.msra.mxu0 0.0
      %1361 = vmatprep.subr.mxu0 0.0
      %1362 = vmatpush1.msra.mxu0 0.0
      %1363 = vmatprep.subr.mxu0 0.0
      %1364 = vmatpush1.msra.mxu0 0.0
      %1365 = vmatprep.subr.mxu0 0.0
      %1366 = vmatpush1.msra.mxu0 0.0
      %1367 = vmatprep.subr.mxu0 0.0
      %1368 = vmatpush1.msra.mxu0 0.0
      %1369 = vmatprep.subr.mxu0 0.0
      %1370 = vmatpush1.msra.mxu0 0.0
      %1371 = vmatprep.subr.mxu0 0.0
      %1372 = vmatpush1.msra.mxu0 0.0
      %1373 = vmatprep.subr.mxu0 0.0
      %1374 = vmatpush1.msra.mxu0 0.0
      %1375 = vmatprep.subr.mxu0 0.0
      %1376 = vmatpush1.msra.mxu0 0.0
      %1377 = vmatprep.subr.mxu0 0.0
      %1378 = vmatpush1.msra.mxu0 0.0
      %1379 = vmatprep.subr.mxu0 0.0
      %1380 = vmatpush1.msra.mxu0 0.0
      %1381 = vmatprep.subr.mxu0 0.0
      %1382 = vmatpush1.msra.mxu0 0.0
      %1383 = vmatprep.subr.mxu0 0.0
      %1384 = vmatpush1.msra.mxu0 0.0
      %1385 = vmatprep.subr.mxu0 0.0
      %1386 = vmatpush1.msra.mxu0 %v1255
      %1387 = vmatprep.subr.mxu0 0.0
      %1388 = vmatpush2.msra.mxu0 0.0
      %1389 = vmatprep.subr.mxu0 0.0
      %1390 = vmatpush2.msra.mxu0 0.0
      %1391 = vmatprep.subr.mxu0 0.0
      %1392 = vmatpush2.msra.mxu0 0.0
      %1393 = vmatprep.subr.mxu0 0.0
      %1394 = vmatpush2.msra.mxu0 0.0
      %1395 = vmatprep.subr.mxu0 0.0
      %1396 = vmatpush2.msra.mxu0 0.0
      %1397 = vmatprep.subr.mxu0 0.0
      %1398 = vmatpush2.msra.mxu0 0.0
      %1399 = vmatprep.subr.mxu0 0.0
      %1400 = vmatpush2.msra.mxu0 0.0
      %1401 = vmatprep.subr.mxu0 0.0
      %1402 = vmatpush2.msra.mxu0 0.0
      %1403 = vmatprep.subr.mxu0 0.0
      %1404 = vmatpush2.msra.mxu0 0.0
      %1405 = vmatprep.subr.mxu0 0.0
      %1406 = vmatpush2.msra.mxu0 0.0
      %1407 = vmatprep.subr.mxu0 0.0
      %1408 = vmatpush2.msra.mxu0 0.0
      %1409 = vmatprep.subr.mxu0 0.0
      %1410 = vmatpush2.msra.mxu0 0.0
      %1411 = vmatprep.subr.mxu0 0.0
      %1412 = vmatpush2.msra.mxu0 0.0
      %1413 = vmatprep.subr.mxu0 0.0
      %1414 = vmatpush2.msra.mxu0 0.0
      %1415 = vmatprep.subr.mxu0 0.0
      %1416 = vmatpush2.msra.mxu0 0.0
      %1417 = vmatprep.subr.mxu0 0.0
      %1418 = vmatpush2.msra.mxu0 0.0
      %1419 = vmatprep.mubr.f32.mxu0 0.0
      %1420 = vmatmul.mubr.f32.gmra.mxu0 %v1353
      %v1421 = vpop.f32.mrf.mxu0
      %v1422 = vadd.f32 0.0, %v1421
      %v1423 = vpop.f32.mrf.mxu0
      %1424 = vdwg.mxu0
      %1425 = vrot.lane.b32.xlu0 %v1262, 120
      %v1426 = vpop.permute.xlu0 %1425
      %1427 = vrot.lane.b32.xlu0 %v1171, 88
      %v1428 = vpop.permute.xlu0 %1427
      %v1429 = vsel %vm1005, %v1426, 0
      %v1431 = vsel %vm1005, %v1428, 0
      %1433 = vmatprep.subr.mxu0 0.0
      %1434 = vmatpush1.xpose.msra.mxu0 0.0
      %1435 = vmatprep.subr.mxu0 0.0
      %1436 = vmatpush1.xpose.msra.mxu0 0.0
      %1437 = vmatprep.subr.mxu0 0.0
      %1438 = vmatpush1.xpose.msra.mxu0 0.0
      %1439 = vmatprep.subr.mxu0 0.0
      %1440 = vmatpush1.xpose.msra.mxu0 0.0
      %1441 = vmatprep.subr.mxu0 0.0
      %1442 = vmatpush1.xpose.msra.mxu0 0.0
      %1443 = vmatprep.subr.mxu0 0.0
      %1444 = vmatpush1.xpose.msra.mxu0 0.0
      %1445 = vmatprep.subr.mxu0 0.0
      %1446 = vmatpush1.xpose.msra.mxu0 0.0
      %1447 = vmatprep.subr.mxu0 0.0
      %1448 = vmatpush1.xpose.msra.mxu0 0.0
      %1449 = vmatprep.subr.mxu0 0.0
      %1450 = vmatpush1.xpose.msra.mxu0 0.0
      %1451 = vmatprep.subr.mxu0 0.0
      %1452 = vmatpush1.xpose.msra.mxu0 0.0
      %1453 = vmatprep.subr.mxu0 0.0
      %1454 = vmatpush1.xpose.msra.mxu0 0.0
      %1455 = vmatprep.subr.mxu0 0.0
      %1456 = vmatpush1.xpose.msra.mxu0 0.0
      %1457 = vmatprep.subr.mxu0 0.0
      %1458 = vmatpush1.xpose.msra.mxu0 0.0
      %1459 = vmatprep.subr.mxu0 0.0
      %1460 = vmatpush1.xpose.msra.mxu0 0.0
      %1461 = vmatprep.subr.mxu0 0.0
      %1462 = vmatpush1.xpose.msra.mxu0 0.0
      %1463 = vmatprep.subr.mxu0 0.0
      %1464 = vmatpush1.xpose.msra.mxu0 %v1431
      %1465 = vmatprep.subr.mxu0 0.0
      %1466 = vmatpush2.xpose.msra.mxu0 0.0
      %1467 = vmatprep.subr.mxu0 0.0
      %1468 = vmatpush2.xpose.msra.mxu0 0.0
      %1469 = vmatprep.subr.mxu0 0.0
      %1470 = vmatpush2.xpose.msra.mxu0 0.0
      %1471 = vmatprep.subr.mxu0 0.0
      %1472 = vmatpush2.xpose.msra.mxu0 0.0
      %1473 = vmatprep.subr.mxu0 0.0
      %1474 = vmatpush2.xpose.msra.mxu0 0.0
      %1475 = vmatprep.subr.mxu0 0.0
      %1476 = vmatpush2.xpose.msra.mxu0 0.0
      %1477 = vmatprep.subr.mxu0 0.0
      %1478 = vmatpush2.xpose.msra.mxu0 0.0
      %1479 = vmatprep.subr.mxu0 0.0
      %1480 = vmatpush2.xpose.msra.mxu0 0.0
      %1481 = vmatprep.subr.mxu0 0.0
      %1482 = vmatpush2.xpose.msra.mxu0 0.0
      %1483 = vmatprep.subr.mxu0 0.0
      %1484 = vmatpush2.xpose.msra.mxu0 0.0
      %1485 = vmatprep.subr.mxu0 0.0
      %1486 = vmatpush2.xpose.msra.mxu0 0.0
      %1487 = vmatprep.subr.mxu0 0.0
      %1488 = vmatpush2.xpose.msra.mxu0 0.0
      %1489 = vmatprep.subr.mxu0 0.0
      %1490 = vmatpush2.xpose.msra.mxu0 0.0
      %1491 = vmatprep.subr.mxu0 0.0
      %1492 = vmatpush2.xpose.msra.mxu0 0.0
      %1493 = vmatprep.subr.mxu0 0.0
      %1494 = vmatpush2.xpose.msra.mxu0 0.0
      %1495 = vmatprep.subr.mxu0 0.0
      %1496 = vmatpush2.xpose.msra.mxu0 0.0
      %1497 = vmatprep.mubr.f32.mxu0 0.0
      %1498 = vmatmul.mubr.f32.gmra.mxu0 %v1429
      %v1499 = vpop.f32.mrf.mxu0
      %v1500 = vadd.f32 0.0, %v1499
      %v1501 = vpop.f32.mrf.mxu0
      %1502 = vdwg.mxu0
      %v1503 = vsel %vm1005, %v1500, -inf
      %1504 = vmax.xlane.f32.xlu0 %v1503
      %v1505 = vpop.xlane.xlu0 %1504
      %v1506 = vsub.f32 %v1500, %v1505
      %v1507 = vmul.f32 %v1506, 1.442695
      %v1508 = vpow.pop %v1507
      %v1509 = vsel %vm1005, %v1508, 0.0
      %1510 = vadd.xlane.f32.xlu0 %v1509
      %v1511 = vpop.xlane.xlu0 %1510
      %v1512 = vrcp.pop %v1511
      %v1513 = vmul.f32 %v1508, %v1512
      %1515 = vrot.lane.b32.xlu0 %v1255, 120
      %v1516 = vpop.permute.xlu0 %1515
      %v1519 = vsel %vm1005, %v1513, 0
      %1521 = vmatprep.subr.mxu0 0.0
      %1522 = vmatpush1.msra.mxu0 0.0
      %1523 = vmatprep.subr.mxu0 0.0
      %1524 = vmatpush1.msra.mxu0 0.0
      %1525 = vmatprep.subr.mxu0 0.0
      %1526 = vmatpush1.msra.mxu0 0.0
      %1527 = vmatprep.subr.mxu0 0.0
      %1528 = vmatpush1.msra.mxu0 0.0
      %1529 = vmatprep.subr.mxu0 0.0
      %1530 = vmatpush1.msra.mxu0 0.0
      %1531 = vmatprep.subr.mxu0 0.0
      %1532 = vmatpush1.msra.mxu0 0.0
      %1533 = vmatprep.subr.mxu0 0.0
      %1534 = vmatpush1.msra.mxu0 0.0
      %1535 = vmatprep.subr.mxu0 0.0
      %1536 = vmatpush1.msra.mxu0 0.0
      %1537 = vmatprep.subr.mxu0 0.0
      %1538 = vmatpush1.msra.mxu0 0.0
      %1539 = vmatprep.subr.mxu0 0.0
      %1540 = vmatpush1.msra.mxu0 0.0
      %1541 = vmatprep.subr.mxu0 0.0
      %1542 = vmatpush1.msra.mxu0 0.0
      %1543 = vmatprep.subr.mxu0 0.0
      %1544 = vmatpush1.msra.mxu0 0.0
      %1545 = vmatprep.subr.mxu0 0.0
      %1546 = vmatpush1.msra.mxu0 0.0
      %1547 = vmatprep.subr.mxu0 0.0
      %1548 = vmatpush1.msra.mxu0 0.0
      %1549 = vmatprep.subr.mxu0 0.0
      %1550 = vmatpush1.msra.mxu0 0.0
      %1551 = vmatprep.subr.mxu0 0.0
      %1552 = vmatpush1.msra.mxu0 %v1516
      %1553 = vmatprep.subr.mxu0 0.0
      %1554 = vmatpush2.msra.mxu0 0.0
      %1555 = vmatprep.subr.mxu0 0.0
      %1556 = vmatpush2.msra.mxu0 0.0
      %1557 = vmatprep.subr.mxu0 0.0
      %1558 = vmatpush2.msra.mxu0 0.0
      %1559 = vmatprep.subr.mxu0 0.0
      %1560 = vmatpush2.msra.mxu0 0.0
      %1561 = vmatprep.subr.mxu0 0.0
      %1562 = vmatpush2.msra.mxu0 0.0
      %1563 = vmatprep.subr.mxu0 0.0
      %1564 = vmatpush2.msra.mxu0 0.0
      %1565 = vmatprep.subr.mxu0 0.0
      %1566 = vmatpush2.msra.mxu0 0.0
      %1567 = vmatprep.subr.mxu0 0.0
      %1568 = vmatpush2.msra.mxu0 0.0
      %1569 = vmatprep.subr.mxu0 0.0
      %1570 = vmatpush2.msra.mxu0 0.0
      %1571 = vmatprep.subr.mxu0 0.0
      %1572 = vmatpush2.msra.mxu0 0.0
      %1573 = vmatprep.subr.mxu0 0.0
      %1574 = vmatpush2.msra.mxu0 0.0
      %1575 = vmatprep.subr.mxu0 0.0
      %1576 = vmatpush2.msra.mxu0 0.0
      %1577 = vmatprep.subr.mxu0 0.0
      %1578 = vmatpush2.msra.mxu0 0.0
      %1579 = vmatprep.subr.mxu0 0.0
      %1580 = vmatpush2.msra.mxu0 0.0
      %1581 = vmatprep.subr.mxu0 0.0
      %1582 = vmatpush2.msra.mxu0 0.0
      %1583 = vmatprep.subr.mxu0 0.0
      %1584 = vmatpush2.msra.mxu0 0.0
      %1585 = vmatprep.mubr.f32.mxu0 0.0
      %1586 = vmatmul.mubr.f32.gmra.mxu0 %v1519
      %v1587 = vpop.f32.mrf.mxu0
      %v1588 = vadd.f32 0.0, %v1587
      %v1589 = vpop.f32.mrf.mxu0
      %1590 = vdwg.mxu0
      %v1592 = vsel %vm1005, %v1588, 0
      %1594 = vmatprep.subr.mxu0 0.0
      %1595 = vmatpush1.msra.mxu0 0.0
      %1596 = vmatprep.subr.mxu0 0.0
      %1597 = vmatpush1.msra.mxu0 0.0
      %1598 = vmatprep.subr.mxu0 0.0
      %1599 = vmatpush1.msra.mxu0 0.0
      %1600 = vmatprep.subr.mxu0 0.0
      %1601 = vmatpush1.msra.mxu0 0.0
      %1602 = vmatprep.subr.mxu0 0.0
      %1603 = vmatpush1.msra.mxu0 0.0
      %1604 = vmatprep.subr.mxu0 0.0
      %1605 = vmatpush1.msra.mxu0 0.0
      %1606 = vmatprep.subr.mxu0 0.0
      %1607 = vmatpush1.msra.mxu0 0.0
      %1608 = vmatprep.subr.mxu0 0.0
      %1609 = vmatpush1.msra.mxu0 0.0
      %1610 = vmatprep.subr.mxu0 0.0
      %1611 = vmatpush1.msra.mxu0 0.0
      %1612 = vmatprep.subr.mxu0 0.0
      %1613 = vmatpush1.msra.mxu0 0.0
      %1614 = vmatprep.subr.mxu0 0.0
      %1615 = vmatpush1.msra.mxu0 0.0
      %1616 = vmatprep.subr.mxu0 0.0
      %1617 = vmatpush1.msra.mxu0 0.0
      %1618 = vmatprep.subr.mxu0 0.0
      %1619 = vmatpush1.msra.mxu0 0.0
      %1620 = vmatprep.subr.mxu0 0.0
      %1621 = vmatpush1.msra.mxu0 0.0
      %1622 = vmatprep.subr.mxu0 0.0
      %1623 = vmatpush1.msra.mxu0 0.0
      %1624 = vmatprep.subr.mxu0 0.0
      %1625 = vmatpush1.msra.mxu0 %v1259
      %1626 = vmatprep.subr.mxu0 0.0
      %1627 = vmatpush2.msra.mxu0 0.0
      %1628 = vmatprep.subr.mxu0 0.0
      %1629 = vmatpush2.msra.mxu0 0.0
      %1630 = vmatprep.subr.mxu0 0.0
      %1631 = vmatpush2.msra.mxu0 0.0
      %1632 = vmatprep.subr.mxu0 0.0
      %1633 = vmatpush2.msra.mxu0 0.0
      %1634 = vmatprep.subr.mxu0 0.0
      %1635 = vmatpush2.msra.mxu0 0.0
      %1636 = vmatprep.subr.mxu0 0.0
      %1637 = vmatpush2.msra.mxu0 0.0
      %1638 = vmatprep.subr.mxu0 0.0
      %1639 = vmatpush2.msra.mxu0 0.0
      %1640 = vmatprep.subr.mxu0 0.0
      %1641 = vmatpush2.msra.mxu0 0.0
      %1642 = vmatprep.subr.mxu0 0.0
      %1643 = vmatpush2.msra.mxu0 0.0
      %1644 = vmatprep.subr.mxu0 0.0
      %1645 = vmatpush2.msra.mxu0 0.0
      %1646 = vmatprep.subr.mxu0 0.0
      %1647 = vmatpush2.msra.mxu0 0.0
      %1648 = vmatprep.subr.mxu0 0.0
      %1649 = vmatpush2.msra.mxu0 0.0
      %1650 = vmatprep.subr.mxu0 0.0
      %1651 = vmatpush2.msra.mxu0 0.0
      %1652 = vmatprep.subr.mxu0 0.0
      %1653 = vmatpush2.msra.mxu0 0.0
      %1654 = vmatprep.subr.mxu0 0.0
      %1655 = vmatpush2.msra.mxu0 0.0
      %1656 = vmatprep.subr.mxu0 0.0
      %1657 = vmatpush2.msra.mxu0 0.0
      %1658 = vmatprep.mubr.f32.mxu0 0.0
      %1659 = vmatmul.mubr.f32.gmra.mxu0 %v1592
      %v1660 = vpop.f32.mrf.mxu0
      %v1661 = vadd.f32 0.0, %v1660
      %v1662 = vpop.f32.mrf.mxu0
      %1663 = vdwg.mxu0
      %v1665 = vsel %vm1005, %v1422, 0
      %1667 = vmatprep.subr.mxu0 0.0
      %1668 = vmatpush1.msra.mxu0 0.0
      %1669 = vmatprep.subr.mxu0 0.0
      %1670 = vmatpush1.msra.mxu0 0.0
      %1671 = vmatprep.subr.mxu0 0.0
      %1672 = vmatpush1.msra.mxu0 0.0
      %1673 = vmatprep.subr.mxu0 0.0
      %1674 = vmatpush1.msra.mxu0 0.0
      %1675 = vmatprep.subr.mxu0 0.0
      %1676 = vmatpush1.msra.mxu0 0.0
      %1677 = vmatprep.subr.mxu0 0.0
      %1678 = vmatpush1.msra.mxu0 0.0
      %1679 = vmatprep.subr.mxu0 0.0
      %1680 = vmatpush1.msra.mxu0 0.0
      %1681 = vmatprep.subr.mxu0 0.0
      %1682 = vmatpush1.msra.mxu0 0.0
      %1683 = vmatprep.subr.mxu0 0.0
      %1684 = vmatpush1.msra.mxu0 0.0
      %1685 = vmatprep.subr.mxu0 0.0
      %1686 = vmatpush1.msra.mxu0 0.0
      %1687 = vmatprep.subr.mxu0 0.0
      %1688 = vmatpush1.msra.mxu0 0.0
      %1689 = vmatprep.subr.mxu0 0.0
      %1690 = vmatpush1.msra.mxu0 0.0
      %1691 = vmatprep.subr.mxu0 0.0
      %1692 = vmatpush1.msra.mxu0 0.0
      %1693 = vmatprep.subr.mxu0 0.0
      %1694 = vmatpush1.msra.mxu0 0.0
      %1695 = vmatprep.subr.mxu0 0.0
      %1696 = vmatpush1.msra.mxu0 0.0
      %1697 = vmatprep.subr.mxu0 0.0
      %1698 = vmatpush1.msra.mxu0 %v1258
      %1699 = vmatprep.subr.mxu0 0.0
      %1700 = vmatpush2.msra.mxu0 0.0
      %1701 = vmatprep.subr.mxu0 0.0
      %1702 = vmatpush2.msra.mxu0 0.0
      %1703 = vmatprep.subr.mxu0 0.0
      %1704 = vmatpush2.msra.mxu0 0.0
      %1705 = vmatprep.subr.mxu0 0.0
      %1706 = vmatpush2.msra.mxu0 0.0
      %1707 = vmatprep.subr.mxu0 0.0
      %1708 = vmatpush2.msra.mxu0 0.0
      %1709 = vmatprep.subr.mxu0 0.0
      %1710 = vmatpush2.msra.mxu0 0.0
      %1711 = vmatprep.subr.mxu0 0.0
      %1712 = vmatpush2.msra.mxu0 0.0
      %1713 = vmatprep.subr.mxu0 0.0
      %1714 = vmatpush2.msra.mxu0 0.0
      %1715 = vmatprep.subr.mxu0 0.0
      %1716 = vmatpush2.msra.mxu0 0.0
      %1717 = vmatprep.subr.mxu0 0.0
      %1718 = vmatpush2.msra.mxu0 0.0
      %1719 = vmatprep.subr.mxu0 0.0
      %1720 = vmatpush2.msra.mxu0 0.0
      %1721 = vmatprep.subr.mxu0 0.0
      %1722 = vmatpush2.msra.mxu0 0.0
      %1723 = vmatprep.subr.mxu0 0.0
      %1724 = vmatpush2.msra.mxu0 0.0
      %1725 = vmatprep.subr.mxu0 0.0
      %1726 = vmatpush2.msra.mxu0 0.0
      %1727 = vmatprep.subr.mxu0 0.0
      %1728 = vmatpush2.msra.mxu0 0.0
      %1729 = vmatprep.subr.mxu0 0.0
      %1730 = vmatpush2.msra.mxu0 0.0
      %1731 = vmatprep.mubr.f32.mxu0 0.0
      %1732 = vmatmul.mubr.f32.gmra.mxu0 %v1665
      %v1733 = vpop.f32.mrf.mxu0
      %v1734 = vadd.f32 %v1661, %v1733
      %v1735 = vpop.f32.mrf.mxu0
      %1736 = vdwg.mxu0
      %1737 = vrot.lane.b32.xlu0 %v1262, 112
      %v1738 = vpop.permute.xlu0 %1737
      %1739 = vrot.lane.b32.xlu0 %v1171, 80
      %v1740 = vpop.permute.xlu0 %1739
      %v1741 = vsel %vm1005, %v1738, 0
      %v1743 = vsel %vm1005, %v1740, 0
      %1745 = vmatprep.subr.mxu0 0.0
      %1746 = vmatpush1.xpose.msra.mxu0 0.0
      %1747 = vmatprep.subr.mxu0 0.0
      %1748 = vmatpush1.xpose.msra.mxu0 0.0
      %1749 = vmatprep.subr.mxu0 0.0
      %1750 = vmatpush1.xpose.msra.mxu0 0.0
      %1751 = vmatprep.subr.mxu0 0.0
      %1752 = vmatpush1.xpose.msra.mxu0 0.0
      %1753 = vmatprep.subr.mxu0 0.0
      %1754 = vmatpush1.xpose.msra.mxu0 0.0
      %1755 = vmatprep.subr.mxu0 0.0
      %1756 = vmatpush1.xpose.msra.mxu0 0.0
      %1757 = vmatprep.subr.mxu0 0.0
      %1758 = vmatpush1.xpose.msra.mxu0 0.0
      %1759 = vmatprep.subr.mxu0 0.0
      %1760 = vmatpush1.xpose.msra.mxu0 0.0
      %1761 = vmatprep.subr.mxu0 0.0
      %1762 = vmatpush1.xpose.msra.mxu0 0.0
      %1763 = vmatprep.subr.mxu0 0.0
      %1764 = vmatpush1.xpose.msra.mxu0 0.0
      %1765 = vmatprep.subr.mxu0 0.0
      %1766 = vmatpush1.xpose.msra.mxu0 0.0
      %1767 = vmatprep.subr.mxu0 0.0
      %1768 = vmatpush1.xpose.msra.mxu0 0.0
      %1769 = vmatprep.subr.mxu0 0.0
      %1770 = vmatpush1.xpose.msra.mxu0 0.0
      %1771 = vmatprep.subr.mxu0 0.0
      %1772 = vmatpush1.xpose.msra.mxu0 0.0
      %1773 = vmatprep.subr.mxu0 0.0
      %1774 = vmatpush1.xpose.msra.mxu0 0.0
      %1775 = vmatprep.subr.mxu0 0.0
      %1776 = vmatpush1.xpose.msra.mxu0 %v1743
      %1777 = vmatprep.subr.mxu0 0.0
      %1778 = vmatpush2.xpose.msra.mxu0 0.0
      %1779 = vmatprep.subr.mxu0 0.0
      %1780 = vmatpush2.xpose.msra.mxu0 0.0
      %1781 = vmatprep.subr.mxu0 0.0
      %1782 = vmatpush2.xpose.msra.mxu0 0.0
      %1783 = vmatprep.subr.mxu0 0.0
      %1784 = vmatpush2.xpose.msra.mxu0 0.0
      %1785 = vmatprep.subr.mxu0 0.0
      %1786 = vmatpush2.xpose.msra.mxu0 0.0
      %1787 = vmatprep.subr.mxu0 0.0
      %1788 = vmatpush2.xpose.msra.mxu0 0.0
      %1789 = vmatprep.subr.mxu0 0.0
      %1790 = vmatpush2.xpose.msra.mxu0 0.0
      %1791 = vmatprep.subr.mxu0 0.0
      %1792 = vmatpush2.xpose.msra.mxu0 0.0
      %1793 = vmatprep.subr.mxu0 0.0
      %1794 = vmatpush2.xpose.msra.mxu0 0.0
      %1795 = vmatprep.subr.mxu0 0.0
      %1796 = vmatpush2.xpose.msra.mxu0 0.0
      %1797 = vmatprep.subr.mxu0 0.0
      %1798 = vmatpush2.xpose.msra.mxu0 0.0
      %1799 = vmatprep.subr.mxu0 0.0
      %1800 = vmatpush2.xpose.msra.mxu0 0.0
      %1801 = vmatprep.subr.mxu0 0.0
      %1802 = vmatpush2.xpose.msra.mxu0 0.0
      %1803 = vmatprep.subr.mxu0 0.0
      %1804 = vmatpush2.xpose.msra.mxu0 0.0
      %1805 = vmatprep.subr.mxu0 0.0
      %1806 = vmatpush2.xpose.msra.mxu0 0.0
      %1807 = vmatprep.subr.mxu0 0.0
      %1808 = vmatpush2.xpose.msra.mxu0 0.0
      %1809 = vmatprep.mubr.f32.mxu0 0.0
      %1810 = vmatmul.mubr.f32.gmra.mxu0 %v1741
      %v1811 = vpop.f32.mrf.mxu0
      %v1812 = vadd.f32 0.0, %v1811
      %v1813 = vpop.f32.mrf.mxu0
      %1814 = vdwg.mxu0
      %v1815 = vsel %vm1005, %v1812, -inf
      %1816 = vmax.xlane.f32.xlu0 %v1815
      %v1817 = vpop.xlane.xlu0 %1816
      %v1818 = vsub.f32 %v1812, %v1817
      %v1819 = vmul.f32 %v1818, 1.442695
      %v1820 = vpow.pop %v1819
      %v1821 = vsel %vm1005, %v1820, 0.0
      %1822 = vadd.xlane.f32.xlu0 %v1821
      %v1823 = vpop.xlane.xlu0 %1822
      %v1824 = vrcp.pop %v1823
      %v1825 = vmul.f32 %v1820, %v1824
      %1826 = vrot.lane.b32.xlu0 %v1255, 112
      %v1827 = vpop.permute.xlu0 %1826
      %v1830 = vsel %vm1005, %v1825, 0
      %1832 = vmatprep.subr.mxu0 0.0
      %1833 = vmatpush1.msra.mxu0 0.0
      %1834 = vmatprep.subr.mxu0 0.0
      %1835 = vmatpush1.msra.mxu0 0.0
      %1836 = vmatprep.subr.mxu0 0.0
      %1837 = vmatpush1.msra.mxu0 0.0
      %1838 = vmatprep.subr.mxu0 0.0
      %1839 = vmatpush1.msra.mxu0 0.0
      %1840 = vmatprep.subr.mxu0 0.0
      %1841 = vmatpush1.msra.mxu0 0.0
      %1842 = vmatprep.subr.mxu0 0.0
      %1843 = vmatpush1.msra.mxu0 0.0
      %1844 = vmatprep.subr.mxu0 0.0
      %1845 = vmatpush1.msra.mxu0 0.0
      %1846 = vmatprep.subr.mxu0 0.0
      %1847 = vmatpush1.msra.mxu0 0.0
      %1848 = vmatprep.subr.mxu0 0.0
      %1849 = vmatpush1.msra.mxu0 0.0
      %1850 = vmatprep.subr.mxu0 0.0
      %1851 = vmatpush1.msra.mxu0 0.0
      %1852 = vmatprep.subr.mxu0 0.0
      %1853 = vmatpush1.msra.mxu0 0.0
      %1854 = vmatprep.subr.mxu0 0.0
      %1855 = vmatpush1.msra.mxu0 0.0
      %1856 = vmatprep.subr.mxu0 0.0
      %1857 = vmatpush1.msra.mxu0 0.0
      %1858 = vmatprep.subr.mxu0 0.0
      %1859 = vmatpush1.msra.mxu0 0.0
      %1860 = vmatprep.subr.mxu0 0.0
      %1861 = vmatpush1.msra.mxu0 0.0
      %1862 = vmatprep.subr.mxu0 0.0
      %1863 = vmatpush1.msra.mxu0 %v1827
      %1864 = vmatprep.subr.mxu0 0.0
      %1865 = vmatpush2.msra.mxu0 0.0
      %1866 = vmatprep.subr.mxu0 0.0
      %1867 = vmatpush2.msra.mxu0 0.0
      %1868 = vmatprep.subr.mxu0 0.0
      %1869 = vmatpush2.msra.mxu0 0.0
      %1870 = vmatprep.subr.mxu0 0.0
      %1871 = vmatpush2.msra.mxu0 0.0
      %1872 = vmatprep.subr.mxu0 0.0
      %1873 = vmatpush2.msra.mxu0 0.0
      %1874 = vmatprep.subr.mxu0 0.0
      %1875 = vmatpush2.msra.mxu0 0.0
      %1876 = vmatprep.subr.mxu0 0.0
      %1877 = vmatpush2.msra.mxu0 0.0
      %1878 = vmatprep.subr.mxu0 0.0
      %1879 = vmatpush2.msra.mxu0 0.0
      %1880 = vmatprep.subr.mxu0 0.0
      %1881 = vmatpush2.msra.mxu0 0.0
      %1882 = vmatprep.subr.mxu0 0.0
      %1883 = vmatpush2.msra.mxu0 0.0
      %1884 = vmatprep.subr.mxu0 0.0
      %1885 = vmatpush2.msra.mxu0 0.0
      %1886 = vmatprep.subr.mxu0 0.0
      %1887 = vmatpush2.msra.mxu0 0.0
      %1888 = vmatprep.subr.mxu0 0.0
      %1889 = vmatpush2.msra.mxu0 0.0
      %1890 = vmatprep.subr.mxu0 0.0
      %1891 = vmatpush2.msra.mxu0 0.0
      %1892 = vmatprep.subr.mxu0 0.0
      %1893 = vmatpush2.msra.mxu0 0.0
      %1894 = vmatprep.subr.mxu0 0.0
      %1895 = vmatpush2.msra.mxu0 0.0
      %1896 = vmatprep.mubr.f32.mxu0 0.0
      %1897 = vmatmul.mubr.f32.gmra.mxu0 %v1830
      %v1898 = vpop.f32.mrf.mxu0
      %v1899 = vadd.f32 0.0, %v1898
      %v1900 = vpop.f32.mrf.mxu0
      %1901 = vdwg.mxu0
      %v1903 = vsel %vm1005, %v1899, 0
      %1905 = vmatprep.subr.mxu0 0.0
      %1906 = vmatpush1.msra.mxu0 0.0
      %1907 = vmatprep.subr.mxu0 0.0
      %1908 = vmatpush1.msra.mxu0 0.0
      %1909 = vmatprep.subr.mxu0 0.0
      %1910 = vmatpush1.msra.mxu0 0.0
      %1911 = vmatprep.subr.mxu0 0.0
      %1912 = vmatpush1.msra.mxu0 0.0
      %1913 = vmatprep.subr.mxu0 0.0
      %1914 = vmatpush1.msra.mxu0 0.0
      %1915 = vmatprep.subr.mxu0 0.0
      %1916 = vmatpush1.msra.mxu0 0.0
      %1917 = vmatprep.subr.mxu0 0.0
      %1918 = vmatpush1.msra.mxu0 0.0
      %1919 = vmatprep.subr.mxu0 0.0
      %1920 = vmatpush1.msra.mxu0 0.0
      %1921 = vmatprep.subr.mxu0 0.0
      %1922 = vmatpush1.msra.mxu0 0.0
      %1923 = vmatprep.subr.mxu0 0.0
      %1924 = vmatpush1.msra.mxu0 0.0
      %1925 = vmatprep.subr.mxu0 0.0
      %1926 = vmatpush1.msra.mxu0 0.0
      %1927 = vmatprep.subr.mxu0 0.0
      %1928 = vmatpush1.msra.mxu0 0.0
      %1929 = vmatprep.subr.mxu0 0.0
      %1930 = vmatpush1.msra.mxu0 0.0
      %1931 = vmatprep.subr.mxu0 0.0
      %1932 = vmatpush1.msra.mxu0 0.0
      %1933 = vmatprep.subr.mxu0 0.0
      %1934 = vmatpush1.msra.mxu0 0.0
      %1935 = vmatprep.subr.mxu0 0.0
      %1936 = vmatpush1.msra.mxu0 %v1260
      %1937 = vmatprep.subr.mxu0 0.0
      %1938 = vmatpush2.msra.mxu0 0.0
      %1939 = vmatprep.subr.mxu0 0.0
      %1940 = vmatpush2.msra.mxu0 0.0
      %1941 = vmatprep.subr.mxu0 0.0
      %1942 = vmatpush2.msra.mxu0 0.0
      %1943 = vmatprep.subr.mxu0 0.0
      %1944 = vmatpush2.msra.mxu0 0.0
      %1945 = vmatprep.subr.mxu0 0.0
      %1946 = vmatpush2.msra.mxu0 0.0
      %1947 = vmatprep.subr.mxu0 0.0
      %1948 = vmatpush2.msra.mxu0 0.0
      %1949 = vmatprep.subr.mxu0 0.0
      %1950 = vmatpush2.msra.mxu0 0.0
      %1951 = vmatprep.subr.mxu0 0.0
      %1952 = vmatpush2.msra.mxu0 0.0
      %1953 = vmatprep.subr.mxu0 0.0
      %1954 = vmatpush2.msra.mxu0 0.0
      %1955 = vmatprep.subr.mxu0 0.0
      %1956 = vmatpush2.msra.mxu0 0.0
      %1957 = vmatprep.subr.mxu0 0.0
      %1958 = vmatpush2.msra.mxu0 0.0
      %1959 = vmatprep.subr.mxu0 0.0
      %1960 = vmatpush2.msra.mxu0 0.0
      %1961 = vmatprep.subr.mxu0 0.0
      %1962 = vmatpush2.msra.mxu0 0.0
      %1963 = vmatprep.subr.mxu0 0.0
      %1964 = vmatpush2.msra.mxu0 0.0
      %1965 = vmatprep.subr.mxu0 0.0
      %1966 = vmatpush2.msra.mxu0 0.0
      %1967 = vmatprep.subr.mxu0 0.0
      %1968 = vmatpush2.msra.mxu0 0.0
      %1969 = vmatprep.mubr.f32.mxu0 0.0
      %1970 = vmatmul.mubr.f32.gmra.mxu0 %v1903
      %v1971 = vpop.f32.mrf.mxu0
      %v1972 = vadd.f32 0.0, %v1971
      %v1973 = vpop.f32.mrf.mxu0
      %1974 = vdwg.mxu0
      %v1975 = vadd.f32 %v1734, %v1972
      %1976 = vrot.lane.b32.xlu0 %v1262, 104
      %v1977 = vpop.permute.xlu0 %1976
      %1978 = vrot.lane.b32.xlu0 %v1171, 72
      %v1979 = vpop.permute.xlu0 %1978
      %v1980 = vsel %vm1005, %v1977, 0
      %v1982 = vsel %vm1005, %v1979, 0
      %1984 = vmatprep.subr.mxu0 0.0
      %1985 = vmatpush1.xpose.msra.mxu0 0.0
      %1986 = vmatprep.subr.mxu0 0.0
      %1987 = vmatpush1.xpose.msra.mxu0 0.0
      %1988 = vmatprep.subr.mxu0 0.0
      %1989 = vmatpush1.xpose.msra.mxu0 0.0
      %1990 = vmatprep.subr.mxu0 0.0
      %1991 = vmatpush1.xpose.msra.mxu0 0.0
      %1992 = vmatprep.subr.mxu0 0.0
      %1993 = vmatpush1.xpose.msra.mxu0 0.0
      %1994 = vmatprep.subr.mxu0 0.0
      %1995 = vmatpush1.xpose.msra.mxu0 0.0
      %1996 = vmatprep.subr.mxu0 0.0
      %1997 = vmatpush1.xpose.msra.mxu0 0.0
      %1998 = vmatprep.subr.mxu0 0.0
      %1999 = vmatpush1.xpose.msra.mxu0 0.0
      %2000 = vmatprep.subr.mxu0 0.0
      %2001 = vmatpush1.xpose.msra.mxu0 0.0
      %2002 = vmatprep.subr.mxu0 0.0
      %2003 = vmatpush1.xpose.msra.mxu0 0.0
      %2004 = vmatprep.subr.mxu0 0.0
      %2005 = vmatpush1.xpose.msra.mxu0 0.0
      %2006 = vmatprep.subr.mxu0 0.0
      %2007 = vmatpush1.xpose.msra.mxu0 0.0
      %2008 = vmatprep.subr.mxu0 0.0
      %2009 = vmatpush1.xpose.msra.mxu0 0.0
      %2010 = vmatprep.subr.mxu0 0.0
      %2011 = vmatpush1.xpose.msra.mxu0 0.0
      %2012 = vmatprep.subr.mxu0 0.0
      %2013 = vmatpush1.xpose.msra.mxu0 0.0
      %2014 = vmatprep.subr.mxu0 0.0
      %2015 = vmatpush1.xpose.msra.mxu0 %v1982
      %2016 = vmatprep.subr.mxu0 0.0
      %2017 = vmatpush2.xpose.msra.mxu0 0.0
      %2018 = vmatprep.subr.mxu0 0.0
      %2019 = vmatpush2.xpose.msra.mxu0 0.0
      %2020 = vmatprep.subr.mxu0 0.0
      %2021 = vmatpush2.xpose.msra.mxu0 0.0
      %2022 = vmatprep.subr.mxu0 0.0
      %2023 = vmatpush2.xpose.msra.mxu0 0.0
      %2024 = vmatprep.subr.mxu0 0.0
      %2025 = vmatpush2.xpose.msra.mxu0 0.0
      %2026 = vmatprep.subr.mxu0 0.0
      %2027 = vmatpush2.xpose.msra.mxu0 0.0
      %2028 = vmatprep.subr.mxu0 0.0
      %2029 = vmatpush2.xpose.msra.mxu0 0.0
      %2030 = vmatprep.subr.mxu0 0.0
      %2031 = vmatpush2.xpose.msra.mxu0 0.0
      %2032 = vmatprep.subr.mxu0 0.0
      %2033 = vmatpush2.xpose.msra.mxu0 0.0
      %2034 = vmatprep.subr.mxu0 0.0
      %2035 = vmatpush2.xpose.msra.mxu0 0.0
      %2036 = vmatprep.subr.mxu0 0.0
      %2037 = vmatpush2.xpose.msra.mxu0 0.0
      %2038 = vmatprep.subr.mxu0 0.0
      %2039 = vmatpush2.xpose.msra.mxu0 0.0
      %2040 = vmatprep.subr.mxu0 0.0
      %2041 = vmatpush2.xpose.msra.mxu0 0.0
      %2042 = vmatprep.subr.mxu0 0.0
      %2043 = vmatpush2.xpose.msra.mxu0 0.0
      %2044 = vmatprep.subr.mxu0 0.0
      %2045 = vmatpush2.xpose.msra.mxu0 0.0
      %2046 = vmatprep.subr.mxu0 0.0
      %2047 = vmatpush2.xpose.msra.mxu0 0.0
      %2048 = vmatprep.mubr.f32.mxu0 0.0
      %2049 = vmatmul.mubr.f32.gmra.mxu0 %v1980
      %v2050 = vpop.f32.mrf.mxu0
      %v2051 = vadd.f32 0.0, %v2050
      %v2052 = vpop.f32.mrf.mxu0
      %2053 = vdwg.mxu0
      %v2054 = vsel %vm1005, %v2051, -inf
      %2055 = vmax.xlane.f32.xlu0 %v2054
      %v2056 = vpop.xlane.xlu0 %2055
      %v2057 = vsub.f32 %v2051, %v2056
      %v2058 = vmul.f32 %v2057, 1.442695
      %v2059 = vpow.pop %v2058
      %v2060 = vsel %vm1005, %v2059, 0.0
      %2061 = vadd.xlane.f32.xlu0 %v2060
      %v2062 = vpop.xlane.xlu0 %2061
      %v2063 = vrcp.pop %v2062
      %v2064 = vmul.f32 %v2059, %v2063
      %2065 = vrot.lane.b32.xlu0 %v1255, 104
      %v2066 = vpop.permute.xlu0 %2065
      %v2069 = vsel %vm1005, %v2064, 0
      %2071 = vmatprep.subr.mxu0 0.0
      %2072 = vmatpush1.msra.mxu0 0.0
      %2073 = vmatprep.subr.mxu0 0.0
      %2074 = vmatpush1.msra.mxu0 0.0
      %2075 = vmatprep.subr.mxu0 0.0
      %2076 = vmatpush1.msra.mxu0 0.0
      %2077 = vmatprep.subr.mxu0 0.0
      %2078 = vmatpush1.msra.mxu0 0.0
      %2079 = vmatprep.subr.mxu0 0.0
      %2080 = vmatpush1.msra.mxu0 0.0
      %2081 = vmatprep.subr.mxu0 0.0
      %2082 = vmatpush1.msra.mxu0 0.0
      %2083 = vmatprep.subr.mxu0 0.0
      %2084 = vmatpush1.msra.mxu0 0.0
      %2085 = vmatprep.subr.mxu0 0.0
      %2086 = vmatpush1.msra.mxu0 0.0
      %2087 = vmatprep.subr.mxu0 0.0
      %2088 = vmatpush1.msra.mxu0 0.0
      %2089 = vmatprep.subr.mxu0 0.0
      %2090 = vmatpush1.msra.mxu0 0.0
      %2091 = vmatprep.subr.mxu0 0.0
      %2092 = vmatpush1.msra.mxu0 0.0
      %2093 = vmatprep.subr.mxu0 0.0
      %2094 = vmatpush1.msra.mxu0 0.0
      %2095 = vmatprep.subr.mxu0 0.0
      %2096 = vmatpush1.msra.mxu0 0.0
      %2097 = vmatprep.subr.mxu0 0.0
      %2098 = vmatpush1.msra.mxu0 0.0
      %2099 = vmatprep.subr.mxu0 0.0
      %2100 = vmatpush1.msra.mxu0 0.0
      %2101 = vmatprep.subr.mxu0 0.0
      %2102 = vmatpush1.msra.mxu0 %v2066
      %2103 = vmatprep.subr.mxu0 0.0
      %2104 = vmatpush2.msra.mxu0 0.0
      %2105 = vmatprep.subr.mxu0 0.0
      %2106 = vmatpush2.msra.mxu0 0.0
      %2107 = vmatprep.subr.mxu0 0.0
      %2108 = vmatpush2.msra.mxu0 0.0
      %2109 = vmatprep.subr.mxu0 0.0
      %2110 = vmatpush2.msra.mxu0 0.0
      %2111 = vmatprep.subr.mxu0 0.0
      %2112 = vmatpush2.msra.mxu0 0.0
      %2113 = vmatprep.subr.mxu0 0.0
      %2114 = vmatpush2.msra.mxu0 0.0
      %2115 = vmatprep.subr.mxu0 0.0
      %2116 = vmatpush2.msra.mxu0 0.0
      %2117 = vmatprep.subr.mxu0 0.0
      %2118 = vmatpush2.msra.mxu0 0.0
      %2119 = vmatprep.subr.mxu0 0.0
      %2120 = vmatpush2.msra.mxu0 0.0
      %2121 = vmatprep.subr.mxu0 0.0
      %2122 = vmatpush2.msra.mxu0 0.0
      %2123 = vmatprep.subr.mxu0 0.0
      %2124 = vmatpush2.msra.mxu0 0.0
      %2125 = vmatprep.subr.mxu0 0.0
      %2126 = vmatpush2.msra.mxu0 0.0
      %2127 = vmatprep.subr.mxu0 0.0
      %2128 = vmatpush2.msra.mxu0 0.0
      %2129 = vmatprep.subr.mxu0 0.0
      %2130 = vmatpush2.msra.mxu0 0.0
      %2131 = vmatprep.subr.mxu0 0.0
      %2132 = vmatpush2.msra.mxu0 0.0
      %2133 = vmatprep.subr.mxu0 0.0
      %2134 = vmatpush2.msra.mxu0 0.0
      %2135 = vmatprep.mubr.f32.mxu0 0.0
      %2136 = vmatmul.mubr.f32.gmra.mxu0 %v2069
      %v2137 = vpop.f32.mrf.mxu0
      %v2138 = vadd.f32 0.0, %v2137
      %v2139 = vpop.f32.mrf.mxu0
      %2140 = vdwg.mxu0
      %v2142 = vsel %vm1005, %v2138, 0
      %2144 = vmatprep.subr.mxu0 0.0
      %2145 = vmatpush1.msra.mxu0 0.0
      %2146 = vmatprep.subr.mxu0 0.0
      %2147 = vmatpush1.msra.mxu0 0.0
      %2148 = vmatprep.subr.mxu0 0.0
      %2149 = vmatpush1.msra.mxu0 0.0
      %2150 = vmatprep.subr.mxu0 0.0
      %2151 = vmatpush1.msra.mxu0 0.0
      %2152 = vmatprep.subr.mxu0 0.0
      %2153 = vmatpush1.msra.mxu0 0.0
      %2154 = vmatprep.subr.mxu0 0.0
      %2155 = vmatpush1.msra.mxu0 0.0
      %2156 = vmatprep.subr.mxu0 0.0
      %2157 = vmatpush1.msra.mxu0 0.0
      %2158 = vmatprep.subr.mxu0 0.0
      %2159 = vmatpush1.msra.mxu0 0.0
      %2160 = vmatprep.subr.mxu0 0.0
      %2161 = vmatpush1.msra.mxu0 0.0
      %2162 = vmatprep.subr.mxu0 0.0
      %2163 = vmatpush1.msra.mxu0 0.0
      %2164 = vmatprep.subr.mxu0 0.0
      %2165 = vmatpush1.msra.mxu0 0.0
      %2166 = vmatprep.subr.mxu0 0.0
      %2167 = vmatpush1.msra.mxu0 0.0
      %2168 = vmatprep.subr.mxu0 0.0
      %2169 = vmatpush1.msra.mxu0 0.0
      %2170 = vmatprep.subr.mxu0 0.0
      %2171 = vmatpush1.msra.mxu0 0.0
      %2172 = vmatprep.subr.mxu0 0.0
      %2173 = vmatpush1.msra.mxu0 0.0
      %2174 = vmatprep.subr.mxu0 0.0
      %2175 = vmatpush1.msra.mxu0 %v1261
      %2176 = vmatprep.subr.mxu0 0.0
      %2177 = vmatpush2.msra.mxu0 0.0
      %2178 = vmatprep.subr.mxu0 0.0
      %2179 = vmatpush2.msra.mxu0 0.0
      %2180 = vmatprep.subr.mxu0 0.0
      %2181 = vmatpush2.msra.mxu0 0.0
      %2182 = vmatprep.subr.mxu0 0.0
      %2183 = vmatpush2.msra.mxu0 0.0
      %2184 = vmatprep.subr.mxu0 0.0
      %2185 = vmatpush2.msra.mxu0 0.0
      %2186 = vmatprep.subr.mxu0 0.0
      %2187 = vmatpush2.msra.mxu0 0.0
      %2188 = vmatprep.subr.mxu0 0.0
      %2189 = vmatpush2.msra.mxu0 0.0
      %2190 = vmatprep.subr.mxu0 0.0
      %2191 = vmatpush2.msra.mxu0 0.0
      %2192 = vmatprep.subr.mxu0 0.0
      %2193 = vmatpush2.msra.mxu0 0.0
      %2194 = vmatprep.subr.mxu0 0.0
      %2195 = vmatpush2.msra.mxu0 0.0
      %2196 = vmatprep.subr.mxu0 0.0
      %2197 = vmatpush2.msra.mxu0 0.0
      %2198 = vmatprep.subr.mxu0 0.0
      %2199 = vmatpush2.msra.mxu0 0.0
      %2200 = vmatprep.subr.mxu0 0.0
      %2201 = vmatpush2.msra.mxu0 0.0
      %2202 = vmatprep.subr.mxu0 0.0
      %2203 = vmatpush2.msra.mxu0 0.0
      %2204 = vmatprep.subr.mxu0 0.0
      %2205 = vmatpush2.msra.mxu0 0.0
      %2206 = vmatprep.subr.mxu0 0.0
      %2207 = vmatpush2.msra.mxu0 0.0
      %2208 = vmatprep.mubr.f32.mxu0 0.0
      %2209 = vmatmul.mubr.f32.gmra.mxu0 %v2142
      %v2210 = vpop.f32.mrf.mxu0
      %v2211 = vadd.f32 0.0, %v2210
      %v2212 = vpop.f32.mrf.mxu0
      %2213 = vdwg.mxu0
      %v2214 = vadd.f32 %v1975, %v2211
      %v2215 = vld [vmem:[%s7] sm:$0x1]
      %v2217 = vlaneseq
      %v2218 = vshrl.u32 %v2217, 7
      %v2219 = vsub.s32 0, %v2218
      %v2220 = vrot.slane %v2215, %v2219
      %v2222 = vadd.f32 %v2214, %v2220
      %v2223 = vadd.f32 %v717, %v2222
      %v2224 = vld [vmem:[%s8] sm:$0x1]
      %v2225 = vld [vmem:[%s9] sm:$0x1]
      %v2226 = vsel %vm722, %v2223, 0.0
      %2227 = vadd.xlane.f32.xlu0 %v2226
      %v2228 = vpop.xlane.xlu0 %2227
      %v2229 = vmul.f32 %v2228, %v726
      %v2230 = vsub.f32 %v2223, %v2229
      %v2231 = vmul.f32 %v2230, %v2230
      %v2232 = vsel %vm722, %v2231, 0.0
      %2233 = vadd.xlane.f32.xlu0 %v2232
      %v2234 = vpop.xlane.xlu0 %2233
      %v2235 = vmul.f32 %v2234, %v726
      %v2236 = vadd.f32 %v2235, 1e-05
      %v2237 = vrsqrt.pop %v2236
      %v2238 = vmul.f32 %v2230, %v2237
      %v2240 = vlaneseq
      %v2241 = vshrl.u32 %v2240, 7
      %v2242 = vsub.s32 0, %v2241
      %v2243 = vrot.slane %v2224, %v2242
      %v2245 = vmul.f32 %v2238, %v2243
      %v2247 = vlaneseq
      %v2248 = vshrl.u32 %v2247, 7
      %v2249 = vsub.s32 0, %v2248
      %v2250 = vrot.slane %v2225, %v2249
      %v2252 = vadd.f32 %v2245, %v2250
      %2253 = vst.msk [vmem:[%s708] sm:$0xff] %vm722, %v2252
      %p2254 = scmp.lt.s32.totalorder %s34, 1
      %s2255 = scalar_select %p2254, %s34, 1
      %s2256 = smul.addr %s2255, 8
      %s2257 = scalar_lea.vmem %s20, %s2256
      %p2258 = scmp.lt.s32.totalorder %s34, 1
      %s2259 = scalar_select %p2258, %s34, 1
      %s2260 = smul.addr %s2259, 8
      %s2261 = scalar_lea.vmem %s21, %s2260
      %p2262 = scmp.lt.s32.totalorder %s34, 1
      %s2263 = scalar_select %p2262, %s34, 1
      %s2264 = smul.addr %s2263, 8
      %s2265 = scalar_lea.vmem %s22, %s2264
      // Predicated region
      $region101: #{transformer_decoder.5} parent=99 // pred_check
        %p2266 = pneg %p482
      $region102: #{transformer_decoder.5} parent=99 // pred_check_branch
        %2268 = sbr.rel (%p2266) target = $region104
      $region103: #{transformer_decoder.5} parent=99 // pred_region
        _
      $region104: #{transformer_decoder.5} parent=99 // pred_fallthru
        _
      // Predicated region
      $region105: #{transformer_decoder.5} parent=99 // pred_check
        %p2269 = pneg %p508
      $region106: #{transformer_decoder.5} parent=99 // pred_check_branch
        %2271 = sbr.rel (%p2269) target = $region108
      $region107: #{transformer_decoder.5} parent=99 // pred_region
        _
      $region108: #{transformer_decoder.5} parent=99 // pred_fallthru
        _
      // Predicated region
      $region109: #{transformer_decoder.5} parent=99 // pred_check
        %p2272 = pneg %p534
      $region110: #{transformer_decoder.5} parent=99 // pred_check_branch
        %2274 = sbr.rel (%p2272) target = $region112
      $region111: #{transformer_decoder.5} parent=99 // pred_region
        _
      $region112: #{transformer_decoder.5} parent=99 // pred_fallthru
        _
    $region100: #{transformer_decoder.5} parent=5 // pred_fallthru
      _
    %p2275 = scmp.le.s32.totalorder 2, %s29
    // Predicated region
    $region113: #{transformer_decoder.5} parent=5 // pred_check
      %p2276 = pneg %p2275
    $region114: #{transformer_decoder.5} parent=5 // pred_check_branch
      %2278 = sbr.rel (%p2276) target = $region116
    $region115: #{transformer_decoder.5} parent=5 // pred_region
      %s2279 = ssub.s32 %s29, 2
      // Predicated region
      $region117: #{transformer_decoder.5} parent=115 // pred_check
        %p2280 = pneg %p488
      $region118: #{transformer_decoder.5} parent=115 // pred_check_branch
        %2282 = sbr.rel (%p2280) target = $region120
      $region119: #{transformer_decoder.5} parent=115 // pred_region
        %p2283 = scmp.lt.s32.totalorder %s35, 1
        %s2284 = scalar_select %p2283, %s35, 1
        %s2285 = smul.addr %s2284, 8
        %s2286 = scalar_lea.vmem %s20, %s2285
      $region120: #{transformer_decoder.5} parent=115 // pred_fallthru
        _
      // Predicated region
      $region121: #{transformer_decoder.5} parent=115 // pred_check
        %p2287 = pneg %p514
      $region122: #{transformer_decoder.5} parent=115 // pred_check_branch
        %2289 = sbr.rel (%p2287) target = $region124
      $region123: #{transformer_decoder.5} parent=115 // pred_region
        %p2290 = scmp.lt.s32.totalorder %s35, 1
        %s2291 = scalar_select %p2290, %s35, 1
        %s2292 = smul.addr %s2291, 8
        %s2293 = scalar_lea.vmem %s21, %s2292
      $region124: #{transformer_decoder.5} parent=115 // pred_fallthru
        _
      // Predicated region
      $region125: #{transformer_decoder.5} parent=115 // pred_check
        %p2294 = pneg %p540
      $region126: #{transformer_decoder.5} parent=115 // pred_check_branch
        %2296 = sbr.rel (%p2294) target = $region128
      $region127: #{transformer_decoder.5} parent=115 // pred_region
        %p2297 = scmp.lt.s32.totalorder %s35, 1
        %s2298 = scalar_select %p2297, %s35, 1
        %s2299 = smul.addr %s2298, 8
        %s2300 = scalar_lea.vmem %s22, %s2299
      $region128: #{transformer_decoder.5} parent=115 // pred_fallthru
        _
    $region116: #{transformer_decoder.5} parent=5 // pred_fallthru
      _
  $region6: #{transformer_decoder.5} parent=0 // loop_footer
    %s33 = sadd.s32 1, %s29
  $region7: #{transformer_decoder.5} parent=0 // loop_footer_branch
    %28 = sbr.rel target = $region3
  $region8: #{transformer_decoder.5} parent=0 // loop_exit
    _

// kernel: transformer_decoder.6
$region0: #{transformer_decoder.6}
  #allocation0 [shape = 'u32[]', space=smem, size = 0x4, offset = 0x4, fixed_abs, tag = 'smem constant byte address 0x4 - core index']
  #allocation1 [shape = 'u32[144,128]{1,0:T(1,128)}', space=vmem, size = 0x12000, scoped, tag = 'internal scratch']
  %s0 = inlined_call_operand.vmem [shape: f32[2,8,32], index: 0, kind: input, shape index: {}]
  %s1 = inlined_call_operand.vmem [shape: f32[2,8,32], index: 1, kind: input, shape index: {}]
  %s2 = inlined_call_operand.vmem [shape: f32[2,16,32], index: 2, kind: input, shape index: {}]
  %s3 = inlined_call_operand.vmem [shape: f32[2,16,32], index: 3, kind: input, shape index: {}]
  %s4 = inlined_call_operand.vmem [shape: f32[2,8,8], index: 4, kind: input, shape index: {}]
  %s5 = inlined_call_operand.vmem [shape: f32[2,16], index: 5, kind: input, shape index: {}]
  %s6 = inlined_call_operand.vmem [shape: f32[1,16], index: 6, kind: input, shape index: {}]
  %s7 = inlined_call_operand.vmem [shape: f32[32,32], index: 7, kind: input, shape index: {}]
  %s8 = inlined_call_operand.vmem [shape: f32[1,32], index: 8, kind: input, shape index: {}]
  %s9 = inlined_call_operand.vmem [shape: f32[32,32], index: 9, kind: input, shape index: {}]
  %s10 = inlined_call_operand.vmem [shape: f32[1,32], index: 10, kind: input, shape index: {}]
  %s11 = inlined_call_operand.vmem [shape: f32[32,32], index: 11, kind: input, shape index: {}]
  %s12 = inlined_call_operand.vmem [shape: f32[1,32], index: 12, kind: input, shape index: {}]
  %s13 = inlined_call_operand.vmem [shape: f32[32,32], index: 13, kind: input, shape index: {}]
  %s14 = inlined_call_operand.vmem [shape: f32[1,32], index: 14, kind: input, shape index: {}]
  %s15 = inlined_call_operand.vmem [shape: f32[1,32], index: 15, kind: input, shape index: {}]
  %s16 = inlined_call_operand.vmem [shape: f32[1,32], index: 16, kind: input, shape index: {}]
  %s17 = inlined_call_operand.vmem [shape: f32[1,32], index: 17, kind: input, shape index: {}]
  %s18 = inlined_call_operand.vmem [shape: f32[1,32], index: 18, kind: input, shape index: {}]
  %s19 = inlined_call_operand.vmem [shape: f32[32,64], index: 19, kind: input, shape index: {}]
  %s20 = inlined_call_operand.vmem [shape: f32[1,64], index: 20, kind: input, shape index: {}]
  %s21 = inlined_call_operand.vmem [shape: f32[64,32], index: 21, kind: input, shape index: {}]
  %s22 = inlined_call_operand.vmem [shape: f32[1,32], index: 22, kind: input, shape index: {}]
  %s23 = inlined_call_operand.vmem [shape: f32[2,8,32], index: 23, kind: output, shape index: {}]
  %s24 = sld [smem:[#allocation0]]
  $region125: #{transformer_decoder.6} parent=0
    _
  %s26 = ssub.s32 1, %s24
  %s27 = scalar_select 0, %s26, %s24
  loop: start=0, step=1, limit=4
  $region2: #{transformer_decoder.6} parent=0 // loop_pre_header
    _
  $region3: #{transformer_decoder.6} parent=0 // loop_header
    %s29 = sphi 0, %s33
    %p30 = scmp.ge.s32.totalorder %s29, 4
    %s39 = sphi 0, %s41
    %s42 = sphi 0, %s39
    %s43 = sphi 0, %s42
    %s59 = sphi 0, %s43
    %s65 = sphi 0, %s67
    %s68 = sphi 0, %s65
    %s69 = sphi 0, %s68
    %s85 = sphi 0, %s69
    %s91 = sphi 0, %s93
    %s94 = sphi 0, %s91
    %s95 = sphi 0, %s94
    %s111 = sphi 0, %s95
    %s117 = sphi 0, %s119
    %s120 = sphi 0, %s117
    %s121 = sphi 0, %s120
    %s137 = sphi 0, %s121
    %s143 = sphi 0, %s145
    %s146 = sphi 0, %s143
    %s147 = sphi 0, %s146
    %s163 = sphi 0, %s147
    %s167 = sphi 0, %s167
    %s169 = sphi 0, %s167
    %s170 = sphi 0, %s169
    %s184 = sphi 0, %s170
    %s188 = sphi 0, %s188
    %s190 = sphi 0, %s188
    %s191 = sphi 0, %s190
    %s205 = sphi 0, %s191
    %s209 = sphi 0, %s209
    %s211 = sphi 0, %s209
    %s212 = sphi 0, %s211
    %s226 = sphi 0, %s212
    %s230 = sphi 0, %s230
    %s232 = sphi 0, %s230
    %s233 = sphi 0, %s232
    %s247 = sphi 0, %s233
    %s251 = sphi 0, %s251
    %s253 = sphi 0, %s251
    %s254 = sphi 0, %s253
    %s268 = sphi 0, %s254
    %s272 = sphi 0, %s272
    %s274 = sphi 0, %s272
    %s275 = sphi 0, %s274
    %s289 = sphi 0, %s275
    %s293 = sphi 0, %s293
    %s295 = sphi 0, %s293
    %s296 = sphi 0, %s295
    %s310 = sphi 0, %s296
    %s314 = sphi 0, %s314
    %s316 = sphi 0, %s314
    %s317 = sphi 0, %s316
    %s331 = sphi 0, %s317
    %s335 = sphi 0, %s335
    %s337 = sphi 0, %s335
    %s338 = sphi 0, %s337
    %s352 = sphi 0, %s338
    %s356 = sphi 0, %s356
    %s358 = sphi 0, %s356
    %s359 = sphi 0, %s358
    %s373 = sphi 0, %s359
    %s377 = sphi 0, %s377
    %s379 = sphi 0, %s377
    %s380 = sphi 0, %s379
    %s394 = sphi 0, %s380
    %s398 = sphi 0, %s398
    %s400 = sphi 0, %s398
    %s401 = sphi 0, %s400
    %s415 = sphi 0, %s401
    %s419 = sphi 0, %s419
    %s421 = sphi 0, %s419
    %s422 = sphi 0, %s421
    %s436 = sphi 0, %s422
    %s440 = sphi 0, %s440
    %s442 = sphi 0, %s440
    %s443 = sphi 0, %s442
    %s457 = sphi 0, %s443
    %s461 = sphi 0, %s461
    %s463 = sphi 0, %s461
    %s464 = sphi 0, %s463
    %s478 = sphi 0, %s464
    %s482 = sphi 0, %s482
    %s484 = sphi 0, %s482
    %s485 = sphi 0, %s484
    %s499 = sphi 0, %s485
    %s503 = sphi 0, %s503
    %s505 = sphi 0, %s503
    %s506 = sphi 0, %s505
    %s520 = sphi 0, %s506
    %s524 = sphi 0, %s524
    %s526 = sphi 0, %s524
    %s527 = sphi 0, %s526
    %s541 = sphi 0, %s527
    %s547 = sphi 0, %s549
    %s550 = sphi 0, %s547
    %s551 = sphi 0, %s550
    %s567 = sphi 0, %s551
  $region4: #{transformer_decoder.6} parent=0 // loop_header_branch
    %32 = sbr.rel (%p30) target = $region8
  $region5: #{transformer_decoder.6} parent=0 // loop_body
    %s34 = ssub.s32 %s29, 1
    %s35 = ssub.s32 %s29, 2
    %s36 = sadd.s32 %s29, 1
    %s37 = ssub.s32 %s29, %s36
    %p38 = scmp.eq.s32.totalorder %s37, 0
    %s40 = sadd.s32 %s39, 1
    %s41 = scalar_select %p38, %s39, %s40
    %p44 = pneg %p38
    %p45 = scmp.eq.s32.totalorder %s29, 1
    %p46 = por %p44, %p45
    %p47 = scmp.ne.s32.totalorder %s39, %s42
    %p48 = scmp.eq.s32.totalorder %s29, 0
    %p49 = por %p47, %p48
    %p50 = scmp.ne.s32.totalorder %s39, %s42
    %p51 = scmp.eq.s32.totalorder %s34, 1
    %p52 = por %p50, %p51
    %p53 = scmp.ne.s32.totalorder %s42, %s43
    %p54 = scmp.eq.s32.totalorder %s34, 0
    %p55 = por %p53, %p54
    %p56 = scmp.ne.s32.totalorder %s42, %s43
    %p57 = scmp.eq.s32.totalorder %s35, 1
    %p58 = por %p56, %p57
    %p60 = scmp.ne.s32.totalorder %s43, %s59
    %p61 = scmp.eq.s32.totalorder %s35, 0
    %p62 = por %p60, %p61
    %s63 = ssub.s32 %s29, %s36
    %p64 = scmp.eq.s32.totalorder %s63, 0
    %s66 = sadd.s32 %s65, 1
    %s67 = scalar_select %p64, %s65, %s66
    %p70 = pneg %p64
    %p71 = scmp.eq.s32.totalorder %s29, 1
    %p72 = por %p70, %p71
    %p73 = scmp.ne.s32.totalorder %s65, %s68
    %p74 = scmp.eq.s32.totalorder %s29, 0
    %p75 = por %p73, %p74
    %p76 = scmp.ne.s32.totalorder %s65, %s68
    %p77 = scmp.eq.s32.totalorder %s34, 1
    %p78 = por %p76, %p77
    %p79 = scmp.ne.s32.totalorder %s68, %s69
    %p80 = scmp.eq.s32.totalorder %s34, 0
    %p81 = por %p79, %p80
    %p82 = scmp.ne.s32.totalorder %s68, %s69
    %p83 = scmp.eq.s32.totalorder %s35, 1
    %p84 = por %p82, %p83
    %p86 = scmp.ne.s32.totalorder %s69, %s85
    %p87 = scmp.eq.s32.totalorder %s35, 0
    %p88 = por %p86, %p87
    %s89 = ssub.s32 %s29, %s36
    %p90 = scmp.eq.s32.totalorder %s89, 0
    %s92 = sadd.s32 %s91, 1
    %s93 = scalar_select %p90, %s91, %s92
    %p96 = pneg %p90
    %p97 = scmp.eq.s32.totalorder %s29, 1
    %p98 = por %p96, %p97
    %p99 = scmp.ne.s32.totalorder %s91, %s94
    %p100 = scmp.eq.s32.totalorder %s29, 0
    %p101 = por %p99, %p100
    %p102 = scmp.ne.s32.totalorder %s91, %s94
    %p103 = scmp.eq.s32.totalorder %s34, 1
    %p104 = por %p102, %p103
    %p105 = scmp.ne.s32.totalorder %s94, %s95
    %p106 = scmp.eq.s32.totalorder %s34, 0
    %p107 = por %p105, %p106
    %p108 = scmp.ne.s32.totalorder %s94, %s95
    %p109 = scmp.eq.s32.totalorder %s35, 1
    %p110 = por %p108, %p109
    %p112 = scmp.ne.s32.totalorder %s95, %s111
    %p113 = scmp.eq.s32.totalorder %s35, 0
    %p114 = por %p112, %p113
    %s115 = ssub.s32 %s29, %s36
    %p116 = scmp.eq.s32.totalorder %s115, 0
    %s118 = sadd.s32 %s117, 1
    %s119 = scalar_select %p116, %s117, %s118
    %p122 = pneg %p116
    %p123 = scmp.eq.s32.totalorder %s29, 1
    %p124 = por %p122, %p123
    %p125 = scmp.ne.s32.totalorder %s117, %s120
    %p126 = scmp.eq.s32.totalorder %s29, 0
    %p127 = por %p125, %p126
    %p128 = scmp.ne.s32.totalorder %s117, %s120
    %p129 = scmp.eq.s32.totalorder %s34, 1
    %p130 = por %p128, %p129
    %p131 = scmp.ne.s32.totalorder %s120, %s121
    %p132 = scmp.eq.s32.totalorder %s34, 0
    %p133 = por %p131, %p132
    %p134 = scmp.ne.s32.totalorder %s120, %s121
    %p135 = scmp.eq.s32.totalorder %s35, 1
    %p136 = por %p134, %p135
    %p138 = scmp.ne.s32.totalorder %s121, %s137
    %p139 = scmp.eq.s32.totalorder %s35, 0
    %p140 = por %p138, %p139
    %s141 = ssub.s32 %s29, %s36
    %p142 = scmp.eq.s32.totalorder %s141, 0
    %s144 = sadd.s32 %s143, 1
    %s145 = scalar_select %p142, %s143, %s144
    %p148 = pneg %p142
    %p149 = scmp.eq.s32.totalorder %s29, 1
    %p150 = por %p148, %p149
    %p151 = scmp.ne.s32.totalorder %s143, %s146
    %p152 = scmp.eq.s32.totalorder %s29, 0
    %p153 = por %p151, %p152
    %p154 = scmp.ne.s32.totalorder %s143, %s146
    %p155 = scmp.eq.s32.totalorder %s34, 1
    %p156 = por %p154, %p155
    %p157 = scmp.ne.s32.totalorder %s146, %s147
    %p158 = scmp.eq.s32.totalorder %s34, 0
    %p159 = por %p157, %p158
    %p160 = scmp.ne.s32.totalorder %s146, %s147
    %p161 = scmp.eq.s32.totalorder %s35, 1
    %p162 = por %p160, %p161
    %p164 = scmp.ne.s32.totalorder %s147, %s163
    %p165 = scmp.eq.s32.totalorder %s35, 0
    %p166 = por %p164, %p165
    %s168 = sadd.s32 %s167, 1
    %p171 = scmp.eq.s32.totalorder %s29, 1
    %p172 = scmp.ne.s32.totalorder %s167, %s169
    %p173 = scmp.eq.s32.totalorder %s29, 0
    %p174 = por %p172, %p173
    %p175 = scmp.ne.s32.totalorder %s167, %s169
    %p176 = scmp.eq.s32.totalorder %s34, 1
    %p177 = por %p175, %p176
    %p178 = scmp.ne.s32.totalorder %s169, %s170
    %p179 = scmp.eq.s32.totalorder %s34, 0
    %p180 = por %p178, %p179
    %p181 = scmp.ne.s32.totalorder %s169, %s170
    %p182 = scmp.eq.s32.totalorder %s35, 1
    %p183 = por %p181, %p182
    %p185 = scmp.ne.s32.totalorder %s170, %s184
    %p186 = scmp.eq.s32.totalorder %s35, 0
    %p187 = por %p185, %p186
    %s189 = sadd.s32 %s188, 1
    %p192 = scmp.eq.s32.totalorder %s29, 1
    %p193 = scmp.ne.s32.totalorder %s188, %s190
    %p194 = scmp.eq.s32.totalorder %s29, 0
    %p195 = por %p193, %p194
    %p196 = scmp.ne.s32.totalorder %s188, %s190
    %p197 = scmp.eq.s32.totalorder %s34, 1
    %p198 = por %p196, %p197
    %p199 = scmp.ne.s32.totalorder %s190, %s191
    %p200 = scmp.eq.s32.totalorder %s34, 0
    %p201 = por %p199, %p200
    %p202 = scmp.ne.s32.totalorder %s190, %s191
    %p203 = scmp.eq.s32.totalorder %s35, 1
    %p204 = por %p202, %p203
    %p206 = scmp.ne.s32.totalorder %s191, %s205
    %p207 = scmp.eq.s32.totalorder %s35, 0
    %p208 = por %p206, %p207
    %s210 = sadd.s32 %s209, 1
    %p213 = scmp.eq.s32.totalorder %s29, 1
    %p214 = scmp.ne.s32.totalorder %s209, %s211
    %p215 = scmp.eq.s32.totalorder %s29, 0
    %p216 = por %p214, %p215
    %p217 = scmp.ne.s32.totalorder %s209, %s211
    %p218 = scmp.eq.s32.totalorder %s34, 1
    %p219 = por %p217, %p218
    %p220 = scmp.ne.s32.totalorder %s211, %s212
    %p221 = scmp.eq.s32.totalorder %s34, 0
    %p222 = por %p220, %p221
    %p223 = scmp.ne.s32.totalorder %s211, %s212
    %p224 = scmp.eq.s32.totalorder %s35, 1
    %p225 = por %p223, %p224
    %p227 = scmp.ne.s32.totalorder %s212, %s226
    %p228 = scmp.eq.s32.totalorder %s35, 0
    %p229 = por %p227, %p228
    %s231 = sadd.s32 %s230, 1
    %p234 = scmp.eq.s32.totalorder %s29, 1
    %p235 = scmp.ne.s32.totalorder %s230, %s232
    %p236 = scmp.eq.s32.totalorder %s29, 0
    %p237 = por %p235, %p236
    %p238 = scmp.ne.s32.totalorder %s230, %s232
    %p239 = scmp.eq.s32.totalorder %s34, 1
    %p240 = por %p238, %p239
    %p241 = scmp.ne.s32.totalorder %s232, %s233
    %p242 = scmp.eq.s32.totalorder %s34, 0
    %p243 = por %p241, %p242
    %p244 = scmp.ne.s32.totalorder %s232, %s233
    %p245 = scmp.eq.s32.totalorder %s35, 1
    %p246 = por %p244, %p245
    %p248 = scmp.ne.s32.totalorder %s233, %s247
    %p249 = scmp.eq.s32.totalorder %s35, 0
    %p250 = por %p248, %p249
    %s252 = sadd.s32 %s251, 1
    %p255 = scmp.eq.s32.totalorder %s29, 1
    %p256 = scmp.ne.s32.totalorder %s251, %s253
    %p257 = scmp.eq.s32.totalorder %s29, 0
    %p258 = por %p256, %p257
    %p259 = scmp.ne.s32.totalorder %s251, %s253
    %p260 = scmp.eq.s32.totalorder %s34, 1
    %p261 = por %p259, %p260
    %p262 = scmp.ne.s32.totalorder %s253, %s254
    %p263 = scmp.eq.s32.totalorder %s34, 0
    %p264 = por %p262, %p263
    %p265 = scmp.ne.s32.totalorder %s253, %s254
    %p266 = scmp.eq.s32.totalorder %s35, 1
    %p267 = por %p265, %p266
    %p269 = scmp.ne.s32.totalorder %s254, %s268
    %p270 = scmp.eq.s32.totalorder %s35, 0
    %p271 = por %p269, %p270
    %s273 = sadd.s32 %s272, 1
    %p276 = scmp.eq.s32.totalorder %s29, 1
    %p277 = scmp.ne.s32.totalorder %s272, %s274
    %p278 = scmp.eq.s32.totalorder %s29, 0
    %p279 = por %p277, %p278
    %p280 = scmp.ne.s32.totalorder %s272, %s274
    %p281 = scmp.eq.s32.totalorder %s34, 1
    %p282 = por %p280, %p281
    %p283 = scmp.ne.s32.totalorder %s274, %s275
    %p284 = scmp.eq.s32.totalorder %s34, 0
    %p285 = por %p283, %p284
    %p286 = scmp.ne.s32.totalorder %s274, %s275
    %p287 = scmp.eq.s32.totalorder %s35, 1
    %p288 = por %p286, %p287
    %p290 = scmp.ne.s32.totalorder %s275, %s289
    %p291 = scmp.eq.s32.totalorder %s35, 0
    %p292 = por %p290, %p291
    %s294 = sadd.s32 %s293, 1
    %p297 = scmp.eq.s32.totalorder %s29, 1
    %p298 = scmp.ne.s32.totalorder %s293, %s295
    %p299 = scmp.eq.s32.totalorder %s29, 0
    %p300 = por %p298, %p299
    %p301 = scmp.ne.s32.totalorder %s293, %s295
    %p302 = scmp.eq.s32.totalorder %s34, 1
    %p303 = por %p301, %p302
    %p304 = scmp.ne.s32.totalorder %s295, %s296
    %p305 = scmp.eq.s32.totalorder %s34, 0
    %p306 = por %p304, %p305
    %p307 = scmp.ne.s32.totalorder %s295, %s296
    %p308 = scmp.eq.s32.totalorder %s35, 1
    %p309 = por %p307, %p308
    %p311 = scmp.ne.s32.totalorder %s296, %s310
    %p312 = scmp.eq.s32.totalorder %s35, 0
    %p313 = por %p311, %p312
    %s315 = sadd.s32 %s314, 1
    %p318 = scmp.eq.s32.totalorder %s29, 1
    %p319 = scmp.ne.s32.totalorder %s314, %s316
    %p320 = scmp.eq.s32.totalorder %s29, 0
    %p321 = por %p319, %p320
    %p322 = scmp.ne.s32.totalorder %s314, %s316
    %p323 = scmp.eq.s32.totalorder %s34, 1
    %p324 = por %p322, %p323
    %p325 = scmp.ne.s32.totalorder %s316, %s317
    %p326 = scmp.eq.s32.totalorder %s34, 0
    %p327 = por %p325, %p326
    %p328 = scmp.ne.s32.totalorder %s316, %s317
    %p329 = scmp.eq.s32.totalorder %s35, 1
    %p330 = por %p328, %p329
    %p332 = scmp.ne.s32.totalorder %s317, %s331
    %p333 = scmp.eq.s32.totalorder %s35, 0
    %p334 = por %p332, %p333
    %s336 = sadd.s32 %s335, 1
    %p339 = scmp.eq.s32.totalorder %s29, 1
    %p340 = scmp.ne.s32.totalorder %s335, %s337
    %p341 = scmp.eq.s32.totalorder %s29, 0
    %p342 = por %p340, %p341
    %p343 = scmp.ne.s32.totalorder %s335, %s337
    %p344 = scmp.eq.s32.totalorder %s34, 1
    %p345 = por %p343, %p344
    %p346 = scmp.ne.s32.totalorder %s337, %s338
    %p347 = scmp.eq.s32.totalorder %s34, 0
    %p348 = por %p346, %p347
    %p349 = scmp.ne.s32.totalorder %s337, %s338
    %p350 = scmp.eq.s32.totalorder %s35, 1
    %p351 = por %p349, %p350
    %p353 = scmp.ne.s32.totalorder %s338, %s352
    %p354 = scmp.eq.s32.totalorder %s35, 0
    %p355 = por %p353, %p354
    %s357 = sadd.s32 %s356, 1
    %p360 = scmp.eq.s32.totalorder %s29, 1
    %p361 = scmp.ne.s32.totalorder %s356, %s358
    %p362 = scmp.eq.s32.totalorder %s29, 0
    %p363 = por %p361, %p362
    %p364 = scmp.ne.s32.totalorder %s356, %s358
    %p365 = scmp.eq.s32.totalorder %s34, 1
    %p366 = por %p364, %p365
    %p367 = scmp.ne.s32.totalorder %s358, %s359
    %p368 = scmp.eq.s32.totalorder %s34, 0
    %p369 = por %p367, %p368
    %p370 = scmp.ne.s32.totalorder %s358, %s359
    %p371 = scmp.eq.s32.totalorder %s35, 1
    %p372 = por %p370, %p371
    %p374 = scmp.ne.s32.totalorder %s359, %s373
    %p375 = scmp.eq.s32.totalorder %s35, 0
    %p376 = por %p374, %p375
    %s378 = sadd.s32 %s377, 1
    %p381 = scmp.eq.s32.totalorder %s29, 1
    %p382 = scmp.ne.s32.totalorder %s377, %s379
    %p383 = scmp.eq.s32.totalorder %s29, 0
    %p384 = por %p382, %p383
    %p385 = scmp.ne.s32.totalorder %s377, %s379
    %p386 = scmp.eq.s32.totalorder %s34, 1
    %p387 = por %p385, %p386
    %p388 = scmp.ne.s32.totalorder %s379, %s380
    %p389 = scmp.eq.s32.totalorder %s34, 0
    %p390 = por %p388, %p389
    %p391 = scmp.ne.s32.totalorder %s379, %s380
    %p392 = scmp.eq.s32.totalorder %s35, 1
    %p393 = por %p391, %p392
    %p395 = scmp.ne.s32.totalorder %s380, %s394
    %p396 = scmp.eq.s32.totalorder %s35, 0
    %p397 = por %p395, %p396
    %s399 = sadd.s32 %s398, 1
    %p402 = scmp.eq.s32.totalorder %s29, 1
    %p403 = scmp.ne.s32.totalorder %s398, %s400
    %p404 = scmp.eq.s32.totalorder %s29, 0
    %p405 = por %p403, %p404
    %p406 = scmp.ne.s32.totalorder %s398, %s400
    %p407 = scmp.eq.s32.totalorder %s34, 1
    %p408 = por %p406, %p407
    %p409 = scmp.ne.s32.totalorder %s400, %s401
    %p410 = scmp.eq.s32.totalorder %s34, 0
    %p411 = por %p409, %p410
    %p412 = scmp.ne.s32.totalorder %s400, %s401
    %p413 = scmp.eq.s32.totalorder %s35, 1
    %p414 = por %p412, %p413
    %p416 = scmp.ne.s32.totalorder %s401, %s415
    %p417 = scmp.eq.s32.totalorder %s35, 0
    %p418 = por %p416, %p417
    %s420 = sadd.s32 %s419, 1
    %p423 = scmp.eq.s32.totalorder %s29, 1
    %p424 = scmp.ne.s32.totalorder %s419, %s421
    %p425 = scmp.eq.s32.totalorder %s29, 0
    %p426 = por %p424, %p425
    %p427 = scmp.ne.s32.totalorder %s419, %s421
    %p428 = scmp.eq.s32.totalorder %s34, 1
    %p429 = por %p427, %p428
    %p430 = scmp.ne.s32.totalorder %s421, %s422
    %p431 = scmp.eq.s32.totalorder %s34, 0
    %p432 = por %p430, %p431
    %p433 = scmp.ne.s32.totalorder %s421, %s422
    %p434 = scmp.eq.s32.totalorder %s35, 1
    %p435 = por %p433, %p434
    %p437 = scmp.ne.s32.totalorder %s422, %s436
    %p438 = scmp.eq.s32.totalorder %s35, 0
    %p439 = por %p437, %p438
    %s441 = sadd.s32 %s440, 1
    %p444 = scmp.eq.s32.totalorder %s29, 1
    %p445 = scmp.ne.s32.totalorder %s440, %s442
    %p446 = scmp.eq.s32.totalorder %s29, 0
    %p447 = por %p445, %p446
    %p448 = scmp.ne.s32.totalorder %s440, %s442
    %p449 = scmp.eq.s32.totalorder %s34, 1
    %p450 = por %p448, %p449
    %p451 = scmp.ne.s32.totalorder %s442, %s443
    %p452 = scmp.eq.s32.totalorder %s34, 0
    %p453 = por %p451, %p452
    %p454 = scmp.ne.s32.totalorder %s442, %s443
    %p455 = scmp.eq.s32.totalorder %s35, 1
    %p456 = por %p454, %p455
    %p458 = scmp.ne.s32.totalorder %s443, %s457
    %p459 = scmp.eq.s32.totalorder %s35, 0
    %p460 = por %p458, %p459
    %s462 = sadd.s32 %s461, 1
    %p465 = scmp.eq.s32.totalorder %s29, 1
    %p466 = scmp.ne.s32.totalorder %s461, %s463
    %p467 = scmp.eq.s32.totalorder %s29, 0
    %p468 = por %p466, %p467
    %p469 = scmp.ne.s32.totalorder %s461, %s463
    %p470 = scmp.eq.s32.totalorder %s34, 1
    %p471 = por %p469, %p470
    %p472 = scmp.ne.s32.totalorder %s463, %s464
    %p473 = scmp.eq.s32.totalorder %s34, 0
    %p474 = por %p472, %p473
    %p475 = scmp.ne.s32.totalorder %s463, %s464
    %p476 = scmp.eq.s32.totalorder %s35, 1
    %p477 = por %p475, %p476
    %p479 = scmp.ne.s32.totalorder %s464, %s478
    %p480 = scmp.eq.s32.totalorder %s35, 0
    %p481 = por %p479, %p480
    %s483 = sadd.s32 %s482, 1
    %p486 = scmp.eq.s32.totalorder %s29, 1
    %p487 = scmp.ne.s32.totalorder %s482, %s484
    %p488 = scmp.eq.s32.totalorder %s29, 0
    %p489 = por %p487, %p488
    %p490 = scmp.ne.s32.totalorder %s482, %s484
    %p491 = scmp.eq.s32.totalorder %s34, 1
    %p492 = por %p490, %p491
    %p493 = scmp.ne.s32.totalorder %s484, %s485
    %p494 = scmp.eq.s32.totalorder %s34, 0
    %p495 = por %p493, %p494
    %p496 = scmp.ne.s32.totalorder %s484, %s485
    %p497 = scmp.eq.s32.totalorder %s35, 1
    %p498 = por %p496, %p497
    %p500 = scmp.ne.s32.totalorder %s485, %s499
    %p501 = scmp.eq.s32.totalorder %s35, 0
    %p502 = por %p500, %p501
    %s504 = sadd.s32 %s503, 1
    %p507 = scmp.eq.s32.totalorder %s29, 1
    %p508 = scmp.ne.s32.totalorder %s503, %s505
    %p509 = scmp.eq.s32.totalorder %s29, 0
    %p510 = por %p508, %p509
    %p511 = scmp.ne.s32.totalorder %s503, %s505
    %p512 = scmp.eq.s32.totalorder %s34, 1
    %p513 = por %p511, %p512
    %p514 = scmp.ne.s32.totalorder %s505, %s506
    %p515 = scmp.eq.s32.totalorder %s34, 0
    %p516 = por %p514, %p515
    %p517 = scmp.ne.s32.totalorder %s505, %s506
    %p518 = scmp.eq.s32.totalorder %s35, 1
    %p519 = por %p517, %p518
    %p521 = scmp.ne.s32.totalorder %s506, %s520
    %p522 = scmp.eq.s32.totalorder %s35, 0
    %p523 = por %p521, %p522
    %s525 = sadd.s32 %s524, 1
    %p528 = scmp.eq.s32.totalorder %s29, 1
    %p529 = scmp.ne.s32.totalorder %s524, %s526
    %p530 = scmp.eq.s32.totalorder %s29, 0
    %p531 = por %p529, %p530
    %p532 = scmp.ne.s32.totalorder %s524, %s526
    %p533 = scmp.eq.s32.totalorder %s34, 1
    %p534 = por %p532, %p533
    %p535 = scmp.ne.s32.totalorder %s526, %s527
    %p536 = scmp.eq.s32.totalorder %s34, 0
    %p537 = por %p535, %p536
    %p538 = scmp.ne.s32.totalorder %s526, %s527
    %p539 = scmp.eq.s32.totalorder %s35, 1
    %p540 = por %p538, %p539
    %p542 = scmp.ne.s32.totalorder %s527, %s541
    %p543 = scmp.eq.s32.totalorder %s35, 0
    %p544 = por %p542, %p543
    %s545 = ssub.s32 %s29, %s36
    %p546 = scmp.eq.s32.totalorder %s545, 0
    %s548 = sadd.s32 %s547, 1
    %s549 = scalar_select %p546, %s547, %s548
    %p552 = pneg %p546
    %p553 = scmp.eq.s32.totalorder %s29, 1
    %p554 = por %p552, %p553
    %p555 = scmp.ne.s32.totalorder %s547, %s550
    %p556 = scmp.eq.s32.totalorder %s29, 0
    %p557 = por %p555, %p556
    %p558 = scmp.ne.s32.totalorder %s547, %s550
    %p559 = scmp.eq.s32.totalorder %s34, 1
    %p560 = por %p558, %p559
    %p561 = scmp.ne.s32.totalorder %s550, %s551
    %p562 = scmp.eq.s32.totalorder %s34, 0
    %p563 = por %p561, %p562
    %p564 = scmp.ne.s32.totalorder %s550, %s551
    %p565 = scmp.eq.s32.totalorder %s35, 1
    %p566 = por %p564, %p565
    %p568 = scmp.ne.s32.totalorder %s551, %s567
    %p569 = scmp.eq.s32.totalorder %s35, 0
    %p570 = por %p568, %p569
    %p571 = scmp.le.s32.totalorder 1, %s29
    %p572 = scmp.lt.s32.totalorder %s29, 3
    %p573 = pnand %p571, %p572
    %p574 = pneg %p573
    // Predicated region
    $region9: #{transformer_decoder.6} parent=5 // pred_check
      _
    $region10: #{transformer_decoder.6} parent=5 // pred_check_branch
      %576 = sbr.rel (%p573) target = $region12
    $region11: #{transformer_decoder.6} parent=5 // pred_region
      %s577 = ssub.s32 %s29, 1
      // Predicated region
      $region13: #{transformer_decoder.6} parent=11 // pred_check
        %p578 = pneg %p180
      $region14: #{transformer_decoder.6} parent=11 // pred_check_branch
        %580 = sbr.rel (%p578) target = $region16
      $region15: #{transformer_decoder.6} parent=11 // pred_region
        _
      $region16: #{transformer_decoder.6} parent=11 // pred_fallthru
        _
      // Predicated region
      $region17: #{transformer_decoder.6} parent=11 // pred_check
        %p581 = pneg %p201
      $region18: #{transformer_decoder.6} parent=11 // pred_check_branch
        %583 = sbr.rel (%p581) target = $region20
      $region19: #{transformer_decoder.6} parent=11 // pred_region
        _
      $region20: #{transformer_decoder.6} parent=11 // pred_fallthru
        _
      // Predicated region
      $region21: #{transformer_decoder.6} parent=11 // pred_check
        %p584 = pneg %p222
      $region22: #{transformer_decoder.6} parent=11 // pred_check_branch
        %586 = sbr.rel (%p584) target = $region24
      $region23: #{transformer_decoder.6} parent=11 // pred_region
        _
      $region24: #{transformer_decoder.6} parent=11 // pred_fallthru
        _
      // Predicated region
      $region25: #{transformer_decoder.6} parent=11 // pred_check
        %p587 = pneg %p243
      $region26: #{transformer_decoder.6} parent=11 // pred_check_branch
        %589 = sbr.rel (%p587) target = $region28
      $region27: #{transformer_decoder.6} parent=11 // pred_region
        _
      $region28: #{transformer_decoder.6} parent=11 // pred_fallthru
        _
      // Predicated region
      $region29: #{transformer_decoder.6} parent=11 // pred_check
        %p590 = pneg %p264
      $region30: #{transformer_decoder.6} parent=11 // pred_check_branch
        %592 = sbr.rel (%p590) target = $region32
      $region31: #{transformer_decoder.6} parent=11 // pred_region
        _
      $region32: #{transformer_decoder.6} parent=11 // pred_fallthru
        _
      // Predicated region
      $region33: #{transformer_decoder.6} parent=11 // pred_check
        %p593 = pneg %p285
      $region34: #{transformer_decoder.6} parent=11 // pred_check_branch
        %595 = sbr.rel (%p593) target = $region36
      $region35: #{transformer_decoder.6} parent=11 // pred_region
        _
      $region36: #{transformer_decoder.6} parent=11 // pred_fallthru
        _
      // Predicated region
      $region37: #{transformer_decoder.6} parent=11 // pred_check
        %p596 = pneg %p306
      $region38: #{transformer_decoder.6} parent=11 // pred_check_branch
        %598 = sbr.rel (%p596) target = $region40
      $region39: #{transformer_decoder.6} parent=11 // pred_region
        _
      $region40: #{transformer_decoder.6} parent=11 // pred_fallthru
        _
      // Predicated region
      $region41: #{transformer_decoder.6} parent=11 // pred_check
        %p599 = pneg %p327
      $region42: #{transformer_decoder.6} parent=11 // pred_check_branch
        %601 = sbr.rel (%p599) target = $region44
      $region43: #{transformer_decoder.6} parent=11 // pred_region
        _
      $region44: #{transformer_decoder.6} parent=11 // pred_fallthru
        _
      // Predicated region
      $region45: #{transformer_decoder.6} parent=11 // pred_check
        %p602 = pneg %p348
      $region46: #{transformer_decoder.6} parent=11 // pred_check_branch
        %604 = sbr.rel (%p602) target = $region48
      $region47: #{transformer_decoder.6} parent=11 // pred_region
        _
      $region48: #{transformer_decoder.6} parent=11 // pred_fallthru
        _
      // Predicated region
      $region49: #{transformer_decoder.6} parent=11 // pred_check
        %p605 = pneg %p369
      $region50: #{transformer_decoder.6} parent=11 // pred_check_branch
        %607 = sbr.rel (%p605) target = $region52
      $region51: #{transformer_decoder.6} parent=11 // pred_region
        _
      $region52: #{transformer_decoder.6} parent=11 // pred_fallthru
        _
      // Predicated region
      $region53: #{transformer_decoder.6} parent=11 // pred_check
        %p608 = pneg %p390
      $region54: #{transformer_decoder.6} parent=11 // pred_check_branch
        %610 = sbr.rel (%p608) target = $region56
      $region55: #{transformer_decoder.6} parent=11 // pred_region
        _
      $region56: #{transformer_decoder.6} parent=11 // pred_fallthru
        _
      // Predicated region
      $region57: #{transformer_decoder.6} parent=11 // pred_check
        %p611 = pneg %p411
      $region58: #{transformer_decoder.6} parent=11 // pred_check_branch
        %613 = sbr.rel (%p611) target = $region60
      $region59: #{transformer_decoder.6} parent=11 // pred_region
        _
      $region60: #{transformer_decoder.6} parent=11 // pred_fallthru
        _
      // Predicated region
      $region61: #{transformer_decoder.6} parent=11 // pred_check
        %p614 = pneg %p432
      $region62: #{transformer_decoder.6} parent=11 // pred_check_branch
        %616 = sbr.rel (%p614) target = $region64
      $region63: #{transformer_decoder.6} parent=11 // pred_region
        _
      $region64: #{transformer_decoder.6} parent=11 // pred_fallthru
        _
      // Predicated region
      $region65: #{transformer_decoder.6} parent=11 // pred_check
        %p617 = pneg %p453
      $region66: #{transformer_decoder.6} parent=11 // pred_check_branch
        %619 = sbr.rel (%p617) target = $region68
      $region67: #{transformer_decoder.6} parent=11 // pred_region
        _
      $region68: #{transformer_decoder.6} parent=11 // pred_fallthru
        _
      // Predicated region
      $region69: #{transformer_decoder.6} parent=11 // pred_check
        %p620 = pneg %p474
      $region70: #{transformer_decoder.6} parent=11 // pred_check_branch
        %622 = sbr.rel (%p620) target = $region72
      $region71: #{transformer_decoder.6} parent=11 // pred_region
        _
      $region72: #{transformer_decoder.6} parent=11 // pred_fallthru
        _
      // Predicated region
      $region73: #{transformer_decoder.6} parent=11 // pred_check
        %p623 = pneg %p495
      $region74: #{transformer_decoder.6} parent=11 // pred_check_branch
        %625 = sbr.rel (%p623) target = $region76
      $region75: #{transformer_decoder.6} parent=11 // pred_region
        _
      $region76: #{transformer_decoder.6} parent=11 // pred_fallthru
        _
      // Predicated region
      $region77: #{transformer_decoder.6} parent=11 // pred_check
        %p626 = pneg %p516
      $region78: #{transformer_decoder.6} parent=11 // pred_check_branch
        %628 = sbr.rel (%p626) target = $region80
      $region79: #{transformer_decoder.6} parent=11 // pred_region
        _
      $region80: #{transformer_decoder.6} parent=11 // pred_fallthru
        _
      // Predicated region
      $region81: #{transformer_decoder.6} parent=11 // pred_check
        %p629 = pneg %p537
      $region82: #{transformer_decoder.6} parent=11 // pred_check_branch
        %631 = sbr.rel (%p629) target = $region84
      $region83: #{transformer_decoder.6} parent=11 // pred_region
        _
      $region84: #{transformer_decoder.6} parent=11 // pred_fallthru
        _
    $region12: #{transformer_decoder.6} parent=5 // pred_fallthru
      _
    %p632 = scmp.lt.s32.totalorder %s29, 2
    // Predicated region
    $region85: #{transformer_decoder.6} parent=5 // pred_check
      %p633 = pneg %p632
    $region86: #{transformer_decoder.6} parent=5 // pred_check_branch
      %635 = sbr.rel (%p633) target = $region88
    $region87: #{transformer_decoder.6} parent=5 // pred_region
      // Predicated region
      $region89: #{transformer_decoder.6} parent=87 // pred_check
        %p636 = pneg %p49
      $region90: #{transformer_decoder.6} parent=87 // pred_check_branch
        %638 = sbr.rel (%p636) target = $region92
      $region91: #{transformer_decoder.6} parent=87 // pred_region
        %p639 = scmp.lt.s32.totalorder %s29, 1
        %s640 = scalar_select %p639, %s29, 1
        %s641 = smul.addr %s640, 8
        %s642 = scalar_lea.vmem %s0, %s641
      $region92: #{transformer_decoder.6} parent=87 // pred_fallthru
        _
      // Predicated region
      $region93: #{transformer_decoder.6} parent=87 // pred_check
        %p643 = pneg %p75
      $region94: #{transformer_decoder.6} parent=87 // pred_check_branch
        %645 = sbr.rel (%p643) target = $region96
      $region95: #{transformer_decoder.6} parent=87 // pred_region
        %p646 = scmp.lt.s32.totalorder %s29, 1
        %s647 = scalar_select %p646, %s29, 1
        %s648 = smul.addr %s647, 8
        %s649 = scalar_lea.vmem %s1, %s648
      $region96: #{transformer_decoder.6} parent=87 // pred_fallthru
        _
      // Predicated region
      $region97: #{transformer_decoder.6} parent=87 // pred_check
        %p650 = pneg %p101
      $region98: #{transformer_decoder.6} parent=87 // pred_check_branch
        %652 = sbr.rel (%p650) target = $region100
      $region99: #{transformer_decoder.6} parent=87 // pred_region
        %p653 = scmp.lt.s32.totalorder %s29, 1
        %s654 = scalar_select %p653, %s29, 1
        %s655 = smul.addr %s654, 2
        %s656 = smul.addr %s655, 8
        %s657 = scalar_lea.vmem %s2, %s656
      $region100: #{transformer_decoder.6} parent=87 // pred_fallthru
        _
      // Predicated region
      $region101: #{transformer_decoder.6} parent=87 // pred_check
        %p658 = pneg %p127
      $region102: #{transformer_decoder.6} parent=87 // pred_check_branch
        %660 = sbr.rel (%p658) target = $region104
      $region103: #{transformer_decoder.6} parent=87 // pred_region
        %p661 = scmp.lt.s32.totalorder %s29, 1
        %s662 = scalar_select %p661, %s29, 1
        %s663 = smul.addr %s662, 2
        %s664 = smul.addr %s663, 8
        %s665 = scalar_lea.vmem %s3, %s664
      $region104: #{transformer_decoder.6} parent=87 // pred_fallthru
        _
      // Predicated region
      $region105: #{transformer_decoder.6} parent=87 // pred_check
        %p666 = pneg %p153
      $region106: #{transformer_decoder.6} parent=87 // pred_check_branch
        %668 = sbr.rel (%p666) target = $region108
      $region107: #{transformer_decoder.6} parent=87 // pred_region
        %p669 = scmp.lt.s32.totalorder %s29, 1
        %s670 = scalar_select %p669, %s29, 1
        %s671 = smul.addr %s670, 8
        %s672 = scalar_lea.vmem %s4, %s671
      $region108: #{transformer_decoder.6} parent=87 // pred_fallthru
        _
    $region88: #{transformer_decoder.6} parent=5 // pred_fallthru
      _
    %p673 = scmp.le.s32.totalorder 1, %s29
    %p674 = scmp.lt.s32.totalorder %s29, 3
    %p675 = pnand %p673, %p674
    %p676 = pneg %p675
    // Predicated region
    $region109: #{transformer_decoder.6} parent=5 // pred_check
      _
    $region110: #{transformer_decoder.6} parent=5 // pred_check_branch
      %678 = sbr.rel (%p675) target = $region112
    $region111: #{transformer_decoder.6} parent=5 // pred_region
      %s679 = ssub.s32 %s29, 1
      %p680 = scmp.lt.s32.totalorder %s34, 1
      %s681 = scalar_select %p680, %s34, 1
      %s682 = smul.addr %s681, 8
      %s683 = scalar_lea.vmem %s0, %s682
      %p684 = pneg %p55
      %p685 = pneg %p52
      %p686 = scmp.lt.s32.totalorder %s34, 1
      %s687 = scalar_select %p686, %s34, 1
      %s688 = smul.addr %s687, 8
      %s689 = scalar_lea.vmem %s1, %s688
      %p690 = pneg %p81
      %p691 = pneg %p78
      %p692 = scmp.lt.s32.totalorder %s34, 1
      %s693 = scalar_select %p692, %s34, 1
      %s694 = smul.addr %s693, 2
      %s695 = smul.addr %s694, 8
      %s696 = scalar_lea.vmem %s2, %s695
      %p697 = pneg %p107
      %p698 = pneg %p104
      %p699 = scmp.lt.s32.totalorder %s34, 1
      %s700 = scalar_select %p699, %s34, 1
      %s701 = smul.addr %s700, 2
      %s702 = smul.addr %s701, 8
      %s703 = scalar_lea.vmem %s3, %s702
      %p704 = pneg %p133
      %p705 = pneg %p130
      %p706 = scmp.lt.s32.totalorder %s34, 1
      %s707 = scalar_select %p706, %s34, 1
      %s708 = smul.addr %s707, 8
      %s709 = scalar_lea.vmem %s4, %s708
      %p710 = pneg %p159
      %p711 = pneg %p156
      %p712 = pneg %p180
      %p713 = pneg %p177
      %p714 = pneg %p201
      %p715 = pneg %p198
      %p716 = pneg %p222
      %p717 = pneg %p219
      %p718 = pneg %p243
      %p719 = pneg %p240
      %p720 = pneg %p264
      %p721 = pneg %p261
      %p722 = pneg %p285
      %p723 = pneg %p282
      %p724 = pneg %p306
      %p725 = pneg %p303
      %p726 = pneg %p327
      %p727 = pneg %p324
      %p728 = pneg %p348
      %p729 = pneg %p345
      %p730 = pneg %p369
      %p731 = pneg %p366
      %p732 = pneg %p390
      %p733 = pneg %p387
      %p734 = pneg %p411
      %p735 = pneg %p408
      %p736 = pneg %p432
      %p737 = pneg %p429
      %p738 = pneg %p453
      %p739 = pneg %p450
      %p740 = pneg %p474
      %p741 = pneg %p471
      %p742 = pneg %p495
      %p743 = pneg %p492
      %p744 = pneg %p516
      %p745 = pneg %p513
      %p746 = pneg %p537
      %p747 = pneg %p534
      %p748 = pneg %p563
      %p749 = pneg %p560
      %p750 = scmp.lt.s32.totalorder %s34, 1
      %s751 = scalar_select %p750, %s34, 1
      %s752 = smul.addr %s751, 8
      %s753 = scalar_lea.vmem %s23, %s752
      %p754 = scmp.lt.s32.totalorder %s34, 1
      %s755 = scalar_select %p754, %s34, 1
      %s756 = smul.addr %s755, 8
      %s757 = scalar_lea.vmem %s0, %s756
      %p758 = scmp.lt.s32.totalorder %s34, 1
      %s759 = scalar_select %p758, %s34, 1
      %s760 = smul.addr %s759, 8
      %s761 = scalar_lea.vmem %s1, %s760
      %p762 = scmp.lt.s32.totalorder %s34, 1
      %s763 = scalar_select %p762, %s34, 1
      %s764 = smul.addr %s763, 2
      %s765 = smul.addr %s764, 8
      %s766 = scalar_lea.vmem %s2, %s765
      %p767 = scmp.lt.s32.totalorder %s34, 1
      %s768 = scalar_select %p767, %s34, 1
      %s769 = smul.addr %s768, 2
      %s770 = smul.addr %s769, 8
      %s771 = scalar_lea.vmem %s3, %s770
      %p772 = scmp.lt.s32.totalorder %s34, 1
      %s773 = scalar_select %p772, %s34, 1
      %s774 = smul.addr %s773, 8
      %s775 = scalar_lea.vmem %s4, %s774
      %p776 = scmp.lt.s32.totalorder %s34, 1
      %s777 = scalar_select %p776, %s34, 1
      %s778 = smul.addr %s777, 8
      %s779 = scalar_lea.vmem %s23, %s778
      %v780 = vld [vmem:[%s757] sm:$0xff]
      %v781 = vld [vmem:[%s761] sm:$0xff]
      %v782 = vld [vmem:[%s766] sm:$0xff]
      %v783 = vld [vmem:[%s766 + $0x8] sm:$0xff]
      %v784 = vld [vmem:[%s771] sm:$0xff]
      %v785 = vld [vmem:[%s771 + $0x8] sm:$0xff]
      %v786 = vld [vmem:[%s775] sm:$0xff]
      %v787 = vld [vmem:[%s5] sm:$0x3]
      %v788 = vld [vmem:[%s6] sm:$0x1]
      %v789 = vadd.f32 %v780, %v781
      %v790 = vld [vmem:[%s7] sm:$0xff]
      %v791 = vld [vmem:[%s7 + $0x8] sm:$0xff]
      %v792 = vld [vmem:[%s7 + $0x10] sm:$0xff]
      %v793 = vld [vmem:[%s7 + $0x18] sm:$0xff]
      %v794 = vld [vmem:[%s8] sm:$0x1]
      %v796 = vlaneseq
      %v797 = vshrl.u32 %v796, 7
      %v798 = vsub.s32 0, %v797
      %v799 = vrot.slane %v794, %v798
      %vm801 = vcmask 261120
      %v803 = vsel %vm801, %v789, 0
      %805 = vmatprep.subr.mxu0 0.0
      %806 = vmatpush1.msra.mxu0 0.0
      %807 = vmatprep.subr.mxu0 0.0
      %808 = vmatpush1.msra.mxu0 0.0
      %809 = vmatprep.subr.mxu0 0.0
      %810 = vmatpush1.msra.mxu0 0.0
      %811 = vmatprep.subr.mxu0 0.0
      %812 = vmatpush1.msra.mxu0 0.0
      %813 = vmatprep.subr.mxu0 0.0
      %814 = vmatpush1.msra.mxu0 0.0
      %815 = vmatprep.subr.mxu0 0.0
      %816 = vmatpush1.msra.mxu0 0.0
      %817 = vmatprep.subr.mxu0 0.0
      %818 = vmatpush1.msra.mxu0 0.0
      %819 = vmatprep.subr.mxu0 0.0
      %820 = vmatpush1.msra.mxu0 0.0
      %821 = vmatprep.subr.mxu0 0.0
      %822 = vmatpush1.msra.mxu0 0.0
      %823 = vmatprep.subr.mxu0 0.0
      %824 = vmatpush1.msra.mxu0 0.0
      %825 = vmatprep.subr.mxu0 0.0
      %826 = vmatpush1.msra.mxu0 0.0
      %827 = vmatprep.subr.mxu0 0.0
      %828 = vmatpush1.msra.mxu0 0.0
      %829 = vmatprep.subr.mxu0 0.0
      %830 = vmatpush1.msra.mxu0 %v793
      %831 = vmatprep.subr.mxu0 0.0
      %832 = vmatpush1.msra.mxu0 %v792
      %833 = vmatprep.subr.mxu0 0.0
      %834 = vmatpush1.msra.mxu0 %v791
      %835 = vmatprep.subr.mxu0 0.0
      %836 = vmatpush1.msra.mxu0 %v790
      %837 = vmatprep.subr.mxu0 0.0
      %838 = vmatpush2.msra.mxu0 0.0
      %839 = vmatprep.subr.mxu0 0.0
      %840 = vmatpush2.msra.mxu0 0.0
      %841 = vmatprep.subr.mxu0 0.0
      %842 = vmatpush2.msra.mxu0 0.0
      %843 = vmatprep.subr.mxu0 0.0
      %844 = vmatpush2.msra.mxu0 0.0
      %845 = vmatprep.subr.mxu0 0.0
      %846 = vmatpush2.msra.mxu0 0.0
      %847 = vmatprep.subr.mxu0 0.0
      %848 = vmatpush2.msra.mxu0 0.0
      %849 = vmatprep.subr.mxu0 0.0
      %850 = vmatpush2.msra.mxu0 0.0
      %851 = vmatprep.subr.mxu0 0.0
      %852 = vmatpush2.msra.mxu0 0.0
      %853 = vmatprep.subr.mxu0 0.0
      %854 = vmatpush2.msra.mxu0 0.0
      %855 = vmatprep.subr.mxu0 0.0
      %856 = vmatpush2.msra.mxu0 0.0
      %857 = vmatprep.subr.mxu0 0.0
      %858 = vmatpush2.msra.mxu0 0.0
      %859 = vmatprep.subr.mxu0 0.0
      %860 = vmatpush2.msra.mxu0 0.0
      %861 = vmatprep.subr.mxu0 0.0
      %862 = vmatpush2.msra.mxu0 0.0
      %863 = vmatprep.subr.mxu0 0.0
      %864 = vmatpush2.msra.mxu0 0.0
      %865 = vmatprep.subr.mxu0 0.0
      %866 = vmatpush2.msra.mxu0 0.0
      %867 = vmatprep.subr.mxu0 0.0
      %868 = vmatpush2.msra.mxu0 0.0
      %869 = vmatprep.mubr.f32.mxu0 0.0
      %870 = vmatmul.mubr.f32.gmra.mxu0 %v803
      %v871 = vpop.f32.mrf.mxu0
      %v872 = vadd.f32 %v799, %v871
      %v873 = vpop.f32.mrf.mxu0
      %874 = vdwg.mxu0
      %v875 = vadd.f32 %v782, %v784
      %v876 = vadd.f32 %v783, %v785
      %v877 = vld [vmem:[%s9] sm:$0xff]
      %v878 = vld [vmem:[%s9 + $0x8] sm:$0xff]
      %v879 = vld [vmem:[%s9 + $0x10] sm:$0xff]
      %v880 = vld [vmem:[%s9 + $0x18] sm:$0xff]
      %v881 = vld [vmem:[%s10] sm:$0x1]
      %v883 = vlaneseq
      %v884 = vshrl.u32 %v883, 7
      %v885 = vsub.s32 0, %v884
      %v886 = vrot.slane %v881, %v885
      %v889 = vsel %vm801, %v875, 0
      %v892 = vsel %vm801, %v876, 0
      %894 = vmatprep.subr.mxu0 0.0
      %895 = vmatpush1.msra.mxu0 0.0
      %896 = vmatprep.subr.mxu0 0.0
      %897 = vmatpush1.msra.mxu0 0.0
      %898 = vmatprep.subr.mxu0 0.0
      %899 = vmatpush1.msra.mxu0 0.0
      %900 = vmatprep.subr.mxu0 0.0
      %901 = vmatpush1.msra.mxu0 0.0
      %902 = vmatprep.subr.mxu0 0.0
      %903 = vmatpush1.msra.mxu0 0.0
      %904 = vmatprep.subr.mxu0 0.0
      %905 = vmatpush1.msra.mxu0 0.0
      %906 = vmatprep.subr.mxu0 0.0
      %907 = vmatpush1.msra.mxu0 0.0
      %908 = vmatprep.subr.mxu0 0.0
      %909 = vmatpush1.msra.mxu0 0.0
      %910 = vmatprep.subr.mxu0 0.0
      %911 = vmatpush1.msra.mxu0 0.0
      %912 = vmatprep.subr.mxu0 0.0
      %913 = vmatpush1.msra.mxu0 0.0
      %914 = vmatprep.subr.mxu0 0.0
      %915 = vmatpush1.msra.mxu0 0.0
      %916 = vmatprep.subr.mxu0 0.0
      %917 = vmatpush1.msra.mxu0 0.0
      %918 = vmatprep.subr.mxu0 0.0
      %919 = vmatpush1.msra.mxu0 %v880
      %920 = vmatprep.subr.mxu0 0.0
      %921 = vmatpush1.msra.mxu0 %v879
      %922 = vmatprep.subr.mxu0 0.0
      %923 = vmatpush1.msra.mxu0 %v878
      %924 = vmatprep.subr.mxu0 0.0
      %925 = vmatpush1.msra.mxu0 %v877
      %926 = vmatprep.subr.mxu0 0.0
      %927 = vmatpush2.msra.mxu0 0.0
      %928 = vmatprep.subr.mxu0 0.0
      %929 = vmatpush2.msra.mxu0 0.0
      %930 = vmatprep.subr.mxu0 0.0
      %931 = vmatpush2.msra.mxu0 0.0
      %932 = vmatprep.subr.mxu0 0.0
      %933 = vmatpush2.msra.mxu0 0.0
      %934 = vmatprep.subr.mxu0 0.0
      %935 = vmatpush2.msra.mxu0 0.0
      %936 = vmatprep.subr.mxu0 0.0
      %937 = vmatpush2.msra.mxu0 0.0
      %938 = vmatprep.subr.mxu0 0.0
      %939 = vmatpush2.msra.mxu0 0.0
      %940 = vmatprep.subr.mxu0 0.0
      %941 = vmatpush2.msra.mxu0 0.0
      %942 = vmatprep.subr.mxu0 0.0
      %943 = vmatpush2.msra.mxu0 0.0
      %944 = vmatprep.subr.mxu0 0.0
      %945 = vmatpush2.msra.mxu0 0.0
      %946 = vmatprep.subr.mxu0 0.0
      %947 = vmatpush2.msra.mxu0 0.0
      %948 = vmatprep.subr.mxu0 0.0
      %949 = vmatpush2.msra.mxu0 0.0
      %950 = vmatprep.subr.mxu0 0.0
      %951 = vmatpush2.msra.mxu0 0.0
      %952 = vmatprep.subr.mxu0 0.0
      %953 = vmatpush2.msra.mxu0 0.0
      %954 = vmatprep.subr.mxu0 0.0
      %955 = vmatpush2.msra.mxu0 0.0
      %956 = vmatprep.subr.mxu0 0.0
      %957 = vmatpush2.msra.mxu0 0.0
      %958 = vmatprep.mubr.f32.mxu0 0.0
      %959 = vmatmul.mubr.f32.gmra.mxu0 %v889
      %v960 = vpop.f32.mrf.mxu0
      %v961 = vadd.f32 %v886, %v960
      %v962 = vpop.f32.mrf.mxu0
      %963 = vmatprep.mubr.f32.mxu0 0.0
      %964 = vmatmul.mubr.f32.gmra.mxu0 %v892
      %v965 = vpop.f32.mrf.mxu0
      %v966 = vadd.f32 %v886, %v965
      %v967 = vpop.f32.mrf.mxu0
      %968 = vdwg.mxu0
      %v969 = vld [vmem:[%s11] sm:$0xff]
      %v970 = vld [vmem:[%s11 + $0x8] sm:$0xff]
      %v971 = vld [vmem:[%s11 + $0x10] sm:$0xff]
      %v972 = vld [vmem:[%s11 + $0x18] sm:$0xff]
      %v973 = vld [vmem:[%s12] sm:$0x1]
      %v975 = vlaneseq
      %v976 = vshrl.u32 %v975, 7
      %v977 = vsub.s32 0, %v976
      %v978 = vrot.slane %v973, %v977
      %v981 = vsel %vm801, %v782, 0
      %v984 = vsel %vm801, %v783, 0
      %986 = vmatprep.subr.mxu0 0.0
      %987 = vmatpush1.msra.mxu0 0.0
      %988 = vmatprep.subr.mxu0 0.0
      %989 = vmatpush1.msra.mxu0 0.0
      %990 = vmatprep.subr.mxu0 0.0
      %991 = vmatpush1.msra.mxu0 0.0
      %992 = vmatprep.subr.mxu0 0.0
      %993 = vmatpush1.msra.mxu0 0.0
      %994 = vmatprep.subr.mxu0 0.0
      %995 = vmatpush1.msra.mxu0 0.0
      %996 = vmatprep.subr.mxu0 0.0
      %997 = vmatpush1.msra.mxu0 0.0
      %998 = vmatprep.subr.mxu0 0.0
      %999 = vmatpush1.msra.mxu0 0.0
      %1000 = vmatprep.subr.mxu0 0.0
      %1001 = vmatpush1.msra.mxu0 0.0
      %1002 = vmatprep.subr.mxu0 0.0
      %1003 = vmatpush1.msra.mxu0 0.0
      %1004 = vmatprep.subr.mxu0 0.0
      %1005 = vmatpush1.msra.mxu0 0.0
      %1006 = vmatprep.subr.mxu0 0.0
      %1007 = vmatpush1.msra.mxu0 0.0
      %1008 = vmatprep.subr.mxu0 0.0
      %1009 = vmatpush1.msra.mxu0 0.0
      %1010 = vmatprep.subr.mxu0 0.0
      %1011 = vmatpush1.msra.mxu0 %v972
      %1012 = vmatprep.subr.mxu0 0.0
      %1013 = vmatpush1.msra.mxu0 %v971
      %1014 = vmatprep.subr.mxu0 0.0
      %1015 = vmatpush1.msra.mxu0 %v970
      %1016 = vmatprep.subr.mxu0 0.0
      %1017 = vmatpush1.msra.mxu0 %v969
      %1018 = vmatprep.subr.mxu0 0.0
      %1019 = vmatpush2.msra.mxu0 0.0
      %1020 = vmatprep.subr.mxu0 0.0
      %1021 = vmatpush2.msra.mxu0 0.0
      %1022 = vmatprep.subr.mxu0 0.0
      %1023 = vmatpush2.msra.mxu0 0.0
      %1024 = vmatprep.subr.mxu0 0.0
      %1025 = vmatpush2.msra.mxu0 0.0
      %1026 = vmatprep.subr.mxu0 0.0
      %1027 = vmatpush2.msra.mxu0 0.0
      %1028 = vmatprep.subr.mxu0 0.0
      %1029 = vmatpush2.msra.mxu0 0.0
      %1030 = vmatprep.subr.mxu0 0.0
      %1031 = vmatpush2.msra.mxu0 0.0
      %1032 = vmatprep.subr.mxu0 0.0
      %1033 = vmatpush2.msra.mxu0 0.0
      %1034 = vmatprep.subr.mxu0 0.0
      %1035 = vmatpush2.msra.mxu0 0.0
      %1036 = vmatprep.subr.mxu0 0.0
      %1037 = vmatpush2.msra.mxu0 0.0
      %1038 = vmatprep.subr.mxu0 0.0
      %1039 = vmatpush2.msra.mxu0 0.0
      %1040 = vmatprep.subr.mxu0 0.0
      %1041 = vmatpush2.msra.mxu0 0.0
      %1042 = vmatprep.subr.mxu0 0.0
      %1043 = vmatpush2.msra.mxu0 0.0
      %1044 = vmatprep.subr.mxu0 0.0
      %1045 = vmatpush2.msra.mxu0 0.0
      %1046 = vmatprep.subr.mxu0 0.0
      %1047 = vmatpush2.msra.mxu0 0.0
      %1048 = vmatprep.subr.mxu0 0.0
      %1049 = vmatpush2.msra.mxu0 0.0
      %1050 = vmatprep.mubr.f32.mxu0 0.0
      %1051 = vmatmul.mubr.f32.gmra.mxu0 %v981
      %v1052 = vpop.f32.mrf.mxu0
      %v1053 = vadd.f32 %v978, %v1052
      %v1054 = vpop.f32.mrf.mxu0
      %1055 = vmatprep.mubr.f32.mxu0 0.0
      %1056 = vmatmul.mubr.f32.gmra.mxu0 %v984
      %v1057 = vpop.f32.mrf.mxu0
      %v1058 = vadd.f32 %v978, %v1057
      %v1059 = vpop.f32.mrf.mxu0
      %1060 = vdwg.mxu0
      %v1061 = vld [vmem:[%s13] sm:$0xff]
      %v1062 = vld [vmem:[%s13 + $0x8] sm:$0xff]
      %v1063 = vld [vmem:[%s13 + $0x10] sm:$0xff]
      %v1064 = vld [vmem:[%s13 + $0x18] sm:$0xff]
      %v1065 = vmul.f32 %v872, 0.35355338
      %v1066 = vmul.f32 %v786, %v786
      %vm1067 = vcmask 15360
      %v1068 = vsel %vm1067, %v1066, 0.0
      %1069 = vadd.xlane.f32.xlu0 %v1068
      %v1070 = vpop.xlane.xlu0 %1069
      %v1072 = vsel %vm1067, %v786, 0
      %vm1074 = vcmask 1041408
      %v1076 = vsel %vm1074, %v787, 0
      %1078 = vmatprep.subr.mxu0 0.0
      %1079 = vmatpush1.msra.mxu0 0.0
      %1080 = vmatprep.subr.mxu0 0.0
      %1081 = vmatpush1.msra.mxu0 0.0
      %1082 = vmatprep.subr.mxu0 0.0
      %1083 = vmatpush1.msra.mxu0 0.0
      %1084 = vmatprep.subr.mxu0 0.0
      %1085 = vmatpush1.msra.mxu0 0.0
      %1086 = vmatprep.subr.mxu0 0.0
      %1087 = vmatpush1.msra.mxu0 0.0
      %1088 = vmatprep.subr.mxu0 0.0
      %1089 = vmatpush1.msra.mxu0 0.0
      %1090 = vmatprep.subr.mxu0 0.0
      %1091 = vmatpush1.msra.mxu0 0.0
      %1092 = vmatprep.subr.mxu0 0.0
      %1093 = vmatpush1.msra.mxu0 0.0
      %1094 = vmatprep.subr.mxu0 0.0
      %1095 = vmatpush1.msra.mxu0 0.0
      %1096 = vmatprep.subr.mxu0 0.0
      %1097 = vmatpush1.msra.mxu0 0.0
      %1098 = vmatprep.subr.mxu0 0.0
      %1099 = vmatpush1.msra.mxu0 0.0
      %1100 = vmatprep.subr.mxu0 0.0
      %1101 = vmatpush1.msra.mxu0 0.0
      %1102 = vmatprep.subr.mxu0 0.0
      %1103 = vmatpush1.msra.mxu0 0.0
      %1104 = vmatprep.subr.mxu0 0.0
      %1105 = vmatpush1.msra.mxu0 0.0
      %1106 = vmatprep.subr.mxu0 0.0
      %1107 = vmatpush1.msra.mxu0 0.0
      %1108 = vmatprep.subr.mxu0 0.0
      %1109 = vmatpush1.msra.mxu0 %v1076
      %1110 = vmatprep.subr.mxu0 0.0
      %1111 = vmatpush2.msra.mxu0 0.0
      %1112 = vmatprep.subr.mxu0 0.0
      %1113 = vmatpush2.msra.mxu0 0.0
      %1114 = vmatprep.subr.mxu0 0.0
      %1115 = vmatpush2.msra.mxu0 0.0
      %1116 = vmatprep.subr.mxu0 0.0
      %1117 = vmatpush2.msra.mxu0 0.0
      %1118 = vmatprep.subr.mxu0 0.0
      %1119 = vmatpush2.msra.mxu0 0.0
      %1120 = vmatprep.subr.mxu0 0.0
      %1121 = vmatpush2.msra.mxu0 0.0
      %1122 = vmatprep.subr.mxu0 0.0
      %1123 = vmatpush2.msra.mxu0 0.0
      %1124 = vmatprep.subr.mxu0 0.0
      %1125 = vmatpush2.msra.mxu0 0.0
      %1126 = vmatprep.subr.mxu0 0.0
      %1127 = vmatpush2.msra.mxu0 0.0
      %1128 = vmatprep.subr.mxu0 0.0
      %1129 = vmatpush2.msra.mxu0 0.0
      %1130 = vmatprep.subr.mxu0 0.0
      %1131 = vmatpush2.msra.mxu0 0.0
      %1132 = vmatprep.subr.mxu0 0.0
      %1133 = vmatpush2.msra.mxu0 0.0
      %1134 = vmatprep.subr.mxu0 0.0
      %1135 = vmatpush2.msra.mxu0 0.0
      %1136 = vmatprep.subr.mxu0 0.0
      %1137 = vmatpush2.msra.mxu0 0.0
      %1138 = vmatprep.subr.mxu0 0.0
      %1139 = vmatpush2.msra.mxu0 0.0
      %1140 = vmatprep.subr.mxu0 0.0
      %1141 = vmatpush2.msra.mxu0 0.0
      %1142 = vmatprep.mubr.f32.mxu0 0.0
      %1143 = vmatmul.mubr.f32.gmra.mxu0 %v1072
      %v1144 = vpop.f32.mrf.mxu0
      %v1145 = vadd.f32 0.0, %v1144
      %v1146 = vpop.f32.mrf.mxu0
      %1147 = vdwg.mxu0
      %v1148 = vmul.f32 %v1145, 2.0
      %v1149 = vsub.f32 %v1070, %v1148
      %v1151 = vlaneseq
      %v1152 = vshrl.u32 %v1151, 7
      %v1153 = vsub.s32 0, %v1152
      %v1154 = vrot.slane %v788, %v1153
      %v1156 = vadd.f32 %v1149, %v1154
      %v1157 = vsub.f32 0.0, %v1156
      %v1158 = vmul.f32 %v1157, 0.125
      %vm1159 = vcmask 64512
      %v1161 = vsel %vm1159, %v1065, 0
      %v1164 = vsel %vm1159, %v961, 0
      %v1167 = vsel %vm1159, %v966, 0
      %1169 = vmatprep.subr.mxu0 0.0
      %1170 = vmatpush1.xpose.msra.mxu0 0.0
      %1171 = vmatprep.subr.mxu0 0.0
      %1172 = vmatpush1.xpose.msra.mxu0 0.0
      %1173 = vmatprep.subr.mxu0 0.0
      %1174 = vmatpush1.xpose.msra.mxu0 0.0
      %1175 = vmatprep.subr.mxu0 0.0
      %1176 = vmatpush1.xpose.msra.mxu0 0.0
      %1177 = vmatprep.subr.mxu0 0.0
      %1178 = vmatpush1.xpose.msra.mxu0 0.0
      %1179 = vmatprep.subr.mxu0 0.0
      %1180 = vmatpush1.xpose.msra.mxu0 0.0
      %1181 = vmatprep.subr.mxu0 0.0
      %1182 = vmatpush1.xpose.msra.mxu0 0.0
      %1183 = vmatprep.subr.mxu0 0.0
      %1184 = vmatpush1.xpose.msra.mxu0 0.0
      %1185 = vmatprep.subr.mxu0 0.0
      %1186 = vmatpush1.xpose.msra.mxu0 0.0
      %1187 = vmatprep.subr.mxu0 0.0
      %1188 = vmatpush1.xpose.msra.mxu0 0.0
      %1189 = vmatprep.subr.mxu0 0.0
      %1190 = vmatpush1.xpose.msra.mxu0 0.0
      %1191 = vmatprep.subr.mxu0 0.0
      %1192 = vmatpush1.xpose.msra.mxu0 0.0
      %1193 = vmatprep.subr.mxu0 0.0
      %1194 = vmatpush1.xpose.msra.mxu0 0.0
      %1195 = vmatprep.subr.mxu0 0.0
      %1196 = vmatpush1.xpose.msra.mxu0 0.0
      %1197 = vmatprep.subr.mxu0 0.0
      %1198 = vmatpush1.xpose.msra.mxu0 %v1167
      %1199 = vmatprep.subr.mxu0 0.0
      %1200 = vmatpush1.xpose.msra.mxu0 %v1164
      %1201 = vmatprep.subr.mxu0 0.0
      %1202 = vmatpush2.xpose.msra.mxu0 0.0
      %1203 = vmatprep.subr.mxu0 0.0
      %1204 = vmatpush2.xpose.msra.mxu0 0.0
      %1205 = vmatprep.subr.mxu0 0.0
      %1206 = vmatpush2.xpose.msra.mxu0 0.0
      %1207 = vmatprep.subr.mxu0 0.0
      %1208 = vmatpush2.xpose.msra.mxu0 0.0
      %1209 = vmatprep.subr.mxu0 0.0
      %1210 = vmatpush2.xpose.msra.mxu0 0.0
      %1211 = vmatprep.subr.mxu0 0.0
      %1212 = vmatpush2.xpose.msra.mxu0 0.0
      %1213 = vmatprep.subr.mxu0 0.0
      %1214 = vmatpush2.xpose.msra.mxu0 0.0
      %1215 = vmatprep.subr.mxu0 0.0
      %1216 = vmatpush2.xpose.msra.mxu0 0.0
      %1217 = vmatprep.subr.mxu0 0.0
      %1218 = vmatpush2.xpose.msra.mxu0 0.0
      %1219 = vmatprep.subr.mxu0 0.0
      %1220 = vmatpush2.xpose.msra.mxu0 0.0
      %1221 = vmatprep.subr.mxu0 0.0
      %1222 = vmatpush2.xpose.msra.mxu0 0.0
      %1223 = vmatprep.subr.mxu0 0.0
      %1224 = vmatpush2.xpose.msra.mxu0 0.0
      %1225 = vmatprep.subr.mxu0 0.0
      %1226 = vmatpush2.xpose.msra.mxu0 0.0
      %1227 = vmatprep.subr.mxu0 0.0
      %1228 = vmatpush2.xpose.msra.mxu0 0.0
      %1229 = vmatprep.subr.mxu0 0.0
      %1230 = vmatpush2.xpose.msra.mxu0 0.0
      %1231 = vmatprep.subr.mxu0 0.0
      %1232 = vmatpush2.xpose.msra.mxu0 0.0
      %1233 = vmatprep.mubr.f32.mxu0 0.0
      %1234 = vmatmul.mubr.f32.gmra.mxu0 %v1161
      %v1235 = vpop.f32.mrf.mxu0
      %v1236 = vadd.f32 %v1158, %v1235
      %v1237 = vpop.f32.mrf.mxu0
      %1238 = vdwg.mxu0
      %vm1239 = vcmask 130048
      %v1240 = vsel %vm1239, %v1236, -inf
      %1241 = vmax.xlane.f32.xlu0 %v1240
      %v1242 = vpop.xlane.xlu0 %1241
      %v1243 = vsub.f32 %v1236, %v1242
      %v1244 = vmul.f32 %v1243, 1.442695
      %v1245 = vpow.pop %v1244
      %v1246 = vsel %vm1239, %v1245, 0.0
      %1247 = vadd.xlane.f32.xlu0 %v1246
      %v1248 = vpop.xlane.xlu0 %1247
      %v1249 = vrcp.pop %v1248
      %v1250 = vmul.f32 %v1245, %v1249
      %v1252 = vsel %vm1239, %v1250, 0
      %1254 = vmatprep.subr.mxu0 0.0
      %1255 = vmatpush1.msra.mxu0 0.0
      %1256 = vmatprep.subr.mxu0 0.0
      %1257 = vmatpush1.msra.mxu0 0.0
      %1258 = vmatprep.subr.mxu0 0.0
      %1259 = vmatpush1.msra.mxu0 0.0
      %1260 = vmatprep.subr.mxu0 0.0
      %1261 = vmatpush1.msra.mxu0 0.0
      %1262 = vmatprep.subr.mxu0 0.0
      %1263 = vmatpush1.msra.mxu0 0.0
      %1264 = vmatprep.subr.mxu0 0.0
      %1265 = vmatpush1.msra.mxu0 0.0
      %1266 = vmatprep.subr.mxu0 0.0
      %1267 = vmatpush1.msra.mxu0 0.0
      %1268 = vmatprep.subr.mxu0 0.0
      %1269 = vmatpush1.msra.mxu0 0.0
      %1270 = vmatprep.subr.mxu0 0.0
      %1271 = vmatpush1.msra.mxu0 0.0
      %1272 = vmatprep.subr.mxu0 0.0
      %1273 = vmatpush1.msra.mxu0 0.0
      %1274 = vmatprep.subr.mxu0 0.0
      %1275 = vmatpush1.msra.mxu0 0.0
      %1276 = vmatprep.subr.mxu0 0.0
      %1277 = vmatpush1.msra.mxu0 0.0
      %1278 = vmatprep.subr.mxu0 0.0
      %1279 = vmatpush1.msra.mxu0 0.0
      %1280 = vmatprep.subr.mxu0 0.0
      %1281 = vmatpush1.msra.mxu0 0.0
      %1282 = vmatprep.subr.mxu0 0.0
      %1283 = vmatpush1.msra.mxu0 %v1058
      %1284 = vmatprep.subr.mxu0 0.0
      %1285 = vmatpush1.msra.mxu0 %v1053
      %1286 = vmatprep.subr.mxu0 0.0
      %1287 = vmatpush2.msra.mxu0 0.0
      %1288 = vmatprep.subr.mxu0 0.0
      %1289 = vmatpush2.msra.mxu0 0.0
      %1290 = vmatprep.subr.mxu0 0.0
      %1291 = vmatpush2.msra.mxu0 0.0
      %1292 = vmatprep.subr.mxu0 0.0
      %1293 = vmatpush2.msra.mxu0 0.0
      %1294 = vmatprep.subr.mxu0 0.0
      %1295 = vmatpush2.msra.mxu0 0.0
      %1296 = vmatprep.subr.mxu0 0.0
      %1297 = vmatpush2.msra.mxu0 0.0
      %1298 = vmatprep.subr.mxu0 0.0
      %1299 = vmatpush2.msra.mxu0 0.0
      %1300 = vmatprep.subr.mxu0 0.0
      %1301 = vmatpush2.msra.mxu0 0.0
      %1302 = vmatprep.subr.mxu0 0.0
      %1303 = vmatpush2.msra.mxu0 0.0
      %1304 = vmatprep.subr.mxu0 0.0
      %1305 = vmatpush2.msra.mxu0 0.0
      %1306 = vmatprep.subr.mxu0 0.0
      %1307 = vmatpush2.msra.mxu0 0.0
      %1308 = vmatprep.subr.mxu0 0.0
      %1309 = vmatpush2.msra.mxu0 0.0
      %1310 = vmatprep.subr.mxu0 0.0
      %1311 = vmatpush2.msra.mxu0 0.0
      %1312 = vmatprep.subr.mxu0 0.0
      %1313 = vmatpush2.msra.mxu0 0.0
      %1314 = vmatprep.subr.mxu0 0.0
      %1315 = vmatpush2.msra.mxu0 0.0
      %1316 = vmatprep.subr.mxu0 0.0
      %1317 = vmatpush2.msra.mxu0 0.0
      %1318 = vmatprep.mubr.f32.mxu0 0.0
      %1319 = vmatmul.mubr.f32.gmra.mxu0 %v1252
      %v1320 = vpop.f32.mrf.mxu0
      %v1321 = vadd.f32 0.0, %v1320
      %v1322 = vpop.f32.mrf.mxu0
      %1323 = vdwg.mxu0
      %1325 = vrot.lane.b32.xlu0 %v1066, 126
      %v1326 = vpop.permute.xlu0 %1325
      %v1328 = vsel %vm1067, %v1326, 0.0
      %1329 = vadd.xlane.f32.xlu0 %v1328
      %v1330 = vpop.xlane.xlu0 %1329
      %1331 = vrot.lane.b32.xlu0 %v786, 126
      %v1332 = vpop.permute.xlu0 %1331
      %v1333 = vsel %vm1067, %v1332, 0
      %1335 = vmatprep.subr.mxu0 0.0
      %1336 = vmatpush1.msra.mxu0 0.0
      %1337 = vmatprep.subr.mxu0 0.0
      %1338 = vmatpush1.msra.mxu0 0.0
      %1339 = vmatprep.subr.mxu0 0.0
      %1340 = vmatpush1.msra.mxu0 0.0
      %1341 = vmatprep.subr.mxu0 0.0
      %1342 = vmatpush1.msra.mxu0 0.0
      %1343 = vmatprep.subr.mxu0 0.0
      %1344 = vmatpush1.msra.mxu0 0.0
      %1345 = vmatprep.subr.mxu0 0.0
      %1346 = vmatpush1.msra.mxu0 0.0
      %1347 = vmatprep.subr.mxu0 0.0
      %1348 = vmatpush1.msra.mxu0 0.0
      %1349 = vmatprep.subr.mxu0 0.0
      %1350 = vmatpush1.msra.mxu0 0.0
      %1351 = vmatprep.subr.mxu0 0.0
      %1352 = vmatpush1.msra.mxu0 0.0
      %1353 = vmatprep.subr.mxu0 0.0
      %1354 = vmatpush1.msra.mxu0 0.0
      %1355 = vmatprep.subr.mxu0 0.0
      %1356 = vmatpush1.msra.mxu0 0.0
      %1357 = vmatprep.subr.mxu0 0.0
      %1358 = vmatpush1.msra.mxu0 0.0
      %1359 = vmatprep.subr.mxu0 0.0
      %1360 = vmatpush1.msra.mxu0 0.0
      %1361 = vmatprep.subr.mxu0 0.0
      %1362 = vmatpush1.msra.mxu0 0.0
      %1363 = vmatprep.subr.mxu0 0.0
      %1364 = vmatpush1.msra.mxu0 0.0
      %1365 = vmatprep.subr.mxu0 0.0
      %1366 = vmatpush1.msra.mxu0 %v1076
      %1367 = vmatprep.subr.mxu0 0.0
      %1368 = vmatpush2.msra.mxu0 0.0
      %1369 = vmatprep.subr.mxu0 0.0
      %1370 = vmatpush2.msra.mxu0 0.0
      %1371 = vmatprep.subr.mxu0 0.0
      %1372 = vmatpush2.msra.mxu0 0.0
      %1373 = vmatprep.subr.mxu0 0.0
      %1374 = vmatpush2.msra.mxu0 0.0
      %1375 = vmatprep.subr.mxu0 0.0
      %1376 = vmatpush2.msra.mxu0 0.0
      %1377 = vmatprep.subr.mxu0 0.0
      %1378 = vmatpush2.msra.mxu0 0.0
      %1379 = vmatprep.subr.mxu0 0.0
      %1380 = vmatpush2.msra.mxu0 0.0
      %1381 = vmatprep.subr.mxu0 0.0
      %1382 = vmatpush2.msra.mxu0 0.0
      %1383 = vmatprep.subr.mxu0 0.0
      %1384 = vmatpush2.msra.mxu0 0.0
      %1385 = vmatprep.subr.mxu0 0.0
      %1386 = vmatpush2.msra.mxu0 0.0
      %1387 = vmatprep.subr.mxu0 0.0
      %1388 = vmatpush2.msra.mxu0 0.0
      %1389 = vmatprep.subr.mxu0 0.0
      %1390 = vmatpush2.msra.mxu0 0.0
      %1391 = vmatprep.subr.mxu0 0.0
      %1392 = vmatpush2.msra.mxu0 0.0
      %1393 = vmatprep.subr.mxu0 0.0
      %1394 = vmatpush2.msra.mxu0 0.0
      %1395 = vmatprep.subr.mxu0 0.0
      %1396 = vmatpush2.msra.mxu0 0.0
      %1397 = vmatprep.subr.mxu0 0.0
      %1398 = vmatpush2.msra.mxu0 0.0
      %1399 = vmatprep.mubr.f32.mxu0 0.0
      %1400 = vmatmul.mubr.f32.gmra.mxu0 %v1333
      %v1401 = vpop.f32.mrf.mxu0
      %v1402 = vadd.f32 0.0, %v1401
      %v1403 = vpop.f32.mrf.mxu0
      %1404 = vdwg.mxu0
      %v1405 = vmul.f32 %v1402, 2.0
      %v1406 = vsub.f32 %v1330, %v1405
      %v1407 = vadd.f32 %v1406, %v1154
      %v1408 = vsub.f32 0.0, %v1407
      %v1409 = vmul.f32 %v1408, 0.125
      %1410 = vrot.lane.b32.xlu0 %v1065, 120
      %v1411 = vpop.permute.xlu0 %1410
      %1412 = vrot.lane.b32.xlu0 %v961, 120
      %v1413 = vpop.permute.xlu0 %1412
      %1414 = vrot.lane.b32.xlu0 %v966, 120
      %v1415 = vpop.permute.xlu0 %1414
      %v1416 = vsel %vm1159, %v1411, 0
      %v1418 = vsel %vm1159, %v1413, 0
      %v1420 = vsel %vm1159, %v1415, 0
      %1422 = vmatprep.subr.mxu0 0.0
      %1423 = vmatpush1.xpose.msra.mxu0 0.0
      %1424 = vmatprep.subr.mxu0 0.0
      %1425 = vmatpush1.xpose.msra.mxu0 0.0
      %1426 = vmatprep.subr.mxu0 0.0
      %1427 = vmatpush1.xpose.msra.mxu0 0.0
      %1428 = vmatprep.subr.mxu0 0.0
      %1429 = vmatpush1.xpose.msra.mxu0 0.0
      %1430 = vmatprep.subr.mxu0 0.0
      %1431 = vmatpush1.xpose.msra.mxu0 0.0
      %1432 = vmatprep.subr.mxu0 0.0
      %1433 = vmatpush1.xpose.msra.mxu0 0.0
      %1434 = vmatprep.subr.mxu0 0.0
      %1435 = vmatpush1.xpose.msra.mxu0 0.0
      %1436 = vmatprep.subr.mxu0 0.0
      %1437 = vmatpush1.xpose.msra.mxu0 0.0
      %1438 = vmatprep.subr.mxu0 0.0
      %1439 = vmatpush1.xpose.msra.mxu0 0.0
      %1440 = vmatprep.subr.mxu0 0.0
      %1441 = vmatpush1.xpose.msra.mxu0 0.0
      %1442 = vmatprep.subr.mxu0 0.0
      %1443 = vmatpush1.xpose.msra.mxu0 0.0
      %1444 = vmatprep.subr.mxu0 0.0
      %1445 = vmatpush1.xpose.msra.mxu0 0.0
      %1446 = vmatprep.subr.mxu0 0.0
      %1447 = vmatpush1.xpose.msra.mxu0 0.0
      %1448 = vmatprep.subr.mxu0 0.0
      %1449 = vmatpush1.xpose.msra.mxu0 0.0
      %1450 = vmatprep.subr.mxu0 0.0
      %1451 = vmatpush1.xpose.msra.mxu0 %v1420
      %1452 = vmatprep.subr.mxu0 0.0
      %1453 = vmatpush1.xpose.msra.mxu0 %v1418
      %1454 = vmatprep.subr.mxu0 0.0
      %1455 = vmatpush2.xpose.msra.mxu0 0.0
      %1456 = vmatprep.subr.mxu0 0.0
      %1457 = vmatpush2.xpose.msra.mxu0 0.0
      %1458 = vmatprep.subr.mxu0 0.0
      %1459 = vmatpush2.xpose.msra.mxu0 0.0
      %1460 = vmatprep.subr.mxu0 0.0
      %1461 = vmatpush2.xpose.msra.mxu0 0.0
      %1462 = vmatprep.subr.mxu0 0.0
      %1463 = vmatpush2.xpose.msra.mxu0 0.0
      %1464 = vmatprep.subr.mxu0 0.0
      %1465 = vmatpush2.xpose.msra.mxu0 0.0
      %1466 = vmatprep.subr.mxu0 0.0
      %1467 = vmatpush2.xpose.msra.mxu0 0.0
      %1468 = vmatprep.subr.mxu0 0.0
      %1469 = vmatpush2.xpose.msra.mxu0 0.0
      %1470 = vmatprep.subr.mxu0 0.0
      %1471 = vmatpush2.xpose.msra.mxu0 0.0
      %1472 = vmatprep.subr.mxu0 0.0
      %1473 = vmatpush2.xpose.msra.mxu0 0.0
      %1474 = vmatprep.subr.mxu0 0.0
      %1475 = vmatpush2.xpose.msra.mxu0 0.0
      %1476 = vmatprep.subr.mxu0 0.0
      %1477 = vmatpush2.xpose.msra.mxu0 0.0
      %1478 = vmatprep.subr.mxu0 0.0
      %1479 = vmatpush2.xpose.msra.mxu0 0.0
      %1480 = vmatprep.subr.mxu0 0.0
      %1481 = vmatpush2.xpose.msra.mxu0 0.0
      %1482 = vmatprep.subr.mxu0 0.0
      %1483 = vmatpush2.xpose.msra.mxu0 0.0
      %1484 = vmatprep.subr.mxu0 0.0
      %1485 = vmatpush2.xpose.msra.mxu0 0.0
      %1486 = vmatprep.mubr.f32.mxu0 0.0
      %1487 = vmatmul.mubr.f32.gmra.mxu0 %v1416
      %v1488 = vpop.f32.mrf.mxu0
      %v1489 = vadd.f32 %v1409, %v1488
      %v1490 = vpop.f32.mrf.mxu0
      %1491 = vdwg.mxu0
      %v1492 = vsel %vm1239, %v1489, -inf
      %1493 = vmax.xlane.f32.xlu0 %v1492
      %v1494 = vpop.xlane.xlu0 %1493
      %v1495 = vsub.f32 %v1489, %v1494
      %v1496 = vmul.f32 %v1495, 1.442695
      %v1497 = vpow.pop %v1496
      %v1498 = vsel %vm1239, %v1497, 0.0
      %1499 = vadd.xlane.f32.xlu0 %v1498
      %v1500 = vpop.xlane.xlu0 %1499
      %v1501 = vrcp.pop %v1500
      %v1502 = vmul.f32 %v1497, %v1501
      %1505 = vrot.lane.b32.xlu0 %v1053, 120
      %v1506 = vpop.permute.xlu0 %1505
      %1507 = vrot.lane.b32.xlu0 %v1058, 120
      %v1508 = vpop.permute.xlu0 %1507
      %v1512 = vsel %vm1239, %v1502, 0
      %1514 = vmatprep.subr.mxu0 0.0
      %1515 = vmatpush1.msra.mxu0 0.0
      %1516 = vmatprep.subr.mxu0 0.0
      %1517 = vmatpush1.msra.mxu0 0.0
      %1518 = vmatprep.subr.mxu0 0.0
      %1519 = vmatpush1.msra.mxu0 0.0
      %1520 = vmatprep.subr.mxu0 0.0
      %1521 = vmatpush1.msra.mxu0 0.0
      %1522 = vmatprep.subr.mxu0 0.0
      %1523 = vmatpush1.msra.mxu0 0.0
      %1524 = vmatprep.subr.mxu0 0.0
      %1525 = vmatpush1.msra.mxu0 0.0
      %1526 = vmatprep.subr.mxu0 0.0
      %1527 = vmatpush1.msra.mxu0 0.0
      %1528 = vmatprep.subr.mxu0 0.0
      %1529 = vmatpush1.msra.mxu0 0.0
      %1530 = vmatprep.subr.mxu0 0.0
      %1531 = vmatpush1.msra.mxu0 0.0
      %1532 = vmatprep.subr.mxu0 0.0
      %1533 = vmatpush1.msra.mxu0 0.0
      %1534 = vmatprep.subr.mxu0 0.0
      %1535 = vmatpush1.msra.mxu0 0.0
      %1536 = vmatprep.subr.mxu0 0.0
      %1537 = vmatpush1.msra.mxu0 0.0
      %1538 = vmatprep.subr.mxu0 0.0
      %1539 = vmatpush1.msra.mxu0 0.0
      %1540 = vmatprep.subr.mxu0 0.0
      %1541 = vmatpush1.msra.mxu0 0.0
      %1542 = vmatprep.subr.mxu0 0.0
      %1543 = vmatpush1.msra.mxu0 %v1508
      %1544 = vmatprep.subr.mxu0 0.0
      %1545 = vmatpush1.msra.mxu0 %v1506
      %1546 = vmatprep.subr.mxu0 0.0
      %1547 = vmatpush2.msra.mxu0 0.0
      %1548 = vmatprep.subr.mxu0 0.0
      %1549 = vmatpush2.msra.mxu0 0.0
      %1550 = vmatprep.subr.mxu0 0.0
      %1551 = vmatpush2.msra.mxu0 0.0
      %1552 = vmatprep.subr.mxu0 0.0
      %1553 = vmatpush2.msra.mxu0 0.0
      %1554 = vmatprep.subr.mxu0 0.0
      %1555 = vmatpush2.msra.mxu0 0.0
      %1556 = vmatprep.subr.mxu0 0.0
      %1557 = vmatpush2.msra.mxu0 0.0
      %1558 = vmatprep.subr.mxu0 0.0
      %1559 = vmatpush2.msra.mxu0 0.0
      %1560 = vmatprep.subr.mxu0 0.0
      %1561 = vmatpush2.msra.mxu0 0.0
      %1562 = vmatprep.subr.mxu0 0.0
      %1563 = vmatpush2.msra.mxu0 0.0
      %1564 = vmatprep.subr.mxu0 0.0
      %1565 = vmatpush2.msra.mxu0 0.0
      %1566 = vmatprep.subr.mxu0 0.0
      %1567 = vmatpush2.msra.mxu0 0.0
      %1568 = vmatprep.subr.mxu0 0.0
      %1569 = vmatpush2.msra.mxu0 0.0
      %1570 = vmatprep.subr.mxu0 0.0
      %1571 = vmatpush2.msra.mxu0 0.0
      %1572 = vmatprep.subr.mxu0 0.0
      %1573 = vmatpush2.msra.mxu0 0.0
      %1574 = vmatprep.subr.mxu0 0.0
      %1575 = vmatpush2.msra.mxu0 0.0
      %1576 = vmatprep.subr.mxu0 0.0
      %1577 = vmatpush2.msra.mxu0 0.0
      %1578 = vmatprep.mubr.f32.mxu0 0.0
      %1579 = vmatmul.mubr.f32.gmra.mxu0 %v1512
      %v1580 = vpop.f32.mrf.mxu0
      %v1581 = vadd.f32 0.0, %v1580
      %v1582 = vpop.f32.mrf.mxu0
      %1583 = vdwg.mxu0
      %v1585 = vsel %vm1159, %v1581, 0
      %1587 = vmatprep.subr.mxu0 0.0
      %1588 = vmatpush1.msra.mxu0 0.0
      %1589 = vmatprep.subr.mxu0 0.0
      %1590 = vmatpush1.msra.mxu0 0.0
      %1591 = vmatprep.subr.mxu0 0.0
      %1592 = vmatpush1.msra.mxu0 0.0
      %1593 = vmatprep.subr.mxu0 0.0
      %1594 = vmatpush1.msra.mxu0 0.0
      %1595 = vmatprep.subr.mxu0 0.0
      %1596 = vmatpush1.msra.mxu0 0.0
      %1597 = vmatprep.subr.mxu0 0.0
      %1598 = vmatpush1.msra.mxu0 0.0
      %1599 = vmatprep.subr.mxu0 0.0
      %1600 = vmatpush1.msra.mxu0 0.0
      %1601 = vmatprep.subr.mxu0 0.0
      %1602 = vmatpush1.msra.mxu0 0.0
      %1603 = vmatprep.subr.mxu0 0.0
      %1604 = vmatpush1.msra.mxu0 0.0
      %1605 = vmatprep.subr.mxu0 0.0
      %1606 = vmatpush1.msra.mxu0 0.0
      %1607 = vmatprep.subr.mxu0 0.0
      %1608 = vmatpush1.msra.mxu0 0.0
      %1609 = vmatprep.subr.mxu0 0.0
      %1610 = vmatpush1.msra.mxu0 0.0
      %1611 = vmatprep.subr.mxu0 0.0
      %1612 = vmatpush1.msra.mxu0 0.0
      %1613 = vmatprep.subr.mxu0 0.0
      %1614 = vmatpush1.msra.mxu0 0.0
      %1615 = vmatprep.subr.mxu0 0.0
      %1616 = vmatpush1.msra.mxu0 0.0
      %1617 = vmatprep.subr.mxu0 0.0
      %1618 = vmatpush1.msra.mxu0 %v1062
      %1619 = vmatprep.subr.mxu0 0.0
      %1620 = vmatpush2.msra.mxu0 0.0
      %1621 = vmatprep.subr.mxu0 0.0
      %1622 = vmatpush2.msra.mxu0 0.0
      %1623 = vmatprep.subr.mxu0 0.0
      %1624 = vmatpush2.msra.mxu0 0.0
      %1625 = vmatprep.subr.mxu0 0.0
      %1626 = vmatpush2.msra.mxu0 0.0
      %1627 = vmatprep.subr.mxu0 0.0
      %1628 = vmatpush2.msra.mxu0 0.0
      %1629 = vmatprep.subr.mxu0 0.0
      %1630 = vmatpush2.msra.mxu0 0.0
      %1631 = vmatprep.subr.mxu0 0.0
      %1632 = vmatpush2.msra.mxu0 0.0
      %1633 = vmatprep.subr.mxu0 0.0
      %1634 = vmatpush2.msra.mxu0 0.0
      %1635 = vmatprep.subr.mxu0 0.0
      %1636 = vmatpush2.msra.mxu0 0.0
      %1637 = vmatprep.subr.mxu0 0.0
      %1638 = vmatpush2.msra.mxu0 0.0
      %1639 = vmatprep.subr.mxu0 0.0
      %1640 = vmatpush2.msra.mxu0 0.0
      %1641 = vmatprep.subr.mxu0 0.0
      %1642 = vmatpush2.msra.mxu0 0.0
      %1643 = vmatprep.subr.mxu0 0.0
      %1644 = vmatpush2.msra.mxu0 0.0
      %1645 = vmatprep.subr.mxu0 0.0
      %1646 = vmatpush2.msra.mxu0 0.0
      %1647 = vmatprep.subr.mxu0 0.0
      %1648 = vmatpush2.msra.mxu0 0.0
      %1649 = vmatprep.subr.mxu0 0.0
      %1650 = vmatpush2.msra.mxu0 0.0
      %1651 = vmatprep.mubr.f32.mxu0 0.0
      %1652 = vmatmul.mubr.f32.gmra.mxu0 %v1585
      %v1653 = vpop.f32.mrf.mxu0
      %v1654 = vadd.f32 0.0, %v1653
      %v1655 = vpop.f32.mrf.mxu0
      %1656 = vdwg.mxu0
      %v1658 = vsel %vm1159, %v1321, 0
      %1660 = vmatprep.subr.mxu0 0.0
      %1661 = vmatpush1.msra.mxu0 0.0
      %1662 = vmatprep.subr.mxu0 0.0
      %1663 = vmatpush1.msra.mxu0 0.0
      %1664 = vmatprep.subr.mxu0 0.0
      %1665 = vmatpush1.msra.mxu0 0.0
      %1666 = vmatprep.subr.mxu0 0.0
      %1667 = vmatpush1.msra.mxu0 0.0
      %1668 = vmatprep.subr.mxu0 0.0
      %1669 = vmatpush1.msra.mxu0 0.0
      %1670 = vmatprep.subr.mxu0 0.0
      %1671 = vmatpush1.msra.mxu0 0.0
      %1672 = vmatprep.subr.mxu0 0.0
      %1673 = vmatpush1.msra.mxu0 0.0
      %1674 = vmatprep.subr.mxu0 0.0
      %1675 = vmatpush1.msra.mxu0 0.0
      %1676 = vmatprep.subr.mxu0 0.0
      %1677 = vmatpush1.msra.mxu0 0.0
      %1678 = vmatprep.subr.mxu0 0.0
      %1679 = vmatpush1.msra.mxu0 0.0
      %1680 = vmatprep.subr.mxu0 0.0
      %1681 = vmatpush1.msra.mxu0 0.0
      %1682 = vmatprep.subr.mxu0 0.0
      %1683 = vmatpush1.msra.mxu0 0.0
      %1684 = vmatprep.subr.mxu0 0.0
      %1685 = vmatpush1.msra.mxu0 0.0
      %1686 = vmatprep.subr.mxu0 0.0
      %1687 = vmatpush1.msra.mxu0 0.0
      %1688 = vmatprep.subr.mxu0 0.0
      %1689 = vmatpush1.msra.mxu0 0.0
      %1690 = vmatprep.subr.mxu0 0.0
      %1691 = vmatpush1.msra.mxu0 %v1061
      %1692 = vmatprep.subr.mxu0 0.0
      %1693 = vmatpush2.msra.mxu0 0.0
      %1694 = vmatprep.subr.mxu0 0.0
      %1695 = vmatpush2.msra.mxu0 0.0
      %1696 = vmatprep.subr.mxu0 0.0
      %1697 = vmatpush2.msra.mxu0 0.0
      %1698 = vmatprep.subr.mxu0 0.0
      %1699 = vmatpush2.msra.mxu0 0.0
      %1700 = vmatprep.subr.mxu0 0.0
      %1701 = vmatpush2.msra.mxu0 0.0
      %1702 = vmatprep.subr.mxu0 0.0
      %1703 = vmatpush2.msra.mxu0 0.0
      %1704 = vmatprep.subr.mxu0 0.0
      %1705 = vmatpush2.msra.mxu0 0.0
      %1706 = vmatprep.subr.mxu0 0.0
      %1707 = vmatpush2.msra.mxu0 0.0
      %1708 = vmatprep.subr.mxu0 0.0
      %1709 = vmatpush2.msra.mxu0 0.0
      %1710 = vmatprep.subr.mxu0 0.0
      %1711 = vmatpush2.msra.mxu0 0.0
      %1712 = vmatprep.subr.mxu0 0.0
      %1713 = vmatpush2.msra.mxu0 0.0
      %1714 = vmatprep.subr.mxu0 0.0
      %1715 = vmatpush2.msra.mxu0 0.0
      %1716 = vmatprep.subr.mxu0 0.0
      %1717 = vmatpush2.msra.mxu0 0.0
      %1718 = vmatprep.subr.mxu0 0.0
      %1719 = vmatpush2.msra.mxu0 0.0
      %1720 = vmatprep.subr.mxu0 0.0
      %1721 = vmatpush2.msra.mxu0 0.0
      %1722 = vmatprep.subr.mxu0 0.0
      %1723 = vmatpush2.msra.mxu0 0.0
      %1724 = vmatprep.mubr.f32.mxu0 0.0
      %1725 = vmatmul.mubr.f32.gmra.mxu0 %v1658
      %v1726 = vpop.f32.mrf.mxu0
      %v1727 = vadd.f32 %v1654, %v1726
      %v1728 = vpop.f32.mrf.mxu0
      %1729 = vdwg.mxu0
      %1730 = vrot.lane.b32.xlu0 %v1066, 124
      %v1731 = vpop.permute.xlu0 %1730
      %v1733 = vsel %vm1067, %v1731, 0.0
      %1734 = vadd.xlane.f32.xlu0 %v1733
      %v1735 = vpop.xlane.xlu0 %1734
      %1736 = vrot.lane.b32.xlu0 %v786, 124
      %v1737 = vpop.permute.xlu0 %1736
      %v1738 = vsel %vm1067, %v1737, 0
      %1740 = vmatprep.subr.mxu0 0.0
      %1741 = vmatpush1.msra.mxu0 0.0
      %1742 = vmatprep.subr.mxu0 0.0
      %1743 = vmatpush1.msra.mxu0 0.0
      %1744 = vmatprep.subr.mxu0 0.0
      %1745 = vmatpush1.msra.mxu0 0.0
      %1746 = vmatprep.subr.mxu0 0.0
      %1747 = vmatpush1.msra.mxu0 0.0
      %1748 = vmatprep.subr.mxu0 0.0
      %1749 = vmatpush1.msra.mxu0 0.0
      %1750 = vmatprep.subr.mxu0 0.0
      %1751 = vmatpush1.msra.mxu0 0.0
      %1752 = vmatprep.subr.mxu0 0.0
      %1753 = vmatpush1.msra.mxu0 0.0
      %1754 = vmatprep.subr.mxu0 0.0
      %1755 = vmatpush1.msra.mxu0 0.0
      %1756 = vmatprep.subr.mxu0 0.0
      %1757 = vmatpush1.msra.mxu0 0.0
      %1758 = vmatprep.subr.mxu0 0.0
      %1759 = vmatpush1.msra.mxu0 0.0
      %1760 = vmatprep.subr.mxu0 0.0
      %1761 = vmatpush1.msra.mxu0 0.0
      %1762 = vmatprep.subr.mxu0 0.0
      %1763 = vmatpush1.msra.mxu0 0.0
      %1764 = vmatprep.subr.mxu0 0.0
      %1765 = vmatpush1.msra.mxu0 0.0
      %1766 = vmatprep.subr.mxu0 0.0
      %1767 = vmatpush1.msra.mxu0 0.0
      %1768 = vmatprep.subr.mxu0 0.0
      %1769 = vmatpush1.msra.mxu0 0.0
      %1770 = vmatprep.subr.mxu0 0.0
      %1771 = vmatpush1.msra.mxu0 %v1076
      %1772 = vmatprep.subr.mxu0 0.0
      %1773 = vmatpush2.msra.mxu0 0.0
      %1774 = vmatprep.subr.mxu0 0.0
      %1775 = vmatpush2.msra.mxu0 0.0
      %1776 = vmatprep.subr.mxu0 0.0
      %1777 = vmatpush2.msra.mxu0 0.0
      %1778 = vmatprep.subr.mxu0 0.0
      %1779 = vmatpush2.msra.mxu0 0.0
      %1780 = vmatprep.subr.mxu0 0.0
      %1781 = vmatpush2.msra.mxu0 0.0
      %1782 = vmatprep.subr.mxu0 0.0
      %1783 = vmatpush2.msra.mxu0 0.0
      %1784 = vmatprep.subr.mxu0 0.0
      %1785 = vmatpush2.msra.mxu0 0.0
      %1786 = vmatprep.subr.mxu0 0.0
      %1787 = vmatpush2.msra.mxu0 0.0
      %1788 = vmatprep.subr.mxu0 0.0
      %1789 = vmatpush2.msra.mxu0 0.0
      %1790 = vmatprep.subr.mxu0 0.0
      %1791 = vmatpush2.msra.mxu0 0.0
      %1792 = vmatprep.subr.mxu0 0.0
      %1793 = vmatpush2.msra.mxu0 0.0
      %1794 = vmatprep.subr.mxu0 0.0
      %1795 = vmatpush2.msra.mxu0 0.0
      %1796 = vmatprep.subr.mxu0 0.0
      %1797 = vmatpush2.msra.mxu0 0.0
      %1798 = vmatprep.subr.mxu0 0.0
      %1799 = vmatpush2.msra.mxu0 0.0
      %1800 = vmatprep.subr.mxu0 0.0
      %1801 = vmatpush2.msra.mxu0 0.0
      %1802 = vmatprep.subr.mxu0 0.0
      %1803 = vmatpush2.msra.mxu0 0.0
      %1804 = vmatprep.mubr.f32.mxu0 0.0
      %1805 = vmatmul.mubr.f32.gmra.mxu0 %v1738
      %v1806 = vpop.f32.mrf.mxu0
      %v1807 = vadd.f32 0.0, %v1806
      %v1808 = vpop.f32.mrf.mxu0
      %1809 = vdwg.mxu0
      %v1810 = vmul.f32 %v1807, 2.0
      %v1811 = vsub.f32 %v1735, %v1810
      %v1812 = vadd.f32 %v1811, %v1154
      %v1813 = vsub.f32 0.0, %v1812
      %v1814 = vmul.f32 %v1813, 0.125
      %1815 = vrot.lane.b32.xlu0 %v1065, 112
      %v1816 = vpop.permute.xlu0 %1815
      %1817 = vrot.lane.b32.xlu0 %v961, 112
      %v1818 = vpop.permute.xlu0 %1817
      %1819 = vrot.lane.b32.xlu0 %v966, 112
      %v1820 = vpop.permute.xlu0 %1819
      %v1821 = vsel %vm1159, %v1816, 0
      %v1823 = vsel %vm1159, %v1818, 0
      %v1825 = vsel %vm1159, %v1820, 0
      %1827 = vmatprep.subr.mxu0 0.0
      %1828 = vmatpush1.xpose.msra.mxu0 0.0
      %1829 = vmatprep.subr.mxu0 0.0
      %1830 = vmatpush1.xpose.msra.mxu0 0.0
      %1831 = vmatprep.subr.mxu0 0.0
      %1832 = vmatpush1.xpose.msra.mxu0 0.0
      %1833 = vmatprep.subr.mxu0 0.0
      %1834 = vmatpush1.xpose.msra.mxu0 0.0
      %1835 = vmatprep.subr.mxu0 0.0
      %1836 = vmatpush1.xpose.msra.mxu0 0.0
      %1837 = vmatprep.subr.mxu0 0.0
      %1838 = vmatpush1.xpose.msra.mxu0 0.0
      %1839 = vmatprep.subr.mxu0 0.0
      %1840 = vmatpush1.xpose.msra.mxu0 0.0
      %1841 = vmatprep.subr.mxu0 0.0
      %1842 = vmatpush1.xpose.msra.mxu0 0.0
      %1843 = vmatprep.subr.mxu0 0.0
      %1844 = vmatpush1.xpose.msra.mxu0 0.0
      %1845 = vmatprep.subr.mxu0 0.0
      %1846 = vmatpush1.xpose.msra.mxu0 0.0
      %1847 = vmatprep.subr.mxu0 0.0
      %1848 = vmatpush1.xpose.msra.mxu0 0.0
      %1849 = vmatprep.subr.mxu0 0.0
      %1850 = vmatpush1.xpose.msra.mxu0 0.0
      %1851 = vmatprep.subr.mxu0 0.0
      %1852 = vmatpush1.xpose.msra.mxu0 0.0
      %1853 = vmatprep.subr.mxu0 0.0
      %1854 = vmatpush1.xpose.msra.mxu0 0.0
      %1855 = vmatprep.subr.mxu0 0.0
      %1856 = vmatpush1.xpose.msra.mxu0 %v1825
      %1857 = vmatprep.subr.mxu0 0.0
      %1858 = vmatpush1.xpose.msra.mxu0 %v1823
      %1859 = vmatprep.subr.mxu0 0.0
      %1860 = vmatpush2.xpose.msra.mxu0 0.0
      %1861 = vmatprep.subr.mxu0 0.0
      %1862 = vmatpush2.xpose.msra.mxu0 0.0
      %1863 = vmatprep.subr.mxu0 0.0
      %1864 = vmatpush2.xpose.msra.mxu0 0.0
      %1865 = vmatprep.subr.mxu0 0.0
      %1866 = vmatpush2.xpose.msra.mxu0 0.0
      %1867 = vmatprep.subr.mxu0 0.0
      %1868 = vmatpush2.xpose.msra.mxu0 0.0
      %1869 = vmatprep.subr.mxu0 0.0
      %1870 = vmatpush2.xpose.msra.mxu0 0.0
      %1871 = vmatprep.subr.mxu0 0.0
      %1872 = vmatpush2.xpose.msra.mxu0 0.0
      %1873 = vmatprep.subr.mxu0 0.0
      %1874 = vmatpush2.xpose.msra.mxu0 0.0
      %1875 = vmatprep.subr.mxu0 0.0
      %1876 = vmatpush2.xpose.msra.mxu0 0.0
      %1877 = vmatprep.subr.mxu0 0.0
      %1878 = vmatpush2.xpose.msra.mxu0 0.0
      %1879 = vmatprep.subr.mxu0 0.0
      %1880 = vmatpush2.xpose.msra.mxu0 0.0
      %1881 = vmatprep.subr.mxu0 0.0
      %1882 = vmatpush2.xpose.msra.mxu0 0.0
      %1883 = vmatprep.subr.mxu0 0.0
      %1884 = vmatpush2.xpose.msra.mxu0 0.0
      %1885 = vmatprep.subr.mxu0 0.0
      %1886 = vmatpush2.xpose.msra.mxu0 0.0
      %1887 = vmatprep.subr.mxu0 0.0
      %1888 = vmatpush2.xpose.msra.mxu0 0.0
      %1889 = vmatprep.subr.mxu0 0.0
      %1890 = vmatpush2.xpose.msra.mxu0 0.0
      %1891 = vmatprep.mubr.f32.mxu0 0.0
      %1892 = vmatmul.mubr.f32.gmra.mxu0 %v1821
      %v1893 = vpop.f32.mrf.mxu0
      %v1894 = vadd.f32 %v1814, %v1893
      %v1895 = vpop.f32.mrf.mxu0
      %1896 = vdwg.mxu0
      %v1897 = vsel %vm1239, %v1894, -inf
      %1898 = vmax.xlane.f32.xlu0 %v1897
      %v1899 = vpop.xlane.xlu0 %1898
      %v1900 = vsub.f32 %v1894, %v1899
      %v1901 = vmul.f32 %v1900, 1.442695
      %v1902 = vpow.pop %v1901
      %v1903 = vsel %vm1239, %v1902, 0.0
      %1904 = vadd.xlane.f32.xlu0 %v1903
      %v1905 = vpop.xlane.xlu0 %1904
      %v1906 = vrcp.pop %v1905
      %v1907 = vmul.f32 %v1902, %v1906
      %1908 = vrot.lane.b32.xlu0 %v1053, 112
      %v1909 = vpop.permute.xlu0 %1908
      %1910 = vrot.lane.b32.xlu0 %v1058, 112
      %v1911 = vpop.permute.xlu0 %1910
      %v1915 = vsel %vm1239, %v1907, 0
      %1917 = vmatprep.subr.mxu0 0.0
      %1918 = vmatpush1.msra.mxu0 0.0
      %1919 = vmatprep.subr.mxu0 0.0
      %1920 = vmatpush1.msra.mxu0 0.0
      %1921 = vmatprep.subr.mxu0 0.0
      %1922 = vmatpush1.msra.mxu0 0.0
      %1923 = vmatprep.subr.mxu0 0.0
      %1924 = vmatpush1.msra.mxu0 0.0
      %1925 = vmatprep.subr.mxu0 0.0
      %1926 = vmatpush1.msra.mxu0 0.0
      %1927 = vmatprep.subr.mxu0 0.0
      %1928 = vmatpush1.msra.mxu0 0.0
      %1929 = vmatprep.subr.mxu0 0.0
      %1930 = vmatpush1.msra.mxu0 0.0
      %1931 = vmatprep.subr.mxu0 0.0
      %1932 = vmatpush1.msra.mxu0 0.0
      %1933 = vmatprep.subr.mxu0 0.0
      %1934 = vmatpush1.msra.mxu0 0.0
      %1935 = vmatprep.subr.mxu0 0.0
      %1936 = vmatpush1.msra.mxu0 0.0
      %1937 = vmatprep.subr.mxu0 0.0
      %1938 = vmatpush1.msra.mxu0 0.0
      %1939 = vmatprep.subr.mxu0 0.0
      %1940 = vmatpush1.msra.mxu0 0.0
      %1941 = vmatprep.subr.mxu0 0.0
      %1942 = vmatpush1.msra.mxu0 0.0
      %1943 = vmatprep.subr.mxu0 0.0
      %1944 = vmatpush1.msra.mxu0 0.0
      %1945 = vmatprep.subr.mxu0 0.0
      %1946 = vmatpush1.msra.mxu0 %v1911
      %1947 = vmatprep.subr.mxu0 0.0
      %1948 = vmatpush1.msra.mxu0 %v1909
      %1949 = vmatprep.subr.mxu0 0.0
      %1950 = vmatpush2.msra.mxu0 0.0
      %1951 = vmatprep.subr.mxu0 0.0
      %1952 = vmatpush2.msra.mxu0 0.0
      %1953 = vmatprep.subr.mxu0 0.0
      %1954 = vmatpush2.msra.mxu0 0.0
      %1955 = vmatprep.subr.mxu0 0.0
      %1956 = vmatpush2.msra.mxu0 0.0
      %1957 = vmatprep.subr.mxu0 0.0
      %1958 = vmatpush2.msra.mxu0 0.0
      %1959 = vmatprep.subr.mxu0 0.0
      %1960 = vmatpush2.msra.mxu0 0.0
      %1961 = vmatprep.subr.mxu0 0.0
      %1962 = vmatpush2.msra.mxu0 0.0
      %1963 = vmatprep.subr.mxu0 0.0
      %1964 = vmatpush2.msra.mxu0 0.0
      %1965 = vmatprep.subr.mxu0 0.0
      %1966 = vmatpush2.msra.mxu0 0.0
      %1967 = vmatprep.subr.mxu0 0.0
      %1968 = vmatpush2.msra.mxu0 0.0
      %1969 = vmatprep.subr.mxu0 0.0
      %1970 = vmatpush2.msra.mxu0 0.0
      %1971 = vmatprep.subr.mxu0 0.0
      %1972 = vmatpush2.msra.mxu0 0.0
      %1973 = vmatprep.subr.mxu0 0.0
      %1974 = vmatpush2.msra.mxu0 0.0
      %1975 = vmatprep.subr.mxu0 0.0
      %1976 = vmatpush2.msra.mxu0 0.0
      %1977 = vmatprep.subr.mxu0 0.0
      %1978 = vmatpush2.msra.mxu0 0.0
      %1979 = vmatprep.subr.mxu0 0.0
      %1980 = vmatpush2.msra.mxu0 0.0
      %1981 = vmatprep.mubr.f32.mxu0 0.0
      %1982 = vmatmul.mubr.f32.gmra.mxu0 %v1915
      %v1983 = vpop.f32.mrf.mxu0
      %v1984 = vadd.f32 0.0, %v1983
      %v1985 = vpop.f32.mrf.mxu0
      %1986 = vdwg.mxu0
      %v1988 = vsel %vm1159, %v1984, 0
      %1990 = vmatprep.subr.mxu0 0.0
      %1991 = vmatpush1.msra.mxu0 0.0
      %1992 = vmatprep.subr.mxu0 0.0
      %1993 = vmatpush1.msra.mxu0 0.0
      %1994 = vmatprep.subr.mxu0 0.0
      %1995 = vmatpush1.msra.mxu0 0.0
      %1996 = vmatprep.subr.mxu0 0.0
      %1997 = vmatpush1.msra.mxu0 0.0
      %1998 = vmatprep.subr.mxu0 0.0
      %1999 = vmatpush1.msra.mxu0 0.0
      %2000 = vmatprep.subr.mxu0 0.0
      %2001 = vmatpush1.msra.mxu0 0.0
      %2002 = vmatprep.subr.mxu0 0.0
      %2003 = vmatpush1.msra.mxu0 0.0
      %2004 = vmatprep.subr.mxu0 0.0
      %2005 = vmatpush1.msra.mxu0 0.0
      %2006 = vmatprep.subr.mxu0 0.0
      %2007 = vmatpush1.msra.mxu0 0.0
      %2008 = vmatprep.subr.mxu0 0.0
      %2009 = vmatpush1.msra.mxu0 0.0
      %2010 = vmatprep.subr.mxu0 0.0
      %2011 = vmatpush1.msra.mxu0 0.0
      %2012 = vmatprep.subr.mxu0 0.0
      %2013 = vmatpush1.msra.mxu0 0.0
      %2014 = vmatprep.subr.mxu0 0.0
      %2015 = vmatpush1.msra.mxu0 0.0
      %2016 = vmatprep.subr.mxu0 0.0
      %2017 = vmatpush1.msra.mxu0 0.0
      %2018 = vmatprep.subr.mxu0 0.0
      %2019 = vmatpush1.msra.mxu0 0.0
      %2020 = vmatprep.subr.mxu0 0.0
      %2021 = vmatpush1.msra.mxu0 %v1063
      %2022 = vmatprep.subr.mxu0 0.0
      %2023 = vmatpush2.msra.mxu0 0.0
      %2024 = vmatprep.subr.mxu0 0.0
      %2025 = vmatpush2.msra.mxu0 0.0
      %2026 = vmatprep.subr.mxu0 0.0
      %2027 = vmatpush2.msra.mxu0 0.0
      %2028 = vmatprep.subr.mxu0 0.0
      %2029 = vmatpush2.msra.mxu0 0.0
      %2030 = vmatprep.subr.mxu0 0.0
      %2031 = vmatpush2.msra.mxu0 0.0
      %2032 = vmatprep.subr.mxu0 0.0
      %2033 = vmatpush2.msra.mxu0 0.0
      %2034 = vmatprep.subr.mxu0 0.0
      %2035 = vmatpush2.msra.mxu0 0.0
      %2036 = vmatprep.subr.mxu0 0.0
      %2037 = vmatpush2.msra.mxu0 0.0
      %2038 = vmatprep.subr.mxu0 0.0
      %2039 = vmatpush2.msra.mxu0 0.0
      %2040 = vmatprep.subr.mxu0 0.0
      %2041 = vmatpush2.msra.mxu0 0.0
      %2042 = vmatprep.subr.mxu0 0.0
      %2043 = vmatpush2.msra.mxu0 0.0
      %2044 = vmatprep.subr.mxu0 0.0
      %2045 = vmatpush2.msra.mxu0 0.0
      %2046 = vmatprep.subr.mxu0 0.0
      %2047 = vmatpush2.msra.mxu0 0.0
      %2048 = vmatprep.subr.mxu0 0.0
      %2049 = vmatpush2.msra.mxu0 0.0
      %2050 = vmatprep.subr.mxu0 0.0
      %2051 = vmatpush2.msra.mxu0 0.0
      %2052 = vmatprep.subr.mxu0 0.0
      %2053 = vmatpush2.msra.mxu0 0.0
      %2054 = vmatprep.mubr.f32.mxu0 0.0
      %2055 = vmatmul.mubr.f32.gmra.mxu0 %v1988
      %v2056 = vpop.f32.mrf.mxu0
      %v2057 = vadd.f32 0.0, %v2056
      %v2058 = vpop.f32.mrf.mxu0
      %2059 = vdwg.mxu0
      %v2060 = vadd.f32 %v1727, %v2057
      %2061 = vrot.lane.b32.xlu0 %v1066, 122
      %v2062 = vpop.permute.xlu0 %2061
      %v2064 = vsel %vm1067, %v2062, 0.0
      %2065 = vadd.xlane.f32.xlu0 %v2064
      %v2066 = vpop.xlane.xlu0 %2065
      %2067 = vrot.lane.b32.xlu0 %v786, 122
      %v2068 = vpop.permute.xlu0 %2067
      %v2069 = vsel %vm1067, %v2068, 0
      %2071 = vmatprep.subr.mxu0 0.0
      %2072 = vmatpush1.msra.mxu0 0.0
      %2073 = vmatprep.subr.mxu0 0.0
      %2074 = vmatpush1.msra.mxu0 0.0
      %2075 = vmatprep.subr.mxu0 0.0
      %2076 = vmatpush1.msra.mxu0 0.0
      %2077 = vmatprep.subr.mxu0 0.0
      %2078 = vmatpush1.msra.mxu0 0.0
      %2079 = vmatprep.subr.mxu0 0.0
      %2080 = vmatpush1.msra.mxu0 0.0
      %2081 = vmatprep.subr.mxu0 0.0
      %2082 = vmatpush1.msra.mxu0 0.0
      %2083 = vmatprep.subr.mxu0 0.0
      %2084 = vmatpush1.msra.mxu0 0.0
      %2085 = vmatprep.subr.mxu0 0.0
      %2086 = vmatpush1.msra.mxu0 0.0
      %2087 = vmatprep.subr.mxu0 0.0
      %2088 = vmatpush1.msra.mxu0 0.0
      %2089 = vmatprep.subr.mxu0 0.0
      %2090 = vmatpush1.msra.mxu0 0.0
      %2091 = vmatprep.subr.mxu0 0.0
      %2092 = vmatpush1.msra.mxu0 0.0
      %2093 = vmatprep.subr.mxu0 0.0
      %2094 = vmatpush1.msra.mxu0 0.0
      %2095 = vmatprep.subr.mxu0 0.0
      %2096 = vmatpush1.msra.mxu0 0.0
      %2097 = vmatprep.subr.mxu0 0.0
      %2098 = vmatpush1.msra.mxu0 0.0
      %2099 = vmatprep.subr.mxu0 0.0
      %2100 = vmatpush1.msra.mxu0 0.0
      %2101 = vmatprep.subr.mxu0 0.0
      %2102 = vmatpush1.msra.mxu0 %v1076
      %2103 = vmatprep.subr.mxu0 0.0
      %2104 = vmatpush2.msra.mxu0 0.0
      %2105 = vmatprep.subr.mxu0 0.0
      %2106 = vmatpush2.msra.mxu0 0.0
      %2107 = vmatprep.subr.mxu0 0.0
      %2108 = vmatpush2.msra.mxu0 0.0
      %2109 = vmatprep.subr.mxu0 0.0
      %2110 = vmatpush2.msra.mxu0 0.0
      %2111 = vmatprep.subr.mxu0 0.0
      %2112 = vmatpush2.msra.mxu0 0.0
      %2113 = vmatprep.subr.mxu0 0.0
      %2114 = vmatpush2.msra.mxu0 0.0
      %2115 = vmatprep.subr.mxu0 0.0
      %2116 = vmatpush2.msra.mxu0 0.0
      %2117 = vmatprep.subr.mxu0 0.0
      %2118 = vmatpush2.msra.mxu0 0.0
      %2119 = vmatprep.subr.mxu0 0.0
      %2120 = vmatpush2.msra.mxu0 0.0
      %2121 = vmatprep.subr.mxu0 0.0
      %2122 = vmatpush2.msra.mxu0 0.0
      %2123 = vmatprep.subr.mxu0 0.0
      %2124 = vmatpush2.msra.mxu0 0.0
      %2125 = vmatprep.subr.mxu0 0.0
      %2126 = vmatpush2.msra.mxu0 0.0
      %2127 = vmatprep.subr.mxu0 0.0
      %2128 = vmatpush2.msra.mxu0 0.0
      %2129 = vmatprep.subr.mxu0 0.0
      %2130 = vmatpush2.msra.mxu0 0.0
      %2131 = vmatprep.subr.mxu0 0.0
      %2132 = vmatpush2.msra.mxu0 0.0
      %2133 = vmatprep.subr.mxu0 0.0
      %2134 = vmatpush2.msra.mxu0 0.0
      %2135 = vmatprep.mubr.f32.mxu0 0.0
      %2136 = vmatmul.mubr.f32.gmra.mxu0 %v2069
      %v2137 = vpop.f32.mrf.mxu0
      %v2138 = vadd.f32 0.0, %v2137
      %v2139 = vpop.f32.mrf.mxu0
      %2140 = vdwg.mxu0
      %v2141 = vmul.f32 %v2138, 2.0
      %v2142 = vsub.f32 %v2066, %v2141
      %v2143 = vadd.f32 %v2142, %v1154
      %v2144 = vsub.f32 0.0, %v2143
      %v2145 = vmul.f32 %v2144, 0.125
      %2146 = vrot.lane.b32.xlu0 %v1065, 104
      %v2147 = vpop.permute.xlu0 %2146
      %2148 = vrot.lane.b32.xlu0 %v961, 104
      %v2149 = vpop.permute.xlu0 %2148
      %2150 = vrot.lane.b32.xlu0 %v966, 104
      %v2151 = vpop.permute.xlu0 %2150
      %v2152 = vsel %vm1159, %v2147, 0
      %v2154 = vsel %vm1159, %v2149, 0
      %v2156 = vsel %vm1159, %v2151, 0
      %2158 = vmatprep.subr.mxu0 0.0
      %2159 = vmatpush1.xpose.msra.mxu0 0.0
      %2160 = vmatprep.subr.mxu0 0.0
      %2161 = vmatpush1.xpose.msra.mxu0 0.0
      %2162 = vmatprep.subr.mxu0 0.0
      %2163 = vmatpush1.xpose.msra.mxu0 0.0
      %2164 = vmatprep.subr.mxu0 0.0
      %2165 = vmatpush1.xpose.msra.mxu0 0.0
      %2166 = vmatprep.subr.mxu0 0.0
      %2167 = vmatpush1.xpose.msra.mxu0 0.0
      %2168 = vmatprep.subr.mxu0 0.0
      %2169 = vmatpush1.xpose.msra.mxu0 0.0
      %2170 = vmatprep.subr.mxu0 0.0
      %2171 = vmatpush1.xpose.msra.mxu0 0.0
      %2172 = vmatprep.subr.mxu0 0.0
      %2173 = vmatpush1.xpose.msra.mxu0 0.0
      %2174 = vmatprep.subr.mxu0 0.0
      %2175 = vmatpush1.xpose.msra.mxu0 0.0
      %2176 = vmatprep.subr.mxu0 0.0
      %2177 = vmatpush1.xpose.msra.mxu0 0.0
      %2178 = vmatprep.subr.mxu0 0.0
      %2179 = vmatpush1.xpose.msra.mxu0 0.0
      %2180 = vmatprep.subr.mxu0 0.0
      %2181 = vmatpush1.xpose.msra.mxu0 0.0
      %2182 = vmatprep.subr.mxu0 0.0
      %2183 = vmatpush1.xpose.msra.mxu0 0.0
      %2184 = vmatprep.subr.mxu0 0.0
      %2185 = vmatpush1.xpose.msra.mxu0 0.0
      %2186 = vmatprep.subr.mxu0 0.0
      %2187 = vmatpush1.xpose.msra.mxu0 %v2156
      %2188 = vmatprep.subr.mxu0 0.0
      %2189 = vmatpush1.xpose.msra.mxu0 %v2154
      %2190 = vmatprep.subr.mxu0 0.0
      %2191 = vmatpush2.xpose.msra.mxu0 0.0
      %2192 = vmatprep.subr.mxu0 0.0
      %2193 = vmatpush2.xpose.msra.mxu0 0.0
      %2194 = vmatprep.subr.mxu0 0.0
      %2195 = vmatpush2.xpose.msra.mxu0 0.0
      %2196 = vmatprep.subr.mxu0 0.0
      %2197 = vmatpush2.xpose.msra.mxu0 0.0
      %2198 = vmatprep.subr.mxu0 0.0
      %2199 = vmatpush2.xpose.msra.mxu0 0.0
      %2200 = vmatprep.subr.mxu0 0.0
      %2201 = vmatpush2.xpose.msra.mxu0 0.0
      %2202 = vmatprep.subr.mxu0 0.0
      %2203 = vmatpush2.xpose.msra.mxu0 0.0
      %2204 = vmatprep.subr.mxu0 0.0
      %2205 = vmatpush2.xpose.msra.mxu0 0.0
      %2206 = vmatprep.subr.mxu0 0.0
      %2207 = vmatpush2.xpose.msra.mxu0 0.0
      %2208 = vmatprep.subr.mxu0 0.0
      %2209 = vmatpush2.xpose.msra.mxu0 0.0
      %2210 = vmatprep.subr.mxu0 0.0
      %2211 = vmatpush2.xpose.msra.mxu0 0.0
      %2212 = vmatprep.subr.mxu0 0.0
      %2213 = vmatpush2.xpose.msra.mxu0 0.0
      %2214 = vmatprep.subr.mxu0 0.0
      %2215 = vmatpush2.xpose.msra.mxu0 0.0
      %2216 = vmatprep.subr.mxu0 0.0
      %2217 = vmatpush2.xpose.msra.mxu0 0.0
      %2218 = vmatprep.subr.mxu0 0.0
      %2219 = vmatpush2.xpose.msra.mxu0 0.0
      %2220 = vmatprep.subr.mxu0 0.0
      %2221 = vmatpush2.xpose.msra.mxu0 0.0
      %2222 = vmatprep.mubr.f32.mxu0 0.0
      %2223 = vmatmul.mubr.f32.gmra.mxu0 %v2152
      %v2224 = vpop.f32.mrf.mxu0
      %v2225 = vadd.f32 %v2145, %v2224
      %v2226 = vpop.f32.mrf.mxu0
      %2227 = vdwg.mxu0
      %v2228 = vsel %vm1239, %v2225, -inf
      %2229 = vmax.xlane.f32.xlu0 %v2228
      %v2230 = vpop.xlane.xlu0 %2229
      %v2231 = vsub.f32 %v2225, %v2230
      %v2232 = vmul.f32 %v2231, 1.442695
      %v2233 = vpow.pop %v2232
      %v2234 = vsel %vm1239, %v2233, 0.0
      %2235 = vadd.xlane.f32.xlu0 %v2234
      %v2236 = vpop.xlane.xlu0 %2235
      %v2237 = vrcp.pop %v2236
      %v2238 = vmul.f32 %v2233, %v2237
      %2239 = vrot.lane.b32.xlu0 %v1053, 104
      %v2240 = vpop.permute.xlu0 %2239
      %2241 = vrot.lane.b32.xlu0 %v1058, 104
      %v2242 = vpop.permute.xlu0 %2241
      %v2246 = vsel %vm1239, %v2238, 0
      %2248 = vmatprep.subr.mxu0 0.0
      %2249 = vmatpush1.msra.mxu0 0.0
      %2250 = vmatprep.subr.mxu0 0.0
      %2251 = vmatpush1.msra.mxu0 0.0
      %2252 = vmatprep.subr.mxu0 0.0
      %2253 = vmatpush1.msra.mxu0 0.0
      %2254 = vmatprep.subr.mxu0 0.0
      %2255 = vmatpush1.msra.mxu0 0.0
      %2256 = vmatprep.subr.mxu0 0.0
      %2257 = vmatpush1.msra.mxu0 0.0
      %2258 = vmatprep.subr.mxu0 0.0
      %2259 = vmatpush1.msra.mxu0 0.0
      %2260 = vmatprep.subr.mxu0 0.0
      %2261 = vmatpush1.msra.mxu0 0.0
      %2262 = vmatprep.subr.mxu0 0.0
      %2263 = vmatpush1.msra.mxu0 0.0
      %2264 = vmatprep.subr.mxu0 0.0
      %2265 = vmatpush1.msra.mxu0 0.0
      %2266 = vmatprep.subr.mxu0 0.0
      %2267 = vmatpush1.msra.mxu0 0.0
      %2268 = vmatprep.subr.mxu0 0.0
      %2269 = vmatpush1.msra.mxu0 0.0
      %2270 = vmatprep.subr.mxu0 0.0
      %2271 = vmatpush1.msra.mxu0 0.0
      %2272 = vmatprep.subr.mxu0 0.0
      %2273 = vmatpush1.msra.mxu0 0.0
      %2274 = vmatprep.subr.mxu0 0.0
      %2275 = vmatpush1.msra.mxu0 0.0
      %2276 = vmatprep.subr.mxu0 0.0
      %2277 = vmatpush1.msra.mxu0 %v2242
      %2278 = vmatprep.subr.mxu0 0.0
      %2279 = vmatpush1.msra.mxu0 %v2240
      %2280 = vmatprep.subr.mxu0 0.0
      %2281 = vmatpush2.msra.mxu0 0.0
      %2282 = vmatprep.subr.mxu0 0.0
      %2283 = vmatpush2.msra.mxu0 0.0
      %2284 = vmatprep.subr.mxu0 0.0
      %2285 = vmatpush2.msra.mxu0 0.0
      %2286 = vmatprep.subr.mxu0 0.0
      %2287 = vmatpush2.msra.mxu0 0.0
      %2288 = vmatprep.subr.mxu0 0.0
      %2289 = vmatpush2.msra.mxu0 0.0
      %2290 = vmatprep.subr.mxu0 0.0
      %2291 = vmatpush2.msra.mxu0 0.0
      %2292 = vmatprep.subr.mxu0 0.0
      %2293 = vmatpush2.msra.mxu0 0.0
      %2294 = vmatprep.subr.mxu0 0.0
      %2295 = vmatpush2.msra.mxu0 0.0
      %2296 = vmatprep.subr.mxu0 0.0
      %2297 = vmatpush2.msra.mxu0 0.0
      %2298 = vmatprep.subr.mxu0 0.0
      %2299 = vmatpush2.msra.mxu0 0.0
      %2300 = vmatprep.subr.mxu0 0.0
      %2301 = vmatpush2.msra.mxu0 0.0
      %2302 = vmatprep.subr.mxu0 0.0
      %2303 = vmatpush2.msra.mxu0 0.0
      %2304 = vmatprep.subr.mxu0 0.0
      %2305 = vmatpush2.msra.mxu0 0.0
      %2306 = vmatprep.subr.mxu0 0.0
      %2307 = vmatpush2.msra.mxu0 0.0
      %2308 = vmatprep.subr.mxu0 0.0
      %2309 = vmatpush2.msra.mxu0 0.0
      %2310 = vmatprep.subr.mxu0 0.0
      %2311 = vmatpush2.msra.mxu0 0.0
      %2312 = vmatprep.mubr.f32.mxu0 0.0
      %2313 = vmatmul.mubr.f32.gmra.mxu0 %v2246
      %v2314 = vpop.f32.mrf.mxu0
      %v2315 = vadd.f32 0.0, %v2314
      %v2316 = vpop.f32.mrf.mxu0
      %2317 = vdwg.mxu0
      %v2319 = vsel %vm1159, %v2315, 0
      %2321 = vmatprep.subr.mxu0 0.0
      %2322 = vmatpush1.msra.mxu0 0.0
      %2323 = vmatprep.subr.mxu0 0.0
      %2324 = vmatpush1.msra.mxu0 0.0
      %2325 = vmatprep.subr.mxu0 0.0
      %2326 = vmatpush1.msra.mxu0 0.0
      %2327 = vmatprep.subr.mxu0 0.0
      %2328 = vmatpush1.msra.mxu0 0.0
      %2329 = vmatprep.subr.mxu0 0.0
      %2330 = vmatpush1.msra.mxu0 0.0
      %2331 = vmatprep.subr.mxu0 0.0
      %2332 = vmatpush1.msra.mxu0 0.0
      %2333 = vmatprep.subr.mxu0 0.0
      %2334 = vmatpush1.msra.mxu0 0.0
      %2335 = vmatprep.subr.mxu0 0.0
      %2336 = vmatpush1.msra.mxu0 0.0
      %2337 = vmatprep.subr.mxu0 0.0
      %2338 = vmatpush1.msra.mxu0 0.0
      %2339 = vmatprep.subr.mxu0 0.0
      %2340 = vmatpush1.msra.mxu0 0.0
      %2341 = vmatprep.subr.mxu0 0.0
      %2342 = vmatpush1.msra.mxu0 0.0
      %2343 = vmatprep.subr.mxu0 0.0
      %2344 = vmatpush1.msra.mxu0 0.0
      %2345 = vmatprep.subr.mxu0 0.0
      %2346 = vmatpush1.msra.mxu0 0.0
      %2347 = vmatprep.subr.mxu0 0.0
      %2348 = vmatpush1.msra.mxu0 0.0
      %2349 = vmatprep.subr.mxu0 0.0
      %2350 = vmatpush1.msra.mxu0 0.0
      %2351 = vmatprep.subr.mxu0 0.0
      %2352 = vmatpush1.msra.mxu0 %v1064
      %2353 = vmatprep.subr.mxu0 0.0
      %2354 = vmatpush2.msra.mxu0 0.0
      %2355 = vmatprep.subr.mxu0 0.0
      %2356 = vmatpush2.msra.mxu0 0.0
      %2357 = vmatprep.subr.mxu0 0.0
      %2358 = vmatpush2.msra.mxu0 0.0
      %2359 = vmatprep.subr.mxu0 0.0
      %2360 = vmatpush2.msra.mxu0 0.0
      %2361 = vmatprep.subr.mxu0 0.0
      %2362 = vmatpush2.msra.mxu0 0.0
      %2363 = vmatprep.subr.mxu0 0.0
      %2364 = vmatpush2.msra.mxu0 0.0
      %2365 = vmatprep.subr.mxu0 0.0
      %2366 = vmatpush2.msra.mxu0 0.0
      %2367 = vmatprep.subr.mxu0 0.0
      %2368 = vmatpush2.msra.mxu0 0.0
      %2369 = vmatprep.subr.mxu0 0.0
      %2370 = vmatpush2.msra.mxu0 0.0
      %2371 = vmatprep.subr.mxu0 0.0
      %2372 = vmatpush2.msra.mxu0 0.0
      %2373 = vmatprep.subr.mxu0 0.0
      %2374 = vmatpush2.msra.mxu0 0.0
      %2375 = vmatprep.subr.mxu0 0.0
      %2376 = vmatpush2.msra.mxu0 0.0
      %2377 = vmatprep.subr.mxu0 0.0
      %2378 = vmatpush2.msra.mxu0 0.0
      %2379 = vmatprep.subr.mxu0 0.0
      %2380 = vmatpush2.msra.mxu0 0.0
      %2381 = vmatprep.subr.mxu0 0.0
      %2382 = vmatpush2.msra.mxu0 0.0
      %2383 = vmatprep.subr.mxu0 0.0
      %2384 = vmatpush2.msra.mxu0 0.0
      %2385 = vmatprep.mubr.f32.mxu0 0.0
      %2386 = vmatmul.mubr.f32.gmra.mxu0 %v2319
      %v2387 = vpop.f32.mrf.mxu0
      %v2388 = vadd.f32 0.0, %v2387
      %v2389 = vpop.f32.mrf.mxu0
      %2390 = vdwg.mxu0
      %v2391 = vadd.f32 %v2060, %v2388
      %v2392 = vld [vmem:[%s14] sm:$0x1]
      %v2394 = vlaneseq
      %v2395 = vshrl.u32 %v2394, 7
      %v2396 = vsub.s32 0, %v2395
      %v2397 = vrot.slane %v2392, %v2396
      %v2399 = vadd.f32 %v2391, %v2397
      %v2400 = vadd.f32 %v780, %v2399
      %v2401 = vld [vmem:[%s15] sm:$0x1]
      %v2402 = vld [vmem:[%s16] sm:$0x1]
      %v2403 = vsel %vm801, %v2400, 0.0
      %2404 = vadd.xlane.f32.xlu0 %v2403
      %v2405 = vpop.xlane.xlu0 %2404
      %v2406 = vrcp.pop 32.0
      %v2407 = vmul.f32 %v2405, %v2406
      %v2408 = vsub.f32 %v2400, %v2407
      %v2409 = vmul.f32 %v2408, %v2408
      %v2410 = vsel %vm801, %v2409, 0.0
      %2411 = vadd.xlane.f32.xlu0 %v2410
      %v2412 = vpop.xlane.xlu0 %2411
      %v2413 = vmul.f32 %v2412, %v2406
      %v2414 = vadd.f32 %v2413, 1e-05
      %v2415 = vrsqrt.pop %v2414
      %v2416 = vmul.f32 %v2408, %v2415
      %v2418 = vlaneseq
      %v2419 = vshrl.u32 %v2418, 7
      %v2420 = vsub.s32 0, %v2419
      %v2421 = vrot.slane %v2401, %v2420
      %v2423 = vmul.f32 %v2416, %v2421
      %v2425 = vlaneseq
      %v2426 = vshrl.u32 %v2425, 7
      %v2427 = vsub.s32 0, %v2426
      %v2428 = vrot.slane %v2402, %v2427
      %v2430 = vadd.f32 %v2423, %v2428
      %v2431 = vld [vmem:[%s19] sm:$0xff]
      %v2432 = vld [vmem:[%s19 + $0x8] sm:$0xff]
      %v2433 = vld [vmem:[%s19 + $0x10] sm:$0xff]
      %v2434 = vld [vmem:[%s19 + $0x18] sm:$0xff]
      %v2435 = vld [vmem:[%s20] sm:$0x1]
      %v2437 = vlaneseq
      %v2438 = vshrl.u32 %v2437, 7
      %v2439 = vsub.s32 0, %v2438
      %v2440 = vrot.slane %v2435, %v2439
      %v2443 = vsel %vm801, %v2430, 0
      %2445 = vmatprep.subr.mxu0 0.0
      %2446 = vmatpush1.msra.mxu0 0.0
      %2447 = vmatprep.subr.mxu0 0.0
      %2448 = vmatpush1.msra.mxu0 0.0
      %2449 = vmatprep.subr.mxu0 0.0
      %2450 = vmatpush1.msra.mxu0 0.0
      %2451 = vmatprep.subr.mxu0 0.0
      %2452 = vmatpush1.msra.mxu0 0.0
      %2453 = vmatprep.subr.mxu0 0.0
      %2454 = vmatpush1.msra.mxu0 0.0
      %2455 = vmatprep.subr.mxu0 0.0
      %2456 = vmatpush1.msra.mxu0 0.0
      %2457 = vmatprep.subr.mxu0 0.0
      %2458 = vmatpush1.msra.mxu0 0.0
      %2459 = vmatprep.subr.mxu0 0.0
      %2460 = vmatpush1.msra.mxu0 0.0
      %2461 = vmatprep.subr.mxu0 0.0
      %2462 = vmatpush1.msra.mxu0 0.0
      %2463 = vmatprep.subr.mxu0 0.0
      %2464 = vmatpush1.msra.mxu0 0.0
      %2465 = vmatprep.subr.mxu0 0.0
      %2466 = vmatpush1.msra.mxu0 0.0
      %2467 = vmatprep.subr.mxu0 0.0
      %2468 = vmatpush1.msra.mxu0 0.0
      %2469 = vmatprep.subr.mxu0 0.0
      %2470 = vmatpush1.msra.mxu0 %v2434
      %2471 = vmatprep.subr.mxu0 0.0
      %2472 = vmatpush1.msra.mxu0 %v2433
      %2473 = vmatprep.subr.mxu0 0.0
      %2474 = vmatpush1.msra.mxu0 %v2432
      %2475 = vmatprep.subr.mxu0 0.0
      %2476 = vmatpush1.msra.mxu0 %v2431
      %2477 = vmatprep.subr.mxu0 0.0
      %2478 = vmatpush2.msra.mxu0 0.0
      %2479 = vmatprep.subr.mxu0 0.0
      %2480 = vmatpush2.msra.mxu0 0.0
      %2481 = vmatprep.subr.mxu0 0.0
      %2482 = vmatpush2.msra.mxu0 0.0
      %2483 = vmatprep.subr.mxu0 0.0
      %2484 = vmatpush2.msra.mxu0 0.0
      %2485 = vmatprep.subr.mxu0 0.0
      %2486 = vmatpush2.msra.mxu0 0.0
      %2487 = vmatprep.subr.mxu0 0.0
      %2488 = vmatpush2.msra.mxu0 0.0
      %2489 = vmatprep.subr.mxu0 0.0
      %2490 = vmatpush2.msra.mxu0 0.0
      %2491 = vmatprep.subr.mxu0 0.0
      %2492 = vmatpush2.msra.mxu0 0.0
      %2493 = vmatprep.subr.mxu0 0.0
      %2494 = vmatpush2.msra.mxu0 0.0
      %2495 = vmatprep.subr.mxu0 0.0
      %2496 = vmatpush2.msra.mxu0 0.0
      %2497 = vmatprep.subr.mxu0 0.0
      %2498 = vmatpush2.msra.mxu0 0.0
      %2499 = vmatprep.subr.mxu0 0.0
      %2500 = vmatpush2.msra.mxu0 0.0
      %2501 = vmatprep.subr.mxu0 0.0
      %2502 = vmatpush2.msra.mxu0 0.0
      %2503 = vmatprep.subr.mxu0 0.0
      %2504 = vmatpush2.msra.mxu0 0.0
      %2505 = vmatprep.subr.mxu0 0.0
      %2506 = vmatpush2.msra.mxu0 0.0
      %2507 = vmatprep.subr.mxu0 0.0
      %2508 = vmatpush2.msra.mxu0 0.0
      %2509 = vmatprep.mubr.f32.mxu0 0.0
      %2510 = vmatmul.mubr.f32.gmra.mxu0 %v2443
      %v2511 = vpop.f32.mrf.mxu0
      %v2512 = vadd.f32 %v2440, %v2511
      %v2513 = vpop.f32.mrf.mxu0
      %2514 = vdwg.mxu0
      %v2515 = vmax.f32 %v2512, 0.0
      %v2516 = vld [vmem:[%s21] sm:$0xff]
      %v2517 = vld [vmem:[%s21 + $0x8] sm:$0xff]
      %v2518 = vld [vmem:[%s21 + $0x10] sm:$0xff]
      %v2519 = vld [vmem:[%s21 + $0x18] sm:$0xff]
      %v2520 = vld [vmem:[%s21 + $0x20] sm:$0xff]
      %v2521 = vld [vmem:[%s21 + $0x28] sm:$0xff]
      %v2522 = vld [vmem:[%s21 + $0x30] sm:$0xff]
      %v2523 = vld [vmem:[%s21 + $0x38] sm:$0xff]
      %v2524 = vld [vmem:[%s22] sm:$0x1]
      %v2526 = vlaneseq
      %v2527 = vshrl.u32 %v2526, 7
      %v2528 = vsub.s32 0, %v2527
      %v2529 = vrot.slane %v2524, %v2528
      %vm2531 = vcmask 523264
      %v2533 = vsel %vm2531, %v2515, 0
      %2535 = vmatprep.subr.mxu0 0.0
      %2536 = vmatpush1.msra.mxu0 0.0
      %2537 = vmatprep.subr.mxu0 0.0
      %2538 = vmatpush1.msra.mxu0 0.0
      %2539 = vmatprep.subr.mxu0 0.0
      %2540 = vmatpush1.msra.mxu0 0.0
      %2541 = vmatprep.subr.mxu0 0.0
      %2542 = vmatpush1.msra.mxu0 0.0
      %2543 = vmatprep.subr.mxu0 0.0
      %2544 = vmatpush1.msra.mxu0 0.0
      %2545 = vmatprep.subr.mxu0 0.0
      %2546 = vmatpush1.msra.mxu0 0.0
      %2547 = vmatprep.subr.mxu0 0.0
      %2548 = vmatpush1.msra.mxu0 0.0
      %2549 = vmatprep.subr.mxu0 0.0
      %2550 = vmatpush1.msra.mxu0 0.0
      %2551 = vmatprep.subr.mxu0 0.0
      %2552 = vmatpush1.msra.mxu0 %v2523
      %2553 = vmatprep.subr.mxu0 0.0
      %2554 = vmatpush1.msra.mxu0 %v2522
      %2555 = vmatprep.subr.mxu0 0.0
      %2556 = vmatpush1.msra.mxu0 %v2521
      %2557 = vmatprep.subr.mxu0 0.0
      %2558 = vmatpush1.msra.mxu0 %v2520
      %2559 = vmatprep.subr.mxu0 0.0
      %2560 = vmatpush1.msra.mxu0 %v2519
      %2561 = vmatprep.subr.mxu0 0.0
      %2562 = vmatpush1.msra.mxu0 %v2518
      %2563 = vmatprep.subr.mxu0 0.0
      %2564 = vmatpush1.msra.mxu0 %v2517
      %2565 = vmatprep.subr.mxu0 0.0
      %2566 = vmatpush1.msra.mxu0 %v2516
      %2567 = vmatprep.subr.mxu0 0.0
      %2568 = vmatpush2.msra.mxu0 0.0
      %2569 = vmatprep.subr.mxu0 0.0
      %2570 = vmatpush2.msra.mxu0 0.0
      %2571 = vmatprep.subr.mxu0 0.0
      %2572 = vmatpush2.msra.mxu0 0.0
      %2573 = vmatprep.subr.mxu0 0.0
      %2574 = vmatpush2.msra.mxu0 0.0
      %2575 = vmatprep.subr.mxu0 0.0
      %2576 = vmatpush2.msra.mxu0 0.0
      %2577 = vmatprep.subr.mxu0 0.0
      %2578 = vmatpush2.msra.mxu0 0.0
      %2579 = vmatprep.subr.mxu0 0.0
      %2580 = vmatpush2.msra.mxu0 0.0
      %2581 = vmatprep.subr.mxu0 0.0
      %2582 = vmatpush2.msra.mxu0 0.0
      %2583 = vmatprep.subr.mxu0 0.0
      %2584 = vmatpush2.msra.mxu0 0.0
      %2585 = vmatprep.subr.mxu0 0.0
      %2586 = vmatpush2.msra.mxu0 0.0
      %2587 = vmatprep.subr.mxu0 0.0
      %2588 = vmatpush2.msra.mxu0 0.0
      %2589 = vmatprep.subr.mxu0 0.0
      %2590 = vmatpush2.msra.mxu0 0.0
      %2591 = vmatprep.subr.mxu0 0.0
      %2592 = vmatpush2.msra.mxu0 0.0
      %2593 = vmatprep.subr.mxu0 0.0
      %2594 = vmatpush2.msra.mxu0 0.0
      %2595 = vmatprep.subr.mxu0 0.0
      %2596 = vmatpush2.msra.mxu0 0.0
      %2597 = vmatprep.subr.mxu0 0.0
      %2598 = vmatpush2.msra.mxu0 0.0
      %2599 = vmatprep.mubr.f32.mxu0 0.0
      %2600 = vmatmul.mubr.f32.gmra.mxu0 %v2533
      %v2601 = vpop.f32.mrf.mxu0
      %v2602 = vadd.f32 %v2529, %v2601
      %v2603 = vpop.f32.mrf.mxu0
      %2604 = vdwg.mxu0
      %v2605 = vadd.f32 %v2430, %v2602
      %v2606 = vld [vmem:[%s17] sm:$0x1]
      %v2607 = vld [vmem:[%s18] sm:$0x1]
      %v2608 = vsel %vm801, %v2605, 0.0
      %2609 = vadd.xlane.f32.xlu0 %v2608
      %v2610 = vpop.xlane.xlu0 %2609
      %v2611 = vmul.f32 %v2610, %v2406
      %v2612 = vsub.f32 %v2605, %v2611
      %v2613 = vmul.f32 %v2612, %v2612
      %v2614 = vsel %vm801, %v2613, 0.0
      %2615 = vadd.xlane.f32.xlu0 %v2614
      %v2616 = vpop.xlane.xlu0 %2615
      %v2617 = vmul.f32 %v2616, %v2406
      %v2618 = vadd.f32 %v2617, 1e-05
      %v2619 = vrsqrt.pop %v2618
      %v2620 = vmul.f32 %v2612, %v2619
      %v2622 = vlaneseq
      %v2623 = vshrl.u32 %v2622, 7
      %v2624 = vsub.s32 0, %v2623
      %v2625 = vrot.slane %v2606, %v2624
      %v2627 = vmul.f32 %v2620, %v2625
      %v2629 = vlaneseq
      %v2630 = vshrl.u32 %v2629, 7
      %v2631 = vsub.s32 0, %v2630
      %v2632 = vrot.slane %v2607, %v2631
      %v2634 = vadd.f32 %v2627, %v2632
      %2635 = vst.msk [vmem:[%s779] sm:$0xff] %vm801, %v2634
      %p2636 = scmp.lt.s32.totalorder %s34, 1
      %s2637 = scalar_select %p2636, %s34, 1
      %s2638 = smul.addr %s2637, 8
      %s2639 = scalar_lea.vmem %s23, %s2638
      // Predicated region
      $region113: #{transformer_decoder.6} parent=111 // pred_check
        %p2640 = pneg %p560
      $region114: #{transformer_decoder.6} parent=111 // pred_check_branch
        %2642 = sbr.rel (%p2640) target = $region116
      $region115: #{transformer_decoder.6} parent=111 // pred_region
        _
      $region116: #{transformer_decoder.6} parent=111 // pred_fallthru
        _
    $region112: #{transformer_decoder.6} parent=5 // pred_fallthru
      _
    %p2643 = scmp.le.s32.totalorder 2, %s29
    // Predicated region
    $region117: #{transformer_decoder.6} parent=5 // pred_check
      %p2644 = pneg %p2643
    $region118: #{transformer_decoder.6} parent=5 // pred_check_branch
      %2646 = sbr.rel (%p2644) target = $region120
    $region119: #{transformer_decoder.6} parent=5 // pred_region
      %s2647 = ssub.s32 %s29, 2
      // Predicated region
      $region121: #{transformer_decoder.6} parent=119 // pred_check
        %p2648 = pneg %p566
      $region122: #{transformer_decoder.6} parent=119 // pred_check_branch
        %2650 = sbr.rel (%p2648) target = $region124
      $region123: #{transformer_decoder.6} parent=119 // pred_region
        %p2651 = scmp.lt.s32.totalorder %s35, 1
        %s2652 = scalar_select %p2651, %s35, 1
        %s2653 = smul.addr %s2652, 8
        %s2654 = scalar_lea.vmem %s23, %s2653
      $region124: #{transformer_decoder.6} parent=119 // pred_fallthru
        _
    $region120: #{transformer_decoder.6} parent=5 // pred_fallthru
      _
  $region6: #{transformer_decoder.6} parent=0 // loop_footer
    %s33 = sadd.s32 1, %s29
  $region7: #{transformer_decoder.6} parent=0 // loop_footer_branch
    %28 = sbr.rel target = $region3
  $region8: #{transformer_decoder.6} parent=0 // loop_exit
    _

</llo_original>
